<compile_context>
chip_gen: v7x
topology: tpu7x:2x2x1
jax: 0.10.0
libtpu: 0.0.40
codegen_flags: <defaults>
</compile_context>

<pallas_src>
import jax
import jax.numpy as jnp
from jax.experimental import pallas as pl
from jax.experimental.pallas import tpu as pltpu

EPS = 1e-5                        # nn.InstanceNorm3d default (affine=False, biased var)
LANE = 128                        # pad Cout up to a multiple of the TPU lane width
VMEM_BUDGET = 28 * 1024 * 1024    # per-grid-step working-set target (v7x-safe)
VMEM_LIMIT = 64 * 1024 * 1024


def _round_up(x, m):
    return (x + m - 1) // m * m


# ----------------------------------------------------------------------------
# Kernel 1: conv3x3x3 (in-VMEM patch contraction) + bias + per-tile IN statistics
# ----------------------------------------------------------------------------
def _conv_bias_stats_kernel(x_ref, w_ref, b_ref, y_ref, st_ref):
    # x_ref : (1, TD, H+2, W+2, 3*Cin)  compute dtype (depth-stacked, spatially padded)
    # w_ref : (3, 3, 3*Cin, Cp)         compute dtype (9 (kh,kw) taps, kd folded in)
    # b_ref : (1, Cp)                   f32
    # y_ref : (1, TD, H, W, Cp)         f32  conv + bias output (pre-norm)
    # st_ref: (1, 1, 2, Cp)             f32  per-tile [sum, sum of squares]
    _, td, hp2, wp2, c3 = x_ref.shape
    h, w = hp2 - 2, wp2 - 2
    cp = y_ref.shape[-1]
    m = td * h * w

    x = x_ref[0]                       # (TD, H+2, W+2, C3)
    wt = w_ref[...]                    # (3, 3, C3, Cp)

    acc = jnp.zeros((m, cp), jnp.float32)
    for kh in range(3):                # static 3x3 unroll over the in-plane taps
        for kw in range(3):
            a = x[:, kh:kh + h, kw:kw + w, :].reshape(m, c3)
            acc = acc + jnp.dot(a, wt[kh, kw],
                                preferred_element_type=jnp.float32)
    acc = acc + b_ref[...]             # (1, Cp) broadcast, f32

    y_ref[0] = acc.reshape(td, h, w, cp)
    st_ref[0, 0, 0:1, :] = jnp.sum(acc, axis=0, keepdims=True)
    st_ref[0, 0, 1:2, :] = jnp.sum(acc * acc, axis=0, keepdims=True)


# ----------------------------------------------------------------------------
# Kernel 2: per-instance InstanceNorm (precomputed scale/shift) + ReLU
# ----------------------------------------------------------------------------
def _norm_relu_kernel(y_ref, sc_ref, sh_ref, o_ref):
    # y_ref: (1, TD, H, W, Cp) f32 ; sc_ref / sh_ref: (1, 1, Cp) f32
    y = y_ref[0]
    out = jnp.maximum(y * sc_ref[0] + sh_ref[0], 0.0)
    o_ref[0] = out.astype(o_ref.dtype)


# ----------------------------------------------------------------------------
# Depth-tile selection (largest divisor of D that fits the VMEM budget)
# ----------------------------------------------------------------------------
def _pick_depth_tile(d, h, w, c3, cp, act_bytes):
    best = 1
    for td in range(1, d + 1):
        if d % td:
            continue
        in_b = 2 * td * (h + 2) * (w + 2) * c3 * act_bytes   # double-buffered input
        out_b = 2 * td * h * w * cp * 4                      # double-buffered f32 out
        acc_b = td * h * w * cp * 4                          # f32 accumulator
        w_b = 9 * c3 * cp * act_bytes + 4 * cp               # weights + bias (resident)
        if in_b + out_b + acc_b + w_b + (1 << 20) <= VMEM_BUDGET:
            best = td
    # TODO(synk): also tile H for volumes where a single depth slice exceeds the budget.
    return best


# ----------------------------------------------------------------------------
# Fused Conv3d(k=3, pad=1) -> InstanceNorm3d -> ReLU, channels-last
# ----------------------------------------------------------------------------
def conv3x3x3_in_relu(x_cl, w, b, *, compute_dtype, out_dtype):
    """x_cl: (N, D, H, W, Cin); w: (Cout, Cin, 3, 3, 3); b: (Cout,).
    Returns (N, D, H, W, Cp) with Cp = Cout rounded up to 128 (padded channels are 0)."""
    n, d, h, w_sp, cin = x_cl.shape
    cout = w.shape[0]
    cp = _round_up(cout, LANE)
    c3 = 3 * cin
    act_bytes = jnp.dtype(compute_dtype).itemsize

    # spatial zero-pad + 3x depth-shifted stack: xs[n,z,y,x, kd*Cin+ci] = xpad[n,z+kd,y,x,ci]
    xpad = jnp.pad(x_cl, ((0, 0), (1, 1), (1, 1), (1, 1), (0, 0)))
    xs = jnp.concatenate(
        [xpad[:, 0:d], xpad[:, 1:d + 1], xpad[:, 2:d + 2]], axis=-1
    ).astype(compute_dtype)                                  # (N, D, H+2, W+2, 3*Cin)

    # weights: (Cout, Cin, kd, kh, kw) -> (kh, kw, kd*Cin, Cp), zero-padded out channels
    wm = jnp.transpose(w, (3, 4, 2, 1, 0)).reshape(3, 3, c3, cout)
    wm = jnp.pad(wm, ((0, 0), (0, 0), (0, 0), (0, cp - cout))).astype(compute_dtype)
    bm = jnp.pad(b, (0, cp - cout)).reshape(1, cp).astype(jnp.float32)

    td = _pick_depth_tile(d, h, w_sp, c3, cp, act_bytes)
    nd = d // td
    grid = (n, nd)
    cparams = pltpu.CompilerParams(
        dimension_semantics=("parallel", "parallel"),
        vmem_limit_bytes=VMEM_LIMIT)

    # pass 1: conv + bias, plus per-tile per-channel (sum, sumsq)
    y, st = pl.pallas_call(
        _conv_bias_stats_kernel,
        out_shape=(jax.ShapeDtypeStruct((n, d, h, w_sp, cp), jnp.float32),
                   jax.ShapeDtypeStruct((n, nd, 2, cp), jnp.float32)),
        grid_spec=pltpu.PrefetchScalarGridSpec(
            num_scalar_prefetch=0,
            grid=grid,
            in_specs=[
                pl.BlockSpec((1, td, h + 2, w_sp + 2, c3),
                             lambda ni, di: (ni, di, 0, 0, 0)),
                pl.BlockSpec((3, 3, c3, cp), lambda ni, di: (0, 0, 0, 0)),
                pl.BlockSpec((1, cp), lambda ni, di: (0, 0)),
            ],
            out_specs=[
                pl.BlockSpec((1, td, h, w_sp, cp),
                             lambda ni, di: (ni, di, 0, 0, 0)),
                pl.BlockSpec((1, 1, 2, cp), lambda ni, di: (ni, di, 0, 0)),
            ],
        ),
        compiler_params=cparams,
    )(xs, wm, bm)

    # streaming InstanceNorm statistics: reduce tiny per-tile partials in f32
    count = float(d * h * w_sp)
    s = jnp.sum(st, axis=1)                                  # (N, 2, Cp)
    mean = s[:, 0] / count
    var = jnp.maximum(s[:, 1] / count - mean * mean, 0.0)    # biased variance
    scale = jax.lax.rsqrt(var + EPS)                         # (N, Cp)
    shift = (-mean) * scale
    scale = scale.reshape(n, 1, cp)
    shift = shift.reshape(n, 1, cp)

    # pass 2: normalize + ReLU (lane-dense Cp-wide stores)
    out = pl.pallas_call(
        _norm_relu_kernel,
        out_shape=jax.ShapeDtypeStruct((n, d, h, w_sp, cp), out_dtype),
        grid_spec=pltpu.PrefetchScalarGridSpec(
            num_scalar_prefetch=0,
            grid=grid,
            in_specs=[
                pl.BlockSpec((1, td, h, w_sp, cp),
                             lambda ni, di: (ni, di, 0, 0, 0)),
                pl.BlockSpec((1, 1, cp), lambda ni, di: (ni, 0, 0)),
                pl.BlockSpec((1, 1, cp), lambda ni, di: (ni, 0, 0)),
            ],
            out_specs=pl.BlockSpec((1, td, h, w_sp, cp),
                                   lambda ni, di: (ni, di, 0, 0, 0)),
        ),
        compiler_params=cparams,
    )(y, scale, shift)
    return out


# ----------------------------------------------------------------------------
# Glue: trilinear (align_corners=True) 2x upsample as small interp matmuls (no gathers)
# ----------------------------------------------------------------------------
def _interp_matrix(in_size, out_size):
    if in_size == out_size:
        return jnp.eye(out_size, dtype=jnp.float32)
    if in_size == 1:
        return jnp.ones((out_size, 1), jnp.float32)
    pos = jnp.arange(out_size, dtype=jnp.float32) * (in_size - 1) / (out_size - 1)
    lo = jnp.clip(jnp.floor(pos), 0.0, in_size - 2)
    frac = pos - lo
    lo_i = lo.astype(jnp.int32)
    cols = jnp.arange(in_size, dtype=jnp.int32)[None, :]
    return ((cols == lo_i[:, None]) * (1.0 - frac)[:, None]
            + (cols == (lo_i + 1)[:, None]) * frac[:, None]).astype(jnp.float32)


def _upsample2x_trilinear_ac(x):
    """nn.Upsample(scale_factor=(2,2,2), mode='trilinear', align_corners=True), NCDHW."""
    _, _, d, h, w = x.shape
    x = jnp.einsum('od,ncdhw->ncohw', _interp_matrix(d, 2 * d), x)
    x = jnp.einsum('ph,ncdhw->ncdpw', _interp_matrix(h, 2 * h), x)
    x = jnp.einsum('qw,ncdhw->ncdhq', _interp_matrix(w, 2 * w), x)
    return x


# ----------------------------------------------------------------------------
# Up.forward
# ----------------------------------------------------------------------------
def up_forward(x, x2, params, compute_dtype=jnp.bfloat16):
    """x: (N, T_channels, D, H, W); x2: (N, C_skip, 2D, 2H, 2W) -> NCDHW output."""
    x = _upsample2x_trilinear_ac(x)

    diff_z = x2.shape[2] - x.shape[2]
    diff_y = x2.shape[3] - x.shape[3]
    diff_x = x2.shape[4] - x.shape[4]
    if diff_x > 0 or diff_y > 0 or diff_z > 0:
        x = jnp.pad(x, ((0, 0), (0, 0),
                        (diff_z // 2, diff_z - diff_z // 2),
                        (diff_y // 2, diff_y - diff_y // 2),
                        (diff_x // 2, diff_x - diff_x // 2)))

    xc = jnp.concatenate([x2, x], axis=1)                    # torch.cat([x2, x], dim=1)
    xc = jnp.transpose(xc, (0, 2, 3, 4, 1))                  # channels-last for the kernels

    cout = params["w1"].shape[0]
    h1 = conv3x3x3_in_relu(xc, params["w1"], params["b1"],
                           compute_dtype=compute_dtype, out_dtype=compute_dtype)
    h1 = h1[..., :cout]                                      # drop lane padding between stages
    h2 = conv3x3x3_in_relu(h1, params["w2"], params["b2"],
                           compute_dtype=compute_dtype, out_dtype=jnp.float32)
    h2 = h2[..., :cout]

    return jnp.transpose(h2, (0, 4, 1, 2, 3))                # back to NCDHW


# ----------------------------------------------------------------------------
# Pure-JAX / XLA reference (PyTorch semantics, f32 end to end)
# ----------------------------------------------------------------------------
def _ref_conv_in_relu_ncdhw(x, w, b):
    y = jax.lax.conv_general_dilated(
        x, w, window_strides=(1, 1, 1), padding=((1, 1), (1, 1), (1, 1)),
        dimension_numbers=("NCDHW", "OIDHW", "NCDHW"))
    y = y + b.reshape(1, -1, 1, 1, 1)
    mean = jnp.mean(y, axis=(2, 3, 4), keepdims=True)
    var = jnp.mean((y - mean) ** 2, axis=(2, 3, 4), keepdims=True)
    y = (y - mean) * jax.lax.rsqrt(var + EPS)
    return jnp.maximum(y, 0.0)


def up_forward_ref(x, x2, params):
    x = _upsample2x_trilinear_ac(x)
    diff_z = x2.shape[2] - x.shape[2]
    diff_y = x2.shape[3] - x.shape[3]
    diff_x = x2.shape[4] - x.shape[4]
    if diff_x > 0 or diff_y > 0 or diff_z > 0:
        x = jnp.pad(x, ((0, 0), (0, 0),
                        (diff_z // 2, diff_z - diff_z // 2),
                        (diff_y // 2, diff_y - diff_y // 2),
                        (diff_x // 2, diff_x - diff_x // 2)))
    xc = jnp.concatenate([x2, x], axis=1)
    h = _ref_conv_in_relu_ncdhw(xc, params["w1"], params["b1"])
    h = _ref_conv_in_relu_ncdhw(h, params["w2"], params["b2"])
    return h


# ----------------------------------------------------------------------------
# Deterministic PyTorch-like parameter init
# ----------------------------------------------------------------------------
def init_params(key, in_channels, out_channels):
    k1, k2, k3, k4 = jax.random.split(key, 4)
    b1 = 1.0 / jnp.sqrt(in_channels * 27)
    b2 = 1.0 / jnp.sqrt(out_channels * 27)
    return {
        "w1": jax.random.uniform(k1, (out_channels, in_channels, 3, 3, 3),
                                 jnp.float32, -b1, b1),
        "b1": jax.random.uniform(k2, (out_channels,), jnp.float32, -b1, b1),
        "w2": jax.random.uniform(k3, (out_channels, out_channels, 3, 3, 3),
                                 jnp.float32, -b2, b2),
        "b2": jax.random.uniform(k4, (out_channels,), jnp.float32, -b2, b2),
    }


if __name__ == "__main__":
    key = jax.random.PRNGKey(0)
    kx, kx2, kp = jax.random.split(key, 3)

    # Up(T_channels=4, in_channels=8, out_channels=8, bilinear=True)
    n, t_ch, c_skip, c_out = 2, 4, 4, 8
    d = h = w = 4
    x = jax.random.normal(kx, (n, t_ch, d, h, w), jnp.float32)                # NCDHW
    x2 = jax.random.normal(kx2, (n, c_skip, 2 * d, 2 * h, 2 * w), jnp.float32)
    params = init_params(kp, t_ch + c_skip, c_out)

    # production (bf16 MXU) path
    out = jax.block_until_ready(jax.jit(up_forward)(x, x2, params))
    assert out.shape == (n, c_out, 2 * d, 2 * h, 2 * w), out.shape

    ref = jax.block_until_ready(jax.jit(up_forward_ref)(x, x2, params))
    err_bf16 = float(jnp.max(jnp.abs(out - ref)))
    assert err_bf16 < 1e-1, f"bf16-path max abs error too large: {err_bf16}"

    # f32 compute path: tight structural-correctness check against the f32 reference
    out_f32 = jax.block_until_ready(
        jax.jit(lambda a, b, p: up_forward(a, b, p, compute_dtype=jnp.float32))(
            x, x2, params))
    err_f32 = float(jnp.max(jnp.abs(out_f32 - ref)))
    assert err_f32 < 2e-3, f"f32-path max abs error too large: {err_f32}"

    print("KERNEL_OK")
</pallas_src>

<mosaic_0001>
module attributes {stable_mosaic.version = 11 : i64} {
  func.func @_conv_bias_stats_kernel(%arg0: i32, %arg1: i32, %arg2: memref<1x8x10x10x24xbf16, #tpu.memory_space<vmem>>, %arg3: memref<3x3x24x128xbf16, #tpu.memory_space<vmem>>, %arg4: memref<1x128xf32, #tpu.memory_space<vmem>>, %arg5: memref<1x8x8x8x128xf32, #tpu.memory_space<vmem>>, %arg6: memref<1x1x2x128xf32, #tpu.memory_space<vmem>>) attributes {dimension_semantics = [#tpu.dimension_semantics<parallel>, #tpu.dimension_semantics<parallel>], iteration_bounds = array<i64: 2, 1>, scalar_prefetch = 0 : i64, scratch_operands = 0 : i64, tpu.core_type = #tpu.core_type<tc>, window_params = [{transform_indices = @transform_0, window_bounds = array<i64: 1, 8, 10, 10, 24>}, {pipeline_mode = #tpu.pipeline_mode<synchronous>, transform_indices = @transform_1, window_bounds = array<i64: 3, 3, 24, 128>}, {pipeline_mode = #tpu.pipeline_mode<synchronous>, transform_indices = @transform_2, window_bounds = array<i64: 1, 128>}, {transform_indices = @transform_3, window_bounds = array<i64: 1, 8, 8, 8, 128>}, {transform_indices = @transform_4, window_bounds = array<i64: 1, 1, 2, 128>}]} {
    %c0 = arith.constant 0 : index
    %c0_0 = arith.constant 0 : index
    %c0_1 = arith.constant 0 : index
    %c0_2 = arith.constant 0 : index
    %c0_3 = arith.constant 0 : index
    %0 = vector.load %arg2[%c0, %c0_0, %c0_1, %c0_2, %c0_3] : memref<1x8x10x10x24xbf16, #tpu.memory_space<vmem>>, vector<1x8x10x10x24xbf16>
    %1 = vector.shape_cast %0 : vector<1x8x10x10x24xbf16> to vector<8x10x10x24xbf16>
    %c0_4 = arith.constant 0 : index
    %c0_5 = arith.constant 0 : index
    %c0_6 = arith.constant 0 : index
    %c0_7 = arith.constant 0 : index
    %2 = vector.load %arg3[%c0_4, %c0_5, %c0_6, %c0_7] : memref<3x3x24x128xbf16, #tpu.memory_space<vmem>>, vector<3x3x24x128xbf16>
    %cst = arith.constant 0.000000e+00 : f32
    %3 = vector.broadcast %cst : f32 to vector<512x128xf32>
    %4 = vector.extract_strided_slice %1 {offsets = [0, 0, 0, 0], sizes = [8, 8, 8, 24], strides = [1, 1, 1, 1]} : vector<8x10x10x24xbf16> to vector<8x8x8x24xbf16>
    %5 = vector.shape_cast %4 : vector<8x8x8x24xbf16> to vector<512x24xbf16>
    %6 = vector.extract_strided_slice %2 {offsets = [0, 0, 0, 0], sizes = [1, 1, 24, 128], strides = [1, 1, 1, 1]} : vector<3x3x24x128xbf16> to vector<1x1x24x128xbf16>
    %7 = vector.shape_cast %6 : vector<1x1x24x128xbf16> to vector<24x128xbf16>
    %cst_8 = arith.constant dense<0.000000e+00> : vector<512x128xf32>
    %8 = tpu.matmul %5, %7, %cst_8 {dimension_numbers = #tpu.dot_dimension_numbers<[1], [0], [0], [1], [0, 0, 1, 1], [], []>} : vector<512x24xbf16>, vector<24x128xbf16>, vector<512x128xf32> -> vector<512x128xf32>
    %9 = arith.addf %3, %8 : vector<512x128xf32>
    %10 = vector.extract_strided_slice %1 {offsets = [0, 0, 1, 0], sizes = [8, 8, 8, 24], strides = [1, 1, 1, 1]} : vector<8x10x10x24xbf16> to vector<8x8x8x24xbf16>
    %11 = vector.shape_cast %10 : vector<8x8x8x24xbf16> to vector<512x24xbf16>
    %12 = vector.extract_strided_slice %2 {offsets = [0, 1, 0, 0], sizes = [1, 1, 24, 128], strides = [1, 1, 1, 1]} : vector<3x3x24x128xbf16> to vector<1x1x24x128xbf16>
    %13 = vector.shape_cast %12 : vector<1x1x24x128xbf16> to vector<24x128xbf16>
    %cst_9 = arith.constant dense<0.000000e+00> : vector<512x128xf32>
    %14 = tpu.matmul %11, %13, %cst_9 {dimension_numbers = #tpu.dot_dimension_numbers<[1], [0], [0], [1], [0, 0, 1, 1], [], []>} : vector<512x24xbf16>, vector<24x128xbf16>, vector<512x128xf32> -> vector<512x128xf32>
    %15 = arith.addf %9, %14 : vector<512x128xf32>
    %16 = vector.extract_strided_slice %1 {offsets = [0, 0, 2, 0], sizes = [8, 8, 8, 24], strides = [1, 1, 1, 1]} : vector<8x10x10x24xbf16> to vector<8x8x8x24xbf16>
    %17 = vector.shape_cast %16 : vector<8x8x8x24xbf16> to vector<512x24xbf16>
    %18 = vector.extract_strided_slice %2 {offsets = [0, 2, 0, 0], sizes = [1, 1, 24, 128], strides = [1, 1, 1, 1]} : vector<3x3x24x128xbf16> to vector<1x1x24x128xbf16>
    %19 = vector.shape_cast %18 : vector<1x1x24x128xbf16> to vector<24x128xbf16>
    %cst_10 = arith.constant dense<0.000000e+00> : vector<512x128xf32>
    %20 = tpu.matmul %17, %19, %cst_10 {dimension_numbers = #tpu.dot_dimension_numbers<[1], [0], [0], [1], [0, 0, 1, 1], [], []>} : vector<512x24xbf16>, vector<24x128xbf16>, vector<512x128xf32> -> vector<512x128xf32>
    %21 = arith.addf %15, %20 : vector<512x128xf32>
    %22 = vector.extract_strided_slice %1 {offsets = [0, 1, 0, 0], sizes = [8, 8, 8, 24], strides = [1, 1, 1, 1]} : vector<8x10x10x24xbf16> to vector<8x8x8x24xbf16>
    %23 = vector.shape_cast %22 : vector<8x8x8x24xbf16> to vector<512x24xbf16>
    %24 = vector.extract_strided_slice %2 {offsets = [1, 0, 0, 0], sizes = [1, 1, 24, 128], strides = [1, 1, 1, 1]} : vector<3x3x24x128xbf16> to vector<1x1x24x128xbf16>
    %25 = vector.shape_cast %24 : vector<1x1x24x128xbf16> to vector<24x128xbf16>
    %cst_11 = arith.constant dense<0.000000e+00> : vector<512x128xf32>
    %26 = tpu.matmul %23, %25, %cst_11 {dimension_numbers = #tpu.dot_dimension_numbers<[1], [0], [0], [1], [0, 0, 1, 1], [], []>} : vector<512x24xbf16>, vector<24x128xbf16>, vector<512x128xf32> -> vector<512x128xf32>
    %27 = arith.addf %21, %26 : vector<512x128xf32>
    %28 = vector.extract_strided_slice %1 {offsets = [0, 1, 1, 0], sizes = [8, 8, 8, 24], strides = [1, 1, 1, 1]} : vector<8x10x10x24xbf16> to vector<8x8x8x24xbf16>
    %29 = vector.shape_cast %28 : vector<8x8x8x24xbf16> to vector<512x24xbf16>
    %30 = vector.extract_strided_slice %2 {offsets = [1, 1, 0, 0], sizes = [1, 1, 24, 128], strides = [1, 1, 1, 1]} : vector<3x3x24x128xbf16> to vector<1x1x24x128xbf16>
    %31 = vector.shape_cast %30 : vector<1x1x24x128xbf16> to vector<24x128xbf16>
    %cst_12 = arith.constant dense<0.000000e+00> : vector<512x128xf32>
    %32 = tpu.matmul %29, %31, %cst_12 {dimension_numbers = #tpu.dot_dimension_numbers<[1], [0], [0], [1], [0, 0, 1, 1], [], []>} : vector<512x24xbf16>, vector<24x128xbf16>, vector<512x128xf32> -> vector<512x128xf32>
    %33 = arith.addf %27, %32 : vector<512x128xf32>
    %34 = vector.extract_strided_slice %1 {offsets = [0, 1, 2, 0], sizes = [8, 8, 8, 24], strides = [1, 1, 1, 1]} : vector<8x10x10x24xbf16> to vector<8x8x8x24xbf16>
    %35 = vector.shape_cast %34 : vector<8x8x8x24xbf16> to vector<512x24xbf16>
    %36 = vector.extract_strided_slice %2 {offsets = [1, 2, 0, 0], sizes = [1, 1, 24, 128], strides = [1, 1, 1, 1]} : vector<3x3x24x128xbf16> to vector<1x1x24x128xbf16>
    %37 = vector.shape_cast %36 : vector<1x1x24x128xbf16> to vector<24x128xbf16>
    %cst_13 = arith.constant dense<0.000000e+00> : vector<512x128xf32>
    %38 = tpu.matmul %35, %37, %cst_13 {dimension_numbers = #tpu.dot_dimension_numbers<[1], [0], [0], [1], [0, 0, 1, 1], [], []>} : vector<512x24xbf16>, vector<24x128xbf16>, vector<512x128xf32> -> vector<512x128xf32>
    %39 = arith.addf %33, %38 : vector<512x128xf32>
    %40 = vector.extract_strided_slice %1 {offsets = [0, 2, 0, 0], sizes = [8, 8, 8, 24], strides = [1, 1, 1, 1]} : vector<8x10x10x24xbf16> to vector<8x8x8x24xbf16>
    %41 = vector.shape_cast %40 : vector<8x8x8x24xbf16> to vector<512x24xbf16>
    %42 = vector.extract_strided_slice %2 {offsets = [2, 0, 0, 0], sizes = [1, 1, 24, 128], strides = [1, 1, 1, 1]} : vector<3x3x24x128xbf16> to vector<1x1x24x128xbf16>
    %43 = vector.shape_cast %42 : vector<1x1x24x128xbf16> to vector<24x128xbf16>
    %cst_14 = arith.constant dense<0.000000e+00> : vector<512x128xf32>
    %44 = tpu.matmul %41, %43, %cst_14 {dimension_numbers = #tpu.dot_dimension_numbers<[1], [0], [0], [1], [0, 0, 1, 1], [], []>} : vector<512x24xbf16>, vector<24x128xbf16>, vector<512x128xf32> -> vector<512x128xf32>
    %45 = arith.addf %39, %44 : vector<512x128xf32>
    %46 = vector.extract_strided_slice %1 {offsets = [0, 2, 1, 0], sizes = [8, 8, 8, 24], strides = [1, 1, 1, 1]} : vector<8x10x10x24xbf16> to vector<8x8x8x24xbf16>
    %47 = vector.shape_cast %46 : vector<8x8x8x24xbf16> to vector<512x24xbf16>
    %48 = vector.extract_strided_slice %2 {offsets = [2, 1, 0, 0], sizes = [1, 1, 24, 128], strides = [1, 1, 1, 1]} : vector<3x3x24x128xbf16> to vector<1x1x24x128xbf16>
    %49 = vector.shape_cast %48 : vector<1x1x24x128xbf16> to vector<24x128xbf16>
    %cst_15 = arith.constant dense<0.000000e+00> : vector<512x128xf32>
    %50 = tpu.matmul %47, %49, %cst_15 {dimension_numbers = #tpu.dot_dimension_numbers<[1], [0], [0], [1], [0, 0, 1, 1], [], []>} : vector<512x24xbf16>, vector<24x128xbf16>, vector<512x128xf32> -> vector<512x128xf32>
    %51 = arith.addf %45, %50 : vector<512x128xf32>
    %52 = vector.extract_strided_slice %1 {offsets = [0, 2, 2, 0], sizes = [8, 8, 8, 24], strides = [1, 1, 1, 1]} : vector<8x10x10x24xbf16> to vector<8x8x8x24xbf16>
    %53 = vector.shape_cast %52 : vector<8x8x8x24xbf16> to vector<512x24xbf16>
    %54 = vector.extract_strided_slice %2 {offsets = [2, 2, 0, 0], sizes = [1, 1, 24, 128], strides = [1, 1, 1, 1]} : vector<3x3x24x128xbf16> to vector<1x1x24x128xbf16>
    %55 = vector.shape_cast %54 : vector<1x1x24x128xbf16> to vector<24x128xbf16>
    %cst_16 = arith.constant dense<0.000000e+00> : vector<512x128xf32>
    %56 = tpu.matmul %53, %55, %cst_16 {dimension_numbers = #tpu.dot_dimension_numbers<[1], [0], [0], [1], [0, 0, 1, 1], [], []>} : vector<512x24xbf16>, vector<24x128xbf16>, vector<512x128xf32> -> vector<512x128xf32>
    %57 = arith.addf %51, %56 : vector<512x128xf32>
    %c0_17 = arith.constant 0 : index
    %c0_18 = arith.constant 0 : index
    %58 = vector.load %arg4[%c0_17, %c0_18] : memref<1x128xf32, #tpu.memory_space<vmem>>, vector<1x128xf32>
    %59 = vector.broadcast %58 : vector<1x128xf32> to vector<512x128xf32>
    %60 = arith.addf %57, %59 : vector<512x128xf32>
    %61 = vector.shape_cast %60 : vector<512x128xf32> to vector<8x8x8x128xf32>
    %c0_19 = arith.constant 0 : index
    %c0_20 = arith.constant 0 : index
    %c0_21 = arith.constant 0 : index
    %c0_22 = arith.constant 0 : index
    %c0_23 = arith.constant 0 : index
    %62 = vector.load %arg5[%c0_19, %c0_20, %c0_21, %c0_22, %c0_23] : memref<1x8x8x8x128xf32, #tpu.memory_space<vmem>>, vector<1x8x8x8x128xf32>
    %63 = vector.shape_cast %62 : vector<1x8x8x8x128xf32> to vector<8x8x8x128xf32>
    %64 = vector.shape_cast %61 : vector<8x8x8x128xf32> to vector<1x8x8x8x128xf32>
    tpu.vector_store %arg5[%c0_19, %c0_20, %c0_21, %c0_22, %c0_23], %64 {strides = array<i32>} : memref<1x8x8x8x128xf32, #tpu.memory_space<vmem>>, vector<1x8x8x8x128xf32>,
    %cst_24 = arith.constant dense<0.000000e+00> : vector<128xf32>
    %65 = vector.multi_reduction <add>, %60, %cst_24 [0] : vector<512x128xf32> to vector<128xf32>
    %66 = vector.shape_cast %65 : vector<128xf32> to vector<1x128xf32>
    %c0_25 = arith.constant 0 : index
    %c0_26 = arith.constant 0 : index
    %c0_27 = arith.constant 0 : index
    %c0_28 = arith.constant 0 : index
    %67 = vector.load %arg6[%c0_25, %c0_26, %c0_27, %c0_28] : memref<1x1x2x128xf32, #tpu.memory_space<vmem>>, vector<1x1x1x128xf32>
    %68 = vector.shape_cast %67 : vector<1x1x1x128xf32> to vector<1x128xf32>
    %69 = vector.shape_cast %66 : vector<1x128xf32> to vector<1x1x1x128xf32>
    tpu.vector_store %arg6[%c0_25, %c0_26, %c0_27, %c0_28], %69 {strides = array<i32>} : memref<1x1x2x128xf32, #tpu.memory_space<vmem>>, vector<1x1x1x128xf32>,
    %70 = arith.mulf %60, %60 : vector<512x128xf32>
    %cst_29 = arith.constant dense<0.000000e+00> : vector<128xf32>
    %71 = vector.multi_reduction <add>, %70, %cst_29 [0] : vector<512x128xf32> to vector<128xf32>
    %72 = vector.shape_cast %71 : vector<128xf32> to vector<1x128xf32>
    %c0_30 = arith.constant 0 : index
    %c0_31 = arith.constant 0 : index
    %c1 = arith.constant 1 : index
    %c0_32 = arith.constant 0 : index
    %73 = vector.load %arg6[%c0_30, %c0_31, %c1, %c0_32] : memref<1x1x2x128xf32, #tpu.memory_space<vmem>>, vector<1x1x1x128xf32>
    %74 = vector.shape_cast %73 : vector<1x1x1x128xf32> to vector<1x128xf32>
    %75 = vector.shape_cast %72 : vector<1x128xf32> to vector<1x1x1x128xf32>
    tpu.vector_store %arg6[%c0_30, %c0_31, %c1, %c0_32], %75 {strides = array<i32>} : memref<1x1x2x128xf32, #tpu.memory_space<vmem>>, vector<1x1x1x128xf32>,
    return
  }
  func.func @transform_0(%arg0: i32, %arg1: i32) -> (i32, i32, i32, i32, i32) {
    %c0_i32 = arith.constant 0 : i32
    %c0_i32_0 = arith.constant 0 : i32
    %c0_i32_1 = arith.constant 0 : i32
    %c0_i32_2 = arith.constant 0 : i32
    return %arg0, %arg1, %c0_i32, %c0_i32_0, %c0_i32_1 : i32, i32, i32, i32, i32
  }
  func.func @transform_1(%arg0: i32, %arg1: i32) -> (i32, i32, i32, i32) {
    %c0_i32 = arith.constant 0 : i32
    %c0_i32_0 = arith.constant 0 : i32
    %c0_i32_1 = arith.constant 0 : i32
    %c0_i32_2 = arith.constant 0 : i32
    %c0_i32_3 = arith.constant 0 : i32
    return %c0_i32, %c0_i32_0, %c0_i32_1, %c0_i32_2 : i32, i32, i32, i32
  }
  func.func @transform_2(%arg0: i32, %arg1: i32) -> (i32, i32) {
    %c0_i32 = arith.constant 0 : i32
    %c0_i32_0 = arith.constant 0 : i32
    %c0_i32_1 = arith.constant 0 : i32
    return %c0_i32, %c0_i32_0 : i32, i32
  }
  func.func @transform_3(%arg0: i32, %arg1: i32) -> (i32, i32, i32, i32, i32) {
    %c0_i32 = arith.constant 0 : i32
    %c0_i32_0 = arith.constant 0 : i32
    %c0_i32_1 = arith.constant 0 : i32
    %c0_i32_2 = arith.constant 0 : i32
    return %arg0, %arg1, %c0_i32, %c0_i32_0, %c0_i32_1 : i32, i32, i32, i32, i32
  }
  func.func @transform_4(%arg0: i32, %arg1: i32) -> (i32, i32, i32, i32) {
    %c0_i32 = arith.constant 0 : i32
    %c0_i32_0 = arith.constant 0 : i32
    %c0_i32_1 = arith.constant 0 : i32
    return %arg0, %arg1, %c0_i32, %c0_i32_0 : i32, i32, i32, i32
  }
}

module attributes {stable_mosaic.version = 11 : i64} {
  func.func @_norm_relu_kernel(%arg0: i32, %arg1: i32, %arg2: memref<1x8x8x8x128xf32, #tpu.memory_space<vmem>>, %arg3: memref<1x1x128xf32, #tpu.memory_space<vmem>>, %arg4: memref<1x1x128xf32, #tpu.memory_space<vmem>>, %arg5: memref<1x8x8x8x128xbf16, #tpu.memory_space<vmem>>) attributes {dimension_semantics = [#tpu.dimension_semantics<parallel>, #tpu.dimension_semantics<parallel>], iteration_bounds = array<i64: 2, 1>, scalar_prefetch = 0 : i64, scratch_operands = 0 : i64, tpu.core_type = #tpu.core_type<tc>, window_params = [{transform_indices = @transform_0, window_bounds = array<i64: 1, 8, 8, 8, 128>}, {transform_indices = @transform_1, window_bounds = array<i64: 1, 1, 128>}, {transform_indices = @transform_2, window_bounds = array<i64: 1, 1, 128>}, {transform_indices = @transform_3, window_bounds = array<i64: 1, 8, 8, 8, 128>}]} {
    %c0 = arith.constant 0 : index
    %c0_0 = arith.constant 0 : index
    %c0_1 = arith.constant 0 : index
    %c0_2 = arith.constant 0 : index
    %c0_3 = arith.constant 0 : index
    %0 = vector.load %arg2[%c0, %c0_0, %c0_1, %c0_2, %c0_3] : memref<1x8x8x8x128xf32, #tpu.memory_space<vmem>>, vector<1x8x8x8x128xf32>
    %1 = vector.shape_cast %0 : vector<1x8x8x8x128xf32> to vector<8x8x8x128xf32>
    %c0_4 = arith.constant 0 : index
    %c0_5 = arith.constant 0 : index
    %c0_6 = arith.constant 0 : index
    %2 = vector.load %arg3[%c0_4, %c0_5, %c0_6] : memref<1x1x128xf32, #tpu.memory_space<vmem>>, vector<1x1x128xf32>
    %3 = vector.shape_cast %2 : vector<1x1x128xf32> to vector<1x128xf32>
    %4 = vector.shape_cast %3 : vector<1x128xf32> to vector<1x1x1x128xf32>
    %5 = vector.broadcast %4 : vector<1x1x1x128xf32> to vector<8x8x8x128xf32>
    %6 = arith.mulf %1, %5 : vector<8x8x8x128xf32>
    %c0_7 = arith.constant 0 : index
    %c0_8 = arith.constant 0 : index
    %c0_9 = arith.constant 0 : index
    %7 = vector.load %arg4[%c0_7, %c0_8, %c0_9] : memref<1x1x128xf32, #tpu.memory_space<vmem>>, vector<1x1x128xf32>
    %8 = vector.shape_cast %7 : vector<1x1x128xf32> to vector<1x128xf32>
    %9 = vector.shape_cast %8 : vector<1x128xf32> to vector<1x1x1x128xf32>
    %10 = vector.broadcast %9 : vector<1x1x1x128xf32> to vector<8x8x8x128xf32>
    %11 = arith.addf %6, %10 : vector<8x8x8x128xf32>
    %cst = arith.constant 0.000000e+00 : f32
    %12 = vector.broadcast %cst : f32 to vector<8x8x8x128xf32>
    %13 = arith.maximumf %11, %12 : vector<8x8x8x128xf32>
    %14 = arith.truncf %13 : vector<8x8x8x128xf32> to vector<8x8x8x128xbf16>
    %c0_10 = arith.constant 0 : index
    %c0_11 = arith.constant 0 : index
    %c0_12 = arith.constant 0 : index
    %c0_13 = arith.constant 0 : index
    %c0_14 = arith.constant 0 : index
    %15 = vector.load %arg5[%c0_10, %c0_11, %c0_12, %c0_13, %c0_14] : memref<1x8x8x8x128xbf16, #tpu.memory_space<vmem>>, vector<1x8x8x8x128xbf16>
    %16 = vector.shape_cast %15 : vector<1x8x8x8x128xbf16> to vector<8x8x8x128xbf16>
    %17 = vector.shape_cast %14 : vector<8x8x8x128xbf16> to vector<1x8x8x8x128xbf16>
    tpu.vector_store %arg5[%c0_10, %c0_11, %c0_12, %c0_13, %c0_14], %17 {strides = array<i32>} : memref<1x8x8x8x128xbf16, #tpu.memory_space<vmem>>, vector<1x8x8x8x128xbf16>,
    return
  }
  func.func @transform_0(%arg0: i32, %arg1: i32) -> (i32, i32, i32, i32, i32) {
    %c0_i32 = arith.constant 0 : i32
    %c0_i32_0 = arith.constant 0 : i32
    %c0_i32_1 = arith.constant 0 : i32
    %c0_i32_2 = arith.constant 0 : i32
    return %arg0, %arg1, %c0_i32, %c0_i32_0, %c0_i32_1 : i32, i32, i32, i32, i32
  }
  func.func @transform_1(%arg0: i32, %arg1: i32) -> (i32, i32, i32) {
    %c0_i32 = arith.constant 0 : i32
    %c0_i32_0 = arith.constant 0 : i32
    %c0_i32_1 = arith.constant 0 : i32
    return %arg0, %c0_i32, %c0_i32_0 : i32, i32, i32
  }
  func.func @transform_2(%arg0: i32, %arg1: i32) -> (i32, i32, i32) {
    %c0_i32 = arith.constant 0 : i32
    %c0_i32_0 = arith.constant 0 : i32
    %c0_i32_1 = arith.constant 0 : i32
    return %arg0, %c0_i32, %c0_i32_0 : i32, i32, i32
  }
  func.func @transform_3(%arg0: i32, %arg1: i32) -> (i32, i32, i32, i32, i32) {
    %c0_i32 = arith.constant 0 : i32
    %c0_i32_0 = arith.constant 0 : i32
    %c0_i32_1 = arith.constant 0 : i32
    %c0_i32_2 = arith.constant 0 : i32
    return %arg0, %arg1, %c0_i32, %c0_i32_0, %c0_i32_1 : i32, i32, i32, i32, i32
  }
}

module attributes {stable_mosaic.version = 11 : i64} {
  func.func @_norm_relu_kernel(%arg0: i32, %arg1: i32, %arg2: memref<1x8x8x8x128xf32, #tpu.memory_space<vmem>>, %arg3: memref<1x1x128xf32, #tpu.memory_space<vmem>>, %arg4: memref<1x1x128xf32, #tpu.memory_space<vmem>>, %arg5: memref<1x8x8x8x128xf32, #tpu.memory_space<vmem>>) attributes {dimension_semantics = [#tpu.dimension_semantics<parallel>, #tpu.dimension_semantics<parallel>], iteration_bounds = array<i64: 2, 1>, scalar_prefetch = 0 : i64, scratch_operands = 0 : i64, tpu.core_type = #tpu.core_type<tc>, window_params = [{transform_indices = @transform_0, window_bounds = array<i64: 1, 8, 8, 8, 128>}, {transform_indices = @transform_1, window_bounds = array<i64: 1, 1, 128>}, {transform_indices = @transform_2, window_bounds = array<i64: 1, 1, 128>}, {transform_indices = @transform_3, window_bounds = array<i64: 1, 8, 8, 8, 128>}]} {
    %c0 = arith.constant 0 : index
    %c0_0 = arith.constant 0 : index
    %c0_1 = arith.constant 0 : index
    %c0_2 = arith.constant 0 : index
    %c0_3 = arith.constant 0 : index
    %0 = vector.load %arg2[%c0, %c0_0, %c0_1, %c0_2, %c0_3] : memref<1x8x8x8x128xf32, #tpu.memory_space<vmem>>, vector<1x8x8x8x128xf32>
    %1 = vector.shape_cast %0 : vector<1x8x8x8x128xf32> to vector<8x8x8x128xf32>
    %c0_4 = arith.constant 0 : index
    %c0_5 = arith.constant 0 : index
    %c0_6 = arith.constant 0 : index
    %2 = vector.load %arg3[%c0_4, %c0_5, %c0_6] : memref<1x1x128xf32, #tpu.memory_space<vmem>>, vector<1x1x128xf32>
    %3 = vector.shape_cast %2 : vector<1x1x128xf32> to vector<1x128xf32>
    %4 = vector.shape_cast %3 : vector<1x128xf32> to vector<1x1x1x128xf32>
    %5 = vector.broadcast %4 : vector<1x1x1x128xf32> to vector<8x8x8x128xf32>
    %6 = arith.mulf %1, %5 : vector<8x8x8x128xf32>
    %c0_7 = arith.constant 0 : index
    %c0_8 = arith.constant 0 : index
    %c0_9 = arith.constant 0 : index
    %7 = vector.load %arg4[%c0_7, %c0_8, %c0_9] : memref<1x1x128xf32, #tpu.memory_space<vmem>>, vector<1x1x128xf32>
    %8 = vector.shape_cast %7 : vector<1x1x128xf32> to vector<1x128xf32>
    %9 = vector.shape_cast %8 : vector<1x128xf32> to vector<1x1x1x128xf32>
    %10 = vector.broadcast %9 : vector<1x1x1x128xf32> to vector<8x8x8x128xf32>
    %11 = arith.addf %6, %10 : vector<8x8x8x128xf32>
    %cst = arith.constant 0.000000e+00 : f32
    %12 = vector.broadcast %cst : f32 to vector<8x8x8x128xf32>
    %13 = arith.maximumf %11, %12 : vector<8x8x8x128xf32>
    %c0_10 = arith.constant 0 : index
    %c0_11 = arith.constant 0 : index
    %c0_12 = arith.constant 0 : index
    %c0_13 = arith.constant 0 : index
    %c0_14 = arith.constant 0 : index
    %14 = vector.load %arg5[%c0_10, %c0_11, %c0_12, %c0_13, %c0_14] : memref<1x8x8x8x128xf32, #tpu.memory_space<vmem>>, vector<1x8x8x8x128xf32>
    %15 = vector.shape_cast %14 : vector<1x8x8x8x128xf32> to vector<8x8x8x128xf32>
    %16 = vector.shape_cast %13 : vector<8x8x8x128xf32> to vector<1x8x8x8x128xf32>
    tpu.vector_store %arg5[%c0_10, %c0_11, %c0_12, %c0_13, %c0_14], %16 {strides = array<i32>} : memref<1x8x8x8x128xf32, #tpu.memory_space<vmem>>, vector<1x8x8x8x128xf32>,
    return
  }
  func.func @transform_0(%arg0: i32, %arg1: i32) -> (i32, i32, i32, i32, i32) {
    %c0_i32 = arith.constant 0 : i32
    %c0_i32_0 = arith.constant 0 : i32
    %c0_i32_1 = arith.constant 0 : i32
    %c0_i32_2 = arith.constant 0 : i32
    return %arg0, %arg1, %c0_i32, %c0_i32_0, %c0_i32_1 : i32, i32, i32, i32, i32
  }
  func.func @transform_1(%arg0: i32, %arg1: i32) -> (i32, i32, i32) {
    %c0_i32 = arith.constant 0 : i32
    %c0_i32_0 = arith.constant 0 : i32
    %c0_i32_1 = arith.constant 0 : i32
    return %arg0, %c0_i32, %c0_i32_0 : i32, i32, i32
  }
  func.func @transform_2(%arg0: i32, %arg1: i32) -> (i32, i32, i32) {
    %c0_i32 = arith.constant 0 : i32
    %c0_i32_0 = arith.constant 0 : i32
    %c0_i32_1 = arith.constant 0 : i32
    return %arg0, %c0_i32, %c0_i32_0 : i32, i32, i32
  }
  func.func @transform_3(%arg0: i32, %arg1: i32) -> (i32, i32, i32, i32, i32) {
    %c0_i32 = arith.constant 0 : i32
    %c0_i32_0 = arith.constant 0 : i32
    %c0_i32_1 = arith.constant 0 : i32
    %c0_i32_2 = arith.constant 0 : i32
    return %arg0, %arg1, %c0_i32, %c0_i32_0, %c0_i32_1 : i32, i32, i32, i32, i32
  }
}

</mosaic_0001>

<llo_original>
// kernel: up_forward.5
$region0: #{up_forward.5}
  #allocation0 [shape = 'u32[]', space=smem, size = 0x4, offset = 0x4, fixed_abs, tag = 'smem constant byte address 0x4 - core index']
  #allocation1 [shape = 'u32[144,128]{1,0:T(1,128)}', space=vmem, size = 0x12000, scoped, tag = 'internal scratch']
  %s0 = inlined_call_operand.hbm [shape: f32[2,8,8,8,128], index: 0, kind: input, shape index: {}]
  %s1 = inlined_call_operand.hbm [shape: f32[2,1,128], index: 1, kind: input, shape index: {}]
  %s2 = inlined_call_operand.hbm [shape: f32[2,1,128], index: 2, kind: input, shape index: {}]
  %s3 = inlined_call_operand.hbm [shape: bf16[2,8,8,8,128], index: 3, kind: output, shape index: {}]
  %s4 = sld [smem:[#allocation0]]
  $region57: #{up_forward.5} parent=0
    _
  %s6 = ssub.s32 1, %s4
  %s7 = scalar_select 0, %s6, %s4
  $region1: #{up_forward.5} parent=0
    #allocation2 [shape = 'u8[524288]{0}', space=vmem, size = 0x80000, scoped, tag = 'input window, operand 0']
    #allocation3 [shape = 's32[2]{0}', space=sflag, size = 0x8, scoped, tag = 'scoped memory for up_forward.5']
    #allocation4 [shape = 's32[2]{0}', space=sflag, size = 0x8, scoped, tag = 'scoped memory for up_forward.5']
    #allocation5 [shape = 'u8[1024]{0}', space=vmem, size = 0x400, scoped, tag = 'input window, operand 1']
    #allocation6 [shape = 's32[2]{0}', space=sflag, size = 0x8, scoped, tag = 'scoped memory for up_forward.5']
    #allocation7 [shape = 'u8[1024]{0}', space=vmem, size = 0x400, scoped, tag = 'input window, operand 2']
    #allocation8 [shape = 'u8[262144]{0}', space=vmem, size = 0x40000, scoped, tag = 'output window, operand 0']
    %8 = vsyncpa [#allocation3], 0
    %s9 = scalar_lea.sflag [#allocation3], 1
    %10 = vsyncpa %s9, 0
    %11 = vsyncpa [#allocation6], 0
    %s12 = scalar_lea.sflag [#allocation6], 1
    %13 = vsyncpa %s12, 0
    %14 = vsyncpa [#allocation4], 0
    %s15 = scalar_lea.sflag [#allocation4], 1
    %16 = vsyncpa %s15, 0
    loop: start=0, step=1, limit=4
    $region2: #{up_forward.5} parent=1 // loop_pre_header
      _
    $region3: #{up_forward.5} parent=1 // loop_header
      %s18 = sphi 0, %s22
      %p19 = scmp.ge.s32.totalorder %s18, 4
      %s25 = sphi 0, %s37
      %s26 = sphi 0, %s33
      %s27 = sphi 0, %s25
      %s28 = sphi 0, %s26
      %s29 = sphi 0, %s27
      %s30 = sphi 0, %s28
      %s42 = sphi 0, %s44
      %s45 = sphi 0, %s42
      %s46 = sphi 0, %s45
      %s62 = sphi 0, %s46
      %s68 = sphi 0, %s70
      %s71 = sphi 0, %s68
      %s72 = sphi 0, %s71
      %s88 = sphi 0, %s72
      %s94 = sphi 0, %s96
      %s97 = sphi 0, %s94
      %s98 = sphi 0, %s97
      %s114 = sphi 0, %s98
      %s122 = sphi 0, %s124
      %s125 = sphi 0, %s122
      %s126 = sphi 0, %s125
      %s142 = sphi 0, %s126
    $region4: #{up_forward.5} parent=1 // loop_header_branch
      %21 = sbr.rel (%p19) target = $region8
    $region5: #{up_forward.5} parent=1 // loop_body
      %s23 = ssub.s32 %s18, 1
      %s24 = ssub.s32 %s18, 2
      %s31 = sadd.s32 1, %s26
      %p32 = scmp.ge.s32.totalorder %s31, 1
      %s33 = scalar_select %p32, 0, %s31
      %s34 = sadd.s32 1, %s25
      %s35 = scalar_select %p32, %s34, %s25
      %p36 = scmp.ge.s32.totalorder %s35, 2
      %s37 = scalar_select %p36, 0, %s35
      %s38 = ssub.s32 %s25, %s37
      %s39 = ssub.s32 %s26, %s33
      %s40 = sor.u32 %s38, %s39
      %p41 = scmp.eq.s32.totalorder %s40, 0
      %s43 = sadd.s32 %s42, 1
      %s44 = scalar_select %p41, %s42, %s43
      %p47 = pneg %p41
      %p48 = scmp.eq.s32.totalorder %s18, 1
      %p49 = por %p47, %p48
      %p50 = scmp.ne.s32.totalorder %s42, %s45
      %p51 = scmp.eq.s32.totalorder %s18, 0
      %p52 = por %p50, %p51
      %p53 = scmp.ne.s32.totalorder %s42, %s45
      %p54 = scmp.eq.s32.totalorder %s23, 1
      %p55 = por %p53, %p54
      %p56 = scmp.ne.s32.totalorder %s45, %s46
      %p57 = scmp.eq.s32.totalorder %s23, 0
      %p58 = por %p56, %p57
      %p59 = scmp.ne.s32.totalorder %s45, %s46
      %p60 = scmp.eq.s32.totalorder %s24, 1
      %p61 = por %p59, %p60
      %p63 = scmp.ne.s32.totalorder %s46, %s62
      %p64 = scmp.eq.s32.totalorder %s24, 0
      %p65 = por %p63, %p64
      %s66 = ssub.s32 %s25, %s37
      %p67 = scmp.eq.s32.totalorder %s66, 0
      %s69 = sadd.s32 %s68, 1
      %s70 = scalar_select %p67, %s68, %s69
      %p73 = pneg %p67
      %p74 = scmp.eq.s32.totalorder %s18, 1
      %p75 = por %p73, %p74
      %p76 = scmp.ne.s32.totalorder %s68, %s71
      %p77 = scmp.eq.s32.totalorder %s18, 0
      %p78 = por %p76, %p77
      %p79 = scmp.ne.s32.totalorder %s68, %s71
      %p80 = scmp.eq.s32.totalorder %s23, 1
      %p81 = por %p79, %p80
      %p82 = scmp.ne.s32.totalorder %s71, %s72
      %p83 = scmp.eq.s32.totalorder %s23, 0
      %p84 = por %p82, %p83
      %p85 = scmp.ne.s32.totalorder %s71, %s72
      %p86 = scmp.eq.s32.totalorder %s24, 1
      %p87 = por %p85, %p86
      %p89 = scmp.ne.s32.totalorder %s72, %s88
      %p90 = scmp.eq.s32.totalorder %s24, 0
      %p91 = por %p89, %p90
      %s92 = ssub.s32 %s25, %s37
      %p93 = scmp.eq.s32.totalorder %s92, 0
      %s95 = sadd.s32 %s94, 1
      %s96 = scalar_select %p93, %s94, %s95
      %p99 = pneg %p93
      %p100 = scmp.eq.s32.totalorder %s18, 1
      %p101 = por %p99, %p100
      %p102 = scmp.ne.s32.totalorder %s94, %s97
      %p103 = scmp.eq.s32.totalorder %s18, 0
      %p104 = por %p102, %p103
      %p105 = scmp.ne.s32.totalorder %s94, %s97
      %p106 = scmp.eq.s32.totalorder %s23, 1
      %p107 = por %p105, %p106
      %p108 = scmp.ne.s32.totalorder %s97, %s98
      %p109 = scmp.eq.s32.totalorder %s23, 0
      %p110 = por %p108, %p109
      %p111 = scmp.ne.s32.totalorder %s97, %s98
      %p112 = scmp.eq.s32.totalorder %s24, 1
      %p113 = por %p111, %p112
      %p115 = scmp.ne.s32.totalorder %s98, %s114
      %p116 = scmp.eq.s32.totalorder %s24, 0
      %p117 = por %p115, %p116
      %s118 = ssub.s32 %s25, %s37
      %s119 = ssub.s32 %s26, %s33
      %s120 = sor.u32 %s118, %s119
      %p121 = scmp.eq.s32.totalorder %s120, 0
      %s123 = sadd.s32 %s122, 1
      %s124 = scalar_select %p121, %s122, %s123
      %p127 = pneg %p121
      %p128 = scmp.eq.s32.totalorder %s18, 1
      %p129 = por %p127, %p128
      %p130 = scmp.ne.s32.totalorder %s122, %s125
      %p131 = scmp.eq.s32.totalorder %s18, 0
      %p132 = por %p130, %p131
      %p133 = scmp.ne.s32.totalorder %s122, %s125
      %p134 = scmp.eq.s32.totalorder %s23, 1
      %p135 = por %p133, %p134
      %p136 = scmp.ne.s32.totalorder %s125, %s126
      %p137 = scmp.eq.s32.totalorder %s23, 0
      %p138 = por %p136, %p137
      %p139 = scmp.ne.s32.totalorder %s125, %s126
      %p140 = scmp.eq.s32.totalorder %s24, 1
      %p141 = por %p139, %p140
      %p143 = scmp.ne.s32.totalorder %s126, %s142
      %p144 = scmp.eq.s32.totalorder %s24, 0
      %p145 = por %p143, %p144
      %p146 = scmp.le.s32.totalorder 1, %s18
      %p147 = scmp.lt.s32.totalorder %s18, 3
      %p148 = pnand %p146, %p147
      %p149 = pneg %p148
      // Predicated region
      $region9: #{up_forward.5} parent=5 // pred_check
        _
      $region10: #{up_forward.5} parent=5 // pred_check_branch
        %151 = sbr.rel (%p148) target = $region12
      $region11: #{up_forward.5} parent=5 // pred_region
        %s152 = ssub.s32 %s18, 1
      $region12: #{up_forward.5} parent=5 // pred_fallthru
        _
      %p153 = scmp.lt.s32.totalorder %s18, 2
      // Predicated region
      $region13: #{up_forward.5} parent=5 // pred_check
        %p154 = pneg %p153
      $region14: #{up_forward.5} parent=5 // pred_check_branch
        %156 = sbr.rel (%p154) target = $region16
      $region15: #{up_forward.5} parent=5 // pred_region
        // Predicated region
        $region17: #{up_forward.5} parent=15 // pred_check
          %p157 = pneg %p52
        $region18: #{up_forward.5} parent=15 // pred_check_branch
          %159 = sbr.rel (%p157) target = $region20
        $region19: #{up_forward.5} parent=15 // pred_region
          %s160 = sand.u32 %s42, 1
          %s161 = scalar_lea.sflag [#allocation3], %s160
          %s162 = sand.u32 %s42, 1
          %s163 = smul.addr %s162, 512
          %s164 = scalar_lea.vmem [#allocation2], %s163
          %s165 = smul.u32 8, %s26
          %s167 = ssub.s32 8192, 8192
          %168 = vsyncadd %s161, %s167
          %s169 = smul.addr %s165, 8
          %s170 = smul.addr %s25, 64
          %s171 = sadd.s32 %s169, %s170
          %s172 = smul.addr %s171, 128
          %s173 = scalar_lea.hbm %s0, %s172
          %s174 = sshll.u32 %s164, 4
          %s175 = int_to_ptr.vmem [resolvable:$true] %s174
          %180 = dma.hbm_to_vmem [thread:$0]  %s173, 8192, %s175, %s161, 128, 128, 8
        $region20: #{up_forward.5} parent=15 // pred_fallthru
          _
        // Predicated region
        $region21: #{up_forward.5} parent=15 // pred_check
          %p181 = pneg %p78
        $region22: #{up_forward.5} parent=15 // pred_check_branch
          %183 = sbr.rel (%p181) target = $region24
        $region23: #{up_forward.5} parent=15 // pred_region
          %s184 = sand.u32 %s18, 1
          %s185 = scalar_lea.sflag [#allocation6], %s184
          %s186 = sand.u32 %s68, 1
          %s187 = scalar_lea.vmem [#allocation5], %s186
          %s189 = ssub.s32 16, 16
          %190 = vsyncadd %s185, %s189
          %s191 = smul.addr %s25, 16
          %s192 = scalar_lea.hbm %s1, %s191
          %s194 = sshll.u32 %s187, 4
          %s195 = int_to_ptr.vmem [resolvable:$true] %s194
          %197 = dma.hbm_to_vmem [thread:$0]  %s192, 16, %s195, %s185
        $region24: #{up_forward.5} parent=15 // pred_fallthru
          _
        // Predicated region
        $region25: #{up_forward.5} parent=15 // pred_check
          %p198 = pneg %p104
        $region26: #{up_forward.5} parent=15 // pred_check_branch
          %200 = sbr.rel (%p198) target = $region28
        $region27: #{up_forward.5} parent=15 // pred_region
          %s201 = sand.u32 %s18, 1
          %s202 = scalar_lea.sflag [#allocation6], %s201
          %s203 = sand.u32 %s94, 1
          %s204 = scalar_lea.vmem [#allocation7], %s203
          %s206 = ssub.s32 16, 16
          %207 = vsyncadd %s202, %s206
          %s208 = smul.addr %s25, 16
          %s209 = scalar_lea.hbm %s2, %s208
          %s211 = sshll.u32 %s204, 4
          %s212 = int_to_ptr.vmem [resolvable:$true] %s211
          %214 = dma.hbm_to_vmem [thread:$0]  %s209, 16, %s212, %s202
        $region28: #{up_forward.5} parent=15 // pred_fallthru
          _
      $region16: #{up_forward.5} parent=5 // pred_fallthru
        _
      %p215 = scmp.le.s32.totalorder 1, %s18
      %p216 = scmp.lt.s32.totalorder %s18, 3
      %p217 = pnand %p215, %p216
      %p218 = pneg %p217
      // Predicated region
      $region29: #{up_forward.5} parent=5 // pred_check
        _
      $region30: #{up_forward.5} parent=5 // pred_check_branch
        %220 = sbr.rel (%p217) target = $region32
      $region31: #{up_forward.5} parent=5 // pred_region
        %s221 = ssub.s32 %s18, 1
        %s222 = sand.u32 %s45, 1
        %s223 = scalar_lea.sflag [#allocation3], %s222
        %s224 = sand.u32 %s45, 1
        %s225 = smul.addr %s224, 512
        %s226 = scalar_lea.vmem [#allocation2], %s225
        // Predicated region
        $region33: #{up_forward.5} parent=31 // pred_check
          %p227 = pneg %p58
        $region34: #{up_forward.5} parent=31 // pred_check_branch
          %229 = sbr.rel (%p227) target = $region36
        $region35: #{up_forward.5} parent=31 // pred_region
          %230 = dma.done %s223, 8192
        $region36: #{up_forward.5} parent=31 // pred_fallthru
          _
        %s231 = sand.u32 %s23, 1
        %s232 = scalar_lea.sflag [#allocation6], %s231
        %s233 = sand.u32 %s71, 1
        %s234 = scalar_lea.vmem [#allocation5], %s233
        // Predicated region
        $region37: #{up_forward.5} parent=31 // pred_check
          %p235 = pneg %p84
        $region38: #{up_forward.5} parent=31 // pred_check_branch
          %237 = sbr.rel (%p235) target = $region40
        $region39: #{up_forward.5} parent=31 // pred_region
          %238 = dma.done %s232, 16
        $region40: #{up_forward.5} parent=31 // pred_fallthru
          _
        %s239 = sand.u32 %s23, 1
        %s240 = scalar_lea.sflag [#allocation6], %s239
        %s241 = sand.u32 %s97, 1
        %s242 = scalar_lea.vmem [#allocation7], %s241
        // Predicated region
        $region41: #{up_forward.5} parent=31 // pred_check
          %p243 = pneg %p110
        $region42: #{up_forward.5} parent=31 // pred_check_branch
          %245 = sbr.rel (%p243) target = $region44
        $region43: #{up_forward.5} parent=31 // pred_region
          %246 = dma.done %s240, 16
        $region44: #{up_forward.5} parent=31 // pred_fallthru
          _
        %s247 = sand.u32 %s45, 1
        %s248 = scalar_lea.sflag [#allocation3], %s247
        %s249 = sand.u32 %s45, 1
        %s250 = smul.addr %s249, 512
        %s251 = scalar_lea.vmem [#allocation2], %s250
        %p252 = pneg %p58
        %p253 = pneg %p55
        %s254 = sand.u32 %s23, 1
        %s255 = scalar_lea.sflag [#allocation6], %s254
        %s256 = sand.u32 %s71, 1
        %s257 = scalar_lea.vmem [#allocation5], %s256
        %p258 = pneg %p84
        %p259 = pneg %p81
        %s260 = sand.u32 %s23, 1
        %s261 = scalar_lea.sflag [#allocation6], %s260
        %s262 = sand.u32 %s97, 1
        %s263 = scalar_lea.vmem [#allocation7], %s262
        %p264 = pneg %p110
        %p265 = pneg %p107
        %p266 = pneg %p138
        %p267 = pneg %p135
        %s268 = sand.u32 %s125, 1
        %s269 = scalar_lea.sflag [#allocation4], %s268
        %s270 = sand.u32 %s125, 1
        %s271 = smul.addr %s270, 256
        %s272 = scalar_lea.vmem [#allocation8], %s271
        %s273 = smul.u32 8, %s28
        %s274 = smul.u32 8, %s28
        %v275 = vld [vmem:[%s226] sm:$0xff]
        %v276 = vld [vmem:[%s226 + $0x8] sm:$0xff]
        %v277 = vld [vmem:[%s226 + $0x10] sm:$0xff]
        %v278 = vld [vmem:[%s226 + $0x18] sm:$0xff]
        %v279 = vld [vmem:[%s226 + $0x20] sm:$0xff]
        %v280 = vld [vmem:[%s226 + $0x28] sm:$0xff]
        %v281 = vld [vmem:[%s226 + $0x30] sm:$0xff]
        %v282 = vld [vmem:[%s226 + $0x38] sm:$0xff]
        %v283 = vld [vmem:[%s226 + $0x40] sm:$0xff]
        %v284 = vld [vmem:[%s226 + $0x48] sm:$0xff]
        %v285 = vld [vmem:[%s226 + $0x50] sm:$0xff]
        %v286 = vld [vmem:[%s226 + $0x58] sm:$0xff]
        %v287 = vld [vmem:[%s226 + $0x60] sm:$0xff]
        %v288 = vld [vmem:[%s226 + $0x68] sm:$0xff]
        %v289 = vld [vmem:[%s226 + $0x70] sm:$0xff]
        %v290 = vld [vmem:[%s226 + $0x78] sm:$0xff]
        %v291 = vld [vmem:[%s226 + $0x80] sm:$0xff]
        %v292 = vld [vmem:[%s226 + $0x88] sm:$0xff]
        %v293 = vld [vmem:[%s226 + $0x90] sm:$0xff]
        %v294 = vld [vmem:[%s226 + $0x98] sm:$0xff]
        %v295 = vld [vmem:[%s226 + $0xa0] sm:$0xff]
        %v296 = vld [vmem:[%s226 + $0xa8] sm:$0xff]
        %v297 = vld [vmem:[%s226 + $0xb0] sm:$0xff]
        %v298 = vld [vmem:[%s226 + $0xb8] sm:$0xff]
        %v299 = vld [vmem:[%s226 + $0xc0] sm:$0xff]
        %v300 = vld [vmem:[%s226 + $0xc8] sm:$0xff]
        %v301 = vld [vmem:[%s226 + $0xd0] sm:$0xff]
        %v302 = vld [vmem:[%s226 + $0xd8] sm:$0xff]
        %v303 = vld [vmem:[%s226 + $0xe0] sm:$0xff]
        %v304 = vld [vmem:[%s226 + $0xe8] sm:$0xff]
        %v305 = vld [vmem:[%s226 + $0xf0] sm:$0xff]
        %v306 = vld [vmem:[%s226 + $0xf8] sm:$0xff]
        %v307 = vld [vmem:[%s226 + $0x100] sm:$0xff]
        %v308 = vld [vmem:[%s226 + $0x108] sm:$0xff]
        %v309 = vld [vmem:[%s226 + $0x110] sm:$0xff]
        %v310 = vld [vmem:[%s226 + $0x118] sm:$0xff]
        %v311 = vld [vmem:[%s226 + $0x120] sm:$0xff]
        %v312 = vld [vmem:[%s226 + $0x128] sm:$0xff]
        %v313 = vld [vmem:[%s226 + $0x130] sm:$0xff]
        %v314 = vld [vmem:[%s226 + $0x138] sm:$0xff]
        %v315 = vld [vmem:[%s226 + $0x140] sm:$0xff]
        %v316 = vld [vmem:[%s226 + $0x148] sm:$0xff]
        %v317 = vld [vmem:[%s226 + $0x150] sm:$0xff]
        %v318 = vld [vmem:[%s226 + $0x158] sm:$0xff]
        %v319 = vld [vmem:[%s226 + $0x160] sm:$0xff]
        %v320 = vld [vmem:[%s226 + $0x168] sm:$0xff]
        %v321 = vld [vmem:[%s226 + $0x170] sm:$0xff]
        %v322 = vld [vmem:[%s226 + $0x178] sm:$0xff]
        %v323 = vld [vmem:[%s226 + $0x180] sm:$0xff]
        %v324 = vld [vmem:[%s226 + $0x188] sm:$0xff]
        %v325 = vld [vmem:[%s226 + $0x190] sm:$0xff]
        %v326 = vld [vmem:[%s226 + $0x198] sm:$0xff]
        %v327 = vld [vmem:[%s226 + $0x1a0] sm:$0xff]
        %v328 = vld [vmem:[%s226 + $0x1a8] sm:$0xff]
        %v329 = vld [vmem:[%s226 + $0x1b0] sm:$0xff]
        %v330 = vld [vmem:[%s226 + $0x1b8] sm:$0xff]
        %v331 = vld [vmem:[%s226 + $0x1c0] sm:$0xff]
        %v332 = vld [vmem:[%s226 + $0x1c8] sm:$0xff]
        %v333 = vld [vmem:[%s226 + $0x1d0] sm:$0xff]
        %v334 = vld [vmem:[%s226 + $0x1d8] sm:$0xff]
        %v335 = vld [vmem:[%s226 + $0x1e0] sm:$0xff]
        %v336 = vld [vmem:[%s226 + $0x1e8] sm:$0xff]
        %v337 = vld [vmem:[%s226 + $0x1f0] sm:$0xff]
        %v338 = vld [vmem:[%s226 + $0x1f8] sm:$0xff]
        %v339 = vld [vmem:[%s234] sm:$0x1]
        %v341 = vlaneseq
        %v342 = vshrl.u32 %v341, 7
        %v343 = vsub.s32 0, %v342
        %v344 = vrot.slane %v339, %v343
        %v346 = vmul.f32 %v275, %v344
        %v347 = vmul.f32 %v276, %v344
        %v348 = vmul.f32 %v277, %v344
        %v349 = vmul.f32 %v278, %v344
        %v350 = vmul.f32 %v279, %v344
        %v351 = vmul.f32 %v280, %v344
        %v352 = vmul.f32 %v281, %v344
        %v353 = vmul.f32 %v282, %v344
        %v354 = vmul.f32 %v283, %v344
        %v355 = vmul.f32 %v284, %v344
        %v356 = vmul.f32 %v285, %v344
        %v357 = vmul.f32 %v286, %v344
        %v358 = vmul.f32 %v287, %v344
        %v359 = vmul.f32 %v288, %v344
        %v360 = vmul.f32 %v289, %v344
        %v361 = vmul.f32 %v290, %v344
        %v362 = vmul.f32 %v291, %v344
        %v363 = vmul.f32 %v292, %v344
        %v364 = vmul.f32 %v293, %v344
        %v365 = vmul.f32 %v294, %v344
        %v366 = vmul.f32 %v295, %v344
        %v367 = vmul.f32 %v296, %v344
        %v368 = vmul.f32 %v297, %v344
        %v369 = vmul.f32 %v298, %v344
        %v370 = vmul.f32 %v299, %v344
        %v371 = vmul.f32 %v300, %v344
        %v372 = vmul.f32 %v301, %v344
        %v373 = vmul.f32 %v302, %v344
        %v374 = vmul.f32 %v303, %v344
        %v375 = vmul.f32 %v304, %v344
        %v376 = vmul.f32 %v305, %v344
        %v377 = vmul.f32 %v306, %v344
        %v378 = vmul.f32 %v307, %v344
        %v379 = vmul.f32 %v308, %v344
        %v380 = vmul.f32 %v309, %v344
        %v381 = vmul.f32 %v310, %v344
        %v382 = vmul.f32 %v311, %v344
        %v383 = vmul.f32 %v312, %v344
        %v384 = vmul.f32 %v313, %v344
        %v385 = vmul.f32 %v314, %v344
        %v386 = vmul.f32 %v315, %v344
        %v387 = vmul.f32 %v316, %v344
        %v388 = vmul.f32 %v317, %v344
        %v389 = vmul.f32 %v318, %v344
        %v390 = vmul.f32 %v319, %v344
        %v391 = vmul.f32 %v320, %v344
        %v392 = vmul.f32 %v321, %v344
        %v393 = vmul.f32 %v322, %v344
        %v394 = vmul.f32 %v323, %v344
        %v395 = vmul.f32 %v324, %v344
        %v396 = vmul.f32 %v325, %v344
        %v397 = vmul.f32 %v326, %v344
        %v398 = vmul.f32 %v327, %v344
        %v399 = vmul.f32 %v328, %v344
        %v400 = vmul.f32 %v329, %v344
        %v401 = vmul.f32 %v330, %v344
        %v402 = vmul.f32 %v331, %v344
        %v403 = vmul.f32 %v332, %v344
        %v404 = vmul.f32 %v333, %v344
        %v405 = vmul.f32 %v334, %v344
        %v406 = vmul.f32 %v335, %v344
        %v407 = vmul.f32 %v336, %v344
        %v408 = vmul.f32 %v337, %v344
        %v409 = vmul.f32 %v338, %v344
        %v410 = vld [vmem:[%s242] sm:$0x1]
        %v412 = vlaneseq
        %v413 = vshrl.u32 %v412, 7
        %v414 = vsub.s32 0, %v413
        %v415 = vrot.slane %v410, %v414
        %v417 = vadd.f32 %v346, %v415
        %v418 = vadd.f32 %v347, %v415
        %v419 = vadd.f32 %v348, %v415
        %v420 = vadd.f32 %v349, %v415
        %v421 = vadd.f32 %v350, %v415
        %v422 = vadd.f32 %v351, %v415
        %v423 = vadd.f32 %v352, %v415
        %v424 = vadd.f32 %v353, %v415
        %v425 = vadd.f32 %v354, %v415
        %v426 = vadd.f32 %v355, %v415
        %v427 = vadd.f32 %v356, %v415
        %v428 = vadd.f32 %v357, %v415
        %v429 = vadd.f32 %v358, %v415
        %v430 = vadd.f32 %v359, %v415
        %v431 = vadd.f32 %v360, %v415
        %v432 = vadd.f32 %v361, %v415
        %v433 = vadd.f32 %v362, %v415
        %v434 = vadd.f32 %v363, %v415
        %v435 = vadd.f32 %v364, %v415
        %v436 = vadd.f32 %v365, %v415
        %v437 = vadd.f32 %v366, %v415
        %v438 = vadd.f32 %v367, %v415
        %v439 = vadd.f32 %v368, %v415
        %v440 = vadd.f32 %v369, %v415
        %v441 = vadd.f32 %v370, %v415
        %v442 = vadd.f32 %v371, %v415
        %v443 = vadd.f32 %v372, %v415
        %v444 = vadd.f32 %v373, %v415
        %v445 = vadd.f32 %v374, %v415
        %v446 = vadd.f32 %v375, %v415
        %v447 = vadd.f32 %v376, %v415
        %v448 = vadd.f32 %v377, %v415
        %v449 = vadd.f32 %v378, %v415
        %v450 = vadd.f32 %v379, %v415
        %v451 = vadd.f32 %v380, %v415
        %v452 = vadd.f32 %v381, %v415
        %v453 = vadd.f32 %v382, %v415
        %v454 = vadd.f32 %v383, %v415
        %v455 = vadd.f32 %v384, %v415
        %v456 = vadd.f32 %v385, %v415
        %v457 = vadd.f32 %v386, %v415
        %v458 = vadd.f32 %v387, %v415
        %v459 = vadd.f32 %v388, %v415
        %v460 = vadd.f32 %v389, %v415
        %v461 = vadd.f32 %v390, %v415
        %v462 = vadd.f32 %v391, %v415
        %v463 = vadd.f32 %v392, %v415
        %v464 = vadd.f32 %v393, %v415
        %v465 = vadd.f32 %v394, %v415
        %v466 = vadd.f32 %v395, %v415
        %v467 = vadd.f32 %v396, %v415
        %v468 = vadd.f32 %v397, %v415
        %v469 = vadd.f32 %v398, %v415
        %v470 = vadd.f32 %v399, %v415
        %v471 = vadd.f32 %v400, %v415
        %v472 = vadd.f32 %v401, %v415
        %v473 = vadd.f32 %v402, %v415
        %v474 = vadd.f32 %v403, %v415
        %v475 = vadd.f32 %v404, %v415
        %v476 = vadd.f32 %v405, %v415
        %v477 = vadd.f32 %v406, %v415
        %v478 = vadd.f32 %v407, %v415
        %v479 = vadd.f32 %v408, %v415
        %v480 = vadd.f32 %v409, %v415
        %v481 = vmax.f32 %v417, 0.0
        %v482 = vmax.f32 %v418, 0.0
        %v483 = vmax.f32 %v419, 0.0
        %v484 = vmax.f32 %v420, 0.0
        %v485 = vmax.f32 %v421, 0.0
        %v486 = vmax.f32 %v422, 0.0
        %v487 = vmax.f32 %v423, 0.0
        %v488 = vmax.f32 %v424, 0.0
        %v489 = vmax.f32 %v425, 0.0
        %v490 = vmax.f32 %v426, 0.0
        %v491 = vmax.f32 %v427, 0.0
        %v492 = vmax.f32 %v428, 0.0
        %v493 = vmax.f32 %v429, 0.0
        %v494 = vmax.f32 %v430, 0.0
        %v495 = vmax.f32 %v431, 0.0
        %v496 = vmax.f32 %v432, 0.0
        %v497 = vmax.f32 %v433, 0.0
        %v498 = vmax.f32 %v434, 0.0
        %v499 = vmax.f32 %v435, 0.0
        %v500 = vmax.f32 %v436, 0.0
        %v501 = vmax.f32 %v437, 0.0
        %v502 = vmax.f32 %v438, 0.0
        %v503 = vmax.f32 %v439, 0.0
        %v504 = vmax.f32 %v440, 0.0
        %v505 = vmax.f32 %v441, 0.0
        %v506 = vmax.f32 %v442, 0.0
        %v507 = vmax.f32 %v443, 0.0
        %v508 = vmax.f32 %v444, 0.0
        %v509 = vmax.f32 %v445, 0.0
        %v510 = vmax.f32 %v446, 0.0
        %v511 = vmax.f32 %v447, 0.0
        %v512 = vmax.f32 %v448, 0.0
        %v513 = vmax.f32 %v449, 0.0
        %v514 = vmax.f32 %v450, 0.0
        %v515 = vmax.f32 %v451, 0.0
        %v516 = vmax.f32 %v452, 0.0
        %v517 = vmax.f32 %v453, 0.0
        %v518 = vmax.f32 %v454, 0.0
        %v519 = vmax.f32 %v455, 0.0
        %v520 = vmax.f32 %v456, 0.0
        %v521 = vmax.f32 %v457, 0.0
        %v522 = vmax.f32 %v458, 0.0
        %v523 = vmax.f32 %v459, 0.0
        %v524 = vmax.f32 %v460, 0.0
        %v525 = vmax.f32 %v461, 0.0
        %v526 = vmax.f32 %v462, 0.0
        %v527 = vmax.f32 %v463, 0.0
        %v528 = vmax.f32 %v464, 0.0
        %v529 = vmax.f32 %v465, 0.0
        %v530 = vmax.f32 %v466, 0.0
        %v531 = vmax.f32 %v467, 0.0
        %v532 = vmax.f32 %v468, 0.0
        %v533 = vmax.f32 %v469, 0.0
        %v534 = vmax.f32 %v470, 0.0
        %v535 = vmax.f32 %v471, 0.0
        %v536 = vmax.f32 %v472, 0.0
        %v537 = vmax.f32 %v473, 0.0
        %v538 = vmax.f32 %v474, 0.0
        %v539 = vmax.f32 %v475, 0.0
        %v540 = vmax.f32 %v476, 0.0
        %v541 = vmax.f32 %v477, 0.0
        %v542 = vmax.f32 %v478, 0.0
        %v543 = vmax.f32 %v479, 0.0
        %v544 = vmax.f32 %v480, 0.0
        %v545 = vpack.c.bf16 %v481, %v481
        %v546 = vpack.c.bf16 %v482, %v482
        %v547 = vpack.c.bf16 %v483, %v483
        %v548 = vpack.c.bf16 %v484, %v484
        %v549 = vpack.c.bf16 %v485, %v485
        %v550 = vpack.c.bf16 %v486, %v486
        %v551 = vpack.c.bf16 %v487, %v487
        %v552 = vpack.c.bf16 %v488, %v488
        %v553 = vpack.c.bf16 %v489, %v489
        %v554 = vpack.c.bf16 %v490, %v490
        %v555 = vpack.c.bf16 %v491, %v491
        %v556 = vpack.c.bf16 %v492, %v492
        %v557 = vpack.c.bf16 %v493, %v493
        %v558 = vpack.c.bf16 %v494, %v494
        %v559 = vpack.c.bf16 %v495, %v495
        %v560 = vpack.c.bf16 %v496, %v496
        %v561 = vpack.c.bf16 %v497, %v497
        %v562 = vpack.c.bf16 %v498, %v498
        %v563 = vpack.c.bf16 %v499, %v499
        %v564 = vpack.c.bf16 %v500, %v500
        %v565 = vpack.c.bf16 %v501, %v501
        %v566 = vpack.c.bf16 %v502, %v502
        %v567 = vpack.c.bf16 %v503, %v503
        %v568 = vpack.c.bf16 %v504, %v504
        %v569 = vpack.c.bf16 %v505, %v505
        %v570 = vpack.c.bf16 %v506, %v506
        %v571 = vpack.c.bf16 %v507, %v507
        %v572 = vpack.c.bf16 %v508, %v508
        %v573 = vpack.c.bf16 %v509, %v509
        %v574 = vpack.c.bf16 %v510, %v510
        %v575 = vpack.c.bf16 %v511, %v511
        %v576 = vpack.c.bf16 %v512, %v512
        %v577 = vpack.c.bf16 %v513, %v513
        %v578 = vpack.c.bf16 %v514, %v514
        %v579 = vpack.c.bf16 %v515, %v515
        %v580 = vpack.c.bf16 %v516, %v516
        %v581 = vpack.c.bf16 %v517, %v517
        %v582 = vpack.c.bf16 %v518, %v518
        %v583 = vpack.c.bf16 %v519, %v519
        %v584 = vpack.c.bf16 %v520, %v520
        %v585 = vpack.c.bf16 %v521, %v521
        %v586 = vpack.c.bf16 %v522, %v522
        %v587 = vpack.c.bf16 %v523, %v523
        %v588 = vpack.c.bf16 %v524, %v524
        %v589 = vpack.c.bf16 %v525, %v525
        %v590 = vpack.c.bf16 %v526, %v526
        %v591 = vpack.c.bf16 %v527, %v527
        %v592 = vpack.c.bf16 %v528, %v528
        %v593 = vpack.c.bf16 %v529, %v529
        %v594 = vpack.c.bf16 %v530, %v530
        %v595 = vpack.c.bf16 %v531, %v531
        %v596 = vpack.c.bf16 %v532, %v532
        %v597 = vpack.c.bf16 %v533, %v533
        %v598 = vpack.c.bf16 %v534, %v534
        %v599 = vpack.c.bf16 %v535, %v535
        %v600 = vpack.c.bf16 %v536, %v536
        %v601 = vpack.c.bf16 %v537, %v537
        %v602 = vpack.c.bf16 %v538, %v538
        %v603 = vpack.c.bf16 %v539, %v539
        %v604 = vpack.c.bf16 %v540, %v540
        %v605 = vpack.c.bf16 %v541, %v541
        %v606 = vpack.c.bf16 %v542, %v542
        %v607 = vpack.c.bf16 %v543, %v543
        %v608 = vpack.c.bf16 %v544, %v544
        %609 = vst [vmem:[%s272] sm:$0xf] %v545
        %610 = vst [vmem:[%s272 + $0x4] sm:$0xf] %v546
        %611 = vst [vmem:[%s272 + $0x8] sm:$0xf] %v547
        %612 = vst [vmem:[%s272 + $0xc] sm:$0xf] %v548
        %613 = vst [vmem:[%s272 + $0x10] sm:$0xf] %v549
        %614 = vst [vmem:[%s272 + $0x14] sm:$0xf] %v550
        %615 = vst [vmem:[%s272 + $0x18] sm:$0xf] %v551
        %616 = vst [vmem:[%s272 + $0x1c] sm:$0xf] %v552
        %617 = vst [vmem:[%s272 + $0x20] sm:$0xf] %v553
        %618 = vst [vmem:[%s272 + $0x24] sm:$0xf] %v554
        %619 = vst [vmem:[%s272 + $0x28] sm:$0xf] %v555
        %620 = vst [vmem:[%s272 + $0x2c] sm:$0xf] %v556
        %621 = vst [vmem:[%s272 + $0x30] sm:$0xf] %v557
        %622 = vst [vmem:[%s272 + $0x34] sm:$0xf] %v558
        %623 = vst [vmem:[%s272 + $0x38] sm:$0xf] %v559
        %624 = vst [vmem:[%s272 + $0x3c] sm:$0xf] %v560
        %625 = vst [vmem:[%s272 + $0x40] sm:$0xf] %v561
        %626 = vst [vmem:[%s272 + $0x44] sm:$0xf] %v562
        %627 = vst [vmem:[%s272 + $0x48] sm:$0xf] %v563
        %628 = vst [vmem:[%s272 + $0x4c] sm:$0xf] %v564
        %629 = vst [vmem:[%s272 + $0x50] sm:$0xf] %v565
        %630 = vst [vmem:[%s272 + $0x54] sm:$0xf] %v566
        %631 = vst [vmem:[%s272 + $0x58] sm:$0xf] %v567
        %632 = vst [vmem:[%s272 + $0x5c] sm:$0xf] %v568
        %633 = vst [vmem:[%s272 + $0x60] sm:$0xf] %v569
        %634 = vst [vmem:[%s272 + $0x64] sm:$0xf] %v570
        %635 = vst [vmem:[%s272 + $0x68] sm:$0xf] %v571
        %636 = vst [vmem:[%s272 + $0x6c] sm:$0xf] %v572
        %637 = vst [vmem:[%s272 + $0x70] sm:$0xf] %v573
        %638 = vst [vmem:[%s272 + $0x74] sm:$0xf] %v574
        %639 = vst [vmem:[%s272 + $0x78] sm:$0xf] %v575
        %640 = vst [vmem:[%s272 + $0x7c] sm:$0xf] %v576
        %641 = vst [vmem:[%s272 + $0x80] sm:$0xf] %v577
        %642 = vst [vmem:[%s272 + $0x84] sm:$0xf] %v578
        %643 = vst [vmem:[%s272 + $0x88] sm:$0xf] %v579
        %644 = vst [vmem:[%s272 + $0x8c] sm:$0xf] %v580
        %645 = vst [vmem:[%s272 + $0x90] sm:$0xf] %v581
        %646 = vst [vmem:[%s272 + $0x94] sm:$0xf] %v582
        %647 = vst [vmem:[%s272 + $0x98] sm:$0xf] %v583
        %648 = vst [vmem:[%s272 + $0x9c] sm:$0xf] %v584
        %649 = vst [vmem:[%s272 + $0xa0] sm:$0xf] %v585
        %650 = vst [vmem:[%s272 + $0xa4] sm:$0xf] %v586
        %651 = vst [vmem:[%s272 + $0xa8] sm:$0xf] %v587
        %652 = vst [vmem:[%s272 + $0xac] sm:$0xf] %v588
        %653 = vst [vmem:[%s272 + $0xb0] sm:$0xf] %v589
        %654 = vst [vmem:[%s272 + $0xb4] sm:$0xf] %v590
        %655 = vst [vmem:[%s272 + $0xb8] sm:$0xf] %v591
        %656 = vst [vmem:[%s272 + $0xbc] sm:$0xf] %v592
        %657 = vst [vmem:[%s272 + $0xc0] sm:$0xf] %v593
        %658 = vst [vmem:[%s272 + $0xc4] sm:$0xf] %v594
        %659 = vst [vmem:[%s272 + $0xc8] sm:$0xf] %v595
        %660 = vst [vmem:[%s272 + $0xcc] sm:$0xf] %v596
        %661 = vst [vmem:[%s272 + $0xd0] sm:$0xf] %v597
        %662 = vst [vmem:[%s272 + $0xd4] sm:$0xf] %v598
        %663 = vst [vmem:[%s272 + $0xd8] sm:$0xf] %v599
        %664 = vst [vmem:[%s272 + $0xdc] sm:$0xf] %v600
        %665 = vst [vmem:[%s272 + $0xe0] sm:$0xf] %v601
        %666 = vst [vmem:[%s272 + $0xe4] sm:$0xf] %v602
        %667 = vst [vmem:[%s272 + $0xe8] sm:$0xf] %v603
        %668 = vst [vmem:[%s272 + $0xec] sm:$0xf] %v604
        %669 = vst [vmem:[%s272 + $0xf0] sm:$0xf] %v605
        %670 = vst [vmem:[%s272 + $0xf4] sm:$0xf] %v606
        %671 = vst [vmem:[%s272 + $0xf8] sm:$0xf] %v607
        %672 = vst [vmem:[%s272 + $0xfc] sm:$0xf] %v608
        %s673 = sand.u32 %s125, 1
        %s674 = scalar_lea.sflag [#allocation4], %s673
        %s675 = sand.u32 %s125, 1
        %s676 = smul.addr %s675, 256
        %s677 = scalar_lea.vmem [#allocation8], %s676
        // Predicated region
        $region45: #{up_forward.5} parent=31 // pred_check
          %p678 = pneg %p135
        $region46: #{up_forward.5} parent=31 // pred_check_branch
          %680 = sbr.rel (%p678) target = $region48
        $region47: #{up_forward.5} parent=31 // pred_region
          %s681 = smul.u32 8, %s28
          %s683 = ssub.s32 4096, 4096
          %684 = vsyncadd %s674, %s683
          %s685 = smul.addr %s681, 8
          %s686 = smul.addr %s27, 64
          %s687 = sadd.s32 %s685, %s686
          %s688 = smul.addr %s687, 64
          %s689 = scalar_lea.hbm %s3, %s688
          %s690 = sshll.u32 %s677, 4
          %s691 = int_to_ptr.vmem [resolvable:$true] %s690
          %696 = dma.vmem_to_hbm [thread:$0]  %s691, 4096, %s689, %s674, 64, 64, 4
        $region48: #{up_forward.5} parent=31 // pred_fallthru
          _
      $region32: #{up_forward.5} parent=5 // pred_fallthru
        _
      %p697 = scmp.le.s32.totalorder 2, %s18
      // Predicated region
      $region49: #{up_forward.5} parent=5 // pred_check
        %p698 = pneg %p697
      $region50: #{up_forward.5} parent=5 // pred_check_branch
        %700 = sbr.rel (%p698) target = $region52
      $region51: #{up_forward.5} parent=5 // pred_region
        %s701 = ssub.s32 %s18, 2
        // Predicated region
        $region53: #{up_forward.5} parent=51 // pred_check
          %p702 = pneg %p141
        $region54: #{up_forward.5} parent=51 // pred_check_branch
          %704 = sbr.rel (%p702) target = $region56
        $region55: #{up_forward.5} parent=51 // pred_region
          %s705 = sand.u32 %s126, 1
          %s706 = scalar_lea.sflag [#allocation4], %s705
          %s707 = sand.u32 %s126, 1
          %s708 = smul.addr %s707, 256
          %s709 = scalar_lea.vmem [#allocation8], %s708
          %710 = dma.done %s706, 4096
        $region56: #{up_forward.5} parent=51 // pred_fallthru
          _
      $region52: #{up_forward.5} parent=5 // pred_fallthru
        _
    $region6: #{up_forward.5} parent=1 // loop_footer
      %s22 = sadd.s32 1, %s18
    $region7: #{up_forward.5} parent=1 // loop_footer_branch
      %17 = sbr.rel target = $region3
    $region8: #{up_forward.5} parent=1 // loop_exit
      _
    %711 = vsyncpa [#allocation3], 1
    %s712 = scalar_lea.sflag [#allocation3], 1
    %713 = vsyncpa %s712, 1
    %714 = vsyncpa [#allocation6], 1
    %s715 = scalar_lea.sflag [#allocation6], 1
    %716 = vsyncpa %s715, 1
    %717 = vsyncpa [#allocation4], 1
    %s718 = scalar_lea.sflag [#allocation4], 1
    %719 = vsyncpa %s718, 1

// kernel: up_forward.7
$region0: #{up_forward.7}
  #allocation0 [shape = 'u32[]', space=smem, size = 0x4, offset = 0x4, fixed_abs, tag = 'smem constant byte address 0x4 - core index']
  #allocation1 [shape = 'u32[144,128]{1,0:T(1,128)}', space=vmem, size = 0x12000, scoped, tag = 'internal scratch']
  %s0 = inlined_call_operand.hbm [shape: f32[2,8,8,8,128], index: 0, kind: input, shape index: {}]
  %s1 = inlined_call_operand.hbm [shape: f32[2,1,128], index: 1, kind: input, shape index: {}]
  %s2 = inlined_call_operand.hbm [shape: f32[2,1,128], index: 2, kind: input, shape index: {}]
  %s3 = inlined_call_operand.hbm [shape: f32[2,8,8,8,128], index: 3, kind: output, shape index: {}]
  %s4 = sld [smem:[#allocation0]]
  $region57: #{up_forward.7} parent=0
    _
  %s6 = ssub.s32 1, %s4
  %s7 = scalar_select 0, %s6, %s4
  $region1: #{up_forward.7} parent=0
    #allocation2 [shape = 'u8[524288]{0}', space=vmem, size = 0x80000, scoped, tag = 'input window, operand 0']
    #allocation3 [shape = 's32[2]{0}', space=sflag, size = 0x8, scoped, tag = 'scoped memory for up_forward.7']
    #allocation4 [shape = 's32[2]{0}', space=sflag, size = 0x8, scoped, tag = 'scoped memory for up_forward.7']
    #allocation5 [shape = 'u8[1024]{0}', space=vmem, size = 0x400, scoped, tag = 'input window, operand 1']
    #allocation6 [shape = 's32[2]{0}', space=sflag, size = 0x8, scoped, tag = 'scoped memory for up_forward.7']
    #allocation7 [shape = 'u8[1024]{0}', space=vmem, size = 0x400, scoped, tag = 'input window, operand 2']
    #allocation8 [shape = 'u8[524288]{0}', space=vmem, size = 0x80000, scoped, tag = 'output window, operand 0']
    %8 = vsyncpa [#allocation3], 0
    %s9 = scalar_lea.sflag [#allocation3], 1
    %10 = vsyncpa %s9, 0
    %11 = vsyncpa [#allocation6], 0
    %s12 = scalar_lea.sflag [#allocation6], 1
    %13 = vsyncpa %s12, 0
    %14 = vsyncpa [#allocation4], 0
    %s15 = scalar_lea.sflag [#allocation4], 1
    %16 = vsyncpa %s15, 0
    loop: start=0, step=1, limit=4
    $region2: #{up_forward.7} parent=1 // loop_pre_header
      _
    $region3: #{up_forward.7} parent=1 // loop_header
      %s18 = sphi 0, %s22
      %p19 = scmp.ge.s32.totalorder %s18, 4
      %s25 = sphi 0, %s37
      %s26 = sphi 0, %s33
      %s27 = sphi 0, %s25
      %s28 = sphi 0, %s26
      %s29 = sphi 0, %s27
      %s30 = sphi 0, %s28
      %s42 = sphi 0, %s44
      %s45 = sphi 0, %s42
      %s46 = sphi 0, %s45
      %s62 = sphi 0, %s46
      %s68 = sphi 0, %s70
      %s71 = sphi 0, %s68
      %s72 = sphi 0, %s71
      %s88 = sphi 0, %s72
      %s94 = sphi 0, %s96
      %s97 = sphi 0, %s94
      %s98 = sphi 0, %s97
      %s114 = sphi 0, %s98
      %s122 = sphi 0, %s124
      %s125 = sphi 0, %s122
      %s126 = sphi 0, %s125
      %s142 = sphi 0, %s126
    $region4: #{up_forward.7} parent=1 // loop_header_branch
      %21 = sbr.rel (%p19) target = $region8
    $region5: #{up_forward.7} parent=1 // loop_body
      %s23 = ssub.s32 %s18, 1
      %s24 = ssub.s32 %s18, 2
      %s31 = sadd.s32 1, %s26
      %p32 = scmp.ge.s32.totalorder %s31, 1
      %s33 = scalar_select %p32, 0, %s31
      %s34 = sadd.s32 1, %s25
      %s35 = scalar_select %p32, %s34, %s25
      %p36 = scmp.ge.s32.totalorder %s35, 2
      %s37 = scalar_select %p36, 0, %s35
      %s38 = ssub.s32 %s25, %s37
      %s39 = ssub.s32 %s26, %s33
      %s40 = sor.u32 %s38, %s39
      %p41 = scmp.eq.s32.totalorder %s40, 0
      %s43 = sadd.s32 %s42, 1
      %s44 = scalar_select %p41, %s42, %s43
      %p47 = pneg %p41
      %p48 = scmp.eq.s32.totalorder %s18, 1
      %p49 = por %p47, %p48
      %p50 = scmp.ne.s32.totalorder %s42, %s45
      %p51 = scmp.eq.s32.totalorder %s18, 0
      %p52 = por %p50, %p51
      %p53 = scmp.ne.s32.totalorder %s42, %s45
      %p54 = scmp.eq.s32.totalorder %s23, 1
      %p55 = por %p53, %p54
      %p56 = scmp.ne.s32.totalorder %s45, %s46
      %p57 = scmp.eq.s32.totalorder %s23, 0
      %p58 = por %p56, %p57
      %p59 = scmp.ne.s32.totalorder %s45, %s46
      %p60 = scmp.eq.s32.totalorder %s24, 1
      %p61 = por %p59, %p60
      %p63 = scmp.ne.s32.totalorder %s46, %s62
      %p64 = scmp.eq.s32.totalorder %s24, 0
      %p65 = por %p63, %p64
      %s66 = ssub.s32 %s25, %s37
      %p67 = scmp.eq.s32.totalorder %s66, 0
      %s69 = sadd.s32 %s68, 1
      %s70 = scalar_select %p67, %s68, %s69
      %p73 = pneg %p67
      %p74 = scmp.eq.s32.totalorder %s18, 1
      %p75 = por %p73, %p74
      %p76 = scmp.ne.s32.totalorder %s68, %s71
      %p77 = scmp.eq.s32.totalorder %s18, 0
      %p78 = por %p76, %p77
      %p79 = scmp.ne.s32.totalorder %s68, %s71
      %p80 = scmp.eq.s32.totalorder %s23, 1
      %p81 = por %p79, %p80
      %p82 = scmp.ne.s32.totalorder %s71, %s72
      %p83 = scmp.eq.s32.totalorder %s23, 0
      %p84 = por %p82, %p83
      %p85 = scmp.ne.s32.totalorder %s71, %s72
      %p86 = scmp.eq.s32.totalorder %s24, 1
      %p87 = por %p85, %p86
      %p89 = scmp.ne.s32.totalorder %s72, %s88
      %p90 = scmp.eq.s32.totalorder %s24, 0
      %p91 = por %p89, %p90
      %s92 = ssub.s32 %s25, %s37
      %p93 = scmp.eq.s32.totalorder %s92, 0
      %s95 = sadd.s32 %s94, 1
      %s96 = scalar_select %p93, %s94, %s95
      %p99 = pneg %p93
      %p100 = scmp.eq.s32.totalorder %s18, 1
      %p101 = por %p99, %p100
      %p102 = scmp.ne.s32.totalorder %s94, %s97
      %p103 = scmp.eq.s32.totalorder %s18, 0
      %p104 = por %p102, %p103
      %p105 = scmp.ne.s32.totalorder %s94, %s97
      %p106 = scmp.eq.s32.totalorder %s23, 1
      %p107 = por %p105, %p106
      %p108 = scmp.ne.s32.totalorder %s97, %s98
      %p109 = scmp.eq.s32.totalorder %s23, 0
      %p110 = por %p108, %p109
      %p111 = scmp.ne.s32.totalorder %s97, %s98
      %p112 = scmp.eq.s32.totalorder %s24, 1
      %p113 = por %p111, %p112
      %p115 = scmp.ne.s32.totalorder %s98, %s114
      %p116 = scmp.eq.s32.totalorder %s24, 0
      %p117 = por %p115, %p116
      %s118 = ssub.s32 %s25, %s37
      %s119 = ssub.s32 %s26, %s33
      %s120 = sor.u32 %s118, %s119
      %p121 = scmp.eq.s32.totalorder %s120, 0
      %s123 = sadd.s32 %s122, 1
      %s124 = scalar_select %p121, %s122, %s123
      %p127 = pneg %p121
      %p128 = scmp.eq.s32.totalorder %s18, 1
      %p129 = por %p127, %p128
      %p130 = scmp.ne.s32.totalorder %s122, %s125
      %p131 = scmp.eq.s32.totalorder %s18, 0
      %p132 = por %p130, %p131
      %p133 = scmp.ne.s32.totalorder %s122, %s125
      %p134 = scmp.eq.s32.totalorder %s23, 1
      %p135 = por %p133, %p134
      %p136 = scmp.ne.s32.totalorder %s125, %s126
      %p137 = scmp.eq.s32.totalorder %s23, 0
      %p138 = por %p136, %p137
      %p139 = scmp.ne.s32.totalorder %s125, %s126
      %p140 = scmp.eq.s32.totalorder %s24, 1
      %p141 = por %p139, %p140
      %p143 = scmp.ne.s32.totalorder %s126, %s142
      %p144 = scmp.eq.s32.totalorder %s24, 0
      %p145 = por %p143, %p144
      %p146 = scmp.le.s32.totalorder 1, %s18
      %p147 = scmp.lt.s32.totalorder %s18, 3
      %p148 = pnand %p146, %p147
      %p149 = pneg %p148
      // Predicated region
      $region9: #{up_forward.7} parent=5 // pred_check
        _
      $region10: #{up_forward.7} parent=5 // pred_check_branch
        %151 = sbr.rel (%p148) target = $region12
      $region11: #{up_forward.7} parent=5 // pred_region
        %s152 = ssub.s32 %s18, 1
      $region12: #{up_forward.7} parent=5 // pred_fallthru
        _
      %p153 = scmp.lt.s32.totalorder %s18, 2
      // Predicated region
      $region13: #{up_forward.7} parent=5 // pred_check
        %p154 = pneg %p153
      $region14: #{up_forward.7} parent=5 // pred_check_branch
        %156 = sbr.rel (%p154) target = $region16
      $region15: #{up_forward.7} parent=5 // pred_region
        // Predicated region
        $region17: #{up_forward.7} parent=15 // pred_check
          %p157 = pneg %p52
        $region18: #{up_forward.7} parent=15 // pred_check_branch
          %159 = sbr.rel (%p157) target = $region20
        $region19: #{up_forward.7} parent=15 // pred_region
          %s160 = sand.u32 %s42, 1
          %s161 = scalar_lea.sflag [#allocation3], %s160
          %s162 = sand.u32 %s42, 1
          %s163 = smul.addr %s162, 512
          %s164 = scalar_lea.vmem [#allocation2], %s163
          %s165 = smul.u32 8, %s26
          %s167 = ssub.s32 8192, 8192
          %168 = vsyncadd %s161, %s167
          %s169 = smul.addr %s165, 8
          %s170 = smul.addr %s25, 64
          %s171 = sadd.s32 %s169, %s170
          %s172 = smul.addr %s171, 128
          %s173 = scalar_lea.hbm %s0, %s172
          %s174 = sshll.u32 %s164, 4
          %s175 = int_to_ptr.vmem [resolvable:$true] %s174
          %180 = dma.hbm_to_vmem [thread:$0]  %s173, 8192, %s175, %s161, 128, 128, 8
        $region20: #{up_forward.7} parent=15 // pred_fallthru
          _
        // Predicated region
        $region21: #{up_forward.7} parent=15 // pred_check
          %p181 = pneg %p78
        $region22: #{up_forward.7} parent=15 // pred_check_branch
          %183 = sbr.rel (%p181) target = $region24
        $region23: #{up_forward.7} parent=15 // pred_region
          %s184 = sand.u32 %s18, 1
          %s185 = scalar_lea.sflag [#allocation6], %s184
          %s186 = sand.u32 %s68, 1
          %s187 = scalar_lea.vmem [#allocation5], %s186
          %s189 = ssub.s32 16, 16
          %190 = vsyncadd %s185, %s189
          %s191 = smul.addr %s25, 16
          %s192 = scalar_lea.hbm %s1, %s191
          %s194 = sshll.u32 %s187, 4
          %s195 = int_to_ptr.vmem [resolvable:$true] %s194
          %197 = dma.hbm_to_vmem [thread:$0]  %s192, 16, %s195, %s185
        $region24: #{up_forward.7} parent=15 // pred_fallthru
          _
        // Predicated region
        $region25: #{up_forward.7} parent=15 // pred_check
          %p198 = pneg %p104
        $region26: #{up_forward.7} parent=15 // pred_check_branch
          %200 = sbr.rel (%p198) target = $region28
        $region27: #{up_forward.7} parent=15 // pred_region
          %s201 = sand.u32 %s18, 1
          %s202 = scalar_lea.sflag [#allocation6], %s201
          %s203 = sand.u32 %s94, 1
          %s204 = scalar_lea.vmem [#allocation7], %s203
          %s206 = ssub.s32 16, 16
          %207 = vsyncadd %s202, %s206
          %s208 = smul.addr %s25, 16
          %s209 = scalar_lea.hbm %s2, %s208
          %s211 = sshll.u32 %s204, 4
          %s212 = int_to_ptr.vmem [resolvable:$true] %s211
          %214 = dma.hbm_to_vmem [thread:$0]  %s209, 16, %s212, %s202
        $region28: #{up_forward.7} parent=15 // pred_fallthru
          _
      $region16: #{up_forward.7} parent=5 // pred_fallthru
        _
      %p215 = scmp.le.s32.totalorder 1, %s18
      %p216 = scmp.lt.s32.totalorder %s18, 3
      %p217 = pnand %p215, %p216
      %p218 = pneg %p217
      // Predicated region
      $region29: #{up_forward.7} parent=5 // pred_check
        _
      $region30: #{up_forward.7} parent=5 // pred_check_branch
        %220 = sbr.rel (%p217) target = $region32
      $region31: #{up_forward.7} parent=5 // pred_region
        %s221 = ssub.s32 %s18, 1
        %s222 = sand.u32 %s45, 1
        %s223 = scalar_lea.sflag [#allocation3], %s222
        %s224 = sand.u32 %s45, 1
        %s225 = smul.addr %s224, 512
        %s226 = scalar_lea.vmem [#allocation2], %s225
        // Predicated region
        $region33: #{up_forward.7} parent=31 // pred_check
          %p227 = pneg %p58
        $region34: #{up_forward.7} parent=31 // pred_check_branch
          %229 = sbr.rel (%p227) target = $region36
        $region35: #{up_forward.7} parent=31 // pred_region
          %230 = dma.done %s223, 8192
        $region36: #{up_forward.7} parent=31 // pred_fallthru
          _
        %s231 = sand.u32 %s23, 1
        %s232 = scalar_lea.sflag [#allocation6], %s231
        %s233 = sand.u32 %s71, 1
        %s234 = scalar_lea.vmem [#allocation5], %s233
        // Predicated region
        $region37: #{up_forward.7} parent=31 // pred_check
          %p235 = pneg %p84
        $region38: #{up_forward.7} parent=31 // pred_check_branch
          %237 = sbr.rel (%p235) target = $region40
        $region39: #{up_forward.7} parent=31 // pred_region
          %238 = dma.done %s232, 16
        $region40: #{up_forward.7} parent=31 // pred_fallthru
          _
        %s239 = sand.u32 %s23, 1
        %s240 = scalar_lea.sflag [#allocation6], %s239
        %s241 = sand.u32 %s97, 1
        %s242 = scalar_lea.vmem [#allocation7], %s241
        // Predicated region
        $region41: #{up_forward.7} parent=31 // pred_check
          %p243 = pneg %p110
        $region42: #{up_forward.7} parent=31 // pred_check_branch
          %245 = sbr.rel (%p243) target = $region44
        $region43: #{up_forward.7} parent=31 // pred_region
          %246 = dma.done %s240, 16
        $region44: #{up_forward.7} parent=31 // pred_fallthru
          _
        %s247 = sand.u32 %s45, 1
        %s248 = scalar_lea.sflag [#allocation3], %s247
        %s249 = sand.u32 %s45, 1
        %s250 = smul.addr %s249, 512
        %s251 = scalar_lea.vmem [#allocation2], %s250
        %p252 = pneg %p58
        %p253 = pneg %p55
        %s254 = sand.u32 %s23, 1
        %s255 = scalar_lea.sflag [#allocation6], %s254
        %s256 = sand.u32 %s71, 1
        %s257 = scalar_lea.vmem [#allocation5], %s256
        %p258 = pneg %p84
        %p259 = pneg %p81
        %s260 = sand.u32 %s23, 1
        %s261 = scalar_lea.sflag [#allocation6], %s260
        %s262 = sand.u32 %s97, 1
        %s263 = scalar_lea.vmem [#allocation7], %s262
        %p264 = pneg %p110
        %p265 = pneg %p107
        %p266 = pneg %p138
        %p267 = pneg %p135
        %s268 = sand.u32 %s125, 1
        %s269 = scalar_lea.sflag [#allocation4], %s268
        %s270 = sand.u32 %s125, 1
        %s271 = smul.addr %s270, 512
        %s272 = scalar_lea.vmem [#allocation8], %s271
        %s273 = smul.u32 8, %s28
        %s274 = smul.u32 8, %s28
        %v275 = vld [vmem:[%s226] sm:$0xff]
        %v276 = vld [vmem:[%s226 + $0x8] sm:$0xff]
        %v277 = vld [vmem:[%s226 + $0x10] sm:$0xff]
        %v278 = vld [vmem:[%s226 + $0x18] sm:$0xff]
        %v279 = vld [vmem:[%s226 + $0x20] sm:$0xff]
        %v280 = vld [vmem:[%s226 + $0x28] sm:$0xff]
        %v281 = vld [vmem:[%s226 + $0x30] sm:$0xff]
        %v282 = vld [vmem:[%s226 + $0x38] sm:$0xff]
        %v283 = vld [vmem:[%s226 + $0x40] sm:$0xff]
        %v284 = vld [vmem:[%s226 + $0x48] sm:$0xff]
        %v285 = vld [vmem:[%s226 + $0x50] sm:$0xff]
        %v286 = vld [vmem:[%s226 + $0x58] sm:$0xff]
        %v287 = vld [vmem:[%s226 + $0x60] sm:$0xff]
        %v288 = vld [vmem:[%s226 + $0x68] sm:$0xff]
        %v289 = vld [vmem:[%s226 + $0x70] sm:$0xff]
        %v290 = vld [vmem:[%s226 + $0x78] sm:$0xff]
        %v291 = vld [vmem:[%s226 + $0x80] sm:$0xff]
        %v292 = vld [vmem:[%s226 + $0x88] sm:$0xff]
        %v293 = vld [vmem:[%s226 + $0x90] sm:$0xff]
        %v294 = vld [vmem:[%s226 + $0x98] sm:$0xff]
        %v295 = vld [vmem:[%s226 + $0xa0] sm:$0xff]
        %v296 = vld [vmem:[%s226 + $0xa8] sm:$0xff]
        %v297 = vld [vmem:[%s226 + $0xb0] sm:$0xff]
        %v298 = vld [vmem:[%s226 + $0xb8] sm:$0xff]
        %v299 = vld [vmem:[%s226 + $0xc0] sm:$0xff]
        %v300 = vld [vmem:[%s226 + $0xc8] sm:$0xff]
        %v301 = vld [vmem:[%s226 + $0xd0] sm:$0xff]
        %v302 = vld [vmem:[%s226 + $0xd8] sm:$0xff]
        %v303 = vld [vmem:[%s226 + $0xe0] sm:$0xff]
        %v304 = vld [vmem:[%s226 + $0xe8] sm:$0xff]
        %v305 = vld [vmem:[%s226 + $0xf0] sm:$0xff]
        %v306 = vld [vmem:[%s226 + $0xf8] sm:$0xff]
        %v307 = vld [vmem:[%s226 + $0x100] sm:$0xff]
        %v308 = vld [vmem:[%s226 + $0x108] sm:$0xff]
        %v309 = vld [vmem:[%s226 + $0x110] sm:$0xff]
        %v310 = vld [vmem:[%s226 + $0x118] sm:$0xff]
        %v311 = vld [vmem:[%s226 + $0x120] sm:$0xff]
        %v312 = vld [vmem:[%s226 + $0x128] sm:$0xff]
        %v313 = vld [vmem:[%s226 + $0x130] sm:$0xff]
        %v314 = vld [vmem:[%s226 + $0x138] sm:$0xff]
        %v315 = vld [vmem:[%s226 + $0x140] sm:$0xff]
        %v316 = vld [vmem:[%s226 + $0x148] sm:$0xff]
        %v317 = vld [vmem:[%s226 + $0x150] sm:$0xff]
        %v318 = vld [vmem:[%s226 + $0x158] sm:$0xff]
        %v319 = vld [vmem:[%s226 + $0x160] sm:$0xff]
        %v320 = vld [vmem:[%s226 + $0x168] sm:$0xff]
        %v321 = vld [vmem:[%s226 + $0x170] sm:$0xff]
        %v322 = vld [vmem:[%s226 + $0x178] sm:$0xff]
        %v323 = vld [vmem:[%s226 + $0x180] sm:$0xff]
        %v324 = vld [vmem:[%s226 + $0x188] sm:$0xff]
        %v325 = vld [vmem:[%s226 + $0x190] sm:$0xff]
        %v326 = vld [vmem:[%s226 + $0x198] sm:$0xff]
        %v327 = vld [vmem:[%s226 + $0x1a0] sm:$0xff]
        %v328 = vld [vmem:[%s226 + $0x1a8] sm:$0xff]
        %v329 = vld [vmem:[%s226 + $0x1b0] sm:$0xff]
        %v330 = vld [vmem:[%s226 + $0x1b8] sm:$0xff]
        %v331 = vld [vmem:[%s226 + $0x1c0] sm:$0xff]
        %v332 = vld [vmem:[%s226 + $0x1c8] sm:$0xff]
        %v333 = vld [vmem:[%s226 + $0x1d0] sm:$0xff]
        %v334 = vld [vmem:[%s226 + $0x1d8] sm:$0xff]
        %v335 = vld [vmem:[%s226 + $0x1e0] sm:$0xff]
        %v336 = vld [vmem:[%s226 + $0x1e8] sm:$0xff]
        %v337 = vld [vmem:[%s226 + $0x1f0] sm:$0xff]
        %v338 = vld [vmem:[%s226 + $0x1f8] sm:$0xff]
        %v339 = vld [vmem:[%s234] sm:$0x1]
        %v341 = vlaneseq
        %v342 = vshrl.u32 %v341, 7
        %v343 = vsub.s32 0, %v342
        %v344 = vrot.slane %v339, %v343
        %v346 = vmul.f32 %v275, %v344
        %v347 = vmul.f32 %v276, %v344
        %v348 = vmul.f32 %v277, %v344
        %v349 = vmul.f32 %v278, %v344
        %v350 = vmul.f32 %v279, %v344
        %v351 = vmul.f32 %v280, %v344
        %v352 = vmul.f32 %v281, %v344
        %v353 = vmul.f32 %v282, %v344
        %v354 = vmul.f32 %v283, %v344
        %v355 = vmul.f32 %v284, %v344
        %v356 = vmul.f32 %v285, %v344
        %v357 = vmul.f32 %v286, %v344
        %v358 = vmul.f32 %v287, %v344
        %v359 = vmul.f32 %v288, %v344
        %v360 = vmul.f32 %v289, %v344
        %v361 = vmul.f32 %v290, %v344
        %v362 = vmul.f32 %v291, %v344
        %v363 = vmul.f32 %v292, %v344
        %v364 = vmul.f32 %v293, %v344
        %v365 = vmul.f32 %v294, %v344
        %v366 = vmul.f32 %v295, %v344
        %v367 = vmul.f32 %v296, %v344
        %v368 = vmul.f32 %v297, %v344
        %v369 = vmul.f32 %v298, %v344
        %v370 = vmul.f32 %v299, %v344
        %v371 = vmul.f32 %v300, %v344
        %v372 = vmul.f32 %v301, %v344
        %v373 = vmul.f32 %v302, %v344
        %v374 = vmul.f32 %v303, %v344
        %v375 = vmul.f32 %v304, %v344
        %v376 = vmul.f32 %v305, %v344
        %v377 = vmul.f32 %v306, %v344
        %v378 = vmul.f32 %v307, %v344
        %v379 = vmul.f32 %v308, %v344
        %v380 = vmul.f32 %v309, %v344
        %v381 = vmul.f32 %v310, %v344
        %v382 = vmul.f32 %v311, %v344
        %v383 = vmul.f32 %v312, %v344
        %v384 = vmul.f32 %v313, %v344
        %v385 = vmul.f32 %v314, %v344
        %v386 = vmul.f32 %v315, %v344
        %v387 = vmul.f32 %v316, %v344
        %v388 = vmul.f32 %v317, %v344
        %v389 = vmul.f32 %v318, %v344
        %v390 = vmul.f32 %v319, %v344
        %v391 = vmul.f32 %v320, %v344
        %v392 = vmul.f32 %v321, %v344
        %v393 = vmul.f32 %v322, %v344
        %v394 = vmul.f32 %v323, %v344
        %v395 = vmul.f32 %v324, %v344
        %v396 = vmul.f32 %v325, %v344
        %v397 = vmul.f32 %v326, %v344
        %v398 = vmul.f32 %v327, %v344
        %v399 = vmul.f32 %v328, %v344
        %v400 = vmul.f32 %v329, %v344
        %v401 = vmul.f32 %v330, %v344
        %v402 = vmul.f32 %v331, %v344
        %v403 = vmul.f32 %v332, %v344
        %v404 = vmul.f32 %v333, %v344
        %v405 = vmul.f32 %v334, %v344
        %v406 = vmul.f32 %v335, %v344
        %v407 = vmul.f32 %v336, %v344
        %v408 = vmul.f32 %v337, %v344
        %v409 = vmul.f32 %v338, %v344
        %v410 = vld [vmem:[%s242] sm:$0x1]
        %v412 = vlaneseq
        %v413 = vshrl.u32 %v412, 7
        %v414 = vsub.s32 0, %v413
        %v415 = vrot.slane %v410, %v414
        %v417 = vadd.f32 %v346, %v415
        %v418 = vadd.f32 %v347, %v415
        %v419 = vadd.f32 %v348, %v415
        %v420 = vadd.f32 %v349, %v415
        %v421 = vadd.f32 %v350, %v415
        %v422 = vadd.f32 %v351, %v415
        %v423 = vadd.f32 %v352, %v415
        %v424 = vadd.f32 %v353, %v415
        %v425 = vadd.f32 %v354, %v415
        %v426 = vadd.f32 %v355, %v415
        %v427 = vadd.f32 %v356, %v415
        %v428 = vadd.f32 %v357, %v415
        %v429 = vadd.f32 %v358, %v415
        %v430 = vadd.f32 %v359, %v415
        %v431 = vadd.f32 %v360, %v415
        %v432 = vadd.f32 %v361, %v415
        %v433 = vadd.f32 %v362, %v415
        %v434 = vadd.f32 %v363, %v415
        %v435 = vadd.f32 %v364, %v415
        %v436 = vadd.f32 %v365, %v415
        %v437 = vadd.f32 %v366, %v415
        %v438 = vadd.f32 %v367, %v415
        %v439 = vadd.f32 %v368, %v415
        %v440 = vadd.f32 %v369, %v415
        %v441 = vadd.f32 %v370, %v415
        %v442 = vadd.f32 %v371, %v415
        %v443 = vadd.f32 %v372, %v415
        %v444 = vadd.f32 %v373, %v415
        %v445 = vadd.f32 %v374, %v415
        %v446 = vadd.f32 %v375, %v415
        %v447 = vadd.f32 %v376, %v415
        %v448 = vadd.f32 %v377, %v415
        %v449 = vadd.f32 %v378, %v415
        %v450 = vadd.f32 %v379, %v415
        %v451 = vadd.f32 %v380, %v415
        %v452 = vadd.f32 %v381, %v415
        %v453 = vadd.f32 %v382, %v415
        %v454 = vadd.f32 %v383, %v415
        %v455 = vadd.f32 %v384, %v415
        %v456 = vadd.f32 %v385, %v415
        %v457 = vadd.f32 %v386, %v415
        %v458 = vadd.f32 %v387, %v415
        %v459 = vadd.f32 %v388, %v415
        %v460 = vadd.f32 %v389, %v415
        %v461 = vadd.f32 %v390, %v415
        %v462 = vadd.f32 %v391, %v415
        %v463 = vadd.f32 %v392, %v415
        %v464 = vadd.f32 %v393, %v415
        %v465 = vadd.f32 %v394, %v415
        %v466 = vadd.f32 %v395, %v415
        %v467 = vadd.f32 %v396, %v415
        %v468 = vadd.f32 %v397, %v415
        %v469 = vadd.f32 %v398, %v415
        %v470 = vadd.f32 %v399, %v415
        %v471 = vadd.f32 %v400, %v415
        %v472 = vadd.f32 %v401, %v415
        %v473 = vadd.f32 %v402, %v415
        %v474 = vadd.f32 %v403, %v415
        %v475 = vadd.f32 %v404, %v415
        %v476 = vadd.f32 %v405, %v415
        %v477 = vadd.f32 %v406, %v415
        %v478 = vadd.f32 %v407, %v415
        %v479 = vadd.f32 %v408, %v415
        %v480 = vadd.f32 %v409, %v415
        %v481 = vmax.f32 %v417, 0.0
        %v482 = vmax.f32 %v418, 0.0
        %v483 = vmax.f32 %v419, 0.0
        %v484 = vmax.f32 %v420, 0.0
        %v485 = vmax.f32 %v421, 0.0
        %v486 = vmax.f32 %v422, 0.0
        %v487 = vmax.f32 %v423, 0.0
        %v488 = vmax.f32 %v424, 0.0
        %v489 = vmax.f32 %v425, 0.0
        %v490 = vmax.f32 %v426, 0.0
        %v491 = vmax.f32 %v427, 0.0
        %v492 = vmax.f32 %v428, 0.0
        %v493 = vmax.f32 %v429, 0.0
        %v494 = vmax.f32 %v430, 0.0
        %v495 = vmax.f32 %v431, 0.0
        %v496 = vmax.f32 %v432, 0.0
        %v497 = vmax.f32 %v433, 0.0
        %v498 = vmax.f32 %v434, 0.0
        %v499 = vmax.f32 %v435, 0.0
        %v500 = vmax.f32 %v436, 0.0
        %v501 = vmax.f32 %v437, 0.0
        %v502 = vmax.f32 %v438, 0.0
        %v503 = vmax.f32 %v439, 0.0
        %v504 = vmax.f32 %v440, 0.0
        %v505 = vmax.f32 %v441, 0.0
        %v506 = vmax.f32 %v442, 0.0
        %v507 = vmax.f32 %v443, 0.0
        %v508 = vmax.f32 %v444, 0.0
        %v509 = vmax.f32 %v445, 0.0
        %v510 = vmax.f32 %v446, 0.0
        %v511 = vmax.f32 %v447, 0.0
        %v512 = vmax.f32 %v448, 0.0
        %v513 = vmax.f32 %v449, 0.0
        %v514 = vmax.f32 %v450, 0.0
        %v515 = vmax.f32 %v451, 0.0
        %v516 = vmax.f32 %v452, 0.0
        %v517 = vmax.f32 %v453, 0.0
        %v518 = vmax.f32 %v454, 0.0
        %v519 = vmax.f32 %v455, 0.0
        %v520 = vmax.f32 %v456, 0.0
        %v521 = vmax.f32 %v457, 0.0
        %v522 = vmax.f32 %v458, 0.0
        %v523 = vmax.f32 %v459, 0.0
        %v524 = vmax.f32 %v460, 0.0
        %v525 = vmax.f32 %v461, 0.0
        %v526 = vmax.f32 %v462, 0.0
        %v527 = vmax.f32 %v463, 0.0
        %v528 = vmax.f32 %v464, 0.0
        %v529 = vmax.f32 %v465, 0.0
        %v530 = vmax.f32 %v466, 0.0
        %v531 = vmax.f32 %v467, 0.0
        %v532 = vmax.f32 %v468, 0.0
        %v533 = vmax.f32 %v469, 0.0
        %v534 = vmax.f32 %v470, 0.0
        %v535 = vmax.f32 %v471, 0.0
        %v536 = vmax.f32 %v472, 0.0
        %v537 = vmax.f32 %v473, 0.0
        %v538 = vmax.f32 %v474, 0.0
        %v539 = vmax.f32 %v475, 0.0
        %v540 = vmax.f32 %v476, 0.0
        %v541 = vmax.f32 %v477, 0.0
        %v542 = vmax.f32 %v478, 0.0
        %v543 = vmax.f32 %v479, 0.0
        %v544 = vmax.f32 %v480, 0.0
        %545 = vst [vmem:[%s272] sm:$0xff] %v481
        %546 = vst [vmem:[%s272 + $0x8] sm:$0xff] %v482
        %547 = vst [vmem:[%s272 + $0x10] sm:$0xff] %v483
        %548 = vst [vmem:[%s272 + $0x18] sm:$0xff] %v484
        %549 = vst [vmem:[%s272 + $0x20] sm:$0xff] %v485
        %550 = vst [vmem:[%s272 + $0x28] sm:$0xff] %v486
        %551 = vst [vmem:[%s272 + $0x30] sm:$0xff] %v487
        %552 = vst [vmem:[%s272 + $0x38] sm:$0xff] %v488
        %553 = vst [vmem:[%s272 + $0x40] sm:$0xff] %v489
        %554 = vst [vmem:[%s272 + $0x48] sm:$0xff] %v490
        %555 = vst [vmem:[%s272 + $0x50] sm:$0xff] %v491
        %556 = vst [vmem:[%s272 + $0x58] sm:$0xff] %v492
        %557 = vst [vmem:[%s272 + $0x60] sm:$0xff] %v493
        %558 = vst [vmem:[%s272 + $0x68] sm:$0xff] %v494
        %559 = vst [vmem:[%s272 + $0x70] sm:$0xff] %v495
        %560 = vst [vmem:[%s272 + $0x78] sm:$0xff] %v496
        %561 = vst [vmem:[%s272 + $0x80] sm:$0xff] %v497
        %562 = vst [vmem:[%s272 + $0x88] sm:$0xff] %v498
        %563 = vst [vmem:[%s272 + $0x90] sm:$0xff] %v499
        %564 = vst [vmem:[%s272 + $0x98] sm:$0xff] %v500
        %565 = vst [vmem:[%s272 + $0xa0] sm:$0xff] %v501
        %566 = vst [vmem:[%s272 + $0xa8] sm:$0xff] %v502
        %567 = vst [vmem:[%s272 + $0xb0] sm:$0xff] %v503
        %568 = vst [vmem:[%s272 + $0xb8] sm:$0xff] %v504
        %569 = vst [vmem:[%s272 + $0xc0] sm:$0xff] %v505
        %570 = vst [vmem:[%s272 + $0xc8] sm:$0xff] %v506
        %571 = vst [vmem:[%s272 + $0xd0] sm:$0xff] %v507
        %572 = vst [vmem:[%s272 + $0xd8] sm:$0xff] %v508
        %573 = vst [vmem:[%s272 + $0xe0] sm:$0xff] %v509
        %574 = vst [vmem:[%s272 + $0xe8] sm:$0xff] %v510
        %575 = vst [vmem:[%s272 + $0xf0] sm:$0xff] %v511
        %576 = vst [vmem:[%s272 + $0xf8] sm:$0xff] %v512
        %577 = vst [vmem:[%s272 + $0x100] sm:$0xff] %v513
        %578 = vst [vmem:[%s272 + $0x108] sm:$0xff] %v514
        %579 = vst [vmem:[%s272 + $0x110] sm:$0xff] %v515
        %580 = vst [vmem:[%s272 + $0x118] sm:$0xff] %v516
        %581 = vst [vmem:[%s272 + $0x120] sm:$0xff] %v517
        %582 = vst [vmem:[%s272 + $0x128] sm:$0xff] %v518
        %583 = vst [vmem:[%s272 + $0x130] sm:$0xff] %v519
        %584 = vst [vmem:[%s272 + $0x138] sm:$0xff] %v520
        %585 = vst [vmem:[%s272 + $0x140] sm:$0xff] %v521
        %586 = vst [vmem:[%s272 + $0x148] sm:$0xff] %v522
        %587 = vst [vmem:[%s272 + $0x150] sm:$0xff] %v523
        %588 = vst [vmem:[%s272 + $0x158] sm:$0xff] %v524
        %589 = vst [vmem:[%s272 + $0x160] sm:$0xff] %v525
        %590 = vst [vmem:[%s272 + $0x168] sm:$0xff] %v526
        %591 = vst [vmem:[%s272 + $0x170] sm:$0xff] %v527
        %592 = vst [vmem:[%s272 + $0x178] sm:$0xff] %v528
        %593 = vst [vmem:[%s272 + $0x180] sm:$0xff] %v529
        %594 = vst [vmem:[%s272 + $0x188] sm:$0xff] %v530
        %595 = vst [vmem:[%s272 + $0x190] sm:$0xff] %v531
        %596 = vst [vmem:[%s272 + $0x198] sm:$0xff] %v532
        %597 = vst [vmem:[%s272 + $0x1a0] sm:$0xff] %v533
        %598 = vst [vmem:[%s272 + $0x1a8] sm:$0xff] %v534
        %599 = vst [vmem:[%s272 + $0x1b0] sm:$0xff] %v535
        %600 = vst [vmem:[%s272 + $0x1b8] sm:$0xff] %v536
        %601 = vst [vmem:[%s272 + $0x1c0] sm:$0xff] %v537
        %602 = vst [vmem:[%s272 + $0x1c8] sm:$0xff] %v538
        %603 = vst [vmem:[%s272 + $0x1d0] sm:$0xff] %v539
        %604 = vst [vmem:[%s272 + $0x1d8] sm:$0xff] %v540
        %605 = vst [vmem:[%s272 + $0x1e0] sm:$0xff] %v541
        %606 = vst [vmem:[%s272 + $0x1e8] sm:$0xff] %v542
        %607 = vst [vmem:[%s272 + $0x1f0] sm:$0xff] %v543
        %608 = vst [vmem:[%s272 + $0x1f8] sm:$0xff] %v544
        %s609 = sand.u32 %s125, 1
        %s610 = scalar_lea.sflag [#allocation4], %s609
        %s611 = sand.u32 %s125, 1
        %s612 = smul.addr %s611, 512
        %s613 = scalar_lea.vmem [#allocation8], %s612
        // Predicated region
        $region45: #{up_forward.7} parent=31 // pred_check
          %p614 = pneg %p135
        $region46: #{up_forward.7} parent=31 // pred_check_branch
          %616 = sbr.rel (%p614) target = $region48
        $region47: #{up_forward.7} parent=31 // pred_region
          %s617 = smul.u32 8, %s28
          %s619 = ssub.s32 8192, 8192
          %620 = vsyncadd %s610, %s619
          %s621 = smul.addr %s617, 8
          %s622 = smul.addr %s27, 64
          %s623 = sadd.s32 %s621, %s622
          %s624 = smul.addr %s623, 128
          %s625 = scalar_lea.hbm %s3, %s624
          %s626 = sshll.u32 %s613, 4
          %s627 = int_to_ptr.vmem [resolvable:$true] %s626
          %632 = dma.vmem_to_hbm [thread:$0]  %s627, 8192, %s625, %s610, 128, 128, 8
        $region48: #{up_forward.7} parent=31 // pred_fallthru
          _
      $region32: #{up_forward.7} parent=5 // pred_fallthru
        _
      %p633 = scmp.le.s32.totalorder 2, %s18
      // Predicated region
      $region49: #{up_forward.7} parent=5 // pred_check
        %p634 = pneg %p633
      $region50: #{up_forward.7} parent=5 // pred_check_branch
        %636 = sbr.rel (%p634) target = $region52
      $region51: #{up_forward.7} parent=5 // pred_region
        %s637 = ssub.s32 %s18, 2
        // Predicated region
        $region53: #{up_forward.7} parent=51 // pred_check
          %p638 = pneg %p141
        $region54: #{up_forward.7} parent=51 // pred_check_branch
          %640 = sbr.rel (%p638) target = $region56
        $region55: #{up_forward.7} parent=51 // pred_region
          %s641 = sand.u32 %s126, 1
          %s642 = scalar_lea.sflag [#allocation4], %s641
          %s643 = sand.u32 %s126, 1
          %s644 = smul.addr %s643, 512
          %s645 = scalar_lea.vmem [#allocation8], %s644
          %646 = dma.done %s642, 8192
        $region56: #{up_forward.7} parent=51 // pred_fallthru
          _
      $region52: #{up_forward.7} parent=5 // pred_fallthru
        _
    $region6: #{up_forward.7} parent=1 // loop_footer
      %s22 = sadd.s32 1, %s18
    $region7: #{up_forward.7} parent=1 // loop_footer_branch
      %17 = sbr.rel target = $region3
    $region8: #{up_forward.7} parent=1 // loop_exit
      _
    %647 = vsyncpa [#allocation3], 1
    %s648 = scalar_lea.sflag [#allocation3], 1
    %649 = vsyncpa %s648, 1
    %650 = vsyncpa [#allocation6], 1
    %s651 = scalar_lea.sflag [#allocation6], 1
    %652 = vsyncpa %s651, 1
    %653 = vsyncpa [#allocation4], 1
    %s654 = scalar_lea.sflag [#allocation4], 1
    %655 = vsyncpa %s654, 1

// kernel: up_forward.4
$region0: #{up_forward.4}
  #allocation0 [shape = 'u32[]', space=smem, size = 0x4, offset = 0x4, fixed_abs, tag = 'smem constant byte address 0x4 - core index']
  #allocation1 [shape = 'u32[144,128]{1,0:T(1,128)}', space=vmem, size = 0x12000, scoped, tag = 'internal scratch']
  %s0 = inlined_call_operand.hbm [shape: bf16[2,8,10,10,24], index: 0, kind: input, shape index: {}]
  %s1 = inlined_call_operand.hbm [shape: bf16[3,3,24,128], index: 1, kind: input, shape index: {}]
  %s2 = inlined_call_operand.hbm [shape: f32[1,128], index: 2, kind: input, shape index: {}]
  %s3 = inlined_call_operand.hbm [shape: f32[2,8,8,8,128], index: 3, kind: output, shape index: {0}]
  %s4 = inlined_call_operand.hbm [shape: f32[2,1,2,128], index: 4, kind: output, shape index: {1}]
  %5 = xla_tuple %s3, %s4
  %s6 = sld [smem:[#allocation0]]
  $region65: #{up_forward.4} parent=0
    _
  %s8 = ssub.s32 1, %s6
  %s9 = scalar_select 0, %s8, %s6
  $region1: #{up_forward.4} parent=0
    #allocation2 [shape = 'u8[655360]{0}', space=vmem, size = 0xa0000, scoped, tag = 'input window, operand 0']
    #allocation3 [shape = 's32[2]{0}', space=sflag, size = 0x8, scoped, tag = 'scoped memory for up_forward.4']
    #allocation4 [shape = 's32[2]{0}', space=sflag, size = 0x8, scoped, tag = 'scoped memory for up_forward.4']
    #allocation5 [shape = 'u8[55296]{0}', space=vmem, size = 0xd800, scoped, tag = 'input window, operand 1, single buffered']
    #allocation6 [shape = 's32[1]{0}', space=sflag, size = 0x4, scoped, tag = 'scoped memory for up_forward.4']
    #allocation7 [shape = 'u8[512]{0}', space=vmem, size = 0x400, scoped, tag = 'input window, operand 2, single buffered']
    #allocation8 [shape = 'u8[524288]{0}', space=vmem, size = 0x80000, scoped, tag = 'output window, operand 0']
    #allocation9 [shape = 'u8[2048]{0}', space=vmem, size = 0x800, scoped, tag = 'output window, operand 1']
    #allocation10 [shape = 's32[2]{0}', space=sflag, size = 0x8, scoped, tag = 'scoped memory for up_forward.4']
    %10 = vsyncpa [#allocation3], 0
    %s11 = scalar_lea.sflag [#allocation3], 1
    %12 = vsyncpa %s11, 0
    %13 = vsyncpa [#allocation6], 0
    %14 = vsyncpa [#allocation4], 0
    %s15 = scalar_lea.sflag [#allocation4], 1
    %16 = vsyncpa %s15, 0
    %17 = vsyncpa [#allocation10], 0
    %s18 = scalar_lea.sflag [#allocation10], 1
    %19 = vsyncpa %s18, 0
    loop: start=0, step=1, limit=4
    $region2: #{up_forward.4} parent=1 // loop_pre_header
      _
    $region3: #{up_forward.4} parent=1 // loop_header
      %s21 = sphi 0, %s25
      %p22 = scmp.ge.s32.totalorder %s21, 4
      %s28 = sphi 0, %s40
      %s29 = sphi 0, %s36
      %s30 = sphi 0, %s28
      %s31 = sphi 0, %s29
      %s32 = sphi 0, %s30
      %s33 = sphi 0, %s31
      %s45 = sphi 0, %s47
      %s48 = sphi 0, %s45
      %s49 = sphi 0, %s48
      %s65 = sphi 0, %s49
      %s69 = sphi 0, %s69
      %s71 = sphi 0, %s69
      %s72 = sphi 0, %s71
      %s86 = sphi 0, %s72
      %s90 = sphi 0, %s90
      %s92 = sphi 0, %s90
      %s93 = sphi 0, %s92
      %s107 = sphi 0, %s93
      %s115 = sphi 0, %s117
      %s118 = sphi 0, %s115
      %s119 = sphi 0, %s118
      %s135 = sphi 0, %s119
      %s143 = sphi 0, %s145
      %s146 = sphi 0, %s143
      %s147 = sphi 0, %s146
      %s163 = sphi 0, %s147
    $region4: #{up_forward.4} parent=1 // loop_header_branch
      %24 = sbr.rel (%p22) target = $region8
    $region5: #{up_forward.4} parent=1 // loop_body
      %s26 = ssub.s32 %s21, 1
      %s27 = ssub.s32 %s21, 2
      %s34 = sadd.s32 1, %s29
      %p35 = scmp.ge.s32.totalorder %s34, 1
      %s36 = scalar_select %p35, 0, %s34
      %s37 = sadd.s32 1, %s28
      %s38 = scalar_select %p35, %s37, %s28
      %p39 = scmp.ge.s32.totalorder %s38, 2
      %s40 = scalar_select %p39, 0, %s38
      %s41 = ssub.s32 %s28, %s40
      %s42 = ssub.s32 %s29, %s36
      %s43 = sor.u32 %s41, %s42
      %p44 = scmp.eq.s32.totalorder %s43, 0
      %s46 = sadd.s32 %s45, 1
      %s47 = scalar_select %p44, %s45, %s46
      %p50 = pneg %p44
      %p51 = scmp.eq.s32.totalorder %s21, 1
      %p52 = por %p50, %p51
      %p53 = scmp.ne.s32.totalorder %s45, %s48
      %p54 = scmp.eq.s32.totalorder %s21, 0
      %p55 = por %p53, %p54
      %p56 = scmp.ne.s32.totalorder %s45, %s48
      %p57 = scmp.eq.s32.totalorder %s26, 1
      %p58 = por %p56, %p57
      %p59 = scmp.ne.s32.totalorder %s48, %s49
      %p60 = scmp.eq.s32.totalorder %s26, 0
      %p61 = por %p59, %p60
      %p62 = scmp.ne.s32.totalorder %s48, %s49
      %p63 = scmp.eq.s32.totalorder %s27, 1
      %p64 = por %p62, %p63
      %p66 = scmp.ne.s32.totalorder %s49, %s65
      %p67 = scmp.eq.s32.totalorder %s27, 0
      %p68 = por %p66, %p67
      %s70 = sadd.s32 %s69, 1
      %p73 = scmp.eq.s32.totalorder %s21, 1
      %p74 = scmp.ne.s32.totalorder %s69, %s71
      %p75 = scmp.eq.s32.totalorder %s21, 0
      %p76 = por %p74, %p75
      %p77 = scmp.ne.s32.totalorder %s69, %s71
      %p78 = scmp.eq.s32.totalorder %s26, 1
      %p79 = por %p77, %p78
      %p80 = scmp.ne.s32.totalorder %s71, %s72
      %p81 = scmp.eq.s32.totalorder %s26, 0
      %p82 = por %p80, %p81
      %p83 = scmp.ne.s32.totalorder %s71, %s72
      %p84 = scmp.eq.s32.totalorder %s27, 1
      %p85 = por %p83, %p84
      %p87 = scmp.ne.s32.totalorder %s72, %s86
      %p88 = scmp.eq.s32.totalorder %s27, 0
      %p89 = por %p87, %p88
      %s91 = sadd.s32 %s90, 1
      %p94 = scmp.eq.s32.totalorder %s21, 1
      %p95 = scmp.ne.s32.totalorder %s90, %s92
      %p96 = scmp.eq.s32.totalorder %s21, 0
      %p97 = por %p95, %p96
      %p98 = scmp.ne.s32.totalorder %s90, %s92
      %p99 = scmp.eq.s32.totalorder %s26, 1
      %p100 = por %p98, %p99
      %p101 = scmp.ne.s32.totalorder %s92, %s93
      %p102 = scmp.eq.s32.totalorder %s26, 0
      %p103 = por %p101, %p102
      %p104 = scmp.ne.s32.totalorder %s92, %s93
      %p105 = scmp.eq.s32.totalorder %s27, 1
      %p106 = por %p104, %p105
      %p108 = scmp.ne.s32.totalorder %s93, %s107
      %p109 = scmp.eq.s32.totalorder %s27, 0
      %p110 = por %p108, %p109
      %s111 = ssub.s32 %s28, %s40
      %s112 = ssub.s32 %s29, %s36
      %s113 = sor.u32 %s111, %s112
      %p114 = scmp.eq.s32.totalorder %s113, 0
      %s116 = sadd.s32 %s115, 1
      %s117 = scalar_select %p114, %s115, %s116
      %p120 = pneg %p114
      %p121 = scmp.eq.s32.totalorder %s21, 1
      %p122 = por %p120, %p121
      %p123 = scmp.ne.s32.totalorder %s115, %s118
      %p124 = scmp.eq.s32.totalorder %s21, 0
      %p125 = por %p123, %p124
      %p126 = scmp.ne.s32.totalorder %s115, %s118
      %p127 = scmp.eq.s32.totalorder %s26, 1
      %p128 = por %p126, %p127
      %p129 = scmp.ne.s32.totalorder %s118, %s119
      %p130 = scmp.eq.s32.totalorder %s26, 0
      %p131 = por %p129, %p130
      %p132 = scmp.ne.s32.totalorder %s118, %s119
      %p133 = scmp.eq.s32.totalorder %s27, 1
      %p134 = por %p132, %p133
      %p136 = scmp.ne.s32.totalorder %s119, %s135
      %p137 = scmp.eq.s32.totalorder %s27, 0
      %p138 = por %p136, %p137
      %s139 = ssub.s32 %s28, %s40
      %s140 = ssub.s32 %s29, %s36
      %s141 = sor.u32 %s139, %s140
      %p142 = scmp.eq.s32.totalorder %s141, 0
      %s144 = sadd.s32 %s143, 1
      %s145 = scalar_select %p142, %s143, %s144
      %p148 = pneg %p142
      %p149 = scmp.eq.s32.totalorder %s21, 1
      %p150 = por %p148, %p149
      %p151 = scmp.ne.s32.totalorder %s143, %s146
      %p152 = scmp.eq.s32.totalorder %s21, 0
      %p153 = por %p151, %p152
      %p154 = scmp.ne.s32.totalorder %s143, %s146
      %p155 = scmp.eq.s32.totalorder %s26, 1
      %p156 = por %p154, %p155
      %p157 = scmp.ne.s32.totalorder %s146, %s147
      %p158 = scmp.eq.s32.totalorder %s26, 0
      %p159 = por %p157, %p158
      %p160 = scmp.ne.s32.totalorder %s146, %s147
      %p161 = scmp.eq.s32.totalorder %s27, 1
      %p162 = por %p160, %p161
      %p164 = scmp.ne.s32.totalorder %s147, %s163
      %p165 = scmp.eq.s32.totalorder %s27, 0
      %p166 = por %p164, %p165
      %p167 = scmp.le.s32.totalorder 1, %s21
      %p168 = scmp.lt.s32.totalorder %s21, 3
      %p169 = pnand %p167, %p168
      %p170 = pneg %p169
      // Predicated region
      $region9: #{up_forward.4} parent=5 // pred_check
        _
      $region10: #{up_forward.4} parent=5 // pred_check_branch
        %172 = sbr.rel (%p169) target = $region12
      $region11: #{up_forward.4} parent=5 // pred_region
        %s173 = ssub.s32 %s21, 1
        // Predicated region
        $region13: #{up_forward.4} parent=11 // pred_check
          %p174 = pneg %p82
        $region14: #{up_forward.4} parent=11 // pred_check_branch
          %176 = sbr.rel (%p174) target = $region16
        $region15: #{up_forward.4} parent=11 // pred_region
          %s178 = ssub.s32 1728, 1728
          %179 = vsyncadd [#allocation6], %s178
          %s180 = sshll.u32 [#allocation5], 4
          %s181 = int_to_ptr.vmem [resolvable:$true] %s180
          %186 = dma.hbm_to_vmem [thread:$0]  %s1, 1728, %s181, [#allocation6], 64, 64, 4
        $region16: #{up_forward.4} parent=11 // pred_fallthru
          _
        // Predicated region
        $region17: #{up_forward.4} parent=11 // pred_check
          %p187 = pneg %p103
        $region18: #{up_forward.4} parent=11 // pred_check_branch
          %189 = sbr.rel (%p187) target = $region20
        $region19: #{up_forward.4} parent=11 // pred_region
          %s191 = ssub.s32 16, 16
          %192 = vsyncadd [#allocation6], %s191
          %s194 = sshll.u32 [#allocation7], 4
          %s195 = int_to_ptr.vmem [resolvable:$true] %s194
          %197 = dma.hbm_to_vmem [thread:$0]  %s2, 16, %s195, [#allocation6]
        $region20: #{up_forward.4} parent=11 // pred_fallthru
          _
      $region12: #{up_forward.4} parent=5 // pred_fallthru
        _
      %p198 = scmp.lt.s32.totalorder %s21, 2
      // Predicated region
      $region21: #{up_forward.4} parent=5 // pred_check
        %p199 = pneg %p198
      $region22: #{up_forward.4} parent=5 // pred_check_branch
        %201 = sbr.rel (%p199) target = $region24
      $region23: #{up_forward.4} parent=5 // pred_region
        // Predicated region
        $region25: #{up_forward.4} parent=23 // pred_check
          %p202 = pneg %p55
        $region26: #{up_forward.4} parent=23 // pred_check_branch
          %204 = sbr.rel (%p202) target = $region28
        $region27: #{up_forward.4} parent=23 // pred_region
          %s205 = sand.u32 %s45, 1
          %s206 = scalar_lea.sflag [#allocation3], %s205
          %s207 = sand.u32 %s45, 1
          %s208 = smul.addr %s207, 640
          %s209 = scalar_lea.vmem [#allocation2], %s208
          %s210 = smul.u32 8, %s29
          %s212 = ssub.s32 10240, 10240
          %213 = vsyncadd %s206, %s212
          %s214 = smul.addr %s210, 20
          %s215 = smul.addr %s28, 160
          %s216 = sadd.s32 %s214, %s215
          %s217 = smul.addr %s216, 64
          %s218 = scalar_lea.hbm %s0, %s217
          %s219 = sshll.u32 %s209, 4
          %s220 = int_to_ptr.vmem [resolvable:$true] %s219
          %225 = dma.hbm_to_vmem [thread:$0]  %s218, 10240, %s220, %s206, 64, 64, 4
        $region28: #{up_forward.4} parent=23 // pred_fallthru
          _
      $region24: #{up_forward.4} parent=5 // pred_fallthru
        _
      %p226 = scmp.le.s32.totalorder 1, %s21
      %p227 = scmp.lt.s32.totalorder %s21, 3
      %p228 = pnand %p226, %p227
      %p229 = pneg %p228
      // Predicated region
      $region29: #{up_forward.4} parent=5 // pred_check
        _
      $region30: #{up_forward.4} parent=5 // pred_check_branch
        %231 = sbr.rel (%p228) target = $region32
      $region31: #{up_forward.4} parent=5 // pred_region
        %s232 = ssub.s32 %s21, 1
        %s233 = sand.u32 %s48, 1
        %s234 = scalar_lea.sflag [#allocation3], %s233
        %s235 = sand.u32 %s48, 1
        %s236 = smul.addr %s235, 640
        %s237 = scalar_lea.vmem [#allocation2], %s236
        // Predicated region
        $region33: #{up_forward.4} parent=31 // pred_check
          %p238 = pneg %p61
        $region34: #{up_forward.4} parent=31 // pred_check_branch
          %240 = sbr.rel (%p238) target = $region36
        $region35: #{up_forward.4} parent=31 // pred_region
          %241 = dma.done %s234, 10240
        $region36: #{up_forward.4} parent=31 // pred_fallthru
          _
        // Predicated region
        $region37: #{up_forward.4} parent=31 // pred_check
          %p242 = pneg %p82
        $region38: #{up_forward.4} parent=31 // pred_check_branch
          %244 = sbr.rel (%p242) target = $region40
        $region39: #{up_forward.4} parent=31 // pred_region
          %245 = dma.done [#allocation6], 1728
        $region40: #{up_forward.4} parent=31 // pred_fallthru
          _
        // Predicated region
        $region41: #{up_forward.4} parent=31 // pred_check
          %p246 = pneg %p103
        $region42: #{up_forward.4} parent=31 // pred_check_branch
          %248 = sbr.rel (%p246) target = $region44
        $region43: #{up_forward.4} parent=31 // pred_region
          %249 = dma.done [#allocation6], 16
        $region44: #{up_forward.4} parent=31 // pred_fallthru
          _
        %s250 = sand.u32 %s48, 1
        %s251 = scalar_lea.sflag [#allocation3], %s250
        %s252 = sand.u32 %s48, 1
        %s253 = smul.addr %s252, 640
        %s254 = scalar_lea.vmem [#allocation2], %s253
        %p255 = pneg %p61
        %p256 = pneg %p58
        %p257 = pneg %p82
        %p258 = pneg %p79
        %p259 = pneg %p103
        %p260 = pneg %p100
        %p261 = pneg %p131
        %p262 = pneg %p128
        %s263 = sand.u32 %s118, 1
        %s264 = scalar_lea.sflag [#allocation4], %s263
        %s265 = sand.u32 %s118, 1
        %s266 = smul.addr %s265, 512
        %s267 = scalar_lea.vmem [#allocation8], %s266
        %p268 = pneg %p159
        %p269 = pneg %p156
        %s270 = sand.u32 %s146, 1
        %s271 = scalar_lea.sflag [#allocation10], %s270
        %s272 = sand.u32 %s146, 1
        %s273 = smul.addr %s272, 2
        %s274 = scalar_lea.vmem [#allocation9], %s273
        %s275 = smul.u32 8, %s31
        %s276 = smul.u32 8, %s31
        %v278 = vld [vmem:[%s237] sm:$0xf]
        %v279 = vld [vmem:[%s237 + $0x4] sm:$0x1]
        %v280 = vld [vmem:[%s237 + $0x8] sm:$0xf]
        %v281 = vld [vmem:[%s237 + $0xc] sm:$0x1]
        %v282 = vld [vmem:[%s237 + $0x10] sm:$0xf]
        %v283 = vld [vmem:[%s237 + $0x14] sm:$0x1]
        %v284 = vld [vmem:[%s237 + $0x18] sm:$0xf]
        %v285 = vld [vmem:[%s237 + $0x1c] sm:$0x1]
        %v286 = vld [vmem:[%s237 + $0x20] sm:$0xf]
        %v287 = vld [vmem:[%s237 + $0x24] sm:$0x1]
        %v288 = vld [vmem:[%s237 + $0x28] sm:$0xf]
        %v289 = vld [vmem:[%s237 + $0x2c] sm:$0x1]
        %v290 = vld [vmem:[%s237 + $0x30] sm:$0xf]
        %v291 = vld [vmem:[%s237 + $0x34] sm:$0x1]
        %v292 = vld [vmem:[%s237 + $0x38] sm:$0xf]
        %v293 = vld [vmem:[%s237 + $0x3c] sm:$0x1]
        %v294 = vld [vmem:[%s237 + $0x40] sm:$0xf]
        %v295 = vld [vmem:[%s237 + $0x44] sm:$0x1]
        %v296 = vld [vmem:[%s237 + $0x48] sm:$0xf]
        %v297 = vld [vmem:[%s237 + $0x4c] sm:$0x1]
        %v298 = vld [vmem:[%s237 + $0x50] sm:$0xf]
        %v299 = vld [vmem:[%s237 + $0x54] sm:$0x1]
        %v300 = vld [vmem:[%s237 + $0x58] sm:$0xf]
        %v301 = vld [vmem:[%s237 + $0x5c] sm:$0x1]
        %v302 = vld [vmem:[%s237 + $0x60] sm:$0xf]
        %v303 = vld [vmem:[%s237 + $0x64] sm:$0x1]
        %v304 = vld [vmem:[%s237 + $0x68] sm:$0xf]
        %v305 = vld [vmem:[%s237 + $0x6c] sm:$0x1]
        %v306 = vld [vmem:[%s237 + $0x70] sm:$0xf]
        %v307 = vld [vmem:[%s237 + $0x74] sm:$0x1]
        %v308 = vld [vmem:[%s237 + $0x78] sm:$0xf]
        %v309 = vld [vmem:[%s237 + $0x7c] sm:$0x1]
        %v310 = vld [vmem:[%s237 + $0x80] sm:$0xf]
        %v311 = vld [vmem:[%s237 + $0x84] sm:$0x1]
        %v312 = vld [vmem:[%s237 + $0x88] sm:$0xf]
        %v313 = vld [vmem:[%s237 + $0x8c] sm:$0x1]
        %v314 = vld [vmem:[%s237 + $0x90] sm:$0xf]
        %v315 = vld [vmem:[%s237 + $0x94] sm:$0x1]
        %v316 = vld [vmem:[%s237 + $0x98] sm:$0xf]
        %v317 = vld [vmem:[%s237 + $0x9c] sm:$0x1]
        %v318 = vld [vmem:[%s237 + $0xa0] sm:$0xf]
        %v319 = vld [vmem:[%s237 + $0xa4] sm:$0x1]
        %v320 = vld [vmem:[%s237 + $0xa8] sm:$0xf]
        %v321 = vld [vmem:[%s237 + $0xac] sm:$0x1]
        %v322 = vld [vmem:[%s237 + $0xb0] sm:$0xf]
        %v323 = vld [vmem:[%s237 + $0xb4] sm:$0x1]
        %v324 = vld [vmem:[%s237 + $0xb8] sm:$0xf]
        %v325 = vld [vmem:[%s237 + $0xbc] sm:$0x1]
        %v326 = vld [vmem:[%s237 + $0xc0] sm:$0xf]
        %v327 = vld [vmem:[%s237 + $0xc4] sm:$0x1]
        %v328 = vld [vmem:[%s237 + $0xc8] sm:$0xf]
        %v329 = vld [vmem:[%s237 + $0xcc] sm:$0x1]
        %v330 = vld [vmem:[%s237 + $0xd0] sm:$0xf]
        %v331 = vld [vmem:[%s237 + $0xd4] sm:$0x1]
        %v332 = vld [vmem:[%s237 + $0xd8] sm:$0xf]
        %v333 = vld [vmem:[%s237 + $0xdc] sm:$0x1]
        %v334 = vld [vmem:[%s237 + $0xe0] sm:$0xf]
        %v335 = vld [vmem:[%s237 + $0xe4] sm:$0x1]
        %v336 = vld [vmem:[%s237 + $0xe8] sm:$0xf]
        %v337 = vld [vmem:[%s237 + $0xec] sm:$0x1]
        %v338 = vld [vmem:[%s237 + $0xf0] sm:$0xf]
        %v339 = vld [vmem:[%s237 + $0xf4] sm:$0x1]
        %v340 = vld [vmem:[%s237 + $0xf8] sm:$0xf]
        %v341 = vld [vmem:[%s237 + $0xfc] sm:$0x1]
        %v342 = vld [vmem:[%s237 + $0x100] sm:$0xf]
        %v343 = vld [vmem:[%s237 + $0x104] sm:$0x1]
        %v344 = vld [vmem:[%s237 + $0x108] sm:$0xf]
        %v345 = vld [vmem:[%s237 + $0x10c] sm:$0x1]
        %v346 = vld [vmem:[%s237 + $0x110] sm:$0xf]
        %v347 = vld [vmem:[%s237 + $0x114] sm:$0x1]
        %v348 = vld [vmem:[%s237 + $0x118] sm:$0xf]
        %v349 = vld [vmem:[%s237 + $0x11c] sm:$0x1]
        %v350 = vld [vmem:[%s237 + $0x120] sm:$0xf]
        %v351 = vld [vmem:[%s237 + $0x124] sm:$0x1]
        %v352 = vld [vmem:[%s237 + $0x128] sm:$0xf]
        %v353 = vld [vmem:[%s237 + $0x12c] sm:$0x1]
        %v354 = vld [vmem:[%s237 + $0x130] sm:$0xf]
        %v355 = vld [vmem:[%s237 + $0x134] sm:$0x1]
        %v356 = vld [vmem:[%s237 + $0x138] sm:$0xf]
        %v357 = vld [vmem:[%s237 + $0x13c] sm:$0x1]
        %v358 = vld [vmem:[%s237 + $0x140] sm:$0xf]
        %v359 = vld [vmem:[%s237 + $0x144] sm:$0x1]
        %v360 = vld [vmem:[%s237 + $0x148] sm:$0xf]
        %v361 = vld [vmem:[%s237 + $0x14c] sm:$0x1]
        %v362 = vld [vmem:[%s237 + $0x150] sm:$0xf]
        %v363 = vld [vmem:[%s237 + $0x154] sm:$0x1]
        %v364 = vld [vmem:[%s237 + $0x158] sm:$0xf]
        %v365 = vld [vmem:[%s237 + $0x15c] sm:$0x1]
        %v366 = vld [vmem:[%s237 + $0x160] sm:$0xf]
        %v367 = vld [vmem:[%s237 + $0x164] sm:$0x1]
        %v368 = vld [vmem:[%s237 + $0x168] sm:$0xf]
        %v369 = vld [vmem:[%s237 + $0x16c] sm:$0x1]
        %v370 = vld [vmem:[%s237 + $0x170] sm:$0xf]
        %v371 = vld [vmem:[%s237 + $0x174] sm:$0x1]
        %v372 = vld [vmem:[%s237 + $0x178] sm:$0xf]
        %v373 = vld [vmem:[%s237 + $0x17c] sm:$0x1]
        %v374 = vld [vmem:[%s237 + $0x180] sm:$0xf]
        %v375 = vld [vmem:[%s237 + $0x184] sm:$0x1]
        %v376 = vld [vmem:[%s237 + $0x188] sm:$0xf]
        %v377 = vld [vmem:[%s237 + $0x18c] sm:$0x1]
        %v378 = vld [vmem:[%s237 + $0x190] sm:$0xf]
        %v379 = vld [vmem:[%s237 + $0x194] sm:$0x1]
        %v380 = vld [vmem:[%s237 + $0x198] sm:$0xf]
        %v381 = vld [vmem:[%s237 + $0x19c] sm:$0x1]
        %v382 = vld [vmem:[%s237 + $0x1a0] sm:$0xf]
        %v383 = vld [vmem:[%s237 + $0x1a4] sm:$0x1]
        %v384 = vld [vmem:[%s237 + $0x1a8] sm:$0xf]
        %v385 = vld [vmem:[%s237 + $0x1ac] sm:$0x1]
        %v386 = vld [vmem:[%s237 + $0x1b0] sm:$0xf]
        %v387 = vld [vmem:[%s237 + $0x1b4] sm:$0x1]
        %v388 = vld [vmem:[%s237 + $0x1b8] sm:$0xf]
        %v389 = vld [vmem:[%s237 + $0x1bc] sm:$0x1]
        %v390 = vld [vmem:[%s237 + $0x1c0] sm:$0xf]
        %v391 = vld [vmem:[%s237 + $0x1c4] sm:$0x1]
        %v392 = vld [vmem:[%s237 + $0x1c8] sm:$0xf]
        %v393 = vld [vmem:[%s237 + $0x1cc] sm:$0x1]
        %v394 = vld [vmem:[%s237 + $0x1d0] sm:$0xf]
        %v395 = vld [vmem:[%s237 + $0x1d4] sm:$0x1]
        %v396 = vld [vmem:[%s237 + $0x1d8] sm:$0xf]
        %v397 = vld [vmem:[%s237 + $0x1dc] sm:$0x1]
        %v398 = vld [vmem:[%s237 + $0x1e0] sm:$0xf]
        %v399 = vld [vmem:[%s237 + $0x1e4] sm:$0x1]
        %v400 = vld [vmem:[%s237 + $0x1e8] sm:$0xf]
        %v401 = vld [vmem:[%s237 + $0x1ec] sm:$0x1]
        %v402 = vld [vmem:[%s237 + $0x1f0] sm:$0xf]
        %v403 = vld [vmem:[%s237 + $0x1f4] sm:$0x1]
        %v404 = vld [vmem:[%s237 + $0x1f8] sm:$0xf]
        %v405 = vld [vmem:[%s237 + $0x1fc] sm:$0x1]
        %v406 = vld [vmem:[%s237 + $0x200] sm:$0xf]
        %v407 = vld [vmem:[%s237 + $0x204] sm:$0x1]
        %v408 = vld [vmem:[%s237 + $0x208] sm:$0xf]
        %v409 = vld [vmem:[%s237 + $0x20c] sm:$0x1]
        %v410 = vld [vmem:[%s237 + $0x210] sm:$0xf]
        %v411 = vld [vmem:[%s237 + $0x214] sm:$0x1]
        %v412 = vld [vmem:[%s237 + $0x218] sm:$0xf]
        %v413 = vld [vmem:[%s237 + $0x21c] sm:$0x1]
        %v414 = vld [vmem:[%s237 + $0x220] sm:$0xf]
        %v415 = vld [vmem:[%s237 + $0x224] sm:$0x1]
        %v416 = vld [vmem:[%s237 + $0x228] sm:$0xf]
        %v417 = vld [vmem:[%s237 + $0x22c] sm:$0x1]
        %v418 = vld [vmem:[%s237 + $0x230] sm:$0xf]
        %v419 = vld [vmem:[%s237 + $0x234] sm:$0x1]
        %v420 = vld [vmem:[%s237 + $0x238] sm:$0xf]
        %v421 = vld [vmem:[%s237 + $0x23c] sm:$0x1]
        %v422 = vld [vmem:[%s237 + $0x240] sm:$0xf]
        %v423 = vld [vmem:[%s237 + $0x244] sm:$0x1]
        %v424 = vld [vmem:[%s237 + $0x248] sm:$0xf]
        %v425 = vld [vmem:[%s237 + $0x24c] sm:$0x1]
        %v426 = vld [vmem:[%s237 + $0x250] sm:$0xf]
        %v427 = vld [vmem:[%s237 + $0x254] sm:$0x1]
        %v428 = vld [vmem:[%s237 + $0x258] sm:$0xf]
        %v429 = vld [vmem:[%s237 + $0x25c] sm:$0x1]
        %v430 = vld [vmem:[%s237 + $0x260] sm:$0xf]
        %v431 = vld [vmem:[%s237 + $0x264] sm:$0x1]
        %v432 = vld [vmem:[%s237 + $0x268] sm:$0xf]
        %v433 = vld [vmem:[%s237 + $0x26c] sm:$0x1]
        %v434 = vld [vmem:[%s237 + $0x270] sm:$0xf]
        %v435 = vld [vmem:[%s237 + $0x274] sm:$0x1]
        %v436 = vld [vmem:[%s237 + $0x278] sm:$0xf]
        %v437 = vld [vmem:[%s237 + $0x27c] sm:$0x1]
        %v438 = vld [vmem:[#allocation5] sm:$0xf]
        %v439 = vld [vmem:[#allocation5 + $0x4] sm:$0xf]
        %v440 = vld [vmem:[#allocation5 + $0x8] sm:$0xf]
        %v441 = vld [vmem:[#allocation5 + $0xc] sm:$0xf]
        %v442 = vld [vmem:[#allocation5 + $0x10] sm:$0xf]
        %v443 = vld [vmem:[#allocation5 + $0x14] sm:$0xf]
        %v444 = vld [vmem:[#allocation5 + $0x18] sm:$0xf]
        %v445 = vld [vmem:[#allocation5 + $0x1c] sm:$0xf]
        %v446 = vld [vmem:[#allocation5 + $0x20] sm:$0xf]
        %v447 = vld [vmem:[#allocation5 + $0x24] sm:$0xf]
        %v448 = vld [vmem:[#allocation5 + $0x28] sm:$0xf]
        %v449 = vld [vmem:[#allocation5 + $0x2c] sm:$0xf]
        %v450 = vld [vmem:[#allocation5 + $0x30] sm:$0xf]
        %v451 = vld [vmem:[#allocation5 + $0x34] sm:$0xf]
        %v452 = vld [vmem:[#allocation5 + $0x38] sm:$0xf]
        %v453 = vld [vmem:[#allocation5 + $0x3c] sm:$0xf]
        %v454 = vld [vmem:[#allocation5 + $0x40] sm:$0xf]
        %v455 = vld [vmem:[#allocation5 + $0x44] sm:$0xf]
        %v456 = vld [vmem:[#allocation5 + $0x48] sm:$0xf]
        %v457 = vld [vmem:[#allocation5 + $0x4c] sm:$0xf]
        %v458 = vld [vmem:[#allocation5 + $0x50] sm:$0xf]
        %v459 = vld [vmem:[#allocation5 + $0x54] sm:$0xf]
        %v460 = vld [vmem:[#allocation5 + $0x58] sm:$0xf]
        %v461 = vld [vmem:[#allocation5 + $0x5c] sm:$0xf]
        %v462 = vld [vmem:[#allocation5 + $0x60] sm:$0xf]
        %v463 = vld [vmem:[#allocation5 + $0x64] sm:$0xf]
        %v464 = vld [vmem:[#allocation5 + $0x68] sm:$0xf]
        %vm465 = vsmask.f32 3328
        %vm466 = vsmask.f32 7440
        %vm467 = vmor %vm465, %vm466
        %v469 = vshrl.u32 %v278, 16
        %v471 = vrot.slane %v469, 4
        %v472 = vshll.u32 %v278, 16
        %v474 = vrot.slane %v472, 5
        %v475 = vor.u32 %v471, %v474
        %v476 = vrot.slane %v475, 4
        %v478 = vshll.u32 %v279, 16
        %v480 = vrot.slane %v478, 5
        %v481 = vsel %vm467, %v476, %v480
        %v483 = vshrl.u32 %v280, 16
        %v485 = vrot.slane %v483, 4
        %v486 = vshll.u32 %v280, 16
        %v488 = vrot.slane %v486, 5
        %v489 = vor.u32 %v485, %v488
        %v490 = vrot.slane %v489, 4
        %v492 = vshll.u32 %v281, 16
        %v494 = vrot.slane %v492, 5
        %v495 = vsel %vm467, %v490, %v494
        %v497 = vshrl.u32 %v282, 16
        %v499 = vrot.slane %v497, 4
        %v500 = vshll.u32 %v282, 16
        %v502 = vrot.slane %v500, 5
        %v503 = vor.u32 %v499, %v502
        %v504 = vrot.slane %v503, 4
        %v506 = vshll.u32 %v283, 16
        %v508 = vrot.slane %v506, 5
        %v509 = vsel %vm467, %v504, %v508
        %v511 = vshrl.u32 %v284, 16
        %v513 = vrot.slane %v511, 4
        %v514 = vshll.u32 %v284, 16
        %v516 = vrot.slane %v514, 5
        %v517 = vor.u32 %v513, %v516
        %v518 = vrot.slane %v517, 4
        %v520 = vshll.u32 %v285, 16
        %v522 = vrot.slane %v520, 5
        %v523 = vsel %vm467, %v518, %v522
        %v525 = vshrl.u32 %v286, 16
        %v527 = vrot.slane %v525, 4
        %v528 = vshll.u32 %v286, 16
        %v530 = vrot.slane %v528, 5
        %v531 = vor.u32 %v527, %v530
        %v532 = vrot.slane %v531, 4
        %v534 = vshll.u32 %v287, 16
        %v536 = vrot.slane %v534, 5
        %v537 = vsel %vm467, %v532, %v536
        %v539 = vshrl.u32 %v288, 16
        %v541 = vrot.slane %v539, 4
        %v542 = vshll.u32 %v288, 16
        %v544 = vrot.slane %v542, 5
        %v545 = vor.u32 %v541, %v544
        %v546 = vrot.slane %v545, 4
        %v548 = vshll.u32 %v289, 16
        %v550 = vrot.slane %v548, 5
        %v551 = vsel %vm467, %v546, %v550
        %v553 = vshrl.u32 %v290, 16
        %v555 = vrot.slane %v553, 4
        %v556 = vshll.u32 %v290, 16
        %v558 = vrot.slane %v556, 5
        %v559 = vor.u32 %v555, %v558
        %v560 = vrot.slane %v559, 4
        %v562 = vshll.u32 %v291, 16
        %v564 = vrot.slane %v562, 5
        %v565 = vsel %vm467, %v560, %v564
        %v567 = vshrl.u32 %v292, 16
        %v569 = vrot.slane %v567, 4
        %v570 = vshll.u32 %v292, 16
        %v572 = vrot.slane %v570, 5
        %v573 = vor.u32 %v569, %v572
        %v574 = vrot.slane %v573, 4
        %v576 = vshll.u32 %v293, 16
        %v578 = vrot.slane %v576, 5
        %v579 = vsel %vm467, %v574, %v578
        %v581 = vshrl.u32 %v298, 16
        %v583 = vrot.slane %v581, 4
        %v584 = vshll.u32 %v298, 16
        %v586 = vrot.slane %v584, 5
        %v587 = vor.u32 %v583, %v586
        %v588 = vrot.slane %v587, 4
        %v590 = vshll.u32 %v299, 16
        %v592 = vrot.slane %v590, 5
        %v593 = vsel %vm467, %v588, %v592
        %v595 = vshrl.u32 %v300, 16
        %v597 = vrot.slane %v595, 4
        %v598 = vshll.u32 %v300, 16
        %v600 = vrot.slane %v598, 5
        %v601 = vor.u32 %v597, %v600
        %v602 = vrot.slane %v601, 4
        %v604 = vshll.u32 %v301, 16
        %v606 = vrot.slane %v604, 5
        %v607 = vsel %vm467, %v602, %v606
        %v609 = vshrl.u32 %v302, 16
        %v611 = vrot.slane %v609, 4
        %v612 = vshll.u32 %v302, 16
        %v614 = vrot.slane %v612, 5
        %v615 = vor.u32 %v611, %v614
        %v616 = vrot.slane %v615, 4
        %v618 = vshll.u32 %v303, 16
        %v620 = vrot.slane %v618, 5
        %v621 = vsel %vm467, %v616, %v620
        %v623 = vshrl.u32 %v304, 16
        %v625 = vrot.slane %v623, 4
        %v626 = vshll.u32 %v304, 16
        %v628 = vrot.slane %v626, 5
        %v629 = vor.u32 %v625, %v628
        %v630 = vrot.slane %v629, 4
        %v632 = vshll.u32 %v305, 16
        %v634 = vrot.slane %v632, 5
        %v635 = vsel %vm467, %v630, %v634
        %v637 = vshrl.u32 %v306, 16
        %v639 = vrot.slane %v637, 4
        %v640 = vshll.u32 %v306, 16
        %v642 = vrot.slane %v640, 5
        %v643 = vor.u32 %v639, %v642
        %v644 = vrot.slane %v643, 4
        %v646 = vshll.u32 %v307, 16
        %v648 = vrot.slane %v646, 5
        %v649 = vsel %vm467, %v644, %v648
        %v651 = vshrl.u32 %v308, 16
        %v653 = vrot.slane %v651, 4
        %v654 = vshll.u32 %v308, 16
        %v656 = vrot.slane %v654, 5
        %v657 = vor.u32 %v653, %v656
        %v658 = vrot.slane %v657, 4
        %v660 = vshll.u32 %v309, 16
        %v662 = vrot.slane %v660, 5
        %v663 = vsel %vm467, %v658, %v662
        %v665 = vshrl.u32 %v310, 16
        %v667 = vrot.slane %v665, 4
        %v668 = vshll.u32 %v310, 16
        %v670 = vrot.slane %v668, 5
        %v671 = vor.u32 %v667, %v670
        %v672 = vrot.slane %v671, 4
        %v674 = vshll.u32 %v311, 16
        %v676 = vrot.slane %v674, 5
        %v677 = vsel %vm467, %v672, %v676
        %v679 = vshrl.u32 %v312, 16
        %v681 = vrot.slane %v679, 4
        %v682 = vshll.u32 %v312, 16
        %v684 = vrot.slane %v682, 5
        %v685 = vor.u32 %v681, %v684
        %v686 = vrot.slane %v685, 4
        %v688 = vshll.u32 %v313, 16
        %v690 = vrot.slane %v688, 5
        %v691 = vsel %vm467, %v686, %v690
        %v693 = vshrl.u32 %v318, 16
        %v695 = vrot.slane %v693, 4
        %v696 = vshll.u32 %v318, 16
        %v698 = vrot.slane %v696, 5
        %v699 = vor.u32 %v695, %v698
        %v700 = vrot.slane %v699, 4
        %v702 = vshll.u32 %v319, 16
        %v704 = vrot.slane %v702, 5
        %v705 = vsel %vm467, %v700, %v704
        %v707 = vshrl.u32 %v320, 16
        %v709 = vrot.slane %v707, 4
        %v710 = vshll.u32 %v320, 16
        %v712 = vrot.slane %v710, 5
        %v713 = vor.u32 %v709, %v712
        %v714 = vrot.slane %v713, 4
        %v716 = vshll.u32 %v321, 16
        %v718 = vrot.slane %v716, 5
        %v719 = vsel %vm467, %v714, %v718
        %v721 = vshrl.u32 %v322, 16
        %v723 = vrot.slane %v721, 4
        %v724 = vshll.u32 %v322, 16
        %v726 = vrot.slane %v724, 5
        %v727 = vor.u32 %v723, %v726
        %v728 = vrot.slane %v727, 4
        %v730 = vshll.u32 %v323, 16
        %v732 = vrot.slane %v730, 5
        %v733 = vsel %vm467, %v728, %v732
        %v735 = vshrl.u32 %v324, 16
        %v737 = vrot.slane %v735, 4
        %v738 = vshll.u32 %v324, 16
        %v740 = vrot.slane %v738, 5
        %v741 = vor.u32 %v737, %v740
        %v742 = vrot.slane %v741, 4
        %v744 = vshll.u32 %v325, 16
        %v746 = vrot.slane %v744, 5
        %v747 = vsel %vm467, %v742, %v746
        %v749 = vshrl.u32 %v326, 16
        %v751 = vrot.slane %v749, 4
        %v752 = vshll.u32 %v326, 16
        %v754 = vrot.slane %v752, 5
        %v755 = vor.u32 %v751, %v754
        %v756 = vrot.slane %v755, 4
        %v758 = vshll.u32 %v327, 16
        %v760 = vrot.slane %v758, 5
        %v761 = vsel %vm467, %v756, %v760
        %v763 = vshrl.u32 %v328, 16
        %v765 = vrot.slane %v763, 4
        %v766 = vshll.u32 %v328, 16
        %v768 = vrot.slane %v766, 5
        %v769 = vor.u32 %v765, %v768
        %v770 = vrot.slane %v769, 4
        %v772 = vshll.u32 %v329, 16
        %v774 = vrot.slane %v772, 5
        %v775 = vsel %vm467, %v770, %v774
        %v777 = vshrl.u32 %v330, 16
        %v779 = vrot.slane %v777, 4
        %v780 = vshll.u32 %v330, 16
        %v782 = vrot.slane %v780, 5
        %v783 = vor.u32 %v779, %v782
        %v784 = vrot.slane %v783, 4
        %v786 = vshll.u32 %v331, 16
        %v788 = vrot.slane %v786, 5
        %v789 = vsel %vm467, %v784, %v788
        %v791 = vshrl.u32 %v332, 16
        %v793 = vrot.slane %v791, 4
        %v794 = vshll.u32 %v332, 16
        %v796 = vrot.slane %v794, 5
        %v797 = vor.u32 %v793, %v796
        %v798 = vrot.slane %v797, 4
        %v800 = vshll.u32 %v333, 16
        %v802 = vrot.slane %v800, 5
        %v803 = vsel %vm467, %v798, %v802
        %v805 = vshrl.u32 %v338, 16
        %v807 = vrot.slane %v805, 4
        %v808 = vshll.u32 %v338, 16
        %v810 = vrot.slane %v808, 5
        %v811 = vor.u32 %v807, %v810
        %v812 = vrot.slane %v811, 4
        %v814 = vshll.u32 %v339, 16
        %v816 = vrot.slane %v814, 5
        %v817 = vsel %vm467, %v812, %v816
        %v819 = vshrl.u32 %v340, 16
        %v821 = vrot.slane %v819, 4
        %v822 = vshll.u32 %v340, 16
        %v824 = vrot.slane %v822, 5
        %v825 = vor.u32 %v821, %v824
        %v826 = vrot.slane %v825, 4
        %v828 = vshll.u32 %v341, 16
        %v830 = vrot.slane %v828, 5
        %v831 = vsel %vm467, %v826, %v830
        %v833 = vshrl.u32 %v342, 16
        %v835 = vrot.slane %v833, 4
        %v836 = vshll.u32 %v342, 16
        %v838 = vrot.slane %v836, 5
        %v839 = vor.u32 %v835, %v838
        %v840 = vrot.slane %v839, 4
        %v842 = vshll.u32 %v343, 16
        %v844 = vrot.slane %v842, 5
        %v845 = vsel %vm467, %v840, %v844
        %v847 = vshrl.u32 %v344, 16
        %v849 = vrot.slane %v847, 4
        %v850 = vshll.u32 %v344, 16
        %v852 = vrot.slane %v850, 5
        %v853 = vor.u32 %v849, %v852
        %v854 = vrot.slane %v853, 4
        %v856 = vshll.u32 %v345, 16
        %v858 = vrot.slane %v856, 5
        %v859 = vsel %vm467, %v854, %v858
        %v861 = vshrl.u32 %v346, 16
        %v863 = vrot.slane %v861, 4
        %v864 = vshll.u32 %v346, 16
        %v866 = vrot.slane %v864, 5
        %v867 = vor.u32 %v863, %v866
        %v868 = vrot.slane %v867, 4
        %v870 = vshll.u32 %v347, 16
        %v872 = vrot.slane %v870, 5
        %v873 = vsel %vm467, %v868, %v872
        %v875 = vshrl.u32 %v348, 16
        %v877 = vrot.slane %v875, 4
        %v878 = vshll.u32 %v348, 16
        %v880 = vrot.slane %v878, 5
        %v881 = vor.u32 %v877, %v880
        %v882 = vrot.slane %v881, 4
        %v884 = vshll.u32 %v349, 16
        %v886 = vrot.slane %v884, 5
        %v887 = vsel %vm467, %v882, %v886
        %v889 = vshrl.u32 %v350, 16
        %v891 = vrot.slane %v889, 4
        %v892 = vshll.u32 %v350, 16
        %v894 = vrot.slane %v892, 5
        %v895 = vor.u32 %v891, %v894
        %v896 = vrot.slane %v895, 4
        %v898 = vshll.u32 %v351, 16
        %v900 = vrot.slane %v898, 5
        %v901 = vsel %vm467, %v896, %v900
        %v903 = vshrl.u32 %v352, 16
        %v905 = vrot.slane %v903, 4
        %v906 = vshll.u32 %v352, 16
        %v908 = vrot.slane %v906, 5
        %v909 = vor.u32 %v905, %v908
        %v910 = vrot.slane %v909, 4
        %v912 = vshll.u32 %v353, 16
        %v914 = vrot.slane %v912, 5
        %v915 = vsel %vm467, %v910, %v914
        %v917 = vshrl.u32 %v358, 16
        %v919 = vrot.slane %v917, 4
        %v920 = vshll.u32 %v358, 16
        %v922 = vrot.slane %v920, 5
        %v923 = vor.u32 %v919, %v922
        %v924 = vrot.slane %v923, 4
        %v926 = vshll.u32 %v359, 16
        %v928 = vrot.slane %v926, 5
        %v929 = vsel %vm467, %v924, %v928
        %v931 = vshrl.u32 %v360, 16
        %v933 = vrot.slane %v931, 4
        %v934 = vshll.u32 %v360, 16
        %v936 = vrot.slane %v934, 5
        %v937 = vor.u32 %v933, %v936
        %v938 = vrot.slane %v937, 4
        %v940 = vshll.u32 %v361, 16
        %v942 = vrot.slane %v940, 5
        %v943 = vsel %vm467, %v938, %v942
        %v945 = vshrl.u32 %v362, 16
        %v947 = vrot.slane %v945, 4
        %v948 = vshll.u32 %v362, 16
        %v950 = vrot.slane %v948, 5
        %v951 = vor.u32 %v947, %v950
        %v952 = vrot.slane %v951, 4
        %v954 = vshll.u32 %v363, 16
        %v956 = vrot.slane %v954, 5
        %v957 = vsel %vm467, %v952, %v956
        %v959 = vshrl.u32 %v364, 16
        %v961 = vrot.slane %v959, 4
        %v962 = vshll.u32 %v364, 16
        %v964 = vrot.slane %v962, 5
        %v965 = vor.u32 %v961, %v964
        %v966 = vrot.slane %v965, 4
        %v968 = vshll.u32 %v365, 16
        %v970 = vrot.slane %v968, 5
        %v971 = vsel %vm467, %v966, %v970
        %v973 = vshrl.u32 %v366, 16
        %v975 = vrot.slane %v973, 4
        %v976 = vshll.u32 %v366, 16
        %v978 = vrot.slane %v976, 5
        %v979 = vor.u32 %v975, %v978
        %v980 = vrot.slane %v979, 4
        %v982 = vshll.u32 %v367, 16
        %v984 = vrot.slane %v982, 5
        %v985 = vsel %vm467, %v980, %v984
        %v987 = vshrl.u32 %v368, 16
        %v989 = vrot.slane %v987, 4
        %v990 = vshll.u32 %v368, 16
        %v992 = vrot.slane %v990, 5
        %v993 = vor.u32 %v989, %v992
        %v994 = vrot.slane %v993, 4
        %v996 = vshll.u32 %v369, 16
        %v998 = vrot.slane %v996, 5
        %v999 = vsel %vm467, %v994, %v998
        %v1001 = vshrl.u32 %v370, 16
        %v1003 = vrot.slane %v1001, 4
        %v1004 = vshll.u32 %v370, 16
        %v1006 = vrot.slane %v1004, 5
        %v1007 = vor.u32 %v1003, %v1006
        %v1008 = vrot.slane %v1007, 4
        %v1010 = vshll.u32 %v371, 16
        %v1012 = vrot.slane %v1010, 5
        %v1013 = vsel %vm467, %v1008, %v1012
        %v1015 = vshrl.u32 %v372, 16
        %v1017 = vrot.slane %v1015, 4
        %v1018 = vshll.u32 %v372, 16
        %v1020 = vrot.slane %v1018, 5
        %v1021 = vor.u32 %v1017, %v1020
        %v1022 = vrot.slane %v1021, 4
        %v1024 = vshll.u32 %v373, 16
        %v1026 = vrot.slane %v1024, 5
        %v1027 = vsel %vm467, %v1022, %v1026
        %v1029 = vshrl.u32 %v378, 16
        %v1031 = vrot.slane %v1029, 4
        %v1032 = vshll.u32 %v378, 16
        %v1034 = vrot.slane %v1032, 5
        %v1035 = vor.u32 %v1031, %v1034
        %v1036 = vrot.slane %v1035, 4
        %v1038 = vshll.u32 %v379, 16
        %v1040 = vrot.slane %v1038, 5
        %v1041 = vsel %vm467, %v1036, %v1040
        %v1043 = vshrl.u32 %v380, 16
        %v1045 = vrot.slane %v1043, 4
        %v1046 = vshll.u32 %v380, 16
        %v1048 = vrot.slane %v1046, 5
        %v1049 = vor.u32 %v1045, %v1048
        %v1050 = vrot.slane %v1049, 4
        %v1052 = vshll.u32 %v381, 16
        %v1054 = vrot.slane %v1052, 5
        %v1055 = vsel %vm467, %v1050, %v1054
        %v1057 = vshrl.u32 %v382, 16
        %v1059 = vrot.slane %v1057, 4
        %v1060 = vshll.u32 %v382, 16
        %v1062 = vrot.slane %v1060, 5
        %v1063 = vor.u32 %v1059, %v1062
        %v1064 = vrot.slane %v1063, 4
        %v1066 = vshll.u32 %v383, 16
        %v1068 = vrot.slane %v1066, 5
        %v1069 = vsel %vm467, %v1064, %v1068
        %v1071 = vshrl.u32 %v384, 16
        %v1073 = vrot.slane %v1071, 4
        %v1074 = vshll.u32 %v384, 16
        %v1076 = vrot.slane %v1074, 5
        %v1077 = vor.u32 %v1073, %v1076
        %v1078 = vrot.slane %v1077, 4
        %v1080 = vshll.u32 %v385, 16
        %v1082 = vrot.slane %v1080, 5
        %v1083 = vsel %vm467, %v1078, %v1082
        %v1085 = vshrl.u32 %v386, 16
        %v1087 = vrot.slane %v1085, 4
        %v1088 = vshll.u32 %v386, 16
        %v1090 = vrot.slane %v1088, 5
        %v1091 = vor.u32 %v1087, %v1090
        %v1092 = vrot.slane %v1091, 4
        %v1094 = vshll.u32 %v387, 16
        %v1096 = vrot.slane %v1094, 5
        %v1097 = vsel %vm467, %v1092, %v1096
        %v1099 = vshrl.u32 %v388, 16
        %v1101 = vrot.slane %v1099, 4
        %v1102 = vshll.u32 %v388, 16
        %v1104 = vrot.slane %v1102, 5
        %v1105 = vor.u32 %v1101, %v1104
        %v1106 = vrot.slane %v1105, 4
        %v1108 = vshll.u32 %v389, 16
        %v1110 = vrot.slane %v1108, 5
        %v1111 = vsel %vm467, %v1106, %v1110
        %v1113 = vshrl.u32 %v390, 16
        %v1115 = vrot.slane %v1113, 4
        %v1116 = vshll.u32 %v390, 16
        %v1118 = vrot.slane %v1116, 5
        %v1119 = vor.u32 %v1115, %v1118
        %v1120 = vrot.slane %v1119, 4
        %v1122 = vshll.u32 %v391, 16
        %v1124 = vrot.slane %v1122, 5
        %v1125 = vsel %vm467, %v1120, %v1124
        %v1127 = vshrl.u32 %v392, 16
        %v1129 = vrot.slane %v1127, 4
        %v1130 = vshll.u32 %v392, 16
        %v1132 = vrot.slane %v1130, 5
        %v1133 = vor.u32 %v1129, %v1132
        %v1134 = vrot.slane %v1133, 4
        %v1136 = vshll.u32 %v393, 16
        %v1138 = vrot.slane %v1136, 5
        %v1139 = vsel %vm467, %v1134, %v1138
        %v1141 = vshrl.u32 %v398, 16
        %v1143 = vrot.slane %v1141, 4
        %v1144 = vshll.u32 %v398, 16
        %v1146 = vrot.slane %v1144, 5
        %v1147 = vor.u32 %v1143, %v1146
        %v1148 = vrot.slane %v1147, 4
        %v1150 = vshll.u32 %v399, 16
        %v1152 = vrot.slane %v1150, 5
        %v1153 = vsel %vm467, %v1148, %v1152
        %v1155 = vshrl.u32 %v400, 16
        %v1157 = vrot.slane %v1155, 4
        %v1158 = vshll.u32 %v400, 16
        %v1160 = vrot.slane %v1158, 5
        %v1161 = vor.u32 %v1157, %v1160
        %v1162 = vrot.slane %v1161, 4
        %v1164 = vshll.u32 %v401, 16
        %v1166 = vrot.slane %v1164, 5
        %v1167 = vsel %vm467, %v1162, %v1166
        %v1169 = vshrl.u32 %v402, 16
        %v1171 = vrot.slane %v1169, 4
        %v1172 = vshll.u32 %v402, 16
        %v1174 = vrot.slane %v1172, 5
        %v1175 = vor.u32 %v1171, %v1174
        %v1176 = vrot.slane %v1175, 4
        %v1178 = vshll.u32 %v403, 16
        %v1180 = vrot.slane %v1178, 5
        %v1181 = vsel %vm467, %v1176, %v1180
        %v1183 = vshrl.u32 %v404, 16
        %v1185 = vrot.slane %v1183, 4
        %v1186 = vshll.u32 %v404, 16
        %v1188 = vrot.slane %v1186, 5
        %v1189 = vor.u32 %v1185, %v1188
        %v1190 = vrot.slane %v1189, 4
        %v1192 = vshll.u32 %v405, 16
        %v1194 = vrot.slane %v1192, 5
        %v1195 = vsel %vm467, %v1190, %v1194
        %v1197 = vshrl.u32 %v406, 16
        %v1199 = vrot.slane %v1197, 4
        %v1200 = vshll.u32 %v406, 16
        %v1202 = vrot.slane %v1200, 5
        %v1203 = vor.u32 %v1199, %v1202
        %v1204 = vrot.slane %v1203, 4
        %v1206 = vshll.u32 %v407, 16
        %v1208 = vrot.slane %v1206, 5
        %v1209 = vsel %vm467, %v1204, %v1208
        %v1211 = vshrl.u32 %v408, 16
        %v1213 = vrot.slane %v1211, 4
        %v1214 = vshll.u32 %v408, 16
        %v1216 = vrot.slane %v1214, 5
        %v1217 = vor.u32 %v1213, %v1216
        %v1218 = vrot.slane %v1217, 4
        %v1220 = vshll.u32 %v409, 16
        %v1222 = vrot.slane %v1220, 5
        %v1223 = vsel %vm467, %v1218, %v1222
        %v1225 = vshrl.u32 %v410, 16
        %v1227 = vrot.slane %v1225, 4
        %v1228 = vshll.u32 %v410, 16
        %v1230 = vrot.slane %v1228, 5
        %v1231 = vor.u32 %v1227, %v1230
        %v1232 = vrot.slane %v1231, 4
        %v1234 = vshll.u32 %v411, 16
        %v1236 = vrot.slane %v1234, 5
        %v1237 = vsel %vm467, %v1232, %v1236
        %v1239 = vshrl.u32 %v412, 16
        %v1241 = vrot.slane %v1239, 4
        %v1242 = vshll.u32 %v412, 16
        %v1244 = vrot.slane %v1242, 5
        %v1245 = vor.u32 %v1241, %v1244
        %v1246 = vrot.slane %v1245, 4
        %v1248 = vshll.u32 %v413, 16
        %v1250 = vrot.slane %v1248, 5
        %v1251 = vsel %vm467, %v1246, %v1250
        %v1253 = vshrl.u32 %v418, 16
        %v1255 = vrot.slane %v1253, 4
        %v1256 = vshll.u32 %v418, 16
        %v1258 = vrot.slane %v1256, 5
        %v1259 = vor.u32 %v1255, %v1258
        %v1260 = vrot.slane %v1259, 4
        %v1262 = vshll.u32 %v419, 16
        %v1264 = vrot.slane %v1262, 5
        %v1265 = vsel %vm467, %v1260, %v1264
        %v1267 = vshrl.u32 %v420, 16
        %v1269 = vrot.slane %v1267, 4
        %v1270 = vshll.u32 %v420, 16
        %v1272 = vrot.slane %v1270, 5
        %v1273 = vor.u32 %v1269, %v1272
        %v1274 = vrot.slane %v1273, 4
        %v1276 = vshll.u32 %v421, 16
        %v1278 = vrot.slane %v1276, 5
        %v1279 = vsel %vm467, %v1274, %v1278
        %v1281 = vshrl.u32 %v422, 16
        %v1283 = vrot.slane %v1281, 4
        %v1284 = vshll.u32 %v422, 16
        %v1286 = vrot.slane %v1284, 5
        %v1287 = vor.u32 %v1283, %v1286
        %v1288 = vrot.slane %v1287, 4
        %v1290 = vshll.u32 %v423, 16
        %v1292 = vrot.slane %v1290, 5
        %v1293 = vsel %vm467, %v1288, %v1292
        %v1295 = vshrl.u32 %v424, 16
        %v1297 = vrot.slane %v1295, 4
        %v1298 = vshll.u32 %v424, 16
        %v1300 = vrot.slane %v1298, 5
        %v1301 = vor.u32 %v1297, %v1300
        %v1302 = vrot.slane %v1301, 4
        %v1304 = vshll.u32 %v425, 16
        %v1306 = vrot.slane %v1304, 5
        %v1307 = vsel %vm467, %v1302, %v1306
        %v1309 = vshrl.u32 %v426, 16
        %v1311 = vrot.slane %v1309, 4
        %v1312 = vshll.u32 %v426, 16
        %v1314 = vrot.slane %v1312, 5
        %v1315 = vor.u32 %v1311, %v1314
        %v1316 = vrot.slane %v1315, 4
        %v1318 = vshll.u32 %v427, 16
        %v1320 = vrot.slane %v1318, 5
        %v1321 = vsel %vm467, %v1316, %v1320
        %v1323 = vshrl.u32 %v428, 16
        %v1325 = vrot.slane %v1323, 4
        %v1326 = vshll.u32 %v428, 16
        %v1328 = vrot.slane %v1326, 5
        %v1329 = vor.u32 %v1325, %v1328
        %v1330 = vrot.slane %v1329, 4
        %v1332 = vshll.u32 %v429, 16
        %v1334 = vrot.slane %v1332, 5
        %v1335 = vsel %vm467, %v1330, %v1334
        %v1337 = vshrl.u32 %v430, 16
        %v1339 = vrot.slane %v1337, 4
        %v1340 = vshll.u32 %v430, 16
        %v1342 = vrot.slane %v1340, 5
        %v1343 = vor.u32 %v1339, %v1342
        %v1344 = vrot.slane %v1343, 4
        %v1346 = vshll.u32 %v431, 16
        %v1348 = vrot.slane %v1346, 5
        %v1349 = vsel %vm467, %v1344, %v1348
        %v1351 = vshrl.u32 %v432, 16
        %v1353 = vrot.slane %v1351, 4
        %v1354 = vshll.u32 %v432, 16
        %v1356 = vrot.slane %v1354, 5
        %v1357 = vor.u32 %v1353, %v1356
        %v1358 = vrot.slane %v1357, 4
        %v1360 = vshll.u32 %v433, 16
        %v1362 = vrot.slane %v1360, 5
        %v1363 = vsel %vm467, %v1358, %v1362
        %v1364 = vunpack.c.l.b16 %v481
        %v1365 = vunpack.c.l.b16 %v495
        %v1366 = vunpack.c.l.b16 %v509
        %v1367 = vunpack.c.l.b16 %v523
        %v1368 = vunpack.c.l.b16 %v537
        %v1369 = vunpack.c.l.b16 %v551
        %v1370 = vunpack.c.l.b16 %v565
        %v1371 = vunpack.c.l.b16 %v579
        %v1372 = vunpack.c.l.b16 %v593
        %v1373 = vunpack.c.l.b16 %v607
        %v1374 = vunpack.c.l.b16 %v621
        %v1375 = vunpack.c.l.b16 %v635
        %v1376 = vunpack.c.l.b16 %v649
        %v1377 = vunpack.c.l.b16 %v663
        %v1378 = vunpack.c.l.b16 %v677
        %v1379 = vunpack.c.l.b16 %v691
        %v1380 = vunpack.c.l.b16 %v705
        %v1381 = vunpack.c.l.b16 %v719
        %v1382 = vunpack.c.l.b16 %v733
        %v1383 = vunpack.c.l.b16 %v747
        %v1384 = vunpack.c.l.b16 %v761
        %v1385 = vunpack.c.l.b16 %v775
        %v1386 = vunpack.c.l.b16 %v789
        %v1387 = vunpack.c.l.b16 %v803
        %v1388 = vunpack.c.l.b16 %v817
        %v1389 = vunpack.c.l.b16 %v831
        %v1390 = vunpack.c.l.b16 %v845
        %v1391 = vunpack.c.l.b16 %v859
        %v1392 = vunpack.c.l.b16 %v873
        %v1393 = vunpack.c.l.b16 %v887
        %v1394 = vunpack.c.l.b16 %v901
        %v1395 = vunpack.c.l.b16 %v915
        %v1396 = vunpack.c.l.b16 %v929
        %v1397 = vunpack.c.l.b16 %v943
        %v1398 = vunpack.c.l.b16 %v957
        %v1399 = vunpack.c.l.b16 %v971
        %v1400 = vunpack.c.l.b16 %v985
        %v1401 = vunpack.c.l.b16 %v999
        %v1402 = vunpack.c.l.b16 %v1013
        %v1403 = vunpack.c.l.b16 %v1027
        %v1404 = vunpack.c.l.b16 %v1041
        %v1405 = vunpack.c.l.b16 %v1055
        %v1406 = vunpack.c.l.b16 %v1069
        %v1407 = vunpack.c.l.b16 %v1083
        %v1408 = vunpack.c.l.b16 %v1097
        %v1409 = vunpack.c.l.b16 %v1111
        %v1410 = vunpack.c.l.b16 %v1125
        %v1411 = vunpack.c.l.b16 %v1139
        %v1412 = vunpack.c.l.b16 %v1153
        %v1413 = vunpack.c.l.b16 %v1167
        %v1414 = vunpack.c.l.b16 %v1181
        %v1415 = vunpack.c.l.b16 %v1195
        %v1416 = vunpack.c.l.b16 %v1209
        %v1417 = vunpack.c.l.b16 %v1223
        %v1418 = vunpack.c.l.b16 %v1237
        %v1419 = vunpack.c.l.b16 %v1251
        %v1420 = vunpack.c.l.b16 %v1265
        %v1421 = vunpack.c.l.b16 %v1279
        %v1422 = vunpack.c.l.b16 %v1293
        %v1423 = vunpack.c.l.b16 %v1307
        %v1424 = vunpack.c.l.b16 %v1321
        %v1425 = vunpack.c.l.b16 %v1335
        %v1426 = vunpack.c.l.b16 %v1349
        %v1427 = vunpack.c.l.b16 %v1363
        %v1428 = vpack.c.b16 %v1365, %v1364
        %v1429 = vpack.c.b16 %v1367, %v1366
        %v1430 = vpack.c.b16 %v1369, %v1368
        %v1431 = vpack.c.b16 %v1371, %v1370
        %v1432 = vpack.c.b16 %v1373, %v1372
        %v1433 = vpack.c.b16 %v1375, %v1374
        %v1434 = vpack.c.b16 %v1377, %v1376
        %v1435 = vpack.c.b16 %v1379, %v1378
        %v1436 = vpack.c.b16 %v1381, %v1380
        %v1437 = vpack.c.b16 %v1383, %v1382
        %v1438 = vpack.c.b16 %v1385, %v1384
        %v1439 = vpack.c.b16 %v1387, %v1386
        %v1440 = vpack.c.b16 %v1389, %v1388
        %v1441 = vpack.c.b16 %v1391, %v1390
        %v1442 = vpack.c.b16 %v1393, %v1392
        %v1443 = vpack.c.b16 %v1395, %v1394
        %v1444 = vpack.c.b16 %v1397, %v1396
        %v1445 = vpack.c.b16 %v1399, %v1398
        %v1446 = vpack.c.b16 %v1401, %v1400
        %v1447 = vpack.c.b16 %v1403, %v1402
        %v1448 = vpack.c.b16 %v1405, %v1404
        %v1449 = vpack.c.b16 %v1407, %v1406
        %v1450 = vpack.c.b16 %v1409, %v1408
        %v1451 = vpack.c.b16 %v1411, %v1410
        %v1452 = vpack.c.b16 %v1413, %v1412
        %v1453 = vpack.c.b16 %v1415, %v1414
        %v1454 = vpack.c.b16 %v1417, %v1416
        %v1455 = vpack.c.b16 %v1419, %v1418
        %v1456 = vpack.c.b16 %v1421, %v1420
        %v1457 = vpack.c.b16 %v1423, %v1422
        %v1458 = vpack.c.b16 %v1425, %v1424
        %v1459 = vpack.c.b16 %v1427, %v1426
        %v1463 = vunpack.c.l.b16 %v441
        %v1464 = vunpack.c.l.b16 %v442
        %v1465 = vunpack.c.l.b16 %v443
        %v1466 = vpack.c.b16 %v1464, %v1463
        %v1467 = vpack.c.b16 %v1465, %v1465
        %vm1469 = vcmask 195584
        %v1471 = vsel %vm1469, %v1428, 0
        %v1474 = vsel %vm1469, %v1429, 0
        %v1477 = vsel %vm1469, %v1430, 0
        %v1480 = vsel %vm1469, %v1431, 0
        %v1483 = vsel %vm1469, %v1432, 0
        %v1486 = vsel %vm1469, %v1433, 0
        %v1489 = vsel %vm1469, %v1434, 0
        %v1492 = vsel %vm1469, %v1435, 0
        %v1495 = vsel %vm1469, %v1436, 0
        %v1498 = vsel %vm1469, %v1437, 0
        %v1501 = vsel %vm1469, %v1438, 0
        %v1504 = vsel %vm1469, %v1439, 0
        %v1507 = vsel %vm1469, %v1440, 0
        %v1510 = vsel %vm1469, %v1441, 0
        %v1513 = vsel %vm1469, %v1442, 0
        %v1516 = vsel %vm1469, %v1443, 0
        %v1519 = vsel %vm1469, %v1444, 0
        %v1522 = vsel %vm1469, %v1445, 0
        %v1525 = vsel %vm1469, %v1446, 0
        %v1528 = vsel %vm1469, %v1447, 0
        %v1531 = vsel %vm1469, %v1448, 0
        %v1534 = vsel %vm1469, %v1449, 0
        %v1537 = vsel %vm1469, %v1450, 0
        %v1540 = vsel %vm1469, %v1451, 0
        %v1543 = vsel %vm1469, %v1452, 0
        %v1546 = vsel %vm1469, %v1453, 0
        %v1549 = vsel %vm1469, %v1454, 0
        %v1552 = vsel %vm1469, %v1455, 0
        %v1555 = vsel %vm1469, %v1456, 0
        %v1558 = vsel %vm1469, %v1457, 0
        %v1561 = vsel %vm1469, %v1458, 0
        %v1564 = vsel %vm1469, %v1459, 0
        %vm1566 = vcmask 1043456
        %v1568 = vsel %vm1566, %v1467, 0
        %1570 = vmatprep.subr.bf16.mxu0 0
        %1571 = vmatpush1.bf16.msra.mxu0 %v1466
        %1572 = vmatprep.subr.bf16.mxu0 0
        %1573 = vmatpush1.bf16.msra.mxu0 %v1568
        %1574 = vmatprep.subr.bf16.mxu0 0
        %1575 = vmatpush1.bf16.msra.mxu0 0
        %1576 = vmatprep.subr.bf16.mxu0 0
        %1577 = vmatpush1.bf16.msra.mxu0 0
        %1578 = vmatprep.subr.bf16.mxu0 0
        %1579 = vmatpush1.bf16.msra.mxu0 0
        %1580 = vmatprep.subr.bf16.mxu0 0
        %1581 = vmatpush1.bf16.msra.mxu0 0
        %1582 = vmatprep.subr.bf16.mxu0 0
        %1583 = vmatpush1.bf16.msra.mxu0 0
        %1584 = vmatprep.subr.bf16.mxu0 0
        %1585 = vmatpush1.bf16.msra.mxu0 0
        %1586 = vmatprep.subr.bf16.mxu0 0
        %1587 = vmatpush1.bf16.msra.mxu0 0
        %1588 = vmatprep.subr.bf16.mxu0 0
        %1589 = vmatpush1.bf16.msra.mxu0 0
        %1590 = vmatprep.subr.bf16.mxu0 0
        %1591 = vmatpush1.bf16.msra.mxu0 0
        %1592 = vmatprep.subr.bf16.mxu0 0
        %1593 = vmatpush1.bf16.msra.mxu0 0
        %1594 = vmatprep.subr.bf16.mxu0 0
        %1595 = vmatpush1.bf16.msra.mxu0 0
        %1596 = vmatprep.subr.bf16.mxu0 0
        %1597 = vmatpush1.bf16.msra.mxu0 0
        %1598 = vmatprep.subr.bf16.mxu0 0
        %1599 = vmatpush1.bf16.msra.mxu0 0
        %1600 = vmatprep.subr.bf16.mxu0 0
        %1601 = vmatpush1.bf16.msra.mxu0 0
        %1602 = vmatprep.mubr.bf16.mxu0 0
        %1603 = vmatmul.mubr.bf16.gmra.mrb[0].mxu0 %v1471
        %v1604 = vpop.f32.mrb[0].mxu0
        %v1605 = vadd.f32 0.0, %v1604
        %v1606 = vpop.f32.mrb[0].mxu0
        %v1607 = vpop.f32.mrb[0].mxu0
        %v1608 = vadd.f32 0.0, %v1607
        %v1609 = vpop.f32.mrb[0].mxu0
        %1610 = vmatprep.mubr.bf16.mxu0 0
        %1611 = vmatmul.mubr.bf16.gmra.mrb[0].mxu0 %v1474
        %v1612 = vpop.f32.mrb[0].mxu0
        %v1613 = vadd.f32 0.0, %v1612
        %v1614 = vpop.f32.mrb[0].mxu0
        %v1615 = vpop.f32.mrb[0].mxu0
        %v1616 = vadd.f32 0.0, %v1615
        %v1617 = vpop.f32.mrb[0].mxu0
        %1618 = vmatprep.mubr.bf16.mxu0 0
        %1619 = vmatmul.mubr.bf16.gmra.mrb[0].mxu0 %v1477
        %v1620 = vpop.f32.mrb[0].mxu0
        %v1621 = vadd.f32 0.0, %v1620
        %v1622 = vpop.f32.mrb[0].mxu0
        %v1623 = vpop.f32.mrb[0].mxu0
        %v1624 = vadd.f32 0.0, %v1623
        %v1625 = vpop.f32.mrb[0].mxu0
        %1626 = vmatprep.mubr.bf16.mxu0 0
        %1627 = vmatmul.mubr.bf16.gmra.mrb[0].mxu0 %v1480
        %v1628 = vpop.f32.mrb[0].mxu0
        %v1629 = vadd.f32 0.0, %v1628
        %v1630 = vpop.f32.mrb[0].mxu0
        %v1631 = vpop.f32.mrb[0].mxu0
        %v1632 = vadd.f32 0.0, %v1631
        %v1633 = vpop.f32.mrb[0].mxu0
        %1634 = vmatprep.mubr.bf16.mxu0 0
        %1635 = vmatmul.mubr.bf16.gmra.mrb[0].mxu0 %v1483
        %v1636 = vpop.f32.mrb[0].mxu0
        %v1637 = vadd.f32 0.0, %v1636
        %v1638 = vpop.f32.mrb[0].mxu0
        %v1639 = vpop.f32.mrb[0].mxu0
        %v1640 = vadd.f32 0.0, %v1639
        %v1641 = vpop.f32.mrb[0].mxu0
        %1642 = vmatprep.mubr.bf16.mxu0 0
        %1643 = vmatmul.mubr.bf16.gmra.mrb[0].mxu0 %v1486
        %v1644 = vpop.f32.mrb[0].mxu0
        %v1645 = vadd.f32 0.0, %v1644
        %v1646 = vpop.f32.mrb[0].mxu0
        %v1647 = vpop.f32.mrb[0].mxu0
        %v1648 = vadd.f32 0.0, %v1647
        %v1649 = vpop.f32.mrb[0].mxu0
        %1650 = vmatprep.mubr.bf16.mxu0 0
        %1651 = vmatmul.mubr.bf16.gmra.mrb[0].mxu0 %v1489
        %v1652 = vpop.f32.mrb[0].mxu0
        %v1653 = vadd.f32 0.0, %v1652
        %v1654 = vpop.f32.mrb[0].mxu0
        %v1655 = vpop.f32.mrb[0].mxu0
        %v1656 = vadd.f32 0.0, %v1655
        %v1657 = vpop.f32.mrb[0].mxu0
        %1658 = vmatprep.mubr.bf16.mxu0 0
        %1659 = vmatmul.mubr.bf16.gmra.mrb[0].mxu0 %v1492
        %v1660 = vpop.f32.mrb[0].mxu0
        %v1661 = vadd.f32 0.0, %v1660
        %v1662 = vpop.f32.mrb[0].mxu0
        %v1663 = vpop.f32.mrb[0].mxu0
        %v1664 = vadd.f32 0.0, %v1663
        %v1665 = vpop.f32.mrb[0].mxu0
        %1666 = vmatprep.mubr.bf16.mxu0 0
        %1667 = vmatmul.mubr.bf16.gmra.mrb[0].mxu0 %v1495
        %v1668 = vpop.f32.mrb[0].mxu0
        %v1669 = vadd.f32 0.0, %v1668
        %v1670 = vpop.f32.mrb[0].mxu0
        %v1671 = vpop.f32.mrb[0].mxu0
        %v1672 = vadd.f32 0.0, %v1671
        %v1673 = vpop.f32.mrb[0].mxu0
        %1674 = vmatprep.mubr.bf16.mxu0 0
        %1675 = vmatmul.mubr.bf16.gmra.mrb[0].mxu0 %v1498
        %v1676 = vpop.f32.mrb[0].mxu0
        %v1677 = vadd.f32 0.0, %v1676
        %v1678 = vpop.f32.mrb[0].mxu0
        %v1679 = vpop.f32.mrb[0].mxu0
        %v1680 = vadd.f32 0.0, %v1679
        %v1681 = vpop.f32.mrb[0].mxu0
        %1682 = vmatprep.mubr.bf16.mxu0 0
        %1683 = vmatmul.mubr.bf16.gmra.mrb[0].mxu0 %v1501
        %v1684 = vpop.f32.mrb[0].mxu0
        %v1685 = vadd.f32 0.0, %v1684
        %v1686 = vpop.f32.mrb[0].mxu0
        %v1687 = vpop.f32.mrb[0].mxu0
        %v1688 = vadd.f32 0.0, %v1687
        %v1689 = vpop.f32.mrb[0].mxu0
        %1690 = vmatprep.mubr.bf16.mxu0 0
        %1691 = vmatmul.mubr.bf16.gmra.mrb[0].mxu0 %v1504
        %v1692 = vpop.f32.mrb[0].mxu0
        %v1693 = vadd.f32 0.0, %v1692
        %v1694 = vpop.f32.mrb[0].mxu0
        %v1695 = vpop.f32.mrb[0].mxu0
        %v1696 = vadd.f32 0.0, %v1695
        %v1697 = vpop.f32.mrb[0].mxu0
        %1698 = vmatprep.mubr.bf16.mxu0 0
        %1699 = vmatmul.mubr.bf16.gmra.mrb[0].mxu0 %v1507
        %v1700 = vpop.f32.mrb[0].mxu0
        %v1701 = vadd.f32 0.0, %v1700
        %v1702 = vpop.f32.mrb[0].mxu0
        %v1703 = vpop.f32.mrb[0].mxu0
        %v1704 = vadd.f32 0.0, %v1703
        %v1705 = vpop.f32.mrb[0].mxu0
        %1706 = vmatprep.mubr.bf16.mxu0 0
        %1707 = vmatmul.mubr.bf16.gmra.mrb[0].mxu0 %v1510
        %v1708 = vpop.f32.mrb[0].mxu0
        %v1709 = vadd.f32 0.0, %v1708
        %v1710 = vpop.f32.mrb[0].mxu0
        %v1711 = vpop.f32.mrb[0].mxu0
        %v1712 = vadd.f32 0.0, %v1711
        %v1713 = vpop.f32.mrb[0].mxu0
        %1714 = vmatprep.mubr.bf16.mxu0 0
        %1715 = vmatmul.mubr.bf16.gmra.mrb[0].mxu0 %v1513
        %v1716 = vpop.f32.mrb[0].mxu0
        %v1717 = vadd.f32 0.0, %v1716
        %v1718 = vpop.f32.mrb[0].mxu0
        %v1719 = vpop.f32.mrb[0].mxu0
        %v1720 = vadd.f32 0.0, %v1719
        %v1721 = vpop.f32.mrb[0].mxu0
        %1722 = vmatprep.mubr.bf16.mxu0 0
        %1723 = vmatmul.mubr.bf16.gmra.mrb[0].mxu0 %v1516
        %v1724 = vpop.f32.mrb[0].mxu0
        %v1725 = vadd.f32 0.0, %v1724
        %v1726 = vpop.f32.mrb[0].mxu0
        %v1727 = vpop.f32.mrb[0].mxu0
        %v1728 = vadd.f32 0.0, %v1727
        %v1729 = vpop.f32.mrb[0].mxu0
        %1730 = vmatprep.mubr.bf16.mxu0 0
        %1731 = vmatmul.mubr.bf16.gmra.mrb[0].mxu0 %v1519
        %v1732 = vpop.f32.mrb[0].mxu0
        %v1733 = vadd.f32 0.0, %v1732
        %v1734 = vpop.f32.mrb[0].mxu0
        %v1735 = vpop.f32.mrb[0].mxu0
        %v1736 = vadd.f32 0.0, %v1735
        %v1737 = vpop.f32.mrb[0].mxu0
        %1738 = vmatprep.mubr.bf16.mxu0 0
        %1739 = vmatmul.mubr.bf16.gmra.mrb[0].mxu0 %v1522
        %v1740 = vpop.f32.mrb[0].mxu0
        %v1741 = vadd.f32 0.0, %v1740
        %v1742 = vpop.f32.mrb[0].mxu0
        %v1743 = vpop.f32.mrb[0].mxu0
        %v1744 = vadd.f32 0.0, %v1743
        %v1745 = vpop.f32.mrb[0].mxu0
        %1746 = vmatprep.mubr.bf16.mxu0 0
        %1747 = vmatmul.mubr.bf16.gmra.mrb[0].mxu0 %v1525
        %v1748 = vpop.f32.mrb[0].mxu0
        %v1749 = vadd.f32 0.0, %v1748
        %v1750 = vpop.f32.mrb[0].mxu0
        %v1751 = vpop.f32.mrb[0].mxu0
        %v1752 = vadd.f32 0.0, %v1751
        %v1753 = vpop.f32.mrb[0].mxu0
        %1754 = vmatprep.mubr.bf16.mxu0 0
        %1755 = vmatmul.mubr.bf16.gmra.mrb[0].mxu0 %v1528
        %v1756 = vpop.f32.mrb[0].mxu0
        %v1757 = vadd.f32 0.0, %v1756
        %v1758 = vpop.f32.mrb[0].mxu0
        %v1759 = vpop.f32.mrb[0].mxu0
        %v1760 = vadd.f32 0.0, %v1759
        %v1761 = vpop.f32.mrb[0].mxu0
        %1762 = vmatprep.mubr.bf16.mxu0 0
        %1763 = vmatmul.mubr.bf16.gmra.mrb[0].mxu0 %v1531
        %v1764 = vpop.f32.mrb[0].mxu0
        %v1765 = vadd.f32 0.0, %v1764
        %v1766 = vpop.f32.mrb[0].mxu0
        %v1767 = vpop.f32.mrb[0].mxu0
        %v1768 = vadd.f32 0.0, %v1767
        %v1769 = vpop.f32.mrb[0].mxu0
        %1770 = vmatprep.mubr.bf16.mxu0 0
        %1771 = vmatmul.mubr.bf16.gmra.mrb[0].mxu0 %v1534
        %v1772 = vpop.f32.mrb[0].mxu0
        %v1773 = vadd.f32 0.0, %v1772
        %v1774 = vpop.f32.mrb[0].mxu0
        %v1775 = vpop.f32.mrb[0].mxu0
        %v1776 = vadd.f32 0.0, %v1775
        %v1777 = vpop.f32.mrb[0].mxu0
        %1778 = vmatprep.mubr.bf16.mxu0 0
        %1779 = vmatmul.mubr.bf16.gmra.mrb[0].mxu0 %v1537
        %v1780 = vpop.f32.mrb[0].mxu0
        %v1781 = vadd.f32 0.0, %v1780
        %v1782 = vpop.f32.mrb[0].mxu0
        %v1783 = vpop.f32.mrb[0].mxu0
        %v1784 = vadd.f32 0.0, %v1783
        %v1785 = vpop.f32.mrb[0].mxu0
        %1786 = vmatprep.mubr.bf16.mxu0 0
        %1787 = vmatmul.mubr.bf16.gmra.mrb[0].mxu0 %v1540
        %v1788 = vpop.f32.mrb[0].mxu0
        %v1789 = vadd.f32 0.0, %v1788
        %v1790 = vpop.f32.mrb[0].mxu0
        %v1791 = vpop.f32.mrb[0].mxu0
        %v1792 = vadd.f32 0.0, %v1791
        %v1793 = vpop.f32.mrb[0].mxu0
        %1794 = vmatprep.mubr.bf16.mxu0 0
        %1795 = vmatmul.mubr.bf16.gmra.mrb[0].mxu0 %v1543
        %v1796 = vpop.f32.mrb[0].mxu0
        %v1797 = vadd.f32 0.0, %v1796
        %v1798 = vpop.f32.mrb[0].mxu0
        %v1799 = vpop.f32.mrb[0].mxu0
        %v1800 = vadd.f32 0.0, %v1799
        %v1801 = vpop.f32.mrb[0].mxu0
        %1802 = vmatprep.mubr.bf16.mxu0 0
        %1803 = vmatmul.mubr.bf16.gmra.mrb[0].mxu0 %v1546
        %v1804 = vpop.f32.mrb[0].mxu0
        %v1805 = vadd.f32 0.0, %v1804
        %v1806 = vpop.f32.mrb[0].mxu0
        %v1807 = vpop.f32.mrb[0].mxu0
        %v1808 = vadd.f32 0.0, %v1807
        %v1809 = vpop.f32.mrb[0].mxu0
        %1810 = vmatprep.mubr.bf16.mxu0 0
        %1811 = vmatmul.mubr.bf16.gmra.mrb[0].mxu0 %v1549
        %v1812 = vpop.f32.mrb[0].mxu0
        %v1813 = vadd.f32 0.0, %v1812
        %v1814 = vpop.f32.mrb[0].mxu0
        %v1815 = vpop.f32.mrb[0].mxu0
        %v1816 = vadd.f32 0.0, %v1815
        %v1817 = vpop.f32.mrb[0].mxu0
        %1818 = vmatprep.mubr.bf16.mxu0 0
        %1819 = vmatmul.mubr.bf16.gmra.mrb[0].mxu0 %v1552
        %v1820 = vpop.f32.mrb[0].mxu0
        %v1821 = vadd.f32 0.0, %v1820
        %v1822 = vpop.f32.mrb[0].mxu0
        %v1823 = vpop.f32.mrb[0].mxu0
        %v1824 = vadd.f32 0.0, %v1823
        %v1825 = vpop.f32.mrb[0].mxu0
        %1826 = vmatprep.mubr.bf16.mxu0 0
        %1827 = vmatmul.mubr.bf16.gmra.mrb[0].mxu0 %v1555
        %v1828 = vpop.f32.mrb[0].mxu0
        %v1829 = vadd.f32 0.0, %v1828
        %v1830 = vpop.f32.mrb[0].mxu0
        %v1831 = vpop.f32.mrb[0].mxu0
        %v1832 = vadd.f32 0.0, %v1831
        %v1833 = vpop.f32.mrb[0].mxu0
        %1834 = vmatprep.mubr.bf16.mxu0 0
        %1835 = vmatmul.mubr.bf16.gmra.mrb[0].mxu0 %v1558
        %v1836 = vpop.f32.mrb[0].mxu0
        %v1837 = vadd.f32 0.0, %v1836
        %v1838 = vpop.f32.mrb[0].mxu0
        %v1839 = vpop.f32.mrb[0].mxu0
        %v1840 = vadd.f32 0.0, %v1839
        %v1841 = vpop.f32.mrb[0].mxu0
        %1842 = vmatprep.mubr.bf16.mxu0 0
        %1843 = vmatmul.mubr.bf16.gmra.mrb[0].mxu0 %v1561
        %v1844 = vpop.f32.mrb[0].mxu0
        %v1845 = vadd.f32 0.0, %v1844
        %v1846 = vpop.f32.mrb[0].mxu0
        %v1847 = vpop.f32.mrb[0].mxu0
        %v1848 = vadd.f32 0.0, %v1847
        %v1849 = vpop.f32.mrb[0].mxu0
        %1850 = vmatprep.mubr.bf16.mxu0 0
        %1851 = vmatmul.mubr.bf16.gmra.mrb[0].mxu0 %v1564
        %v1852 = vpop.f32.mrb[0].mxu0
        %v1853 = vadd.f32 0.0, %v1852
        %v1854 = vpop.f32.mrb[0].mxu0
        %v1855 = vpop.f32.mrb[0].mxu0
        %v1856 = vadd.f32 0.0, %v1855
        %v1857 = vpop.f32.mrb[0].mxu0
        %1858 = vdwg.mxu0
        %v1923 = vunpack.c.l.b16 %v278
        %v1924 = vunpack.c.l.b16 %v280
        %v1925 = vunpack.c.l.b16 %v282
        %v1926 = vunpack.c.l.b16 %v284
        %v1927 = vunpack.c.l.b16 %v286
        %v1928 = vunpack.c.l.b16 %v288
        %v1929 = vunpack.c.l.b16 %v290
        %v1930 = vunpack.c.l.b16 %v292
        %v1931 = vunpack.c.l.b16 %v298
        %v1932 = vunpack.c.l.b16 %v300
        %v1933 = vunpack.c.l.b16 %v302
        %v1934 = vunpack.c.l.b16 %v304
        %v1935 = vunpack.c.l.b16 %v306
        %v1936 = vunpack.c.l.b16 %v308
        %v1937 = vunpack.c.l.b16 %v310
        %v1938 = vunpack.c.l.b16 %v312
        %v1939 = vunpack.c.l.b16 %v318
        %v1940 = vunpack.c.l.b16 %v320
        %v1941 = vunpack.c.l.b16 %v322
        %v1942 = vunpack.c.l.b16 %v324
        %v1943 = vunpack.c.l.b16 %v326
        %v1944 = vunpack.c.l.b16 %v328
        %v1945 = vunpack.c.l.b16 %v330
        %v1946 = vunpack.c.l.b16 %v332
        %v1947 = vunpack.c.l.b16 %v338
        %v1948 = vunpack.c.l.b16 %v340
        %v1949 = vunpack.c.l.b16 %v342
        %v1950 = vunpack.c.l.b16 %v344
        %v1951 = vunpack.c.l.b16 %v346
        %v1952 = vunpack.c.l.b16 %v348
        %v1953 = vunpack.c.l.b16 %v350
        %v1954 = vunpack.c.l.b16 %v352
        %v1955 = vunpack.c.l.b16 %v358
        %v1956 = vunpack.c.l.b16 %v360
        %v1957 = vunpack.c.l.b16 %v362
        %v1958 = vunpack.c.l.b16 %v364
        %v1959 = vunpack.c.l.b16 %v366
        %v1960 = vunpack.c.l.b16 %v368
        %v1961 = vunpack.c.l.b16 %v370
        %v1962 = vunpack.c.l.b16 %v372
        %v1963 = vunpack.c.l.b16 %v378
        %v1964 = vunpack.c.l.b16 %v380
        %v1965 = vunpack.c.l.b16 %v382
        %v1966 = vunpack.c.l.b16 %v384
        %v1967 = vunpack.c.l.b16 %v386
        %v1968 = vunpack.c.l.b16 %v388
        %v1969 = vunpack.c.l.b16 %v390
        %v1970 = vunpack.c.l.b16 %v392
        %v1971 = vunpack.c.l.b16 %v398
        %v1972 = vunpack.c.l.b16 %v400
        %v1973 = vunpack.c.l.b16 %v402
        %v1974 = vunpack.c.l.b16 %v404
        %v1975 = vunpack.c.l.b16 %v406
        %v1976 = vunpack.c.l.b16 %v408
        %v1977 = vunpack.c.l.b16 %v410
        %v1978 = vunpack.c.l.b16 %v412
        %v1979 = vunpack.c.l.b16 %v418
        %v1980 = vunpack.c.l.b16 %v420
        %v1981 = vunpack.c.l.b16 %v422
        %v1982 = vunpack.c.l.b16 %v424
        %v1983 = vunpack.c.l.b16 %v426
        %v1984 = vunpack.c.l.b16 %v428
        %v1985 = vunpack.c.l.b16 %v430
        %v1986 = vunpack.c.l.b16 %v432
        %v1987 = vpack.c.b16 %v1924, %v1923
        %v1988 = vpack.c.b16 %v1926, %v1925
        %v1989 = vpack.c.b16 %v1928, %v1927
        %v1990 = vpack.c.b16 %v1930, %v1929
        %v1991 = vpack.c.b16 %v1932, %v1931
        %v1992 = vpack.c.b16 %v1934, %v1933
        %v1993 = vpack.c.b16 %v1936, %v1935
        %v1994 = vpack.c.b16 %v1938, %v1937
        %v1995 = vpack.c.b16 %v1940, %v1939
        %v1996 = vpack.c.b16 %v1942, %v1941
        %v1997 = vpack.c.b16 %v1944, %v1943
        %v1998 = vpack.c.b16 %v1946, %v1945
        %v1999 = vpack.c.b16 %v1948, %v1947
        %v2000 = vpack.c.b16 %v1950, %v1949
        %v2001 = vpack.c.b16 %v1952, %v1951
        %v2002 = vpack.c.b16 %v1954, %v1953
        %v2003 = vpack.c.b16 %v1956, %v1955
        %v2004 = vpack.c.b16 %v1958, %v1957
        %v2005 = vpack.c.b16 %v1960, %v1959
        %v2006 = vpack.c.b16 %v1962, %v1961
        %v2007 = vpack.c.b16 %v1964, %v1963
        %v2008 = vpack.c.b16 %v1966, %v1965
        %v2009 = vpack.c.b16 %v1968, %v1967
        %v2010 = vpack.c.b16 %v1970, %v1969
        %v2011 = vpack.c.b16 %v1972, %v1971
        %v2012 = vpack.c.b16 %v1974, %v1973
        %v2013 = vpack.c.b16 %v1976, %v1975
        %v2014 = vpack.c.b16 %v1978, %v1977
        %v2015 = vpack.c.b16 %v1980, %v1979
        %v2016 = vpack.c.b16 %v1982, %v1981
        %v2017 = vpack.c.b16 %v1984, %v1983
        %v2018 = vpack.c.b16 %v1986, %v1985
        %v2022 = vunpack.c.l.b16 %v438
        %v2023 = vunpack.c.l.b16 %v439
        %v2024 = vunpack.c.l.b16 %v440
        %v2025 = vpack.c.b16 %v2023, %v2022
        %v2026 = vpack.c.b16 %v2024, %v2024
        %v2029 = vsel %vm1469, %v1987, 0
        %v2032 = vsel %vm1469, %v1988, 0
        %v2035 = vsel %vm1469, %v1989, 0
        %v2038 = vsel %vm1469, %v1990, 0
        %v2041 = vsel %vm1469, %v1991, 0
        %v2044 = vsel %vm1469, %v1992, 0
        %v2047 = vsel %vm1469, %v1993, 0
        %v2050 = vsel %vm1469, %v1994, 0
        %v2053 = vsel %vm1469, %v1995, 0
        %v2056 = vsel %vm1469, %v1996, 0
        %v2059 = vsel %vm1469, %v1997, 0
        %v2062 = vsel %vm1469, %v1998, 0
        %v2065 = vsel %vm1469, %v1999, 0
        %v2068 = vsel %vm1469, %v2000, 0
        %v2071 = vsel %vm1469, %v2001, 0
        %v2074 = vsel %vm1469, %v2002, 0
        %v2077 = vsel %vm1469, %v2003, 0
        %v2080 = vsel %vm1469, %v2004, 0
        %v2083 = vsel %vm1469, %v2005, 0
        %v2086 = vsel %vm1469, %v2006, 0
        %v2089 = vsel %vm1469, %v2007, 0
        %v2092 = vsel %vm1469, %v2008, 0
        %v2095 = vsel %vm1469, %v2009, 0
        %v2098 = vsel %vm1469, %v2010, 0
        %v2101 = vsel %vm1469, %v2011, 0
        %v2104 = vsel %vm1469, %v2012, 0
        %v2107 = vsel %vm1469, %v2013, 0
        %v2110 = vsel %vm1469, %v2014, 0
        %v2113 = vsel %vm1469, %v2015, 0
        %v2116 = vsel %vm1469, %v2016, 0
        %v2119 = vsel %vm1469, %v2017, 0
        %v2122 = vsel %vm1469, %v2018, 0
        %v2125 = vsel %vm1566, %v2026, 0
        %2127 = vmatprep.subr.bf16.mxu0 0
        %2128 = vmatpush1.bf16.msra.mxu0 %v2025
        %2129 = vmatprep.subr.bf16.mxu0 0
        %2130 = vmatpush1.bf16.msra.mxu0 %v2125
        %2131 = vmatprep.subr.bf16.mxu0 0
        %2132 = vmatpush1.bf16.msra.mxu0 0
        %2133 = vmatprep.subr.bf16.mxu0 0
        %2134 = vmatpush1.bf16.msra.mxu0 0
        %2135 = vmatprep.subr.bf16.mxu0 0
        %2136 = vmatpush1.bf16.msra.mxu0 0
        %2137 = vmatprep.subr.bf16.mxu0 0
        %2138 = vmatpush1.bf16.msra.mxu0 0
        %2139 = vmatprep.subr.bf16.mxu0 0
        %2140 = vmatpush1.bf16.msra.mxu0 0
        %2141 = vmatprep.subr.bf16.mxu0 0
        %2142 = vmatpush1.bf16.msra.mxu0 0
        %2143 = vmatprep.subr.bf16.mxu0 0
        %2144 = vmatpush1.bf16.msra.mxu0 0
        %2145 = vmatprep.subr.bf16.mxu0 0
        %2146 = vmatpush1.bf16.msra.mxu0 0
        %2147 = vmatprep.subr.bf16.mxu0 0
        %2148 = vmatpush1.bf16.msra.mxu0 0
        %2149 = vmatprep.subr.bf16.mxu0 0
        %2150 = vmatpush1.bf16.msra.mxu0 0
        %2151 = vmatprep.subr.bf16.mxu0 0
        %2152 = vmatpush1.bf16.msra.mxu0 0
        %2153 = vmatprep.subr.bf16.mxu0 0
        %2154 = vmatpush1.bf16.msra.mxu0 0
        %2155 = vmatprep.subr.bf16.mxu0 0
        %2156 = vmatpush1.bf16.msra.mxu0 0
        %2157 = vmatprep.subr.bf16.mxu0 0
        %2158 = vmatpush1.bf16.msra.mxu0 0
        %2159 = vmatprep.mubr.bf16.mxu0 0
        %2160 = vmatmul.mubr.bf16.gmra.mrb[0].mxu0 %v2029
        %v2161 = vpop.f32.mrb[0].mxu0
        %v2162 = vadd.f32 %v1605, %v2161
        %v2163 = vpop.f32.mrb[0].mxu0
        %v2164 = vpop.f32.mrb[0].mxu0
        %v2165 = vadd.f32 %v1608, %v2164
        %v2166 = vpop.f32.mrb[0].mxu0
        %2167 = vmatprep.mubr.bf16.mxu0 0
        %2168 = vmatmul.mubr.bf16.gmra.mrb[0].mxu0 %v2032
        %v2169 = vpop.f32.mrb[0].mxu0
        %v2170 = vadd.f32 %v1613, %v2169
        %v2171 = vpop.f32.mrb[0].mxu0
        %v2172 = vpop.f32.mrb[0].mxu0
        %v2173 = vadd.f32 %v1616, %v2172
        %v2174 = vpop.f32.mrb[0].mxu0
        %2175 = vmatprep.mubr.bf16.mxu0 0
        %2176 = vmatmul.mubr.bf16.gmra.mrb[0].mxu0 %v2035
        %v2177 = vpop.f32.mrb[0].mxu0
        %v2178 = vadd.f32 %v1621, %v2177
        %v2179 = vpop.f32.mrb[0].mxu0
        %v2180 = vpop.f32.mrb[0].mxu0
        %v2181 = vadd.f32 %v1624, %v2180
        %v2182 = vpop.f32.mrb[0].mxu0
        %2183 = vmatprep.mubr.bf16.mxu0 0
        %2184 = vmatmul.mubr.bf16.gmra.mrb[0].mxu0 %v2038
        %v2185 = vpop.f32.mrb[0].mxu0
        %v2186 = vadd.f32 %v1629, %v2185
        %v2187 = vpop.f32.mrb[0].mxu0
        %v2188 = vpop.f32.mrb[0].mxu0
        %v2189 = vadd.f32 %v1632, %v2188
        %v2190 = vpop.f32.mrb[0].mxu0
        %2191 = vmatprep.mubr.bf16.mxu0 0
        %2192 = vmatmul.mubr.bf16.gmra.mrb[0].mxu0 %v2041
        %v2193 = vpop.f32.mrb[0].mxu0
        %v2194 = vadd.f32 %v1637, %v2193
        %v2195 = vpop.f32.mrb[0].mxu0
        %v2196 = vpop.f32.mrb[0].mxu0
        %v2197 = vadd.f32 %v1640, %v2196
        %v2198 = vpop.f32.mrb[0].mxu0
        %2199 = vmatprep.mubr.bf16.mxu0 0
        %2200 = vmatmul.mubr.bf16.gmra.mrb[0].mxu0 %v2044
        %v2201 = vpop.f32.mrb[0].mxu0
        %v2202 = vadd.f32 %v1645, %v2201
        %v2203 = vpop.f32.mrb[0].mxu0
        %v2204 = vpop.f32.mrb[0].mxu0
        %v2205 = vadd.f32 %v1648, %v2204
        %v2206 = vpop.f32.mrb[0].mxu0
        %2207 = vmatprep.mubr.bf16.mxu0 0
        %2208 = vmatmul.mubr.bf16.gmra.mrb[0].mxu0 %v2047
        %v2209 = vpop.f32.mrb[0].mxu0
        %v2210 = vadd.f32 %v1653, %v2209
        %v2211 = vpop.f32.mrb[0].mxu0
        %v2212 = vpop.f32.mrb[0].mxu0
        %v2213 = vadd.f32 %v1656, %v2212
        %v2214 = vpop.f32.mrb[0].mxu0
        %2215 = vmatprep.mubr.bf16.mxu0 0
        %2216 = vmatmul.mubr.bf16.gmra.mrb[0].mxu0 %v2050
        %v2217 = vpop.f32.mrb[0].mxu0
        %v2218 = vadd.f32 %v1661, %v2217
        %v2219 = vpop.f32.mrb[0].mxu0
        %v2220 = vpop.f32.mrb[0].mxu0
        %v2221 = vadd.f32 %v1664, %v2220
        %v2222 = vpop.f32.mrb[0].mxu0
        %2223 = vmatprep.mubr.bf16.mxu0 0
        %2224 = vmatmul.mubr.bf16.gmra.mrb[0].mxu0 %v2053
        %v2225 = vpop.f32.mrb[0].mxu0
        %v2226 = vadd.f32 %v1669, %v2225
        %v2227 = vpop.f32.mrb[0].mxu0
        %v2228 = vpop.f32.mrb[0].mxu0
        %v2229 = vadd.f32 %v1672, %v2228
        %v2230 = vpop.f32.mrb[0].mxu0
        %2231 = vmatprep.mubr.bf16.mxu0 0
        %2232 = vmatmul.mubr.bf16.gmra.mrb[0].mxu0 %v2056
        %v2233 = vpop.f32.mrb[0].mxu0
        %v2234 = vadd.f32 %v1677, %v2233
        %v2235 = vpop.f32.mrb[0].mxu0
        %v2236 = vpop.f32.mrb[0].mxu0
        %v2237 = vadd.f32 %v1680, %v2236
        %v2238 = vpop.f32.mrb[0].mxu0
        %2239 = vmatprep.mubr.bf16.mxu0 0
        %2240 = vmatmul.mubr.bf16.gmra.mrb[0].mxu0 %v2059
        %v2241 = vpop.f32.mrb[0].mxu0
        %v2242 = vadd.f32 %v1685, %v2241
        %v2243 = vpop.f32.mrb[0].mxu0
        %v2244 = vpop.f32.mrb[0].mxu0
        %v2245 = vadd.f32 %v1688, %v2244
        %v2246 = vpop.f32.mrb[0].mxu0
        %2247 = vmatprep.mubr.bf16.mxu0 0
        %2248 = vmatmul.mubr.bf16.gmra.mrb[0].mxu0 %v2062
        %v2249 = vpop.f32.mrb[0].mxu0
        %v2250 = vadd.f32 %v1693, %v2249
        %v2251 = vpop.f32.mrb[0].mxu0
        %v2252 = vpop.f32.mrb[0].mxu0
        %v2253 = vadd.f32 %v1696, %v2252
        %v2254 = vpop.f32.mrb[0].mxu0
        %2255 = vmatprep.mubr.bf16.mxu0 0
        %2256 = vmatmul.mubr.bf16.gmra.mrb[0].mxu0 %v2065
        %v2257 = vpop.f32.mrb[0].mxu0
        %v2258 = vadd.f32 %v1701, %v2257
        %v2259 = vpop.f32.mrb[0].mxu0
        %v2260 = vpop.f32.mrb[0].mxu0
        %v2261 = vadd.f32 %v1704, %v2260
        %v2262 = vpop.f32.mrb[0].mxu0
        %2263 = vmatprep.mubr.bf16.mxu0 0
        %2264 = vmatmul.mubr.bf16.gmra.mrb[0].mxu0 %v2068
        %v2265 = vpop.f32.mrb[0].mxu0
        %v2266 = vadd.f32 %v1709, %v2265
        %v2267 = vpop.f32.mrb[0].mxu0
        %v2268 = vpop.f32.mrb[0].mxu0
        %v2269 = vadd.f32 %v1712, %v2268
        %v2270 = vpop.f32.mrb[0].mxu0
        %2271 = vmatprep.mubr.bf16.mxu0 0
        %2272 = vmatmul.mubr.bf16.gmra.mrb[0].mxu0 %v2071
        %v2273 = vpop.f32.mrb[0].mxu0
        %v2274 = vadd.f32 %v1717, %v2273
        %v2275 = vpop.f32.mrb[0].mxu0
        %v2276 = vpop.f32.mrb[0].mxu0
        %v2277 = vadd.f32 %v1720, %v2276
        %v2278 = vpop.f32.mrb[0].mxu0
        %2279 = vmatprep.mubr.bf16.mxu0 0
        %2280 = vmatmul.mubr.bf16.gmra.mrb[0].mxu0 %v2074
        %v2281 = vpop.f32.mrb[0].mxu0
        %v2282 = vadd.f32 %v1725, %v2281
        %v2283 = vpop.f32.mrb[0].mxu0
        %v2284 = vpop.f32.mrb[0].mxu0
        %v2285 = vadd.f32 %v1728, %v2284
        %v2286 = vpop.f32.mrb[0].mxu0
        %2287 = vmatprep.mubr.bf16.mxu0 0
        %2288 = vmatmul.mubr.bf16.gmra.mrb[0].mxu0 %v2077
        %v2289 = vpop.f32.mrb[0].mxu0
        %v2290 = vadd.f32 %v1733, %v2289
        %v2291 = vpop.f32.mrb[0].mxu0
        %v2292 = vpop.f32.mrb[0].mxu0
        %v2293 = vadd.f32 %v1736, %v2292
        %v2294 = vpop.f32.mrb[0].mxu0
        %2295 = vmatprep.mubr.bf16.mxu0 0
        %2296 = vmatmul.mubr.bf16.gmra.mrb[0].mxu0 %v2080
        %v2297 = vpop.f32.mrb[0].mxu0
        %v2298 = vadd.f32 %v1741, %v2297
        %v2299 = vpop.f32.mrb[0].mxu0
        %v2300 = vpop.f32.mrb[0].mxu0
        %v2301 = vadd.f32 %v1744, %v2300
        %v2302 = vpop.f32.mrb[0].mxu0
        %2303 = vmatprep.mubr.bf16.mxu0 0
        %2304 = vmatmul.mubr.bf16.gmra.mrb[0].mxu0 %v2083
        %v2305 = vpop.f32.mrb[0].mxu0
        %v2306 = vadd.f32 %v1749, %v2305
        %v2307 = vpop.f32.mrb[0].mxu0
        %v2308 = vpop.f32.mrb[0].mxu0
        %v2309 = vadd.f32 %v1752, %v2308
        %v2310 = vpop.f32.mrb[0].mxu0
        %2311 = vmatprep.mubr.bf16.mxu0 0
        %2312 = vmatmul.mubr.bf16.gmra.mrb[0].mxu0 %v2086
        %v2313 = vpop.f32.mrb[0].mxu0
        %v2314 = vadd.f32 %v1757, %v2313
        %v2315 = vpop.f32.mrb[0].mxu0
        %v2316 = vpop.f32.mrb[0].mxu0
        %v2317 = vadd.f32 %v1760, %v2316
        %v2318 = vpop.f32.mrb[0].mxu0
        %2319 = vmatprep.mubr.bf16.mxu0 0
        %2320 = vmatmul.mubr.bf16.gmra.mrb[0].mxu0 %v2089
        %v2321 = vpop.f32.mrb[0].mxu0
        %v2322 = vadd.f32 %v1765, %v2321
        %v2323 = vpop.f32.mrb[0].mxu0
        %v2324 = vpop.f32.mrb[0].mxu0
        %v2325 = vadd.f32 %v1768, %v2324
        %v2326 = vpop.f32.mrb[0].mxu0
        %2327 = vmatprep.mubr.bf16.mxu0 0
        %2328 = vmatmul.mubr.bf16.gmra.mrb[0].mxu0 %v2092
        %v2329 = vpop.f32.mrb[0].mxu0
        %v2330 = vadd.f32 %v1773, %v2329
        %v2331 = vpop.f32.mrb[0].mxu0
        %v2332 = vpop.f32.mrb[0].mxu0
        %v2333 = vadd.f32 %v1776, %v2332
        %v2334 = vpop.f32.mrb[0].mxu0
        %2335 = vmatprep.mubr.bf16.mxu0 0
        %2336 = vmatmul.mubr.bf16.gmra.mrb[0].mxu0 %v2095
        %v2337 = vpop.f32.mrb[0].mxu0
        %v2338 = vadd.f32 %v1781, %v2337
        %v2339 = vpop.f32.mrb[0].mxu0
        %v2340 = vpop.f32.mrb[0].mxu0
        %v2341 = vadd.f32 %v1784, %v2340
        %v2342 = vpop.f32.mrb[0].mxu0
        %2343 = vmatprep.mubr.bf16.mxu0 0
        %2344 = vmatmul.mubr.bf16.gmra.mrb[0].mxu0 %v2098
        %v2345 = vpop.f32.mrb[0].mxu0
        %v2346 = vadd.f32 %v1789, %v2345
        %v2347 = vpop.f32.mrb[0].mxu0
        %v2348 = vpop.f32.mrb[0].mxu0
        %v2349 = vadd.f32 %v1792, %v2348
        %v2350 = vpop.f32.mrb[0].mxu0
        %2351 = vmatprep.mubr.bf16.mxu0 0
        %2352 = vmatmul.mubr.bf16.gmra.mrb[0].mxu0 %v2101
        %v2353 = vpop.f32.mrb[0].mxu0
        %v2354 = vadd.f32 %v1797, %v2353
        %v2355 = vpop.f32.mrb[0].mxu0
        %v2356 = vpop.f32.mrb[0].mxu0
        %v2357 = vadd.f32 %v1800, %v2356
        %v2358 = vpop.f32.mrb[0].mxu0
        %2359 = vmatprep.mubr.bf16.mxu0 0
        %2360 = vmatmul.mubr.bf16.gmra.mrb[0].mxu0 %v2104
        %v2361 = vpop.f32.mrb[0].mxu0
        %v2362 = vadd.f32 %v1805, %v2361
        %v2363 = vpop.f32.mrb[0].mxu0
        %v2364 = vpop.f32.mrb[0].mxu0
        %v2365 = vadd.f32 %v1808, %v2364
        %v2366 = vpop.f32.mrb[0].mxu0
        %2367 = vmatprep.mubr.bf16.mxu0 0
        %2368 = vmatmul.mubr.bf16.gmra.mrb[0].mxu0 %v2107
        %v2369 = vpop.f32.mrb[0].mxu0
        %v2370 = vadd.f32 %v1813, %v2369
        %v2371 = vpop.f32.mrb[0].mxu0
        %v2372 = vpop.f32.mrb[0].mxu0
        %v2373 = vadd.f32 %v1816, %v2372
        %v2374 = vpop.f32.mrb[0].mxu0
        %2375 = vmatprep.mubr.bf16.mxu0 0
        %2376 = vmatmul.mubr.bf16.gmra.mrb[0].mxu0 %v2110
        %v2377 = vpop.f32.mrb[0].mxu0
        %v2378 = vadd.f32 %v1821, %v2377
        %v2379 = vpop.f32.mrb[0].mxu0
        %v2380 = vpop.f32.mrb[0].mxu0
        %v2381 = vadd.f32 %v1824, %v2380
        %v2382 = vpop.f32.mrb[0].mxu0
        %2383 = vmatprep.mubr.bf16.mxu0 0
        %2384 = vmatmul.mubr.bf16.gmra.mrb[0].mxu0 %v2113
        %v2385 = vpop.f32.mrb[0].mxu0
        %v2386 = vadd.f32 %v1829, %v2385
        %v2387 = vpop.f32.mrb[0].mxu0
        %v2388 = vpop.f32.mrb[0].mxu0
        %v2389 = vadd.f32 %v1832, %v2388
        %v2390 = vpop.f32.mrb[0].mxu0
        %2391 = vmatprep.mubr.bf16.mxu0 0
        %2392 = vmatmul.mubr.bf16.gmra.mrb[0].mxu0 %v2116
        %v2393 = vpop.f32.mrb[0].mxu0
        %v2394 = vadd.f32 %v1837, %v2393
        %v2395 = vpop.f32.mrb[0].mxu0
        %v2396 = vpop.f32.mrb[0].mxu0
        %v2397 = vadd.f32 %v1840, %v2396
        %v2398 = vpop.f32.mrb[0].mxu0
        %2399 = vmatprep.mubr.bf16.mxu0 0
        %2400 = vmatmul.mubr.bf16.gmra.mrb[0].mxu0 %v2119
        %v2401 = vpop.f32.mrb[0].mxu0
        %v2402 = vadd.f32 %v1845, %v2401
        %v2403 = vpop.f32.mrb[0].mxu0
        %v2404 = vpop.f32.mrb[0].mxu0
        %v2405 = vadd.f32 %v1848, %v2404
        %v2406 = vpop.f32.mrb[0].mxu0
        %2407 = vmatprep.mubr.bf16.mxu0 0
        %2408 = vmatmul.mubr.bf16.gmra.mrb[0].mxu0 %v2122
        %v2409 = vpop.f32.mrb[0].mxu0
        %v2410 = vadd.f32 %v1853, %v2409
        %v2411 = vpop.f32.mrb[0].mxu0
        %v2412 = vpop.f32.mrb[0].mxu0
        %v2413 = vadd.f32 %v1856, %v2412
        %v2414 = vpop.f32.mrb[0].mxu0
        %2415 = vdwg.mxu0
        %vm2480 = vcmask 1042432
        %vm2481 = vcmask 1046532
        %vm2482 = vmor %vm2480, %vm2481
        %v2483 = vrot.slane %v278, 5
        %v2484 = vrot.slane %v2483, 4
        %v2485 = vrot.slane %v279, 5
        %v2486 = vsel %vm2482, %v2484, %v2485
        %v2487 = vrot.slane %v280, 5
        %v2488 = vrot.slane %v2487, 4
        %v2489 = vrot.slane %v281, 5
        %v2490 = vsel %vm2482, %v2488, %v2489
        %v2491 = vrot.slane %v282, 5
        %v2492 = vrot.slane %v2491, 4
        %v2493 = vrot.slane %v283, 5
        %v2494 = vsel %vm2482, %v2492, %v2493
        %v2495 = vrot.slane %v284, 5
        %v2496 = vrot.slane %v2495, 4
        %v2497 = vrot.slane %v285, 5
        %v2498 = vsel %vm2482, %v2496, %v2497
        %v2499 = vrot.slane %v286, 5
        %v2500 = vrot.slane %v2499, 4
        %v2501 = vrot.slane %v287, 5
        %v2502 = vsel %vm2482, %v2500, %v2501
        %v2503 = vrot.slane %v288, 5
        %v2504 = vrot.slane %v2503, 4
        %v2505 = vrot.slane %v289, 5
        %v2506 = vsel %vm2482, %v2504, %v2505
        %v2507 = vrot.slane %v290, 5
        %v2508 = vrot.slane %v2507, 4
        %v2509 = vrot.slane %v291, 5
        %v2510 = vsel %vm2482, %v2508, %v2509
        %v2511 = vrot.slane %v292, 5
        %v2512 = vrot.slane %v2511, 4
        %v2513 = vrot.slane %v293, 5
        %v2514 = vsel %vm2482, %v2512, %v2513
        %v2515 = vrot.slane %v298, 5
        %v2516 = vrot.slane %v2515, 4
        %v2517 = vrot.slane %v299, 5
        %v2518 = vsel %vm2482, %v2516, %v2517
        %v2519 = vrot.slane %v300, 5
        %v2520 = vrot.slane %v2519, 4
        %v2521 = vrot.slane %v301, 5
        %v2522 = vsel %vm2482, %v2520, %v2521
        %v2523 = vrot.slane %v302, 5
        %v2524 = vrot.slane %v2523, 4
        %v2525 = vrot.slane %v303, 5
        %v2526 = vsel %vm2482, %v2524, %v2525
        %v2527 = vrot.slane %v304, 5
        %v2528 = vrot.slane %v2527, 4
        %v2529 = vrot.slane %v305, 5
        %v2530 = vsel %vm2482, %v2528, %v2529
        %v2531 = vrot.slane %v306, 5
        %v2532 = vrot.slane %v2531, 4
        %v2533 = vrot.slane %v307, 5
        %v2534 = vsel %vm2482, %v2532, %v2533
        %v2535 = vrot.slane %v308, 5
        %v2536 = vrot.slane %v2535, 4
        %v2537 = vrot.slane %v309, 5
        %v2538 = vsel %vm2482, %v2536, %v2537
        %v2539 = vrot.slane %v310, 5
        %v2540 = vrot.slane %v2539, 4
        %v2541 = vrot.slane %v311, 5
        %v2542 = vsel %vm2482, %v2540, %v2541
        %v2543 = vrot.slane %v312, 5
        %v2544 = vrot.slane %v2543, 4
        %v2545 = vrot.slane %v313, 5
        %v2546 = vsel %vm2482, %v2544, %v2545
        %v2547 = vrot.slane %v318, 5
        %v2548 = vrot.slane %v2547, 4
        %v2549 = vrot.slane %v319, 5
        %v2550 = vsel %vm2482, %v2548, %v2549
        %v2551 = vrot.slane %v320, 5
        %v2552 = vrot.slane %v2551, 4
        %v2553 = vrot.slane %v321, 5
        %v2554 = vsel %vm2482, %v2552, %v2553
        %v2555 = vrot.slane %v322, 5
        %v2556 = vrot.slane %v2555, 4
        %v2557 = vrot.slane %v323, 5
        %v2558 = vsel %vm2482, %v2556, %v2557
        %v2559 = vrot.slane %v324, 5
        %v2560 = vrot.slane %v2559, 4
        %v2561 = vrot.slane %v325, 5
        %v2562 = vsel %vm2482, %v2560, %v2561
        %v2563 = vrot.slane %v326, 5
        %v2564 = vrot.slane %v2563, 4
        %v2565 = vrot.slane %v327, 5
        %v2566 = vsel %vm2482, %v2564, %v2565
        %v2567 = vrot.slane %v328, 5
        %v2568 = vrot.slane %v2567, 4
        %v2569 = vrot.slane %v329, 5
        %v2570 = vsel %vm2482, %v2568, %v2569
        %v2571 = vrot.slane %v330, 5
        %v2572 = vrot.slane %v2571, 4
        %v2573 = vrot.slane %v331, 5
        %v2574 = vsel %vm2482, %v2572, %v2573
        %v2575 = vrot.slane %v332, 5
        %v2576 = vrot.slane %v2575, 4
        %v2577 = vrot.slane %v333, 5
        %v2578 = vsel %vm2482, %v2576, %v2577
        %v2579 = vrot.slane %v338, 5
        %v2580 = vrot.slane %v2579, 4
        %v2581 = vrot.slane %v339, 5
        %v2582 = vsel %vm2482, %v2580, %v2581
        %v2583 = vrot.slane %v340, 5
        %v2584 = vrot.slane %v2583, 4
        %v2585 = vrot.slane %v341, 5
        %v2586 = vsel %vm2482, %v2584, %v2585
        %v2587 = vrot.slane %v342, 5
        %v2588 = vrot.slane %v2587, 4
        %v2589 = vrot.slane %v343, 5
        %v2590 = vsel %vm2482, %v2588, %v2589
        %v2591 = vrot.slane %v344, 5
        %v2592 = vrot.slane %v2591, 4
        %v2593 = vrot.slane %v345, 5
        %v2594 = vsel %vm2482, %v2592, %v2593
        %v2595 = vrot.slane %v346, 5
        %v2596 = vrot.slane %v2595, 4
        %v2597 = vrot.slane %v347, 5
        %v2598 = vsel %vm2482, %v2596, %v2597
        %v2599 = vrot.slane %v348, 5
        %v2600 = vrot.slane %v2599, 4
        %v2601 = vrot.slane %v349, 5
        %v2602 = vsel %vm2482, %v2600, %v2601
        %v2603 = vrot.slane %v350, 5
        %v2604 = vrot.slane %v2603, 4
        %v2605 = vrot.slane %v351, 5
        %v2606 = vsel %vm2482, %v2604, %v2605
        %v2607 = vrot.slane %v352, 5
        %v2608 = vrot.slane %v2607, 4
        %v2609 = vrot.slane %v353, 5
        %v2610 = vsel %vm2482, %v2608, %v2609
        %v2611 = vrot.slane %v358, 5
        %v2612 = vrot.slane %v2611, 4
        %v2613 = vrot.slane %v359, 5
        %v2614 = vsel %vm2482, %v2612, %v2613
        %v2615 = vrot.slane %v360, 5
        %v2616 = vrot.slane %v2615, 4
        %v2617 = vrot.slane %v361, 5
        %v2618 = vsel %vm2482, %v2616, %v2617
        %v2619 = vrot.slane %v362, 5
        %v2620 = vrot.slane %v2619, 4
        %v2621 = vrot.slane %v363, 5
        %v2622 = vsel %vm2482, %v2620, %v2621
        %v2623 = vrot.slane %v364, 5
        %v2624 = vrot.slane %v2623, 4
        %v2625 = vrot.slane %v365, 5
        %v2626 = vsel %vm2482, %v2624, %v2625
        %v2627 = vrot.slane %v366, 5
        %v2628 = vrot.slane %v2627, 4
        %v2629 = vrot.slane %v367, 5
        %v2630 = vsel %vm2482, %v2628, %v2629
        %v2631 = vrot.slane %v368, 5
        %v2632 = vrot.slane %v2631, 4
        %v2633 = vrot.slane %v369, 5
        %v2634 = vsel %vm2482, %v2632, %v2633
        %v2635 = vrot.slane %v370, 5
        %v2636 = vrot.slane %v2635, 4
        %v2637 = vrot.slane %v371, 5
        %v2638 = vsel %vm2482, %v2636, %v2637
        %v2639 = vrot.slane %v372, 5
        %v2640 = vrot.slane %v2639, 4
        %v2641 = vrot.slane %v373, 5
        %v2642 = vsel %vm2482, %v2640, %v2641
        %v2643 = vrot.slane %v378, 5
        %v2644 = vrot.slane %v2643, 4
        %v2645 = vrot.slane %v379, 5
        %v2646 = vsel %vm2482, %v2644, %v2645
        %v2647 = vrot.slane %v380, 5
        %v2648 = vrot.slane %v2647, 4
        %v2649 = vrot.slane %v381, 5
        %v2650 = vsel %vm2482, %v2648, %v2649
        %v2651 = vrot.slane %v382, 5
        %v2652 = vrot.slane %v2651, 4
        %v2653 = vrot.slane %v383, 5
        %v2654 = vsel %vm2482, %v2652, %v2653
        %v2655 = vrot.slane %v384, 5
        %v2656 = vrot.slane %v2655, 4
        %v2657 = vrot.slane %v385, 5
        %v2658 = vsel %vm2482, %v2656, %v2657
        %v2659 = vrot.slane %v386, 5
        %v2660 = vrot.slane %v2659, 4
        %v2661 = vrot.slane %v387, 5
        %v2662 = vsel %vm2482, %v2660, %v2661
        %v2663 = vrot.slane %v388, 5
        %v2664 = vrot.slane %v2663, 4
        %v2665 = vrot.slane %v389, 5
        %v2666 = vsel %vm2482, %v2664, %v2665
        %v2667 = vrot.slane %v390, 5
        %v2668 = vrot.slane %v2667, 4
        %v2669 = vrot.slane %v391, 5
        %v2670 = vsel %vm2482, %v2668, %v2669
        %v2671 = vrot.slane %v392, 5
        %v2672 = vrot.slane %v2671, 4
        %v2673 = vrot.slane %v393, 5
        %v2674 = vsel %vm2482, %v2672, %v2673
        %v2675 = vrot.slane %v398, 5
        %v2676 = vrot.slane %v2675, 4
        %v2677 = vrot.slane %v399, 5
        %v2678 = vsel %vm2482, %v2676, %v2677
        %v2679 = vrot.slane %v400, 5
        %v2680 = vrot.slane %v2679, 4
        %v2681 = vrot.slane %v401, 5
        %v2682 = vsel %vm2482, %v2680, %v2681
        %v2683 = vrot.slane %v402, 5
        %v2684 = vrot.slane %v2683, 4
        %v2685 = vrot.slane %v403, 5
        %v2686 = vsel %vm2482, %v2684, %v2685
        %v2687 = vrot.slane %v404, 5
        %v2688 = vrot.slane %v2687, 4
        %v2689 = vrot.slane %v405, 5
        %v2690 = vsel %vm2482, %v2688, %v2689
        %v2691 = vrot.slane %v406, 5
        %v2692 = vrot.slane %v2691, 4
        %v2693 = vrot.slane %v407, 5
        %v2694 = vsel %vm2482, %v2692, %v2693
        %v2695 = vrot.slane %v408, 5
        %v2696 = vrot.slane %v2695, 4
        %v2697 = vrot.slane %v409, 5
        %v2698 = vsel %vm2482, %v2696, %v2697
        %v2699 = vrot.slane %v410, 5
        %v2700 = vrot.slane %v2699, 4
        %v2701 = vrot.slane %v411, 5
        %v2702 = vsel %vm2482, %v2700, %v2701
        %v2703 = vrot.slane %v412, 5
        %v2704 = vrot.slane %v2703, 4
        %v2705 = vrot.slane %v413, 5
        %v2706 = vsel %vm2482, %v2704, %v2705
        %v2707 = vrot.slane %v418, 5
        %v2708 = vrot.slane %v2707, 4
        %v2709 = vrot.slane %v419, 5
        %v2710 = vsel %vm2482, %v2708, %v2709
        %v2711 = vrot.slane %v420, 5
        %v2712 = vrot.slane %v2711, 4
        %v2713 = vrot.slane %v421, 5
        %v2714 = vsel %vm2482, %v2712, %v2713
        %v2715 = vrot.slane %v422, 5
        %v2716 = vrot.slane %v2715, 4
        %v2717 = vrot.slane %v423, 5
        %v2718 = vsel %vm2482, %v2716, %v2717
        %v2719 = vrot.slane %v424, 5
        %v2720 = vrot.slane %v2719, 4
        %v2721 = vrot.slane %v425, 5
        %v2722 = vsel %vm2482, %v2720, %v2721
        %v2723 = vrot.slane %v426, 5
        %v2724 = vrot.slane %v2723, 4
        %v2725 = vrot.slane %v427, 5
        %v2726 = vsel %vm2482, %v2724, %v2725
        %v2727 = vrot.slane %v428, 5
        %v2728 = vrot.slane %v2727, 4
        %v2729 = vrot.slane %v429, 5
        %v2730 = vsel %vm2482, %v2728, %v2729
        %v2731 = vrot.slane %v430, 5
        %v2732 = vrot.slane %v2731, 4
        %v2733 = vrot.slane %v431, 5
        %v2734 = vsel %vm2482, %v2732, %v2733
        %v2735 = vrot.slane %v432, 5
        %v2736 = vrot.slane %v2735, 4
        %v2737 = vrot.slane %v433, 5
        %v2738 = vsel %vm2482, %v2736, %v2737
        %v2739 = vunpack.c.l.b16 %v2486
        %v2740 = vunpack.c.l.b16 %v2490
        %v2741 = vunpack.c.l.b16 %v2494
        %v2742 = vunpack.c.l.b16 %v2498
        %v2743 = vunpack.c.l.b16 %v2502
        %v2744 = vunpack.c.l.b16 %v2506
        %v2745 = vunpack.c.l.b16 %v2510
        %v2746 = vunpack.c.l.b16 %v2514
        %v2747 = vunpack.c.l.b16 %v2518
        %v2748 = vunpack.c.l.b16 %v2522
        %v2749 = vunpack.c.l.b16 %v2526
        %v2750 = vunpack.c.l.b16 %v2530
        %v2751 = vunpack.c.l.b16 %v2534
        %v2752 = vunpack.c.l.b16 %v2538
        %v2753 = vunpack.c.l.b16 %v2542
        %v2754 = vunpack.c.l.b16 %v2546
        %v2755 = vunpack.c.l.b16 %v2550
        %v2756 = vunpack.c.l.b16 %v2554
        %v2757 = vunpack.c.l.b16 %v2558
        %v2758 = vunpack.c.l.b16 %v2562
        %v2759 = vunpack.c.l.b16 %v2566
        %v2760 = vunpack.c.l.b16 %v2570
        %v2761 = vunpack.c.l.b16 %v2574
        %v2762 = vunpack.c.l.b16 %v2578
        %v2763 = vunpack.c.l.b16 %v2582
        %v2764 = vunpack.c.l.b16 %v2586
        %v2765 = vunpack.c.l.b16 %v2590
        %v2766 = vunpack.c.l.b16 %v2594
        %v2767 = vunpack.c.l.b16 %v2598
        %v2768 = vunpack.c.l.b16 %v2602
        %v2769 = vunpack.c.l.b16 %v2606
        %v2770 = vunpack.c.l.b16 %v2610
        %v2771 = vunpack.c.l.b16 %v2614
        %v2772 = vunpack.c.l.b16 %v2618
        %v2773 = vunpack.c.l.b16 %v2622
        %v2774 = vunpack.c.l.b16 %v2626
        %v2775 = vunpack.c.l.b16 %v2630
        %v2776 = vunpack.c.l.b16 %v2634
        %v2777 = vunpack.c.l.b16 %v2638
        %v2778 = vunpack.c.l.b16 %v2642
        %v2779 = vunpack.c.l.b16 %v2646
        %v2780 = vunpack.c.l.b16 %v2650
        %v2781 = vunpack.c.l.b16 %v2654
        %v2782 = vunpack.c.l.b16 %v2658
        %v2783 = vunpack.c.l.b16 %v2662
        %v2784 = vunpack.c.l.b16 %v2666
        %v2785 = vunpack.c.l.b16 %v2670
        %v2786 = vunpack.c.l.b16 %v2674
        %v2787 = vunpack.c.l.b16 %v2678
        %v2788 = vunpack.c.l.b16 %v2682
        %v2789 = vunpack.c.l.b16 %v2686
        %v2790 = vunpack.c.l.b16 %v2690
        %v2791 = vunpack.c.l.b16 %v2694
        %v2792 = vunpack.c.l.b16 %v2698
        %v2793 = vunpack.c.l.b16 %v2702
        %v2794 = vunpack.c.l.b16 %v2706
        %v2795 = vunpack.c.l.b16 %v2710
        %v2796 = vunpack.c.l.b16 %v2714
        %v2797 = vunpack.c.l.b16 %v2718
        %v2798 = vunpack.c.l.b16 %v2722
        %v2799 = vunpack.c.l.b16 %v2726
        %v2800 = vunpack.c.l.b16 %v2730
        %v2801 = vunpack.c.l.b16 %v2734
        %v2802 = vunpack.c.l.b16 %v2738
        %v2803 = vpack.c.b16 %v2740, %v2739
        %v2804 = vpack.c.b16 %v2742, %v2741
        %v2805 = vpack.c.b16 %v2744, %v2743
        %v2806 = vpack.c.b16 %v2746, %v2745
        %v2807 = vpack.c.b16 %v2748, %v2747
        %v2808 = vpack.c.b16 %v2750, %v2749
        %v2809 = vpack.c.b16 %v2752, %v2751
        %v2810 = vpack.c.b16 %v2754, %v2753
        %v2811 = vpack.c.b16 %v2756, %v2755
        %v2812 = vpack.c.b16 %v2758, %v2757
        %v2813 = vpack.c.b16 %v2760, %v2759
        %v2814 = vpack.c.b16 %v2762, %v2761
        %v2815 = vpack.c.b16 %v2764, %v2763
        %v2816 = vpack.c.b16 %v2766, %v2765
        %v2817 = vpack.c.b16 %v2768, %v2767
        %v2818 = vpack.c.b16 %v2770, %v2769
        %v2819 = vpack.c.b16 %v2772, %v2771
        %v2820 = vpack.c.b16 %v2774, %v2773
        %v2821 = vpack.c.b16 %v2776, %v2775
        %v2822 = vpack.c.b16 %v2778, %v2777
        %v2823 = vpack.c.b16 %v2780, %v2779
        %v2824 = vpack.c.b16 %v2782, %v2781
        %v2825 = vpack.c.b16 %v2784, %v2783
        %v2826 = vpack.c.b16 %v2786, %v2785
        %v2827 = vpack.c.b16 %v2788, %v2787
        %v2828 = vpack.c.b16 %v2790, %v2789
        %v2829 = vpack.c.b16 %v2792, %v2791
        %v2830 = vpack.c.b16 %v2794, %v2793
        %v2831 = vpack.c.b16 %v2796, %v2795
        %v2832 = vpack.c.b16 %v2798, %v2797
        %v2833 = vpack.c.b16 %v2800, %v2799
        %v2834 = vpack.c.b16 %v2802, %v2801
        %v2838 = vunpack.c.l.b16 %v444
        %v2839 = vunpack.c.l.b16 %v445
        %v2840 = vunpack.c.l.b16 %v446
        %v2841 = vpack.c.b16 %v2839, %v2838
        %v2842 = vpack.c.b16 %v2840, %v2840
        %v2845 = vsel %vm1469, %v2803, 0
        %v2848 = vsel %vm1469, %v2804, 0
        %v2851 = vsel %vm1469, %v2805, 0
        %v2854 = vsel %vm1469, %v2806, 0
        %v2857 = vsel %vm1469, %v2807, 0
        %v2860 = vsel %vm1469, %v2808, 0
        %v2863 = vsel %vm1469, %v2809, 0
        %v2866 = vsel %vm1469, %v2810, 0
        %v2869 = vsel %vm1469, %v2811, 0
        %v2872 = vsel %vm1469, %v2812, 0
        %v2875 = vsel %vm1469, %v2813, 0
        %v2878 = vsel %vm1469, %v2814, 0
        %v2881 = vsel %vm1469, %v2815, 0
        %v2884 = vsel %vm1469, %v2816, 0
        %v2887 = vsel %vm1469, %v2817, 0
        %v2890 = vsel %vm1469, %v2818, 0
        %v2893 = vsel %vm1469, %v2819, 0
        %v2896 = vsel %vm1469, %v2820, 0
        %v2899 = vsel %vm1469, %v2821, 0
        %v2902 = vsel %vm1469, %v2822, 0
        %v2905 = vsel %vm1469, %v2823, 0
        %v2908 = vsel %vm1469, %v2824, 0
        %v2911 = vsel %vm1469, %v2825, 0
        %v2914 = vsel %vm1469, %v2826, 0
        %v2917 = vsel %vm1469, %v2827, 0
        %v2920 = vsel %vm1469, %v2828, 0
        %v2923 = vsel %vm1469, %v2829, 0
        %v2926 = vsel %vm1469, %v2830, 0
        %v2929 = vsel %vm1469, %v2831, 0
        %v2932 = vsel %vm1469, %v2832, 0
        %v2935 = vsel %vm1469, %v2833, 0
        %v2938 = vsel %vm1469, %v2834, 0
        %v2941 = vsel %vm1566, %v2842, 0
        %2943 = vmatprep.subr.bf16.mxu0 0
        %2944 = vmatpush1.bf16.msra.mxu0 %v2841
        %2945 = vmatprep.subr.bf16.mxu0 0
        %2946 = vmatpush1.bf16.msra.mxu0 %v2941
        %2947 = vmatprep.subr.bf16.mxu0 0
        %2948 = vmatpush1.bf16.msra.mxu0 0
        %2949 = vmatprep.subr.bf16.mxu0 0
        %2950 = vmatpush1.bf16.msra.mxu0 0
        %2951 = vmatprep.subr.bf16.mxu0 0
        %2952 = vmatpush1.bf16.msra.mxu0 0
        %2953 = vmatprep.subr.bf16.mxu0 0
        %2954 = vmatpush1.bf16.msra.mxu0 0
        %2955 = vmatprep.subr.bf16.mxu0 0
        %2956 = vmatpush1.bf16.msra.mxu0 0
        %2957 = vmatprep.subr.bf16.mxu0 0
        %2958 = vmatpush1.bf16.msra.mxu0 0
        %2959 = vmatprep.subr.bf16.mxu0 0
        %2960 = vmatpush1.bf16.msra.mxu0 0
        %2961 = vmatprep.subr.bf16.mxu0 0
        %2962 = vmatpush1.bf16.msra.mxu0 0
        %2963 = vmatprep.subr.bf16.mxu0 0
        %2964 = vmatpush1.bf16.msra.mxu0 0
        %2965 = vmatprep.subr.bf16.mxu0 0
        %2966 = vmatpush1.bf16.msra.mxu0 0
        %2967 = vmatprep.subr.bf16.mxu0 0
        %2968 = vmatpush1.bf16.msra.mxu0 0
        %2969 = vmatprep.subr.bf16.mxu0 0
        %2970 = vmatpush1.bf16.msra.mxu0 0
        %2971 = vmatprep.subr.bf16.mxu0 0
        %2972 = vmatpush1.bf16.msra.mxu0 0
        %2973 = vmatprep.subr.bf16.mxu0 0
        %2974 = vmatpush1.bf16.msra.mxu0 0
        %2975 = vmatprep.mubr.bf16.mxu0 0
        %2976 = vmatmul.mubr.bf16.gmra.mrb[0].mxu0 %v2845
        %v2977 = vpop.f32.mrb[0].mxu0
        %v2978 = vadd.f32 0.0, %v2977
        %v2979 = vpop.f32.mrb[0].mxu0
        %v2980 = vpop.f32.mrb[0].mxu0
        %v2981 = vadd.f32 0.0, %v2980
        %v2982 = vpop.f32.mrb[0].mxu0
        %2983 = vmatprep.mubr.bf16.mxu0 0
        %2984 = vmatmul.mubr.bf16.gmra.mrb[0].mxu0 %v2848
        %v2985 = vpop.f32.mrb[0].mxu0
        %v2986 = vadd.f32 0.0, %v2985
        %v2987 = vpop.f32.mrb[0].mxu0
        %v2988 = vpop.f32.mrb[0].mxu0
        %v2989 = vadd.f32 0.0, %v2988
        %v2990 = vpop.f32.mrb[0].mxu0
        %2991 = vmatprep.mubr.bf16.mxu0 0
        %2992 = vmatmul.mubr.bf16.gmra.mrb[0].mxu0 %v2851
        %v2993 = vpop.f32.mrb[0].mxu0
        %v2994 = vadd.f32 0.0, %v2993
        %v2995 = vpop.f32.mrb[0].mxu0
        %v2996 = vpop.f32.mrb[0].mxu0
        %v2997 = vadd.f32 0.0, %v2996
        %v2998 = vpop.f32.mrb[0].mxu0
        %2999 = vmatprep.mubr.bf16.mxu0 0
        %3000 = vmatmul.mubr.bf16.gmra.mrb[0].mxu0 %v2854
        %v3001 = vpop.f32.mrb[0].mxu0
        %v3002 = vadd.f32 0.0, %v3001
        %v3003 = vpop.f32.mrb[0].mxu0
        %v3004 = vpop.f32.mrb[0].mxu0
        %v3005 = vadd.f32 0.0, %v3004
        %v3006 = vpop.f32.mrb[0].mxu0
        %3007 = vmatprep.mubr.bf16.mxu0 0
        %3008 = vmatmul.mubr.bf16.gmra.mrb[0].mxu0 %v2857
        %v3009 = vpop.f32.mrb[0].mxu0
        %v3010 = vadd.f32 0.0, %v3009
        %v3011 = vpop.f32.mrb[0].mxu0
        %v3012 = vpop.f32.mrb[0].mxu0
        %v3013 = vadd.f32 0.0, %v3012
        %v3014 = vpop.f32.mrb[0].mxu0
        %3015 = vmatprep.mubr.bf16.mxu0 0
        %3016 = vmatmul.mubr.bf16.gmra.mrb[0].mxu0 %v2860
        %v3017 = vpop.f32.mrb[0].mxu0
        %v3018 = vadd.f32 0.0, %v3017
        %v3019 = vpop.f32.mrb[0].mxu0
        %v3020 = vpop.f32.mrb[0].mxu0
        %v3021 = vadd.f32 0.0, %v3020
        %v3022 = vpop.f32.mrb[0].mxu0
        %3023 = vmatprep.mubr.bf16.mxu0 0
        %3024 = vmatmul.mubr.bf16.gmra.mrb[0].mxu0 %v2863
        %v3025 = vpop.f32.mrb[0].mxu0
        %v3026 = vadd.f32 0.0, %v3025
        %v3027 = vpop.f32.mrb[0].mxu0
        %v3028 = vpop.f32.mrb[0].mxu0
        %v3029 = vadd.f32 0.0, %v3028
        %v3030 = vpop.f32.mrb[0].mxu0
        %3031 = vmatprep.mubr.bf16.mxu0 0
        %3032 = vmatmul.mubr.bf16.gmra.mrb[0].mxu0 %v2866
        %v3033 = vpop.f32.mrb[0].mxu0
        %v3034 = vadd.f32 0.0, %v3033
        %v3035 = vpop.f32.mrb[0].mxu0
        %v3036 = vpop.f32.mrb[0].mxu0
        %v3037 = vadd.f32 0.0, %v3036
        %v3038 = vpop.f32.mrb[0].mxu0
        %3039 = vmatprep.mubr.bf16.mxu0 0
        %3040 = vmatmul.mubr.bf16.gmra.mrb[0].mxu0 %v2869
        %v3041 = vpop.f32.mrb[0].mxu0
        %v3042 = vadd.f32 0.0, %v3041
        %v3043 = vpop.f32.mrb[0].mxu0
        %v3044 = vpop.f32.mrb[0].mxu0
        %v3045 = vadd.f32 0.0, %v3044
        %v3046 = vpop.f32.mrb[0].mxu0
        %3047 = vmatprep.mubr.bf16.mxu0 0
        %3048 = vmatmul.mubr.bf16.gmra.mrb[0].mxu0 %v2872
        %v3049 = vpop.f32.mrb[0].mxu0
        %v3050 = vadd.f32 0.0, %v3049
        %v3051 = vpop.f32.mrb[0].mxu0
        %v3052 = vpop.f32.mrb[0].mxu0
        %v3053 = vadd.f32 0.0, %v3052
        %v3054 = vpop.f32.mrb[0].mxu0
        %3055 = vmatprep.mubr.bf16.mxu0 0
        %3056 = vmatmul.mubr.bf16.gmra.mrb[0].mxu0 %v2875
        %v3057 = vpop.f32.mrb[0].mxu0
        %v3058 = vadd.f32 0.0, %v3057
        %v3059 = vpop.f32.mrb[0].mxu0
        %v3060 = vpop.f32.mrb[0].mxu0
        %v3061 = vadd.f32 0.0, %v3060
        %v3062 = vpop.f32.mrb[0].mxu0
        %3063 = vmatprep.mubr.bf16.mxu0 0
        %3064 = vmatmul.mubr.bf16.gmra.mrb[0].mxu0 %v2878
        %v3065 = vpop.f32.mrb[0].mxu0
        %v3066 = vadd.f32 0.0, %v3065
        %v3067 = vpop.f32.mrb[0].mxu0
        %v3068 = vpop.f32.mrb[0].mxu0
        %v3069 = vadd.f32 0.0, %v3068
        %v3070 = vpop.f32.mrb[0].mxu0
        %3071 = vmatprep.mubr.bf16.mxu0 0
        %3072 = vmatmul.mubr.bf16.gmra.mrb[0].mxu0 %v2881
        %v3073 = vpop.f32.mrb[0].mxu0
        %v3074 = vadd.f32 0.0, %v3073
        %v3075 = vpop.f32.mrb[0].mxu0
        %v3076 = vpop.f32.mrb[0].mxu0
        %v3077 = vadd.f32 0.0, %v3076
        %v3078 = vpop.f32.mrb[0].mxu0
        %3079 = vmatprep.mubr.bf16.mxu0 0
        %3080 = vmatmul.mubr.bf16.gmra.mrb[0].mxu0 %v2884
        %v3081 = vpop.f32.mrb[0].mxu0
        %v3082 = vadd.f32 0.0, %v3081
        %v3083 = vpop.f32.mrb[0].mxu0
        %v3084 = vpop.f32.mrb[0].mxu0
        %v3085 = vadd.f32 0.0, %v3084
        %v3086 = vpop.f32.mrb[0].mxu0
        %3087 = vmatprep.mubr.bf16.mxu0 0
        %3088 = vmatmul.mubr.bf16.gmra.mrb[0].mxu0 %v2887
        %v3089 = vpop.f32.mrb[0].mxu0
        %v3090 = vadd.f32 0.0, %v3089
        %v3091 = vpop.f32.mrb[0].mxu0
        %v3092 = vpop.f32.mrb[0].mxu0
        %v3093 = vadd.f32 0.0, %v3092
        %v3094 = vpop.f32.mrb[0].mxu0
        %3095 = vmatprep.mubr.bf16.mxu0 0
        %3096 = vmatmul.mubr.bf16.gmra.mrb[0].mxu0 %v2890
        %v3097 = vpop.f32.mrb[0].mxu0
        %v3098 = vadd.f32 0.0, %v3097
        %v3099 = vpop.f32.mrb[0].mxu0
        %v3100 = vpop.f32.mrb[0].mxu0
        %v3101 = vadd.f32 0.0, %v3100
        %v3102 = vpop.f32.mrb[0].mxu0
        %3103 = vmatprep.mubr.bf16.mxu0 0
        %3104 = vmatmul.mubr.bf16.gmra.mrb[0].mxu0 %v2893
        %v3105 = vpop.f32.mrb[0].mxu0
        %v3106 = vadd.f32 0.0, %v3105
        %v3107 = vpop.f32.mrb[0].mxu0
        %v3108 = vpop.f32.mrb[0].mxu0
        %v3109 = vadd.f32 0.0, %v3108
        %v3110 = vpop.f32.mrb[0].mxu0
        %3111 = vmatprep.mubr.bf16.mxu0 0
        %3112 = vmatmul.mubr.bf16.gmra.mrb[0].mxu0 %v2896
        %v3113 = vpop.f32.mrb[0].mxu0
        %v3114 = vadd.f32 0.0, %v3113
        %v3115 = vpop.f32.mrb[0].mxu0
        %v3116 = vpop.f32.mrb[0].mxu0
        %v3117 = vadd.f32 0.0, %v3116
        %v3118 = vpop.f32.mrb[0].mxu0
        %3119 = vmatprep.mubr.bf16.mxu0 0
        %3120 = vmatmul.mubr.bf16.gmra.mrb[0].mxu0 %v2899
        %v3121 = vpop.f32.mrb[0].mxu0
        %v3122 = vadd.f32 0.0, %v3121
        %v3123 = vpop.f32.mrb[0].mxu0
        %v3124 = vpop.f32.mrb[0].mxu0
        %v3125 = vadd.f32 0.0, %v3124
        %v3126 = vpop.f32.mrb[0].mxu0
        %3127 = vmatprep.mubr.bf16.mxu0 0
        %3128 = vmatmul.mubr.bf16.gmra.mrb[0].mxu0 %v2902
        %v3129 = vpop.f32.mrb[0].mxu0
        %v3130 = vadd.f32 0.0, %v3129
        %v3131 = vpop.f32.mrb[0].mxu0
        %v3132 = vpop.f32.mrb[0].mxu0
        %v3133 = vadd.f32 0.0, %v3132
        %v3134 = vpop.f32.mrb[0].mxu0
        %3135 = vmatprep.mubr.bf16.mxu0 0
        %3136 = vmatmul.mubr.bf16.gmra.mrb[0].mxu0 %v2905
        %v3137 = vpop.f32.mrb[0].mxu0
        %v3138 = vadd.f32 0.0, %v3137
        %v3139 = vpop.f32.mrb[0].mxu0
        %v3140 = vpop.f32.mrb[0].mxu0
        %v3141 = vadd.f32 0.0, %v3140
        %v3142 = vpop.f32.mrb[0].mxu0
        %3143 = vmatprep.mubr.bf16.mxu0 0
        %3144 = vmatmul.mubr.bf16.gmra.mrb[0].mxu0 %v2908
        %v3145 = vpop.f32.mrb[0].mxu0
        %v3146 = vadd.f32 0.0, %v3145
        %v3147 = vpop.f32.mrb[0].mxu0
        %v3148 = vpop.f32.mrb[0].mxu0
        %v3149 = vadd.f32 0.0, %v3148
        %v3150 = vpop.f32.mrb[0].mxu0
        %3151 = vmatprep.mubr.bf16.mxu0 0
        %3152 = vmatmul.mubr.bf16.gmra.mrb[0].mxu0 %v2911
        %v3153 = vpop.f32.mrb[0].mxu0
        %v3154 = vadd.f32 0.0, %v3153
        %v3155 = vpop.f32.mrb[0].mxu0
        %v3156 = vpop.f32.mrb[0].mxu0
        %v3157 = vadd.f32 0.0, %v3156
        %v3158 = vpop.f32.mrb[0].mxu0
        %3159 = vmatprep.mubr.bf16.mxu0 0
        %3160 = vmatmul.mubr.bf16.gmra.mrb[0].mxu0 %v2914
        %v3161 = vpop.f32.mrb[0].mxu0
        %v3162 = vadd.f32 0.0, %v3161
        %v3163 = vpop.f32.mrb[0].mxu0
        %v3164 = vpop.f32.mrb[0].mxu0
        %v3165 = vadd.f32 0.0, %v3164
        %v3166 = vpop.f32.mrb[0].mxu0
        %3167 = vmatprep.mubr.bf16.mxu0 0
        %3168 = vmatmul.mubr.bf16.gmra.mrb[0].mxu0 %v2917
        %v3169 = vpop.f32.mrb[0].mxu0
        %v3170 = vadd.f32 0.0, %v3169
        %v3171 = vpop.f32.mrb[0].mxu0
        %v3172 = vpop.f32.mrb[0].mxu0
        %v3173 = vadd.f32 0.0, %v3172
        %v3174 = vpop.f32.mrb[0].mxu0
        %3175 = vmatprep.mubr.bf16.mxu0 0
        %3176 = vmatmul.mubr.bf16.gmra.mrb[0].mxu0 %v2920
        %v3177 = vpop.f32.mrb[0].mxu0
        %v3178 = vadd.f32 0.0, %v3177
        %v3179 = vpop.f32.mrb[0].mxu0
        %v3180 = vpop.f32.mrb[0].mxu0
        %v3181 = vadd.f32 0.0, %v3180
        %v3182 = vpop.f32.mrb[0].mxu0
        %3183 = vmatprep.mubr.bf16.mxu0 0
        %3184 = vmatmul.mubr.bf16.gmra.mrb[0].mxu0 %v2923
        %v3185 = vpop.f32.mrb[0].mxu0
        %v3186 = vadd.f32 0.0, %v3185
        %v3187 = vpop.f32.mrb[0].mxu0
        %v3188 = vpop.f32.mrb[0].mxu0
        %v3189 = vadd.f32 0.0, %v3188
        %v3190 = vpop.f32.mrb[0].mxu0
        %3191 = vmatprep.mubr.bf16.mxu0 0
        %3192 = vmatmul.mubr.bf16.gmra.mrb[0].mxu0 %v2926
        %v3193 = vpop.f32.mrb[0].mxu0
        %v3194 = vadd.f32 0.0, %v3193
        %v3195 = vpop.f32.mrb[0].mxu0
        %v3196 = vpop.f32.mrb[0].mxu0
        %v3197 = vadd.f32 0.0, %v3196
        %v3198 = vpop.f32.mrb[0].mxu0
        %3199 = vmatprep.mubr.bf16.mxu0 0
        %3200 = vmatmul.mubr.bf16.gmra.mrb[0].mxu0 %v2929
        %v3201 = vpop.f32.mrb[0].mxu0
        %v3202 = vadd.f32 0.0, %v3201
        %v3203 = vpop.f32.mrb[0].mxu0
        %v3204 = vpop.f32.mrb[0].mxu0
        %v3205 = vadd.f32 0.0, %v3204
        %v3206 = vpop.f32.mrb[0].mxu0
        %3207 = vmatprep.mubr.bf16.mxu0 0
        %3208 = vmatmul.mubr.bf16.gmra.mrb[0].mxu0 %v2932
        %v3209 = vpop.f32.mrb[0].mxu0
        %v3210 = vadd.f32 0.0, %v3209
        %v3211 = vpop.f32.mrb[0].mxu0
        %v3212 = vpop.f32.mrb[0].mxu0
        %v3213 = vadd.f32 0.0, %v3212
        %v3214 = vpop.f32.mrb[0].mxu0
        %3215 = vmatprep.mubr.bf16.mxu0 0
        %3216 = vmatmul.mubr.bf16.gmra.mrb[0].mxu0 %v2935
        %v3217 = vpop.f32.mrb[0].mxu0
        %v3218 = vadd.f32 0.0, %v3217
        %v3219 = vpop.f32.mrb[0].mxu0
        %v3220 = vpop.f32.mrb[0].mxu0
        %v3221 = vadd.f32 0.0, %v3220
        %v3222 = vpop.f32.mrb[0].mxu0
        %3223 = vmatprep.mubr.bf16.mxu0 0
        %3224 = vmatmul.mubr.bf16.gmra.mrb[0].mxu0 %v2938
        %v3225 = vpop.f32.mrb[0].mxu0
        %v3226 = vadd.f32 0.0, %v3225
        %v3227 = vpop.f32.mrb[0].mxu0
        %v3228 = vpop.f32.mrb[0].mxu0
        %v3229 = vadd.f32 0.0, %v3228
        %v3230 = vpop.f32.mrb[0].mxu0
        %3231 = vdwg.mxu0
        %v3232 = vadd.f32 %v2162, %v2978
        %v3233 = vadd.f32 %v2165, %v2981
        %v3234 = vadd.f32 %v2170, %v2986
        %v3235 = vadd.f32 %v2173, %v2989
        %v3236 = vadd.f32 %v2178, %v2994
        %v3237 = vadd.f32 %v2181, %v2997
        %v3238 = vadd.f32 %v2186, %v3002
        %v3239 = vadd.f32 %v2189, %v3005
        %v3240 = vadd.f32 %v2194, %v3010
        %v3241 = vadd.f32 %v2197, %v3013
        %v3242 = vadd.f32 %v2202, %v3018
        %v3243 = vadd.f32 %v2205, %v3021
        %v3244 = vadd.f32 %v2210, %v3026
        %v3245 = vadd.f32 %v2213, %v3029
        %v3246 = vadd.f32 %v2218, %v3034
        %v3247 = vadd.f32 %v2221, %v3037
        %v3248 = vadd.f32 %v2226, %v3042
        %v3249 = vadd.f32 %v2229, %v3045
        %v3250 = vadd.f32 %v2234, %v3050
        %v3251 = vadd.f32 %v2237, %v3053
        %v3252 = vadd.f32 %v2242, %v3058
        %v3253 = vadd.f32 %v2245, %v3061
        %v3254 = vadd.f32 %v2250, %v3066
        %v3255 = vadd.f32 %v2253, %v3069
        %v3256 = vadd.f32 %v2258, %v3074
        %v3257 = vadd.f32 %v2261, %v3077
        %v3258 = vadd.f32 %v2266, %v3082
        %v3259 = vadd.f32 %v2269, %v3085
        %v3260 = vadd.f32 %v2274, %v3090
        %v3261 = vadd.f32 %v2277, %v3093
        %v3262 = vadd.f32 %v2282, %v3098
        %v3263 = vadd.f32 %v2285, %v3101
        %v3264 = vadd.f32 %v2290, %v3106
        %v3265 = vadd.f32 %v2293, %v3109
        %v3266 = vadd.f32 %v2298, %v3114
        %v3267 = vadd.f32 %v2301, %v3117
        %v3268 = vadd.f32 %v2306, %v3122
        %v3269 = vadd.f32 %v2309, %v3125
        %v3270 = vadd.f32 %v2314, %v3130
        %v3271 = vadd.f32 %v2317, %v3133
        %v3272 = vadd.f32 %v2322, %v3138
        %v3273 = vadd.f32 %v2325, %v3141
        %v3274 = vadd.f32 %v2330, %v3146
        %v3275 = vadd.f32 %v2333, %v3149
        %v3276 = vadd.f32 %v2338, %v3154
        %v3277 = vadd.f32 %v2341, %v3157
        %v3278 = vadd.f32 %v2346, %v3162
        %v3279 = vadd.f32 %v2349, %v3165
        %v3280 = vadd.f32 %v2354, %v3170
        %v3281 = vadd.f32 %v2357, %v3173
        %v3282 = vadd.f32 %v2362, %v3178
        %v3283 = vadd.f32 %v2365, %v3181
        %v3284 = vadd.f32 %v2370, %v3186
        %v3285 = vadd.f32 %v2373, %v3189
        %v3286 = vadd.f32 %v2378, %v3194
        %v3287 = vadd.f32 %v2381, %v3197
        %v3288 = vadd.f32 %v2386, %v3202
        %v3289 = vadd.f32 %v2389, %v3205
        %v3290 = vadd.f32 %v2394, %v3210
        %v3291 = vadd.f32 %v2397, %v3213
        %v3292 = vadd.f32 %v2402, %v3218
        %v3293 = vadd.f32 %v2405, %v3221
        %v3294 = vadd.f32 %v2410, %v3226
        %v3295 = vadd.f32 %v2413, %v3229
        %v3304 = vunpack.c.l.b16 %v294
        %v3305 = vunpack.c.l.b16 %v314
        %v3306 = vunpack.c.l.b16 %v334
        %v3307 = vunpack.c.l.b16 %v354
        %v3308 = vunpack.c.l.b16 %v374
        %v3309 = vunpack.c.l.b16 %v394
        %v3310 = vunpack.c.l.b16 %v414
        %v3311 = vunpack.c.l.b16 %v434
        %v3312 = vpack.c.b16 %v1925, %v1924
        %v3313 = vpack.c.b16 %v1927, %v1926
        %v3314 = vpack.c.b16 %v1929, %v1928
        %v3315 = vpack.c.b16 %v3304, %v1930
        %v3316 = vpack.c.b16 %v1933, %v1932
        %v3317 = vpack.c.b16 %v1935, %v1934
        %v3318 = vpack.c.b16 %v1937, %v1936
        %v3319 = vpack.c.b16 %v3305, %v1938
        %v3320 = vpack.c.b16 %v1941, %v1940
        %v3321 = vpack.c.b16 %v1943, %v1942
        %v3322 = vpack.c.b16 %v1945, %v1944
        %v3323 = vpack.c.b16 %v3306, %v1946
        %v3324 = vpack.c.b16 %v1949, %v1948
        %v3325 = vpack.c.b16 %v1951, %v1950
        %v3326 = vpack.c.b16 %v1953, %v1952
        %v3327 = vpack.c.b16 %v3307, %v1954
        %v3328 = vpack.c.b16 %v1957, %v1956
        %v3329 = vpack.c.b16 %v1959, %v1958
        %v3330 = vpack.c.b16 %v1961, %v1960
        %v3331 = vpack.c.b16 %v3308, %v1962
        %v3332 = vpack.c.b16 %v1965, %v1964
        %v3333 = vpack.c.b16 %v1967, %v1966
        %v3334 = vpack.c.b16 %v1969, %v1968
        %v3335 = vpack.c.b16 %v3309, %v1970
        %v3336 = vpack.c.b16 %v1973, %v1972
        %v3337 = vpack.c.b16 %v1975, %v1974
        %v3338 = vpack.c.b16 %v1977, %v1976
        %v3339 = vpack.c.b16 %v3310, %v1978
        %v3340 = vpack.c.b16 %v1981, %v1980
        %v3341 = vpack.c.b16 %v1983, %v1982
        %v3342 = vpack.c.b16 %v1985, %v1984
        %v3343 = vpack.c.b16 %v3311, %v1986
        %v3347 = vunpack.c.l.b16 %v447
        %v3348 = vunpack.c.l.b16 %v448
        %v3349 = vunpack.c.l.b16 %v449
        %v3350 = vpack.c.b16 %v3348, %v3347
        %v3351 = vpack.c.b16 %v3349, %v3349
        %v3354 = vsel %vm1469, %v3312, 0
        %v3357 = vsel %vm1469, %v3313, 0
        %v3360 = vsel %vm1469, %v3314, 0
        %v3363 = vsel %vm1469, %v3315, 0
        %v3366 = vsel %vm1469, %v3316, 0
        %v3369 = vsel %vm1469, %v3317, 0
        %v3372 = vsel %vm1469, %v3318, 0
        %v3375 = vsel %vm1469, %v3319, 0
        %v3378 = vsel %vm1469, %v3320, 0
        %v3381 = vsel %vm1469, %v3321, 0
        %v3384 = vsel %vm1469, %v3322, 0
        %v3387 = vsel %vm1469, %v3323, 0
        %v3390 = vsel %vm1469, %v3324, 0
        %v3393 = vsel %vm1469, %v3325, 0
        %v3396 = vsel %vm1469, %v3326, 0
        %v3399 = vsel %vm1469, %v3327, 0
        %v3402 = vsel %vm1469, %v3328, 0
        %v3405 = vsel %vm1469, %v3329, 0
        %v3408 = vsel %vm1469, %v3330, 0
        %v3411 = vsel %vm1469, %v3331, 0
        %v3414 = vsel %vm1469, %v3332, 0
        %v3417 = vsel %vm1469, %v3333, 0
        %v3420 = vsel %vm1469, %v3334, 0
        %v3423 = vsel %vm1469, %v3335, 0
        %v3426 = vsel %vm1469, %v3336, 0
        %v3429 = vsel %vm1469, %v3337, 0
        %v3432 = vsel %vm1469, %v3338, 0
        %v3435 = vsel %vm1469, %v3339, 0
        %v3438 = vsel %vm1469, %v3340, 0
        %v3441 = vsel %vm1469, %v3341, 0
        %v3444 = vsel %vm1469, %v3342, 0
        %v3447 = vsel %vm1469, %v3343, 0
        %v3450 = vsel %vm1566, %v3351, 0
        %3452 = vmatprep.subr.bf16.mxu0 0
        %3453 = vmatpush1.bf16.msra.mxu0 %v3350
        %3454 = vmatprep.subr.bf16.mxu0 0
        %3455 = vmatpush1.bf16.msra.mxu0 %v3450
        %3456 = vmatprep.subr.bf16.mxu0 0
        %3457 = vmatpush1.bf16.msra.mxu0 0
        %3458 = vmatprep.subr.bf16.mxu0 0
        %3459 = vmatpush1.bf16.msra.mxu0 0
        %3460 = vmatprep.subr.bf16.mxu0 0
        %3461 = vmatpush1.bf16.msra.mxu0 0
        %3462 = vmatprep.subr.bf16.mxu0 0
        %3463 = vmatpush1.bf16.msra.mxu0 0
        %3464 = vmatprep.subr.bf16.mxu0 0
        %3465 = vmatpush1.bf16.msra.mxu0 0
        %3466 = vmatprep.subr.bf16.mxu0 0
        %3467 = vmatpush1.bf16.msra.mxu0 0
        %3468 = vmatprep.subr.bf16.mxu0 0
        %3469 = vmatpush1.bf16.msra.mxu0 0
        %3470 = vmatprep.subr.bf16.mxu0 0
        %3471 = vmatpush1.bf16.msra.mxu0 0
        %3472 = vmatprep.subr.bf16.mxu0 0
        %3473 = vmatpush1.bf16.msra.mxu0 0
        %3474 = vmatprep.subr.bf16.mxu0 0
        %3475 = vmatpush1.bf16.msra.mxu0 0
        %3476 = vmatprep.subr.bf16.mxu0 0
        %3477 = vmatpush1.bf16.msra.mxu0 0
        %3478 = vmatprep.subr.bf16.mxu0 0
        %3479 = vmatpush1.bf16.msra.mxu0 0
        %3480 = vmatprep.subr.bf16.mxu0 0
        %3481 = vmatpush1.bf16.msra.mxu0 0
        %3482 = vmatprep.subr.bf16.mxu0 0
        %3483 = vmatpush1.bf16.msra.mxu0 0
        %3484 = vmatprep.mubr.bf16.mxu0 0
        %3485 = vmatmul.mubr.bf16.gmra.mrb[0].mxu0 %v3354
        %v3486 = vpop.f32.mrb[0].mxu0
        %v3487 = vadd.f32 0.0, %v3486
        %v3488 = vpop.f32.mrb[0].mxu0
        %v3489 = vpop.f32.mrb[0].mxu0
        %v3490 = vadd.f32 0.0, %v3489
        %v3491 = vpop.f32.mrb[0].mxu0
        %3492 = vmatprep.mubr.bf16.mxu0 0
        %3493 = vmatmul.mubr.bf16.gmra.mrb[0].mxu0 %v3357
        %v3494 = vpop.f32.mrb[0].mxu0
        %v3495 = vadd.f32 0.0, %v3494
        %v3496 = vpop.f32.mrb[0].mxu0
        %v3497 = vpop.f32.mrb[0].mxu0
        %v3498 = vadd.f32 0.0, %v3497
        %v3499 = vpop.f32.mrb[0].mxu0
        %3500 = vmatprep.mubr.bf16.mxu0 0
        %3501 = vmatmul.mubr.bf16.gmra.mrb[0].mxu0 %v3360
        %v3502 = vpop.f32.mrb[0].mxu0
        %v3503 = vadd.f32 0.0, %v3502
        %v3504 = vpop.f32.mrb[0].mxu0
        %v3505 = vpop.f32.mrb[0].mxu0
        %v3506 = vadd.f32 0.0, %v3505
        %v3507 = vpop.f32.mrb[0].mxu0
        %3508 = vmatprep.mubr.bf16.mxu0 0
        %3509 = vmatmul.mubr.bf16.gmra.mrb[0].mxu0 %v3363
        %v3510 = vpop.f32.mrb[0].mxu0
        %v3511 = vadd.f32 0.0, %v3510
        %v3512 = vpop.f32.mrb[0].mxu0
        %v3513 = vpop.f32.mrb[0].mxu0
        %v3514 = vadd.f32 0.0, %v3513
        %v3515 = vpop.f32.mrb[0].mxu0
        %3516 = vmatprep.mubr.bf16.mxu0 0
        %3517 = vmatmul.mubr.bf16.gmra.mrb[0].mxu0 %v3366
        %v3518 = vpop.f32.mrb[0].mxu0
        %v3519 = vadd.f32 0.0, %v3518
        %v3520 = vpop.f32.mrb[0].mxu0
        %v3521 = vpop.f32.mrb[0].mxu0
        %v3522 = vadd.f32 0.0, %v3521
        %v3523 = vpop.f32.mrb[0].mxu0
        %3524 = vmatprep.mubr.bf16.mxu0 0
        %3525 = vmatmul.mubr.bf16.gmra.mrb[0].mxu0 %v3369
        %v3526 = vpop.f32.mrb[0].mxu0
        %v3527 = vadd.f32 0.0, %v3526
        %v3528 = vpop.f32.mrb[0].mxu0
        %v3529 = vpop.f32.mrb[0].mxu0
        %v3530 = vadd.f32 0.0, %v3529
        %v3531 = vpop.f32.mrb[0].mxu0
        %3532 = vmatprep.mubr.bf16.mxu0 0
        %3533 = vmatmul.mubr.bf16.gmra.mrb[0].mxu0 %v3372
        %v3534 = vpop.f32.mrb[0].mxu0
        %v3535 = vadd.f32 0.0, %v3534
        %v3536 = vpop.f32.mrb[0].mxu0
        %v3537 = vpop.f32.mrb[0].mxu0
        %v3538 = vadd.f32 0.0, %v3537
        %v3539 = vpop.f32.mrb[0].mxu0
        %3540 = vmatprep.mubr.bf16.mxu0 0
        %3541 = vmatmul.mubr.bf16.gmra.mrb[0].mxu0 %v3375
        %v3542 = vpop.f32.mrb[0].mxu0
        %v3543 = vadd.f32 0.0, %v3542
        %v3544 = vpop.f32.mrb[0].mxu0
        %v3545 = vpop.f32.mrb[0].mxu0
        %v3546 = vadd.f32 0.0, %v3545
        %v3547 = vpop.f32.mrb[0].mxu0
        %3548 = vmatprep.mubr.bf16.mxu0 0
        %3549 = vmatmul.mubr.bf16.gmra.mrb[0].mxu0 %v3378
        %v3550 = vpop.f32.mrb[0].mxu0
        %v3551 = vadd.f32 0.0, %v3550
        %v3552 = vpop.f32.mrb[0].mxu0
        %v3553 = vpop.f32.mrb[0].mxu0
        %v3554 = vadd.f32 0.0, %v3553
        %v3555 = vpop.f32.mrb[0].mxu0
        %3556 = vmatprep.mubr.bf16.mxu0 0
        %3557 = vmatmul.mubr.bf16.gmra.mrb[0].mxu0 %v3381
        %v3558 = vpop.f32.mrb[0].mxu0
        %v3559 = vadd.f32 0.0, %v3558
        %v3560 = vpop.f32.mrb[0].mxu0
        %v3561 = vpop.f32.mrb[0].mxu0
        %v3562 = vadd.f32 0.0, %v3561
        %v3563 = vpop.f32.mrb[0].mxu0
        %3564 = vmatprep.mubr.bf16.mxu0 0
        %3565 = vmatmul.mubr.bf16.gmra.mrb[0].mxu0 %v3384
        %v3566 = vpop.f32.mrb[0].mxu0
        %v3567 = vadd.f32 0.0, %v3566
        %v3568 = vpop.f32.mrb[0].mxu0
        %v3569 = vpop.f32.mrb[0].mxu0
        %v3570 = vadd.f32 0.0, %v3569
        %v3571 = vpop.f32.mrb[0].mxu0
        %3572 = vmatprep.mubr.bf16.mxu0 0
        %3573 = vmatmul.mubr.bf16.gmra.mrb[0].mxu0 %v3387
        %v3574 = vpop.f32.mrb[0].mxu0
        %v3575 = vadd.f32 0.0, %v3574
        %v3576 = vpop.f32.mrb[0].mxu0
        %v3577 = vpop.f32.mrb[0].mxu0
        %v3578 = vadd.f32 0.0, %v3577
        %v3579 = vpop.f32.mrb[0].mxu0
        %3580 = vmatprep.mubr.bf16.mxu0 0
        %3581 = vmatmul.mubr.bf16.gmra.mrb[0].mxu0 %v3390
        %v3582 = vpop.f32.mrb[0].mxu0
        %v3583 = vadd.f32 0.0, %v3582
        %v3584 = vpop.f32.mrb[0].mxu0
        %v3585 = vpop.f32.mrb[0].mxu0
        %v3586 = vadd.f32 0.0, %v3585
        %v3587 = vpop.f32.mrb[0].mxu0
        %3588 = vmatprep.mubr.bf16.mxu0 0
        %3589 = vmatmul.mubr.bf16.gmra.mrb[0].mxu0 %v3393
        %v3590 = vpop.f32.mrb[0].mxu0
        %v3591 = vadd.f32 0.0, %v3590
        %v3592 = vpop.f32.mrb[0].mxu0
        %v3593 = vpop.f32.mrb[0].mxu0
        %v3594 = vadd.f32 0.0, %v3593
        %v3595 = vpop.f32.mrb[0].mxu0
        %3596 = vmatprep.mubr.bf16.mxu0 0
        %3597 = vmatmul.mubr.bf16.gmra.mrb[0].mxu0 %v3396
        %v3598 = vpop.f32.mrb[0].mxu0
        %v3599 = vadd.f32 0.0, %v3598
        %v3600 = vpop.f32.mrb[0].mxu0
        %v3601 = vpop.f32.mrb[0].mxu0
        %v3602 = vadd.f32 0.0, %v3601
        %v3603 = vpop.f32.mrb[0].mxu0
        %3604 = vmatprep.mubr.bf16.mxu0 0
        %3605 = vmatmul.mubr.bf16.gmra.mrb[0].mxu0 %v3399
        %v3606 = vpop.f32.mrb[0].mxu0
        %v3607 = vadd.f32 0.0, %v3606
        %v3608 = vpop.f32.mrb[0].mxu0
        %v3609 = vpop.f32.mrb[0].mxu0
        %v3610 = vadd.f32 0.0, %v3609
        %v3611 = vpop.f32.mrb[0].mxu0
        %3612 = vmatprep.mubr.bf16.mxu0 0
        %3613 = vmatmul.mubr.bf16.gmra.mrb[0].mxu0 %v3402
        %v3614 = vpop.f32.mrb[0].mxu0
        %v3615 = vadd.f32 0.0, %v3614
        %v3616 = vpop.f32.mrb[0].mxu0
        %v3617 = vpop.f32.mrb[0].mxu0
        %v3618 = vadd.f32 0.0, %v3617
        %v3619 = vpop.f32.mrb[0].mxu0
        %3620 = vmatprep.mubr.bf16.mxu0 0
        %3621 = vmatmul.mubr.bf16.gmra.mrb[0].mxu0 %v3405
        %v3622 = vpop.f32.mrb[0].mxu0
        %v3623 = vadd.f32 0.0, %v3622
        %v3624 = vpop.f32.mrb[0].mxu0
        %v3625 = vpop.f32.mrb[0].mxu0
        %v3626 = vadd.f32 0.0, %v3625
        %v3627 = vpop.f32.mrb[0].mxu0
        %3628 = vmatprep.mubr.bf16.mxu0 0
        %3629 = vmatmul.mubr.bf16.gmra.mrb[0].mxu0 %v3408
        %v3630 = vpop.f32.mrb[0].mxu0
        %v3631 = vadd.f32 0.0, %v3630
        %v3632 = vpop.f32.mrb[0].mxu0
        %v3633 = vpop.f32.mrb[0].mxu0
        %v3634 = vadd.f32 0.0, %v3633
        %v3635 = vpop.f32.mrb[0].mxu0
        %3636 = vmatprep.mubr.bf16.mxu0 0
        %3637 = vmatmul.mubr.bf16.gmra.mrb[0].mxu0 %v3411
        %v3638 = vpop.f32.mrb[0].mxu0
        %v3639 = vadd.f32 0.0, %v3638
        %v3640 = vpop.f32.mrb[0].mxu0
        %v3641 = vpop.f32.mrb[0].mxu0
        %v3642 = vadd.f32 0.0, %v3641
        %v3643 = vpop.f32.mrb[0].mxu0
        %3644 = vmatprep.mubr.bf16.mxu0 0
        %3645 = vmatmul.mubr.bf16.gmra.mrb[0].mxu0 %v3414
        %v3646 = vpop.f32.mrb[0].mxu0
        %v3647 = vadd.f32 0.0, %v3646
        %v3648 = vpop.f32.mrb[0].mxu0
        %v3649 = vpop.f32.mrb[0].mxu0
        %v3650 = vadd.f32 0.0, %v3649
        %v3651 = vpop.f32.mrb[0].mxu0
        %3652 = vmatprep.mubr.bf16.mxu0 0
        %3653 = vmatmul.mubr.bf16.gmra.mrb[0].mxu0 %v3417
        %v3654 = vpop.f32.mrb[0].mxu0
        %v3655 = vadd.f32 0.0, %v3654
        %v3656 = vpop.f32.mrb[0].mxu0
        %v3657 = vpop.f32.mrb[0].mxu0
        %v3658 = vadd.f32 0.0, %v3657
        %v3659 = vpop.f32.mrb[0].mxu0
        %3660 = vmatprep.mubr.bf16.mxu0 0
        %3661 = vmatmul.mubr.bf16.gmra.mrb[0].mxu0 %v3420
        %v3662 = vpop.f32.mrb[0].mxu0
        %v3663 = vadd.f32 0.0, %v3662
        %v3664 = vpop.f32.mrb[0].mxu0
        %v3665 = vpop.f32.mrb[0].mxu0
        %v3666 = vadd.f32 0.0, %v3665
        %v3667 = vpop.f32.mrb[0].mxu0
        %3668 = vmatprep.mubr.bf16.mxu0 0
        %3669 = vmatmul.mubr.bf16.gmra.mrb[0].mxu0 %v3423
        %v3670 = vpop.f32.mrb[0].mxu0
        %v3671 = vadd.f32 0.0, %v3670
        %v3672 = vpop.f32.mrb[0].mxu0
        %v3673 = vpop.f32.mrb[0].mxu0
        %v3674 = vadd.f32 0.0, %v3673
        %v3675 = vpop.f32.mrb[0].mxu0
        %3676 = vmatprep.mubr.bf16.mxu0 0
        %3677 = vmatmul.mubr.bf16.gmra.mrb[0].mxu0 %v3426
        %v3678 = vpop.f32.mrb[0].mxu0
        %v3679 = vadd.f32 0.0, %v3678
        %v3680 = vpop.f32.mrb[0].mxu0
        %v3681 = vpop.f32.mrb[0].mxu0
        %v3682 = vadd.f32 0.0, %v3681
        %v3683 = vpop.f32.mrb[0].mxu0
        %3684 = vmatprep.mubr.bf16.mxu0 0
        %3685 = vmatmul.mubr.bf16.gmra.mrb[0].mxu0 %v3429
        %v3686 = vpop.f32.mrb[0].mxu0
        %v3687 = vadd.f32 0.0, %v3686
        %v3688 = vpop.f32.mrb[0].mxu0
        %v3689 = vpop.f32.mrb[0].mxu0
        %v3690 = vadd.f32 0.0, %v3689
        %v3691 = vpop.f32.mrb[0].mxu0
        %3692 = vmatprep.mubr.bf16.mxu0 0
        %3693 = vmatmul.mubr.bf16.gmra.mrb[0].mxu0 %v3432
        %v3694 = vpop.f32.mrb[0].mxu0
        %v3695 = vadd.f32 0.0, %v3694
        %v3696 = vpop.f32.mrb[0].mxu0
        %v3697 = vpop.f32.mrb[0].mxu0
        %v3698 = vadd.f32 0.0, %v3697
        %v3699 = vpop.f32.mrb[0].mxu0
        %3700 = vmatprep.mubr.bf16.mxu0 0
        %3701 = vmatmul.mubr.bf16.gmra.mrb[0].mxu0 %v3435
        %v3702 = vpop.f32.mrb[0].mxu0
        %v3703 = vadd.f32 0.0, %v3702
        %v3704 = vpop.f32.mrb[0].mxu0
        %v3705 = vpop.f32.mrb[0].mxu0
        %v3706 = vadd.f32 0.0, %v3705
        %v3707 = vpop.f32.mrb[0].mxu0
        %3708 = vmatprep.mubr.bf16.mxu0 0
        %3709 = vmatmul.mubr.bf16.gmra.mrb[0].mxu0 %v3438
        %v3710 = vpop.f32.mrb[0].mxu0
        %v3711 = vadd.f32 0.0, %v3710
        %v3712 = vpop.f32.mrb[0].mxu0
        %v3713 = vpop.f32.mrb[0].mxu0
        %v3714 = vadd.f32 0.0, %v3713
        %v3715 = vpop.f32.mrb[0].mxu0
        %3716 = vmatprep.mubr.bf16.mxu0 0
        %3717 = vmatmul.mubr.bf16.gmra.mrb[0].mxu0 %v3441
        %v3718 = vpop.f32.mrb[0].mxu0
        %v3719 = vadd.f32 0.0, %v3718
        %v3720 = vpop.f32.mrb[0].mxu0
        %v3721 = vpop.f32.mrb[0].mxu0
        %v3722 = vadd.f32 0.0, %v3721
        %v3723 = vpop.f32.mrb[0].mxu0
        %3724 = vmatprep.mubr.bf16.mxu0 0
        %3725 = vmatmul.mubr.bf16.gmra.mrb[0].mxu0 %v3444
        %v3726 = vpop.f32.mrb[0].mxu0
        %v3727 = vadd.f32 0.0, %v3726
        %v3728 = vpop.f32.mrb[0].mxu0
        %v3729 = vpop.f32.mrb[0].mxu0
        %v3730 = vadd.f32 0.0, %v3729
        %v3731 = vpop.f32.mrb[0].mxu0
        %3732 = vmatprep.mubr.bf16.mxu0 0
        %3733 = vmatmul.mubr.bf16.gmra.mrb[0].mxu0 %v3447
        %v3734 = vpop.f32.mrb[0].mxu0
        %v3735 = vadd.f32 0.0, %v3734
        %v3736 = vpop.f32.mrb[0].mxu0
        %v3737 = vpop.f32.mrb[0].mxu0
        %v3738 = vadd.f32 0.0, %v3737
        %v3739 = vpop.f32.mrb[0].mxu0
        %3740 = vdwg.mxu0
        %v3741 = vadd.f32 %v3232, %v3487
        %v3742 = vadd.f32 %v3233, %v3490
        %v3743 = vadd.f32 %v3234, %v3495
        %v3744 = vadd.f32 %v3235, %v3498
        %v3745 = vadd.f32 %v3236, %v3503
        %v3746 = vadd.f32 %v3237, %v3506
        %v3747 = vadd.f32 %v3238, %v3511
        %v3748 = vadd.f32 %v3239, %v3514
        %v3749 = vadd.f32 %v3240, %v3519
        %v3750 = vadd.f32 %v3241, %v3522
        %v3751 = vadd.f32 %v3242, %v3527
        %v3752 = vadd.f32 %v3243, %v3530
        %v3753 = vadd.f32 %v3244, %v3535
        %v3754 = vadd.f32 %v3245, %v3538
        %v3755 = vadd.f32 %v3246, %v3543
        %v3756 = vadd.f32 %v3247, %v3546
        %v3757 = vadd.f32 %v3248, %v3551
        %v3758 = vadd.f32 %v3249, %v3554
        %v3759 = vadd.f32 %v3250, %v3559
        %v3760 = vadd.f32 %v3251, %v3562
        %v3761 = vadd.f32 %v3252, %v3567
        %v3762 = vadd.f32 %v3253, %v3570
        %v3763 = vadd.f32 %v3254, %v3575
        %v3764 = vadd.f32 %v3255, %v3578
        %v3765 = vadd.f32 %v3256, %v3583
        %v3766 = vadd.f32 %v3257, %v3586
        %v3767 = vadd.f32 %v3258, %v3591
        %v3768 = vadd.f32 %v3259, %v3594
        %v3769 = vadd.f32 %v3260, %v3599
        %v3770 = vadd.f32 %v3261, %v3602
        %v3771 = vadd.f32 %v3262, %v3607
        %v3772 = vadd.f32 %v3263, %v3610
        %v3773 = vadd.f32 %v3264, %v3615
        %v3774 = vadd.f32 %v3265, %v3618
        %v3775 = vadd.f32 %v3266, %v3623
        %v3776 = vadd.f32 %v3267, %v3626
        %v3777 = vadd.f32 %v3268, %v3631
        %v3778 = vadd.f32 %v3269, %v3634
        %v3779 = vadd.f32 %v3270, %v3639
        %v3780 = vadd.f32 %v3271, %v3642
        %v3781 = vadd.f32 %v3272, %v3647
        %v3782 = vadd.f32 %v3273, %v3650
        %v3783 = vadd.f32 %v3274, %v3655
        %v3784 = vadd.f32 %v3275, %v3658
        %v3785 = vadd.f32 %v3276, %v3663
        %v3786 = vadd.f32 %v3277, %v3666
        %v3787 = vadd.f32 %v3278, %v3671
        %v3788 = vadd.f32 %v3279, %v3674
        %v3789 = vadd.f32 %v3280, %v3679
        %v3790 = vadd.f32 %v3281, %v3682
        %v3791 = vadd.f32 %v3282, %v3687
        %v3792 = vadd.f32 %v3283, %v3690
        %v3793 = vadd.f32 %v3284, %v3695
        %v3794 = vadd.f32 %v3285, %v3698
        %v3795 = vadd.f32 %v3286, %v3703
        %v3796 = vadd.f32 %v3287, %v3706
        %v3797 = vadd.f32 %v3288, %v3711
        %v3798 = vadd.f32 %v3289, %v3714
        %v3799 = vadd.f32 %v3290, %v3719
        %v3800 = vadd.f32 %v3291, %v3722
        %v3801 = vadd.f32 %v3292, %v3727
        %v3802 = vadd.f32 %v3293, %v3730
        %v3803 = vadd.f32 %v3294, %v3735
        %v3804 = vadd.f32 %v3295, %v3738
        %v3806 = vshrl.u32 %v294, 16
        %v3808 = vrot.slane %v3806, 4
        %v3809 = vshll.u32 %v294, 16
        %v3811 = vrot.slane %v3809, 5
        %v3812 = vor.u32 %v3808, %v3811
        %v3813 = vrot.slane %v3812, 4
        %v3815 = vshll.u32 %v295, 16
        %v3817 = vrot.slane %v3815, 5
        %v3818 = vsel %vm467, %v3813, %v3817
        %v3820 = vshrl.u32 %v314, 16
        %v3822 = vrot.slane %v3820, 4
        %v3823 = vshll.u32 %v314, 16
        %v3825 = vrot.slane %v3823, 5
        %v3826 = vor.u32 %v3822, %v3825
        %v3827 = vrot.slane %v3826, 4
        %v3829 = vshll.u32 %v315, 16
        %v3831 = vrot.slane %v3829, 5
        %v3832 = vsel %vm467, %v3827, %v3831
        %v3834 = vshrl.u32 %v334, 16
        %v3836 = vrot.slane %v3834, 4
        %v3837 = vshll.u32 %v334, 16
        %v3839 = vrot.slane %v3837, 5
        %v3840 = vor.u32 %v3836, %v3839
        %v3841 = vrot.slane %v3840, 4
        %v3843 = vshll.u32 %v335, 16
        %v3845 = vrot.slane %v3843, 5
        %v3846 = vsel %vm467, %v3841, %v3845
        %v3848 = vshrl.u32 %v354, 16
        %v3850 = vrot.slane %v3848, 4
        %v3851 = vshll.u32 %v354, 16
        %v3853 = vrot.slane %v3851, 5
        %v3854 = vor.u32 %v3850, %v3853
        %v3855 = vrot.slane %v3854, 4
        %v3857 = vshll.u32 %v355, 16
        %v3859 = vrot.slane %v3857, 5
        %v3860 = vsel %vm467, %v3855, %v3859
        %v3862 = vshrl.u32 %v374, 16
        %v3864 = vrot.slane %v3862, 4
        %v3865 = vshll.u32 %v374, 16
        %v3867 = vrot.slane %v3865, 5
        %v3868 = vor.u32 %v3864, %v3867
        %v3869 = vrot.slane %v3868, 4
        %v3871 = vshll.u32 %v375, 16
        %v3873 = vrot.slane %v3871, 5
        %v3874 = vsel %vm467, %v3869, %v3873
        %v3876 = vshrl.u32 %v394, 16
        %v3878 = vrot.slane %v3876, 4
        %v3879 = vshll.u32 %v394, 16
        %v3881 = vrot.slane %v3879, 5
        %v3882 = vor.u32 %v3878, %v3881
        %v3883 = vrot.slane %v3882, 4
        %v3885 = vshll.u32 %v395, 16
        %v3887 = vrot.slane %v3885, 5
        %v3888 = vsel %vm467, %v3883, %v3887
        %v3890 = vshrl.u32 %v414, 16
        %v3892 = vrot.slane %v3890, 4
        %v3893 = vshll.u32 %v414, 16
        %v3895 = vrot.slane %v3893, 5
        %v3896 = vor.u32 %v3892, %v3895
        %v3897 = vrot.slane %v3896, 4
        %v3899 = vshll.u32 %v415, 16
        %v3901 = vrot.slane %v3899, 5
        %v3902 = vsel %vm467, %v3897, %v3901
        %v3904 = vshrl.u32 %v434, 16
        %v3906 = vrot.slane %v3904, 4
        %v3907 = vshll.u32 %v434, 16
        %v3909 = vrot.slane %v3907, 5
        %v3910 = vor.u32 %v3906, %v3909
        %v3911 = vrot.slane %v3910, 4
        %v3913 = vshll.u32 %v435, 16
        %v3915 = vrot.slane %v3913, 5
        %v3916 = vsel %vm467, %v3911, %v3915
        %v3917 = vunpack.c.l.b16 %v3818
        %v3918 = vunpack.c.l.b16 %v3832
        %v3919 = vunpack.c.l.b16 %v3846
        %v3920 = vunpack.c.l.b16 %v3860
        %v3921 = vunpack.c.l.b16 %v3874
        %v3922 = vunpack.c.l.b16 %v3888
        %v3923 = vunpack.c.l.b16 %v3902
        %v3924 = vunpack.c.l.b16 %v3916
        %v3925 = vpack.c.b16 %v1366, %v1365
        %v3926 = vpack.c.b16 %v1368, %v1367
        %v3927 = vpack.c.b16 %v1370, %v1369
        %v3928 = vpack.c.b16 %v3917, %v1371
        %v3929 = vpack.c.b16 %v1374, %v1373
        %v3930 = vpack.c.b16 %v1376, %v1375
        %v3931 = vpack.c.b16 %v1378, %v1377
        %v3932 = vpack.c.b16 %v3918, %v1379
        %v3933 = vpack.c.b16 %v1382, %v1381
        %v3934 = vpack.c.b16 %v1384, %v1383
        %v3935 = vpack.c.b16 %v1386, %v1385
        %v3936 = vpack.c.b16 %v3919, %v1387
        %v3937 = vpack.c.b16 %v1390, %v1389
        %v3938 = vpack.c.b16 %v1392, %v1391
        %v3939 = vpack.c.b16 %v1394, %v1393
        %v3940 = vpack.c.b16 %v3920, %v1395
        %v3941 = vpack.c.b16 %v1398, %v1397
        %v3942 = vpack.c.b16 %v1400, %v1399
        %v3943 = vpack.c.b16 %v1402, %v1401
        %v3944 = vpack.c.b16 %v3921, %v1403
        %v3945 = vpack.c.b16 %v1406, %v1405
        %v3946 = vpack.c.b16 %v1408, %v1407
        %v3947 = vpack.c.b16 %v1410, %v1409
        %v3948 = vpack.c.b16 %v3922, %v1411
        %v3949 = vpack.c.b16 %v1414, %v1413
        %v3950 = vpack.c.b16 %v1416, %v1415
        %v3951 = vpack.c.b16 %v1418, %v1417
        %v3952 = vpack.c.b16 %v3923, %v1419
        %v3953 = vpack.c.b16 %v1422, %v1421
        %v3954 = vpack.c.b16 %v1424, %v1423
        %v3955 = vpack.c.b16 %v1426, %v1425
        %v3956 = vpack.c.b16 %v3924, %v1427
        %v3960 = vunpack.c.l.b16 %v450
        %v3961 = vunpack.c.l.b16 %v451
        %v3962 = vunpack.c.l.b16 %v452
        %v3963 = vpack.c.b16 %v3961, %v3960
        %v3964 = vpack.c.b16 %v3962, %v3962
        %v3967 = vsel %vm1469, %v3925, 0
        %v3970 = vsel %vm1469, %v3926, 0
        %v3973 = vsel %vm1469, %v3927, 0
        %v3976 = vsel %vm1469, %v3928, 0
        %v3979 = vsel %vm1469, %v3929, 0
        %v3982 = vsel %vm1469, %v3930, 0
        %v3985 = vsel %vm1469, %v3931, 0
        %v3988 = vsel %vm1469, %v3932, 0
        %v3991 = vsel %vm1469, %v3933, 0
        %v3994 = vsel %vm1469, %v3934, 0
        %v3997 = vsel %vm1469, %v3935, 0
        %v4000 = vsel %vm1469, %v3936, 0
        %v4003 = vsel %vm1469, %v3937, 0
        %v4006 = vsel %vm1469, %v3938, 0
        %v4009 = vsel %vm1469, %v3939, 0
        %v4012 = vsel %vm1469, %v3940, 0
        %v4015 = vsel %vm1469, %v3941, 0
        %v4018 = vsel %vm1469, %v3942, 0
        %v4021 = vsel %vm1469, %v3943, 0
        %v4024 = vsel %vm1469, %v3944, 0
        %v4027 = vsel %vm1469, %v3945, 0
        %v4030 = vsel %vm1469, %v3946, 0
        %v4033 = vsel %vm1469, %v3947, 0
        %v4036 = vsel %vm1469, %v3948, 0
        %v4039 = vsel %vm1469, %v3949, 0
        %v4042 = vsel %vm1469, %v3950, 0
        %v4045 = vsel %vm1469, %v3951, 0
        %v4048 = vsel %vm1469, %v3952, 0
        %v4051 = vsel %vm1469, %v3953, 0
        %v4054 = vsel %vm1469, %v3954, 0
        %v4057 = vsel %vm1469, %v3955, 0
        %v4060 = vsel %vm1469, %v3956, 0
        %v4063 = vsel %vm1566, %v3964, 0
        %4065 = vmatprep.subr.bf16.mxu0 0
        %4066 = vmatpush1.bf16.msra.mxu0 %v3963
        %4067 = vmatprep.subr.bf16.mxu0 0
        %4068 = vmatpush1.bf16.msra.mxu0 %v4063
        %4069 = vmatprep.subr.bf16.mxu0 0
        %4070 = vmatpush1.bf16.msra.mxu0 0
        %4071 = vmatprep.subr.bf16.mxu0 0
        %4072 = vmatpush1.bf16.msra.mxu0 0
        %4073 = vmatprep.subr.bf16.mxu0 0
        %4074 = vmatpush1.bf16.msra.mxu0 0
        %4075 = vmatprep.subr.bf16.mxu0 0
        %4076 = vmatpush1.bf16.msra.mxu0 0
        %4077 = vmatprep.subr.bf16.mxu0 0
        %4078 = vmatpush1.bf16.msra.mxu0 0
        %4079 = vmatprep.subr.bf16.mxu0 0
        %4080 = vmatpush1.bf16.msra.mxu0 0
        %4081 = vmatprep.subr.bf16.mxu0 0
        %4082 = vmatpush1.bf16.msra.mxu0 0
        %4083 = vmatprep.subr.bf16.mxu0 0
        %4084 = vmatpush1.bf16.msra.mxu0 0
        %4085 = vmatprep.subr.bf16.mxu0 0
        %4086 = vmatpush1.bf16.msra.mxu0 0
        %4087 = vmatprep.subr.bf16.mxu0 0
        %4088 = vmatpush1.bf16.msra.mxu0 0
        %4089 = vmatprep.subr.bf16.mxu0 0
        %4090 = vmatpush1.bf16.msra.mxu0 0
        %4091 = vmatprep.subr.bf16.mxu0 0
        %4092 = vmatpush1.bf16.msra.mxu0 0
        %4093 = vmatprep.subr.bf16.mxu0 0
        %4094 = vmatpush1.bf16.msra.mxu0 0
        %4095 = vmatprep.subr.bf16.mxu0 0
        %4096 = vmatpush1.bf16.msra.mxu0 0
        %4097 = vmatprep.mubr.bf16.mxu0 0
        %4098 = vmatmul.mubr.bf16.gmra.mrb[0].mxu0 %v3967
        %v4099 = vpop.f32.mrb[0].mxu0
        %v4100 = vadd.f32 0.0, %v4099
        %v4101 = vpop.f32.mrb[0].mxu0
        %v4102 = vpop.f32.mrb[0].mxu0
        %v4103 = vadd.f32 0.0, %v4102
        %v4104 = vpop.f32.mrb[0].mxu0
        %4105 = vmatprep.mubr.bf16.mxu0 0
        %4106 = vmatmul.mubr.bf16.gmra.mrb[0].mxu0 %v3970
        %v4107 = vpop.f32.mrb[0].mxu0
        %v4108 = vadd.f32 0.0, %v4107
        %v4109 = vpop.f32.mrb[0].mxu0
        %v4110 = vpop.f32.mrb[0].mxu0
        %v4111 = vadd.f32 0.0, %v4110
        %v4112 = vpop.f32.mrb[0].mxu0
        %4113 = vmatprep.mubr.bf16.mxu0 0
        %4114 = vmatmul.mubr.bf16.gmra.mrb[0].mxu0 %v3973
        %v4115 = vpop.f32.mrb[0].mxu0
        %v4116 = vadd.f32 0.0, %v4115
        %v4117 = vpop.f32.mrb[0].mxu0
        %v4118 = vpop.f32.mrb[0].mxu0
        %v4119 = vadd.f32 0.0, %v4118
        %v4120 = vpop.f32.mrb[0].mxu0
        %4121 = vmatprep.mubr.bf16.mxu0 0
        %4122 = vmatmul.mubr.bf16.gmra.mrb[0].mxu0 %v3976
        %v4123 = vpop.f32.mrb[0].mxu0
        %v4124 = vadd.f32 0.0, %v4123
        %v4125 = vpop.f32.mrb[0].mxu0
        %v4126 = vpop.f32.mrb[0].mxu0
        %v4127 = vadd.f32 0.0, %v4126
        %v4128 = vpop.f32.mrb[0].mxu0
        %4129 = vmatprep.mubr.bf16.mxu0 0
        %4130 = vmatmul.mubr.bf16.gmra.mrb[0].mxu0 %v3979
        %v4131 = vpop.f32.mrb[0].mxu0
        %v4132 = vadd.f32 0.0, %v4131
        %v4133 = vpop.f32.mrb[0].mxu0
        %v4134 = vpop.f32.mrb[0].mxu0
        %v4135 = vadd.f32 0.0, %v4134
        %v4136 = vpop.f32.mrb[0].mxu0
        %4137 = vmatprep.mubr.bf16.mxu0 0
        %4138 = vmatmul.mubr.bf16.gmra.mrb[0].mxu0 %v3982
        %v4139 = vpop.f32.mrb[0].mxu0
        %v4140 = vadd.f32 0.0, %v4139
        %v4141 = vpop.f32.mrb[0].mxu0
        %v4142 = vpop.f32.mrb[0].mxu0
        %v4143 = vadd.f32 0.0, %v4142
        %v4144 = vpop.f32.mrb[0].mxu0
        %4145 = vmatprep.mubr.bf16.mxu0 0
        %4146 = vmatmul.mubr.bf16.gmra.mrb[0].mxu0 %v3985
        %v4147 = vpop.f32.mrb[0].mxu0
        %v4148 = vadd.f32 0.0, %v4147
        %v4149 = vpop.f32.mrb[0].mxu0
        %v4150 = vpop.f32.mrb[0].mxu0
        %v4151 = vadd.f32 0.0, %v4150
        %v4152 = vpop.f32.mrb[0].mxu0
        %4153 = vmatprep.mubr.bf16.mxu0 0
        %4154 = vmatmul.mubr.bf16.gmra.mrb[0].mxu0 %v3988
        %v4155 = vpop.f32.mrb[0].mxu0
        %v4156 = vadd.f32 0.0, %v4155
        %v4157 = vpop.f32.mrb[0].mxu0
        %v4158 = vpop.f32.mrb[0].mxu0
        %v4159 = vadd.f32 0.0, %v4158
        %v4160 = vpop.f32.mrb[0].mxu0
        %4161 = vmatprep.mubr.bf16.mxu0 0
        %4162 = vmatmul.mubr.bf16.gmra.mrb[0].mxu0 %v3991
        %v4163 = vpop.f32.mrb[0].mxu0
        %v4164 = vadd.f32 0.0, %v4163
        %v4165 = vpop.f32.mrb[0].mxu0
        %v4166 = vpop.f32.mrb[0].mxu0
        %v4167 = vadd.f32 0.0, %v4166
        %v4168 = vpop.f32.mrb[0].mxu0
        %4169 = vmatprep.mubr.bf16.mxu0 0
        %4170 = vmatmul.mubr.bf16.gmra.mrb[0].mxu0 %v3994
        %v4171 = vpop.f32.mrb[0].mxu0
        %v4172 = vadd.f32 0.0, %v4171
        %v4173 = vpop.f32.mrb[0].mxu0
        %v4174 = vpop.f32.mrb[0].mxu0
        %v4175 = vadd.f32 0.0, %v4174
        %v4176 = vpop.f32.mrb[0].mxu0
        %4177 = vmatprep.mubr.bf16.mxu0 0
        %4178 = vmatmul.mubr.bf16.gmra.mrb[0].mxu0 %v3997
        %v4179 = vpop.f32.mrb[0].mxu0
        %v4180 = vadd.f32 0.0, %v4179
        %v4181 = vpop.f32.mrb[0].mxu0
        %v4182 = vpop.f32.mrb[0].mxu0
        %v4183 = vadd.f32 0.0, %v4182
        %v4184 = vpop.f32.mrb[0].mxu0
        %4185 = vmatprep.mubr.bf16.mxu0 0
        %4186 = vmatmul.mubr.bf16.gmra.mrb[0].mxu0 %v4000
        %v4187 = vpop.f32.mrb[0].mxu0
        %v4188 = vadd.f32 0.0, %v4187
        %v4189 = vpop.f32.mrb[0].mxu0
        %v4190 = vpop.f32.mrb[0].mxu0
        %v4191 = vadd.f32 0.0, %v4190
        %v4192 = vpop.f32.mrb[0].mxu0
        %4193 = vmatprep.mubr.bf16.mxu0 0
        %4194 = vmatmul.mubr.bf16.gmra.mrb[0].mxu0 %v4003
        %v4195 = vpop.f32.mrb[0].mxu0
        %v4196 = vadd.f32 0.0, %v4195
        %v4197 = vpop.f32.mrb[0].mxu0
        %v4198 = vpop.f32.mrb[0].mxu0
        %v4199 = vadd.f32 0.0, %v4198
        %v4200 = vpop.f32.mrb[0].mxu0
        %4201 = vmatprep.mubr.bf16.mxu0 0
        %4202 = vmatmul.mubr.bf16.gmra.mrb[0].mxu0 %v4006
        %v4203 = vpop.f32.mrb[0].mxu0
        %v4204 = vadd.f32 0.0, %v4203
        %v4205 = vpop.f32.mrb[0].mxu0
        %v4206 = vpop.f32.mrb[0].mxu0
        %v4207 = vadd.f32 0.0, %v4206
        %v4208 = vpop.f32.mrb[0].mxu0
        %4209 = vmatprep.mubr.bf16.mxu0 0
        %4210 = vmatmul.mubr.bf16.gmra.mrb[0].mxu0 %v4009
        %v4211 = vpop.f32.mrb[0].mxu0
        %v4212 = vadd.f32 0.0, %v4211
        %v4213 = vpop.f32.mrb[0].mxu0
        %v4214 = vpop.f32.mrb[0].mxu0
        %v4215 = vadd.f32 0.0, %v4214
        %v4216 = vpop.f32.mrb[0].mxu0
        %4217 = vmatprep.mubr.bf16.mxu0 0
        %4218 = vmatmul.mubr.bf16.gmra.mrb[0].mxu0 %v4012
        %v4219 = vpop.f32.mrb[0].mxu0
        %v4220 = vadd.f32 0.0, %v4219
        %v4221 = vpop.f32.mrb[0].mxu0
        %v4222 = vpop.f32.mrb[0].mxu0
        %v4223 = vadd.f32 0.0, %v4222
        %v4224 = vpop.f32.mrb[0].mxu0
        %4225 = vmatprep.mubr.bf16.mxu0 0
        %4226 = vmatmul.mubr.bf16.gmra.mrb[0].mxu0 %v4015
        %v4227 = vpop.f32.mrb[0].mxu0
        %v4228 = vadd.f32 0.0, %v4227
        %v4229 = vpop.f32.mrb[0].mxu0
        %v4230 = vpop.f32.mrb[0].mxu0
        %v4231 = vadd.f32 0.0, %v4230
        %v4232 = vpop.f32.mrb[0].mxu0
        %4233 = vmatprep.mubr.bf16.mxu0 0
        %4234 = vmatmul.mubr.bf16.gmra.mrb[0].mxu0 %v4018
        %v4235 = vpop.f32.mrb[0].mxu0
        %v4236 = vadd.f32 0.0, %v4235
        %v4237 = vpop.f32.mrb[0].mxu0
        %v4238 = vpop.f32.mrb[0].mxu0
        %v4239 = vadd.f32 0.0, %v4238
        %v4240 = vpop.f32.mrb[0].mxu0
        %4241 = vmatprep.mubr.bf16.mxu0 0
        %4242 = vmatmul.mubr.bf16.gmra.mrb[0].mxu0 %v4021
        %v4243 = vpop.f32.mrb[0].mxu0
        %v4244 = vadd.f32 0.0, %v4243
        %v4245 = vpop.f32.mrb[0].mxu0
        %v4246 = vpop.f32.mrb[0].mxu0
        %v4247 = vadd.f32 0.0, %v4246
        %v4248 = vpop.f32.mrb[0].mxu0
        %4249 = vmatprep.mubr.bf16.mxu0 0
        %4250 = vmatmul.mubr.bf16.gmra.mrb[0].mxu0 %v4024
        %v4251 = vpop.f32.mrb[0].mxu0
        %v4252 = vadd.f32 0.0, %v4251
        %v4253 = vpop.f32.mrb[0].mxu0
        %v4254 = vpop.f32.mrb[0].mxu0
        %v4255 = vadd.f32 0.0, %v4254
        %v4256 = vpop.f32.mrb[0].mxu0
        %4257 = vmatprep.mubr.bf16.mxu0 0
        %4258 = vmatmul.mubr.bf16.gmra.mrb[0].mxu0 %v4027
        %v4259 = vpop.f32.mrb[0].mxu0
        %v4260 = vadd.f32 0.0, %v4259
        %v4261 = vpop.f32.mrb[0].mxu0
        %v4262 = vpop.f32.mrb[0].mxu0
        %v4263 = vadd.f32 0.0, %v4262
        %v4264 = vpop.f32.mrb[0].mxu0
        %4265 = vmatprep.mubr.bf16.mxu0 0
        %4266 = vmatmul.mubr.bf16.gmra.mrb[0].mxu0 %v4030
        %v4267 = vpop.f32.mrb[0].mxu0
        %v4268 = vadd.f32 0.0, %v4267
        %v4269 = vpop.f32.mrb[0].mxu0
        %v4270 = vpop.f32.mrb[0].mxu0
        %v4271 = vadd.f32 0.0, %v4270
        %v4272 = vpop.f32.mrb[0].mxu0
        %4273 = vmatprep.mubr.bf16.mxu0 0
        %4274 = vmatmul.mubr.bf16.gmra.mrb[0].mxu0 %v4033
        %v4275 = vpop.f32.mrb[0].mxu0
        %v4276 = vadd.f32 0.0, %v4275
        %v4277 = vpop.f32.mrb[0].mxu0
        %v4278 = vpop.f32.mrb[0].mxu0
        %v4279 = vadd.f32 0.0, %v4278
        %v4280 = vpop.f32.mrb[0].mxu0
        %4281 = vmatprep.mubr.bf16.mxu0 0
        %4282 = vmatmul.mubr.bf16.gmra.mrb[0].mxu0 %v4036
        %v4283 = vpop.f32.mrb[0].mxu0
        %v4284 = vadd.f32 0.0, %v4283
        %v4285 = vpop.f32.mrb[0].mxu0
        %v4286 = vpop.f32.mrb[0].mxu0
        %v4287 = vadd.f32 0.0, %v4286
        %v4288 = vpop.f32.mrb[0].mxu0
        %4289 = vmatprep.mubr.bf16.mxu0 0
        %4290 = vmatmul.mubr.bf16.gmra.mrb[0].mxu0 %v4039
        %v4291 = vpop.f32.mrb[0].mxu0
        %v4292 = vadd.f32 0.0, %v4291
        %v4293 = vpop.f32.mrb[0].mxu0
        %v4294 = vpop.f32.mrb[0].mxu0
        %v4295 = vadd.f32 0.0, %v4294
        %v4296 = vpop.f32.mrb[0].mxu0
        %4297 = vmatprep.mubr.bf16.mxu0 0
        %4298 = vmatmul.mubr.bf16.gmra.mrb[0].mxu0 %v4042
        %v4299 = vpop.f32.mrb[0].mxu0
        %v4300 = vadd.f32 0.0, %v4299
        %v4301 = vpop.f32.mrb[0].mxu0
        %v4302 = vpop.f32.mrb[0].mxu0
        %v4303 = vadd.f32 0.0, %v4302
        %v4304 = vpop.f32.mrb[0].mxu0
        %4305 = vmatprep.mubr.bf16.mxu0 0
        %4306 = vmatmul.mubr.bf16.gmra.mrb[0].mxu0 %v4045
        %v4307 = vpop.f32.mrb[0].mxu0
        %v4308 = vadd.f32 0.0, %v4307
        %v4309 = vpop.f32.mrb[0].mxu0
        %v4310 = vpop.f32.mrb[0].mxu0
        %v4311 = vadd.f32 0.0, %v4310
        %v4312 = vpop.f32.mrb[0].mxu0
        %4313 = vmatprep.mubr.bf16.mxu0 0
        %4314 = vmatmul.mubr.bf16.gmra.mrb[0].mxu0 %v4048
        %v4315 = vpop.f32.mrb[0].mxu0
        %v4316 = vadd.f32 0.0, %v4315
        %v4317 = vpop.f32.mrb[0].mxu0
        %v4318 = vpop.f32.mrb[0].mxu0
        %v4319 = vadd.f32 0.0, %v4318
        %v4320 = vpop.f32.mrb[0].mxu0
        %4321 = vmatprep.mubr.bf16.mxu0 0
        %4322 = vmatmul.mubr.bf16.gmra.mrb[0].mxu0 %v4051
        %v4323 = vpop.f32.mrb[0].mxu0
        %v4324 = vadd.f32 0.0, %v4323
        %v4325 = vpop.f32.mrb[0].mxu0
        %v4326 = vpop.f32.mrb[0].mxu0
        %v4327 = vadd.f32 0.0, %v4326
        %v4328 = vpop.f32.mrb[0].mxu0
        %4329 = vmatprep.mubr.bf16.mxu0 0
        %4330 = vmatmul.mubr.bf16.gmra.mrb[0].mxu0 %v4054
        %v4331 = vpop.f32.mrb[0].mxu0
        %v4332 = vadd.f32 0.0, %v4331
        %v4333 = vpop.f32.mrb[0].mxu0
        %v4334 = vpop.f32.mrb[0].mxu0
        %v4335 = vadd.f32 0.0, %v4334
        %v4336 = vpop.f32.mrb[0].mxu0
        %4337 = vmatprep.mubr.bf16.mxu0 0
        %4338 = vmatmul.mubr.bf16.gmra.mrb[0].mxu0 %v4057
        %v4339 = vpop.f32.mrb[0].mxu0
        %v4340 = vadd.f32 0.0, %v4339
        %v4341 = vpop.f32.mrb[0].mxu0
        %v4342 = vpop.f32.mrb[0].mxu0
        %v4343 = vadd.f32 0.0, %v4342
        %v4344 = vpop.f32.mrb[0].mxu0
        %4345 = vmatprep.mubr.bf16.mxu0 0
        %4346 = vmatmul.mubr.bf16.gmra.mrb[0].mxu0 %v4060
        %v4347 = vpop.f32.mrb[0].mxu0
        %v4348 = vadd.f32 0.0, %v4347
        %v4349 = vpop.f32.mrb[0].mxu0
        %v4350 = vpop.f32.mrb[0].mxu0
        %v4351 = vadd.f32 0.0, %v4350
        %v4352 = vpop.f32.mrb[0].mxu0
        %4353 = vdwg.mxu0
        %v4354 = vadd.f32 %v3741, %v4100
        %v4355 = vadd.f32 %v3742, %v4103
        %v4356 = vadd.f32 %v3743, %v4108
        %v4357 = vadd.f32 %v3744, %v4111
        %v4358 = vadd.f32 %v3745, %v4116
        %v4359 = vadd.f32 %v3746, %v4119
        %v4360 = vadd.f32 %v3747, %v4124
        %v4361 = vadd.f32 %v3748, %v4127
        %v4362 = vadd.f32 %v3749, %v4132
        %v4363 = vadd.f32 %v3750, %v4135
        %v4364 = vadd.f32 %v3751, %v4140
        %v4365 = vadd.f32 %v3752, %v4143
        %v4366 = vadd.f32 %v3753, %v4148
        %v4367 = vadd.f32 %v3754, %v4151
        %v4368 = vadd.f32 %v3755, %v4156
        %v4369 = vadd.f32 %v3756, %v4159
        %v4370 = vadd.f32 %v3757, %v4164
        %v4371 = vadd.f32 %v3758, %v4167
        %v4372 = vadd.f32 %v3759, %v4172
        %v4373 = vadd.f32 %v3760, %v4175
        %v4374 = vadd.f32 %v3761, %v4180
        %v4375 = vadd.f32 %v3762, %v4183
        %v4376 = vadd.f32 %v3763, %v4188
        %v4377 = vadd.f32 %v3764, %v4191
        %v4378 = vadd.f32 %v3765, %v4196
        %v4379 = vadd.f32 %v3766, %v4199
        %v4380 = vadd.f32 %v3767, %v4204
        %v4381 = vadd.f32 %v3768, %v4207
        %v4382 = vadd.f32 %v3769, %v4212
        %v4383 = vadd.f32 %v3770, %v4215
        %v4384 = vadd.f32 %v3771, %v4220
        %v4385 = vadd.f32 %v3772, %v4223
        %v4386 = vadd.f32 %v3773, %v4228
        %v4387 = vadd.f32 %v3774, %v4231
        %v4388 = vadd.f32 %v3775, %v4236
        %v4389 = vadd.f32 %v3776, %v4239
        %v4390 = vadd.f32 %v3777, %v4244
        %v4391 = vadd.f32 %v3778, %v4247
        %v4392 = vadd.f32 %v3779, %v4252
        %v4393 = vadd.f32 %v3780, %v4255
        %v4394 = vadd.f32 %v3781, %v4260
        %v4395 = vadd.f32 %v3782, %v4263
        %v4396 = vadd.f32 %v3783, %v4268
        %v4397 = vadd.f32 %v3784, %v4271
        %v4398 = vadd.f32 %v3785, %v4276
        %v4399 = vadd.f32 %v3786, %v4279
        %v4400 = vadd.f32 %v3787, %v4284
        %v4401 = vadd.f32 %v3788, %v4287
        %v4402 = vadd.f32 %v3789, %v4292
        %v4403 = vadd.f32 %v3790, %v4295
        %v4404 = vadd.f32 %v3791, %v4300
        %v4405 = vadd.f32 %v3792, %v4303
        %v4406 = vadd.f32 %v3793, %v4308
        %v4407 = vadd.f32 %v3794, %v4311
        %v4408 = vadd.f32 %v3795, %v4316
        %v4409 = vadd.f32 %v3796, %v4319
        %v4410 = vadd.f32 %v3797, %v4324
        %v4411 = vadd.f32 %v3798, %v4327
        %v4412 = vadd.f32 %v3799, %v4332
        %v4413 = vadd.f32 %v3800, %v4335
        %v4414 = vadd.f32 %v3801, %v4340
        %v4415 = vadd.f32 %v3802, %v4343
        %v4416 = vadd.f32 %v3803, %v4348
        %v4417 = vadd.f32 %v3804, %v4351
        %v4426 = vrot.slane %v294, 5
        %v4427 = vrot.slane %v4426, 4
        %v4428 = vrot.slane %v295, 5
        %v4429 = vsel %vm2482, %v4427, %v4428
        %v4430 = vrot.slane %v314, 5
        %v4431 = vrot.slane %v4430, 4
        %v4432 = vrot.slane %v315, 5
        %v4433 = vsel %vm2482, %v4431, %v4432
        %v4434 = vrot.slane %v334, 5
        %v4435 = vrot.slane %v4434, 4
        %v4436 = vrot.slane %v335, 5
        %v4437 = vsel %vm2482, %v4435, %v4436
        %v4438 = vrot.slane %v354, 5
        %v4439 = vrot.slane %v4438, 4
        %v4440 = vrot.slane %v355, 5
        %v4441 = vsel %vm2482, %v4439, %v4440
        %v4442 = vrot.slane %v374, 5
        %v4443 = vrot.slane %v4442, 4
        %v4444 = vrot.slane %v375, 5
        %v4445 = vsel %vm2482, %v4443, %v4444
        %v4446 = vrot.slane %v394, 5
        %v4447 = vrot.slane %v4446, 4
        %v4448 = vrot.slane %v395, 5
        %v4449 = vsel %vm2482, %v4447, %v4448
        %v4450 = vrot.slane %v414, 5
        %v4451 = vrot.slane %v4450, 4
        %v4452 = vrot.slane %v415, 5
        %v4453 = vsel %vm2482, %v4451, %v4452
        %v4454 = vrot.slane %v434, 5
        %v4455 = vrot.slane %v4454, 4
        %v4456 = vrot.slane %v435, 5
        %v4457 = vsel %vm2482, %v4455, %v4456
        %v4458 = vunpack.c.l.b16 %v4429
        %v4459 = vunpack.c.l.b16 %v4433
        %v4460 = vunpack.c.l.b16 %v4437
        %v4461 = vunpack.c.l.b16 %v4441
        %v4462 = vunpack.c.l.b16 %v4445
        %v4463 = vunpack.c.l.b16 %v4449
        %v4464 = vunpack.c.l.b16 %v4453
        %v4465 = vunpack.c.l.b16 %v4457
        %v4466 = vpack.c.b16 %v2741, %v2740
        %v4467 = vpack.c.b16 %v2743, %v2742
        %v4468 = vpack.c.b16 %v2745, %v2744
        %v4469 = vpack.c.b16 %v4458, %v2746
        %v4470 = vpack.c.b16 %v2749, %v2748
        %v4471 = vpack.c.b16 %v2751, %v2750
        %v4472 = vpack.c.b16 %v2753, %v2752
        %v4473 = vpack.c.b16 %v4459, %v2754
        %v4474 = vpack.c.b16 %v2757, %v2756
        %v4475 = vpack.c.b16 %v2759, %v2758
        %v4476 = vpack.c.b16 %v2761, %v2760
        %v4477 = vpack.c.b16 %v4460, %v2762
        %v4478 = vpack.c.b16 %v2765, %v2764
        %v4479 = vpack.c.b16 %v2767, %v2766
        %v4480 = vpack.c.b16 %v2769, %v2768
        %v4481 = vpack.c.b16 %v4461, %v2770
        %v4482 = vpack.c.b16 %v2773, %v2772
        %v4483 = vpack.c.b16 %v2775, %v2774
        %v4484 = vpack.c.b16 %v2777, %v2776
        %v4485 = vpack.c.b16 %v4462, %v2778
        %v4486 = vpack.c.b16 %v2781, %v2780
        %v4487 = vpack.c.b16 %v2783, %v2782
        %v4488 = vpack.c.b16 %v2785, %v2784
        %v4489 = vpack.c.b16 %v4463, %v2786
        %v4490 = vpack.c.b16 %v2789, %v2788
        %v4491 = vpack.c.b16 %v2791, %v2790
        %v4492 = vpack.c.b16 %v2793, %v2792
        %v4493 = vpack.c.b16 %v4464, %v2794
        %v4494 = vpack.c.b16 %v2797, %v2796
        %v4495 = vpack.c.b16 %v2799, %v2798
        %v4496 = vpack.c.b16 %v2801, %v2800
        %v4497 = vpack.c.b16 %v4465, %v2802
        %v4501 = vunpack.c.l.b16 %v453
        %v4502 = vunpack.c.l.b16 %v454
        %v4503 = vunpack.c.l.b16 %v455
        %v4504 = vpack.c.b16 %v4502, %v4501
        %v4505 = vpack.c.b16 %v4503, %v4503
        %v4508 = vsel %vm1469, %v4466, 0
        %v4511 = vsel %vm1469, %v4467, 0
        %v4514 = vsel %vm1469, %v4468, 0
        %v4517 = vsel %vm1469, %v4469, 0
        %v4520 = vsel %vm1469, %v4470, 0
        %v4523 = vsel %vm1469, %v4471, 0
        %v4526 = vsel %vm1469, %v4472, 0
        %v4529 = vsel %vm1469, %v4473, 0
        %v4532 = vsel %vm1469, %v4474, 0
        %v4535 = vsel %vm1469, %v4475, 0
        %v4538 = vsel %vm1469, %v4476, 0
        %v4541 = vsel %vm1469, %v4477, 0
        %v4544 = vsel %vm1469, %v4478, 0
        %v4547 = vsel %vm1469, %v4479, 0
        %v4550 = vsel %vm1469, %v4480, 0
        %v4553 = vsel %vm1469, %v4481, 0
        %v4556 = vsel %vm1469, %v4482, 0
        %v4559 = vsel %vm1469, %v4483, 0
        %v4562 = vsel %vm1469, %v4484, 0
        %v4565 = vsel %vm1469, %v4485, 0
        %v4568 = vsel %vm1469, %v4486, 0
        %v4571 = vsel %vm1469, %v4487, 0
        %v4574 = vsel %vm1469, %v4488, 0
        %v4577 = vsel %vm1469, %v4489, 0
        %v4580 = vsel %vm1469, %v4490, 0
        %v4583 = vsel %vm1469, %v4491, 0
        %v4586 = vsel %vm1469, %v4492, 0
        %v4589 = vsel %vm1469, %v4493, 0
        %v4592 = vsel %vm1469, %v4494, 0
        %v4595 = vsel %vm1469, %v4495, 0
        %v4598 = vsel %vm1469, %v4496, 0
        %v4601 = vsel %vm1469, %v4497, 0
        %v4604 = vsel %vm1566, %v4505, 0
        %4606 = vmatprep.subr.bf16.mxu0 0
        %4607 = vmatpush1.bf16.msra.mxu0 %v4504
        %4608 = vmatprep.subr.bf16.mxu0 0
        %4609 = vmatpush1.bf16.msra.mxu0 %v4604
        %4610 = vmatprep.subr.bf16.mxu0 0
        %4611 = vmatpush1.bf16.msra.mxu0 0
        %4612 = vmatprep.subr.bf16.mxu0 0
        %4613 = vmatpush1.bf16.msra.mxu0 0
        %4614 = vmatprep.subr.bf16.mxu0 0
        %4615 = vmatpush1.bf16.msra.mxu0 0
        %4616 = vmatprep.subr.bf16.mxu0 0
        %4617 = vmatpush1.bf16.msra.mxu0 0
        %4618 = vmatprep.subr.bf16.mxu0 0
        %4619 = vmatpush1.bf16.msra.mxu0 0
        %4620 = vmatprep.subr.bf16.mxu0 0
        %4621 = vmatpush1.bf16.msra.mxu0 0
        %4622 = vmatprep.subr.bf16.mxu0 0
        %4623 = vmatpush1.bf16.msra.mxu0 0
        %4624 = vmatprep.subr.bf16.mxu0 0
        %4625 = vmatpush1.bf16.msra.mxu0 0
        %4626 = vmatprep.subr.bf16.mxu0 0
        %4627 = vmatpush1.bf16.msra.mxu0 0
        %4628 = vmatprep.subr.bf16.mxu0 0
        %4629 = vmatpush1.bf16.msra.mxu0 0
        %4630 = vmatprep.subr.bf16.mxu0 0
        %4631 = vmatpush1.bf16.msra.mxu0 0
        %4632 = vmatprep.subr.bf16.mxu0 0
        %4633 = vmatpush1.bf16.msra.mxu0 0
        %4634 = vmatprep.subr.bf16.mxu0 0
        %4635 = vmatpush1.bf16.msra.mxu0 0
        %4636 = vmatprep.subr.bf16.mxu0 0
        %4637 = vmatpush1.bf16.msra.mxu0 0
        %4638 = vmatprep.mubr.bf16.mxu0 0
        %4639 = vmatmul.mubr.bf16.gmra.mrb[0].mxu0 %v4508
        %v4640 = vpop.f32.mrb[0].mxu0
        %v4641 = vadd.f32 0.0, %v4640
        %v4642 = vpop.f32.mrb[0].mxu0
        %v4643 = vpop.f32.mrb[0].mxu0
        %v4644 = vadd.f32 0.0, %v4643
        %v4645 = vpop.f32.mrb[0].mxu0
        %4646 = vmatprep.mubr.bf16.mxu0 0
        %4647 = vmatmul.mubr.bf16.gmra.mrb[0].mxu0 %v4511
        %v4648 = vpop.f32.mrb[0].mxu0
        %v4649 = vadd.f32 0.0, %v4648
        %v4650 = vpop.f32.mrb[0].mxu0
        %v4651 = vpop.f32.mrb[0].mxu0
        %v4652 = vadd.f32 0.0, %v4651
        %v4653 = vpop.f32.mrb[0].mxu0
        %4654 = vmatprep.mubr.bf16.mxu0 0
        %4655 = vmatmul.mubr.bf16.gmra.mrb[0].mxu0 %v4514
        %v4656 = vpop.f32.mrb[0].mxu0
        %v4657 = vadd.f32 0.0, %v4656
        %v4658 = vpop.f32.mrb[0].mxu0
        %v4659 = vpop.f32.mrb[0].mxu0
        %v4660 = vadd.f32 0.0, %v4659
        %v4661 = vpop.f32.mrb[0].mxu0
        %4662 = vmatprep.mubr.bf16.mxu0 0
        %4663 = vmatmul.mubr.bf16.gmra.mrb[0].mxu0 %v4517
        %v4664 = vpop.f32.mrb[0].mxu0
        %v4665 = vadd.f32 0.0, %v4664
        %v4666 = vpop.f32.mrb[0].mxu0
        %v4667 = vpop.f32.mrb[0].mxu0
        %v4668 = vadd.f32 0.0, %v4667
        %v4669 = vpop.f32.mrb[0].mxu0
        %4670 = vmatprep.mubr.bf16.mxu0 0
        %4671 = vmatmul.mubr.bf16.gmra.mrb[0].mxu0 %v4520
        %v4672 = vpop.f32.mrb[0].mxu0
        %v4673 = vadd.f32 0.0, %v4672
        %v4674 = vpop.f32.mrb[0].mxu0
        %v4675 = vpop.f32.mrb[0].mxu0
        %v4676 = vadd.f32 0.0, %v4675
        %v4677 = vpop.f32.mrb[0].mxu0
        %4678 = vmatprep.mubr.bf16.mxu0 0
        %4679 = vmatmul.mubr.bf16.gmra.mrb[0].mxu0 %v4523
        %v4680 = vpop.f32.mrb[0].mxu0
        %v4681 = vadd.f32 0.0, %v4680
        %v4682 = vpop.f32.mrb[0].mxu0
        %v4683 = vpop.f32.mrb[0].mxu0
        %v4684 = vadd.f32 0.0, %v4683
        %v4685 = vpop.f32.mrb[0].mxu0
        %4686 = vmatprep.mubr.bf16.mxu0 0
        %4687 = vmatmul.mubr.bf16.gmra.mrb[0].mxu0 %v4526
        %v4688 = vpop.f32.mrb[0].mxu0
        %v4689 = vadd.f32 0.0, %v4688
        %v4690 = vpop.f32.mrb[0].mxu0
        %v4691 = vpop.f32.mrb[0].mxu0
        %v4692 = vadd.f32 0.0, %v4691
        %v4693 = vpop.f32.mrb[0].mxu0
        %4694 = vmatprep.mubr.bf16.mxu0 0
        %4695 = vmatmul.mubr.bf16.gmra.mrb[0].mxu0 %v4529
        %v4696 = vpop.f32.mrb[0].mxu0
        %v4697 = vadd.f32 0.0, %v4696
        %v4698 = vpop.f32.mrb[0].mxu0
        %v4699 = vpop.f32.mrb[0].mxu0
        %v4700 = vadd.f32 0.0, %v4699
        %v4701 = vpop.f32.mrb[0].mxu0
        %4702 = vmatprep.mubr.bf16.mxu0 0
        %4703 = vmatmul.mubr.bf16.gmra.mrb[0].mxu0 %v4532
        %v4704 = vpop.f32.mrb[0].mxu0
        %v4705 = vadd.f32 0.0, %v4704
        %v4706 = vpop.f32.mrb[0].mxu0
        %v4707 = vpop.f32.mrb[0].mxu0
        %v4708 = vadd.f32 0.0, %v4707
        %v4709 = vpop.f32.mrb[0].mxu0
        %4710 = vmatprep.mubr.bf16.mxu0 0
        %4711 = vmatmul.mubr.bf16.gmra.mrb[0].mxu0 %v4535
        %v4712 = vpop.f32.mrb[0].mxu0
        %v4713 = vadd.f32 0.0, %v4712
        %v4714 = vpop.f32.mrb[0].mxu0
        %v4715 = vpop.f32.mrb[0].mxu0
        %v4716 = vadd.f32 0.0, %v4715
        %v4717 = vpop.f32.mrb[0].mxu0
        %4718 = vmatprep.mubr.bf16.mxu0 0
        %4719 = vmatmul.mubr.bf16.gmra.mrb[0].mxu0 %v4538
        %v4720 = vpop.f32.mrb[0].mxu0
        %v4721 = vadd.f32 0.0, %v4720
        %v4722 = vpop.f32.mrb[0].mxu0
        %v4723 = vpop.f32.mrb[0].mxu0
        %v4724 = vadd.f32 0.0, %v4723
        %v4725 = vpop.f32.mrb[0].mxu0
        %4726 = vmatprep.mubr.bf16.mxu0 0
        %4727 = vmatmul.mubr.bf16.gmra.mrb[0].mxu0 %v4541
        %v4728 = vpop.f32.mrb[0].mxu0
        %v4729 = vadd.f32 0.0, %v4728
        %v4730 = vpop.f32.mrb[0].mxu0
        %v4731 = vpop.f32.mrb[0].mxu0
        %v4732 = vadd.f32 0.0, %v4731
        %v4733 = vpop.f32.mrb[0].mxu0
        %4734 = vmatprep.mubr.bf16.mxu0 0
        %4735 = vmatmul.mubr.bf16.gmra.mrb[0].mxu0 %v4544
        %v4736 = vpop.f32.mrb[0].mxu0
        %v4737 = vadd.f32 0.0, %v4736
        %v4738 = vpop.f32.mrb[0].mxu0
        %v4739 = vpop.f32.mrb[0].mxu0
        %v4740 = vadd.f32 0.0, %v4739
        %v4741 = vpop.f32.mrb[0].mxu0
        %4742 = vmatprep.mubr.bf16.mxu0 0
        %4743 = vmatmul.mubr.bf16.gmra.mrb[0].mxu0 %v4547
        %v4744 = vpop.f32.mrb[0].mxu0
        %v4745 = vadd.f32 0.0, %v4744
        %v4746 = vpop.f32.mrb[0].mxu0
        %v4747 = vpop.f32.mrb[0].mxu0
        %v4748 = vadd.f32 0.0, %v4747
        %v4749 = vpop.f32.mrb[0].mxu0
        %4750 = vmatprep.mubr.bf16.mxu0 0
        %4751 = vmatmul.mubr.bf16.gmra.mrb[0].mxu0 %v4550
        %v4752 = vpop.f32.mrb[0].mxu0
        %v4753 = vadd.f32 0.0, %v4752
        %v4754 = vpop.f32.mrb[0].mxu0
        %v4755 = vpop.f32.mrb[0].mxu0
        %v4756 = vadd.f32 0.0, %v4755
        %v4757 = vpop.f32.mrb[0].mxu0
        %4758 = vmatprep.mubr.bf16.mxu0 0
        %4759 = vmatmul.mubr.bf16.gmra.mrb[0].mxu0 %v4553
        %v4760 = vpop.f32.mrb[0].mxu0
        %v4761 = vadd.f32 0.0, %v4760
        %v4762 = vpop.f32.mrb[0].mxu0
        %v4763 = vpop.f32.mrb[0].mxu0
        %v4764 = vadd.f32 0.0, %v4763
        %v4765 = vpop.f32.mrb[0].mxu0
        %4766 = vmatprep.mubr.bf16.mxu0 0
        %4767 = vmatmul.mubr.bf16.gmra.mrb[0].mxu0 %v4556
        %v4768 = vpop.f32.mrb[0].mxu0
        %v4769 = vadd.f32 0.0, %v4768
        %v4770 = vpop.f32.mrb[0].mxu0
        %v4771 = vpop.f32.mrb[0].mxu0
        %v4772 = vadd.f32 0.0, %v4771
        %v4773 = vpop.f32.mrb[0].mxu0
        %4774 = vmatprep.mubr.bf16.mxu0 0
        %4775 = vmatmul.mubr.bf16.gmra.mrb[0].mxu0 %v4559
        %v4776 = vpop.f32.mrb[0].mxu0
        %v4777 = vadd.f32 0.0, %v4776
        %v4778 = vpop.f32.mrb[0].mxu0
        %v4779 = vpop.f32.mrb[0].mxu0
        %v4780 = vadd.f32 0.0, %v4779
        %v4781 = vpop.f32.mrb[0].mxu0
        %4782 = vmatprep.mubr.bf16.mxu0 0
        %4783 = vmatmul.mubr.bf16.gmra.mrb[0].mxu0 %v4562
        %v4784 = vpop.f32.mrb[0].mxu0
        %v4785 = vadd.f32 0.0, %v4784
        %v4786 = vpop.f32.mrb[0].mxu0
        %v4787 = vpop.f32.mrb[0].mxu0
        %v4788 = vadd.f32 0.0, %v4787
        %v4789 = vpop.f32.mrb[0].mxu0
        %4790 = vmatprep.mubr.bf16.mxu0 0
        %4791 = vmatmul.mubr.bf16.gmra.mrb[0].mxu0 %v4565
        %v4792 = vpop.f32.mrb[0].mxu0
        %v4793 = vadd.f32 0.0, %v4792
        %v4794 = vpop.f32.mrb[0].mxu0
        %v4795 = vpop.f32.mrb[0].mxu0
        %v4796 = vadd.f32 0.0, %v4795
        %v4797 = vpop.f32.mrb[0].mxu0
        %4798 = vmatprep.mubr.bf16.mxu0 0
        %4799 = vmatmul.mubr.bf16.gmra.mrb[0].mxu0 %v4568
        %v4800 = vpop.f32.mrb[0].mxu0
        %v4801 = vadd.f32 0.0, %v4800
        %v4802 = vpop.f32.mrb[0].mxu0
        %v4803 = vpop.f32.mrb[0].mxu0
        %v4804 = vadd.f32 0.0, %v4803
        %v4805 = vpop.f32.mrb[0].mxu0
        %4806 = vmatprep.mubr.bf16.mxu0 0
        %4807 = vmatmul.mubr.bf16.gmra.mrb[0].mxu0 %v4571
        %v4808 = vpop.f32.mrb[0].mxu0
        %v4809 = vadd.f32 0.0, %v4808
        %v4810 = vpop.f32.mrb[0].mxu0
        %v4811 = vpop.f32.mrb[0].mxu0
        %v4812 = vadd.f32 0.0, %v4811
        %v4813 = vpop.f32.mrb[0].mxu0
        %4814 = vmatprep.mubr.bf16.mxu0 0
        %4815 = vmatmul.mubr.bf16.gmra.mrb[0].mxu0 %v4574
        %v4816 = vpop.f32.mrb[0].mxu0
        %v4817 = vadd.f32 0.0, %v4816
        %v4818 = vpop.f32.mrb[0].mxu0
        %v4819 = vpop.f32.mrb[0].mxu0
        %v4820 = vadd.f32 0.0, %v4819
        %v4821 = vpop.f32.mrb[0].mxu0
        %4822 = vmatprep.mubr.bf16.mxu0 0
        %4823 = vmatmul.mubr.bf16.gmra.mrb[0].mxu0 %v4577
        %v4824 = vpop.f32.mrb[0].mxu0
        %v4825 = vadd.f32 0.0, %v4824
        %v4826 = vpop.f32.mrb[0].mxu0
        %v4827 = vpop.f32.mrb[0].mxu0
        %v4828 = vadd.f32 0.0, %v4827
        %v4829 = vpop.f32.mrb[0].mxu0
        %4830 = vmatprep.mubr.bf16.mxu0 0
        %4831 = vmatmul.mubr.bf16.gmra.mrb[0].mxu0 %v4580
        %v4832 = vpop.f32.mrb[0].mxu0
        %v4833 = vadd.f32 0.0, %v4832
        %v4834 = vpop.f32.mrb[0].mxu0
        %v4835 = vpop.f32.mrb[0].mxu0
        %v4836 = vadd.f32 0.0, %v4835
        %v4837 = vpop.f32.mrb[0].mxu0
        %4838 = vmatprep.mubr.bf16.mxu0 0
        %4839 = vmatmul.mubr.bf16.gmra.mrb[0].mxu0 %v4583
        %v4840 = vpop.f32.mrb[0].mxu0
        %v4841 = vadd.f32 0.0, %v4840
        %v4842 = vpop.f32.mrb[0].mxu0
        %v4843 = vpop.f32.mrb[0].mxu0
        %v4844 = vadd.f32 0.0, %v4843
        %v4845 = vpop.f32.mrb[0].mxu0
        %4846 = vmatprep.mubr.bf16.mxu0 0
        %4847 = vmatmul.mubr.bf16.gmra.mrb[0].mxu0 %v4586
        %v4848 = vpop.f32.mrb[0].mxu0
        %v4849 = vadd.f32 0.0, %v4848
        %v4850 = vpop.f32.mrb[0].mxu0
        %v4851 = vpop.f32.mrb[0].mxu0
        %v4852 = vadd.f32 0.0, %v4851
        %v4853 = vpop.f32.mrb[0].mxu0
        %4854 = vmatprep.mubr.bf16.mxu0 0
        %4855 = vmatmul.mubr.bf16.gmra.mrb[0].mxu0 %v4589
        %v4856 = vpop.f32.mrb[0].mxu0
        %v4857 = vadd.f32 0.0, %v4856
        %v4858 = vpop.f32.mrb[0].mxu0
        %v4859 = vpop.f32.mrb[0].mxu0
        %v4860 = vadd.f32 0.0, %v4859
        %v4861 = vpop.f32.mrb[0].mxu0
        %4862 = vmatprep.mubr.bf16.mxu0 0
        %4863 = vmatmul.mubr.bf16.gmra.mrb[0].mxu0 %v4592
        %v4864 = vpop.f32.mrb[0].mxu0
        %v4865 = vadd.f32 0.0, %v4864
        %v4866 = vpop.f32.mrb[0].mxu0
        %v4867 = vpop.f32.mrb[0].mxu0
        %v4868 = vadd.f32 0.0, %v4867
        %v4869 = vpop.f32.mrb[0].mxu0
        %4870 = vmatprep.mubr.bf16.mxu0 0
        %4871 = vmatmul.mubr.bf16.gmra.mrb[0].mxu0 %v4595
        %v4872 = vpop.f32.mrb[0].mxu0
        %v4873 = vadd.f32 0.0, %v4872
        %v4874 = vpop.f32.mrb[0].mxu0
        %v4875 = vpop.f32.mrb[0].mxu0
        %v4876 = vadd.f32 0.0, %v4875
        %v4877 = vpop.f32.mrb[0].mxu0
        %4878 = vmatprep.mubr.bf16.mxu0 0
        %4879 = vmatmul.mubr.bf16.gmra.mrb[0].mxu0 %v4598
        %v4880 = vpop.f32.mrb[0].mxu0
        %v4881 = vadd.f32 0.0, %v4880
        %v4882 = vpop.f32.mrb[0].mxu0
        %v4883 = vpop.f32.mrb[0].mxu0
        %v4884 = vadd.f32 0.0, %v4883
        %v4885 = vpop.f32.mrb[0].mxu0
        %4886 = vmatprep.mubr.bf16.mxu0 0
        %4887 = vmatmul.mubr.bf16.gmra.mrb[0].mxu0 %v4601
        %v4888 = vpop.f32.mrb[0].mxu0
        %v4889 = vadd.f32 0.0, %v4888
        %v4890 = vpop.f32.mrb[0].mxu0
        %v4891 = vpop.f32.mrb[0].mxu0
        %v4892 = vadd.f32 0.0, %v4891
        %v4893 = vpop.f32.mrb[0].mxu0
        %4894 = vdwg.mxu0
        %v4895 = vadd.f32 %v4354, %v4641
        %v4896 = vadd.f32 %v4355, %v4644
        %v4897 = vadd.f32 %v4356, %v4649
        %v4898 = vadd.f32 %v4357, %v4652
        %v4899 = vadd.f32 %v4358, %v4657
        %v4900 = vadd.f32 %v4359, %v4660
        %v4901 = vadd.f32 %v4360, %v4665
        %v4902 = vadd.f32 %v4361, %v4668
        %v4903 = vadd.f32 %v4362, %v4673
        %v4904 = vadd.f32 %v4363, %v4676
        %v4905 = vadd.f32 %v4364, %v4681
        %v4906 = vadd.f32 %v4365, %v4684
        %v4907 = vadd.f32 %v4366, %v4689
        %v4908 = vadd.f32 %v4367, %v4692
        %v4909 = vadd.f32 %v4368, %v4697
        %v4910 = vadd.f32 %v4369, %v4700
        %v4911 = vadd.f32 %v4370, %v4705
        %v4912 = vadd.f32 %v4371, %v4708
        %v4913 = vadd.f32 %v4372, %v4713
        %v4914 = vadd.f32 %v4373, %v4716
        %v4915 = vadd.f32 %v4374, %v4721
        %v4916 = vadd.f32 %v4375, %v4724
        %v4917 = vadd.f32 %v4376, %v4729
        %v4918 = vadd.f32 %v4377, %v4732
        %v4919 = vadd.f32 %v4378, %v4737
        %v4920 = vadd.f32 %v4379, %v4740
        %v4921 = vadd.f32 %v4380, %v4745
        %v4922 = vadd.f32 %v4381, %v4748
        %v4923 = vadd.f32 %v4382, %v4753
        %v4924 = vadd.f32 %v4383, %v4756
        %v4925 = vadd.f32 %v4384, %v4761
        %v4926 = vadd.f32 %v4385, %v4764
        %v4927 = vadd.f32 %v4386, %v4769
        %v4928 = vadd.f32 %v4387, %v4772
        %v4929 = vadd.f32 %v4388, %v4777
        %v4930 = vadd.f32 %v4389, %v4780
        %v4931 = vadd.f32 %v4390, %v4785
        %v4932 = vadd.f32 %v4391, %v4788
        %v4933 = vadd.f32 %v4392, %v4793
        %v4934 = vadd.f32 %v4393, %v4796
        %v4935 = vadd.f32 %v4394, %v4801
        %v4936 = vadd.f32 %v4395, %v4804
        %v4937 = vadd.f32 %v4396, %v4809
        %v4938 = vadd.f32 %v4397, %v4812
        %v4939 = vadd.f32 %v4398, %v4817
        %v4940 = vadd.f32 %v4399, %v4820
        %v4941 = vadd.f32 %v4400, %v4825
        %v4942 = vadd.f32 %v4401, %v4828
        %v4943 = vadd.f32 %v4402, %v4833
        %v4944 = vadd.f32 %v4403, %v4836
        %v4945 = vadd.f32 %v4404, %v4841
        %v4946 = vadd.f32 %v4405, %v4844
        %v4947 = vadd.f32 %v4406, %v4849
        %v4948 = vadd.f32 %v4407, %v4852
        %v4949 = vadd.f32 %v4408, %v4857
        %v4950 = vadd.f32 %v4409, %v4860
        %v4951 = vadd.f32 %v4410, %v4865
        %v4952 = vadd.f32 %v4411, %v4868
        %v4953 = vadd.f32 %v4412, %v4873
        %v4954 = vadd.f32 %v4413, %v4876
        %v4955 = vadd.f32 %v4414, %v4881
        %v4956 = vadd.f32 %v4415, %v4884
        %v4957 = vadd.f32 %v4416, %v4889
        %v4958 = vadd.f32 %v4417, %v4892
        %v4967 = vunpack.c.l.b16 %v296
        %v4968 = vunpack.c.l.b16 %v316
        %v4969 = vunpack.c.l.b16 %v336
        %v4970 = vunpack.c.l.b16 %v356
        %v4971 = vunpack.c.l.b16 %v376
        %v4972 = vunpack.c.l.b16 %v396
        %v4973 = vunpack.c.l.b16 %v416
        %v4974 = vunpack.c.l.b16 %v436
        %v4975 = vpack.c.b16 %v4967, %v3304
        %v4976 = vpack.c.b16 %v4968, %v3305
        %v4977 = vpack.c.b16 %v4969, %v3306
        %v4978 = vpack.c.b16 %v4970, %v3307
        %v4979 = vpack.c.b16 %v4971, %v3308
        %v4980 = vpack.c.b16 %v4972, %v3309
        %v4981 = vpack.c.b16 %v4973, %v3310
        %v4982 = vpack.c.b16 %v4974, %v3311
        %v4986 = vunpack.c.l.b16 %v456
        %v4987 = vunpack.c.l.b16 %v457
        %v4988 = vunpack.c.l.b16 %v458
        %v4989 = vpack.c.b16 %v4987, %v4986
        %v4990 = vpack.c.b16 %v4988, %v4988
        %v4993 = vsel %vm1469, %v4975, 0
        %v4996 = vsel %vm1469, %v4976, 0
        %v4999 = vsel %vm1469, %v4977, 0
        %v5002 = vsel %vm1469, %v4978, 0
        %v5005 = vsel %vm1469, %v4979, 0
        %v5008 = vsel %vm1469, %v4980, 0
        %v5011 = vsel %vm1469, %v4981, 0
        %v5014 = vsel %vm1469, %v4982, 0
        %v5017 = vsel %vm1566, %v4990, 0
        %5019 = vmatprep.subr.bf16.mxu0 0
        %5020 = vmatpush1.bf16.msra.mxu0 %v4989
        %5021 = vmatprep.subr.bf16.mxu0 0
        %5022 = vmatpush1.bf16.msra.mxu0 %v5017
        %5023 = vmatprep.subr.bf16.mxu0 0
        %5024 = vmatpush1.bf16.msra.mxu0 0
        %5025 = vmatprep.subr.bf16.mxu0 0
        %5026 = vmatpush1.bf16.msra.mxu0 0
        %5027 = vmatprep.subr.bf16.mxu0 0
        %5028 = vmatpush1.bf16.msra.mxu0 0
        %5029 = vmatprep.subr.bf16.mxu0 0
        %5030 = vmatpush1.bf16.msra.mxu0 0
        %5031 = vmatprep.subr.bf16.mxu0 0
        %5032 = vmatpush1.bf16.msra.mxu0 0
        %5033 = vmatprep.subr.bf16.mxu0 0
        %5034 = vmatpush1.bf16.msra.mxu0 0
        %5035 = vmatprep.subr.bf16.mxu0 0
        %5036 = vmatpush1.bf16.msra.mxu0 0
        %5037 = vmatprep.subr.bf16.mxu0 0
        %5038 = vmatpush1.bf16.msra.mxu0 0
        %5039 = vmatprep.subr.bf16.mxu0 0
        %5040 = vmatpush1.bf16.msra.mxu0 0
        %5041 = vmatprep.subr.bf16.mxu0 0
        %5042 = vmatpush1.bf16.msra.mxu0 0
        %5043 = vmatprep.subr.bf16.mxu0 0
        %5044 = vmatpush1.bf16.msra.mxu0 0
        %5045 = vmatprep.subr.bf16.mxu0 0
        %5046 = vmatpush1.bf16.msra.mxu0 0
        %5047 = vmatprep.subr.bf16.mxu0 0
        %5048 = vmatpush1.bf16.msra.mxu0 0
        %5049 = vmatprep.subr.bf16.mxu0 0
        %5050 = vmatpush1.bf16.msra.mxu0 0
        %5051 = vmatprep.mubr.bf16.mxu0 0
        %5052 = vmatmul.mubr.bf16.gmra.mrb[0].mxu0 %v2032
        %v5053 = vpop.f32.mrb[0].mxu0
        %v5054 = vadd.f32 0.0, %v5053
        %v5055 = vpop.f32.mrb[0].mxu0
        %v5056 = vpop.f32.mrb[0].mxu0
        %v5057 = vadd.f32 0.0, %v5056
        %v5058 = vpop.f32.mrb[0].mxu0
        %5059 = vmatprep.mubr.bf16.mxu0 0
        %5060 = vmatmul.mubr.bf16.gmra.mrb[0].mxu0 %v2035
        %v5061 = vpop.f32.mrb[0].mxu0
        %v5062 = vadd.f32 0.0, %v5061
        %v5063 = vpop.f32.mrb[0].mxu0
        %v5064 = vpop.f32.mrb[0].mxu0
        %v5065 = vadd.f32 0.0, %v5064
        %v5066 = vpop.f32.mrb[0].mxu0
        %5067 = vmatprep.mubr.bf16.mxu0 0
        %5068 = vmatmul.mubr.bf16.gmra.mrb[0].mxu0 %v2038
        %v5069 = vpop.f32.mrb[0].mxu0
        %v5070 = vadd.f32 0.0, %v5069
        %v5071 = vpop.f32.mrb[0].mxu0
        %v5072 = vpop.f32.mrb[0].mxu0
        %v5073 = vadd.f32 0.0, %v5072
        %v5074 = vpop.f32.mrb[0].mxu0
        %5075 = vmatprep.mubr.bf16.mxu0 0
        %5076 = vmatmul.mubr.bf16.gmra.mrb[0].mxu0 %v4993
        %v5077 = vpop.f32.mrb[0].mxu0
        %v5078 = vadd.f32 0.0, %v5077
        %v5079 = vpop.f32.mrb[0].mxu0
        %v5080 = vpop.f32.mrb[0].mxu0
        %v5081 = vadd.f32 0.0, %v5080
        %v5082 = vpop.f32.mrb[0].mxu0
        %5083 = vmatprep.mubr.bf16.mxu0 0
        %5084 = vmatmul.mubr.bf16.gmra.mrb[0].mxu0 %v2044
        %v5085 = vpop.f32.mrb[0].mxu0
        %v5086 = vadd.f32 0.0, %v5085
        %v5087 = vpop.f32.mrb[0].mxu0
        %v5088 = vpop.f32.mrb[0].mxu0
        %v5089 = vadd.f32 0.0, %v5088
        %v5090 = vpop.f32.mrb[0].mxu0
        %5091 = vmatprep.mubr.bf16.mxu0 0
        %5092 = vmatmul.mubr.bf16.gmra.mrb[0].mxu0 %v2047
        %v5093 = vpop.f32.mrb[0].mxu0
        %v5094 = vadd.f32 0.0, %v5093
        %v5095 = vpop.f32.mrb[0].mxu0
        %v5096 = vpop.f32.mrb[0].mxu0
        %v5097 = vadd.f32 0.0, %v5096
        %v5098 = vpop.f32.mrb[0].mxu0
        %5099 = vmatprep.mubr.bf16.mxu0 0
        %5100 = vmatmul.mubr.bf16.gmra.mrb[0].mxu0 %v2050
        %v5101 = vpop.f32.mrb[0].mxu0
        %v5102 = vadd.f32 0.0, %v5101
        %v5103 = vpop.f32.mrb[0].mxu0
        %v5104 = vpop.f32.mrb[0].mxu0
        %v5105 = vadd.f32 0.0, %v5104
        %v5106 = vpop.f32.mrb[0].mxu0
        %5107 = vmatprep.mubr.bf16.mxu0 0
        %5108 = vmatmul.mubr.bf16.gmra.mrb[0].mxu0 %v4996
        %v5109 = vpop.f32.mrb[0].mxu0
        %v5110 = vadd.f32 0.0, %v5109
        %v5111 = vpop.f32.mrb[0].mxu0
        %v5112 = vpop.f32.mrb[0].mxu0
        %v5113 = vadd.f32 0.0, %v5112
        %v5114 = vpop.f32.mrb[0].mxu0
        %5115 = vmatprep.mubr.bf16.mxu0 0
        %5116 = vmatmul.mubr.bf16.gmra.mrb[0].mxu0 %v2056
        %v5117 = vpop.f32.mrb[0].mxu0
        %v5118 = vadd.f32 0.0, %v5117
        %v5119 = vpop.f32.mrb[0].mxu0
        %v5120 = vpop.f32.mrb[0].mxu0
        %v5121 = vadd.f32 0.0, %v5120
        %v5122 = vpop.f32.mrb[0].mxu0
        %5123 = vmatprep.mubr.bf16.mxu0 0
        %5124 = vmatmul.mubr.bf16.gmra.mrb[0].mxu0 %v2059
        %v5125 = vpop.f32.mrb[0].mxu0
        %v5126 = vadd.f32 0.0, %v5125
        %v5127 = vpop.f32.mrb[0].mxu0
        %v5128 = vpop.f32.mrb[0].mxu0
        %v5129 = vadd.f32 0.0, %v5128
        %v5130 = vpop.f32.mrb[0].mxu0
        %5131 = vmatprep.mubr.bf16.mxu0 0
        %5132 = vmatmul.mubr.bf16.gmra.mrb[0].mxu0 %v2062
        %v5133 = vpop.f32.mrb[0].mxu0
        %v5134 = vadd.f32 0.0, %v5133
        %v5135 = vpop.f32.mrb[0].mxu0
        %v5136 = vpop.f32.mrb[0].mxu0
        %v5137 = vadd.f32 0.0, %v5136
        %v5138 = vpop.f32.mrb[0].mxu0
        %5139 = vmatprep.mubr.bf16.mxu0 0
        %5140 = vmatmul.mubr.bf16.gmra.mrb[0].mxu0 %v4999
        %v5141 = vpop.f32.mrb[0].mxu0
        %v5142 = vadd.f32 0.0, %v5141
        %v5143 = vpop.f32.mrb[0].mxu0
        %v5144 = vpop.f32.mrb[0].mxu0
        %v5145 = vadd.f32 0.0, %v5144
        %v5146 = vpop.f32.mrb[0].mxu0
        %5147 = vmatprep.mubr.bf16.mxu0 0
        %5148 = vmatmul.mubr.bf16.gmra.mrb[0].mxu0 %v2068
        %v5149 = vpop.f32.mrb[0].mxu0
        %v5150 = vadd.f32 0.0, %v5149
        %v5151 = vpop.f32.mrb[0].mxu0
        %v5152 = vpop.f32.mrb[0].mxu0
        %v5153 = vadd.f32 0.0, %v5152
        %v5154 = vpop.f32.mrb[0].mxu0
        %5155 = vmatprep.mubr.bf16.mxu0 0
        %5156 = vmatmul.mubr.bf16.gmra.mrb[0].mxu0 %v2071
        %v5157 = vpop.f32.mrb[0].mxu0
        %v5158 = vadd.f32 0.0, %v5157
        %v5159 = vpop.f32.mrb[0].mxu0
        %v5160 = vpop.f32.mrb[0].mxu0
        %v5161 = vadd.f32 0.0, %v5160
        %v5162 = vpop.f32.mrb[0].mxu0
        %5163 = vmatprep.mubr.bf16.mxu0 0
        %5164 = vmatmul.mubr.bf16.gmra.mrb[0].mxu0 %v2074
        %v5165 = vpop.f32.mrb[0].mxu0
        %v5166 = vadd.f32 0.0, %v5165
        %v5167 = vpop.f32.mrb[0].mxu0
        %v5168 = vpop.f32.mrb[0].mxu0
        %v5169 = vadd.f32 0.0, %v5168
        %v5170 = vpop.f32.mrb[0].mxu0
        %5171 = vmatprep.mubr.bf16.mxu0 0
        %5172 = vmatmul.mubr.bf16.gmra.mrb[0].mxu0 %v5002
        %v5173 = vpop.f32.mrb[0].mxu0
        %v5174 = vadd.f32 0.0, %v5173
        %v5175 = vpop.f32.mrb[0].mxu0
        %v5176 = vpop.f32.mrb[0].mxu0
        %v5177 = vadd.f32 0.0, %v5176
        %v5178 = vpop.f32.mrb[0].mxu0
        %5179 = vmatprep.mubr.bf16.mxu0 0
        %5180 = vmatmul.mubr.bf16.gmra.mrb[0].mxu0 %v2080
        %v5181 = vpop.f32.mrb[0].mxu0
        %v5182 = vadd.f32 0.0, %v5181
        %v5183 = vpop.f32.mrb[0].mxu0
        %v5184 = vpop.f32.mrb[0].mxu0
        %v5185 = vadd.f32 0.0, %v5184
        %v5186 = vpop.f32.mrb[0].mxu0
        %5187 = vmatprep.mubr.bf16.mxu0 0
        %5188 = vmatmul.mubr.bf16.gmra.mrb[0].mxu0 %v2083
        %v5189 = vpop.f32.mrb[0].mxu0
        %v5190 = vadd.f32 0.0, %v5189
        %v5191 = vpop.f32.mrb[0].mxu0
        %v5192 = vpop.f32.mrb[0].mxu0
        %v5193 = vadd.f32 0.0, %v5192
        %v5194 = vpop.f32.mrb[0].mxu0
        %5195 = vmatprep.mubr.bf16.mxu0 0
        %5196 = vmatmul.mubr.bf16.gmra.mrb[0].mxu0 %v2086
        %v5197 = vpop.f32.mrb[0].mxu0
        %v5198 = vadd.f32 0.0, %v5197
        %v5199 = vpop.f32.mrb[0].mxu0
        %v5200 = vpop.f32.mrb[0].mxu0
        %v5201 = vadd.f32 0.0, %v5200
        %v5202 = vpop.f32.mrb[0].mxu0
        %5203 = vmatprep.mubr.bf16.mxu0 0
        %5204 = vmatmul.mubr.bf16.gmra.mrb[0].mxu0 %v5005
        %v5205 = vpop.f32.mrb[0].mxu0
        %v5206 = vadd.f32 0.0, %v5205
        %v5207 = vpop.f32.mrb[0].mxu0
        %v5208 = vpop.f32.mrb[0].mxu0
        %v5209 = vadd.f32 0.0, %v5208
        %v5210 = vpop.f32.mrb[0].mxu0
        %5211 = vmatprep.mubr.bf16.mxu0 0
        %5212 = vmatmul.mubr.bf16.gmra.mrb[0].mxu0 %v2092
        %v5213 = vpop.f32.mrb[0].mxu0
        %v5214 = vadd.f32 0.0, %v5213
        %v5215 = vpop.f32.mrb[0].mxu0
        %v5216 = vpop.f32.mrb[0].mxu0
        %v5217 = vadd.f32 0.0, %v5216
        %v5218 = vpop.f32.mrb[0].mxu0
        %5219 = vmatprep.mubr.bf16.mxu0 0
        %5220 = vmatmul.mubr.bf16.gmra.mrb[0].mxu0 %v2095
        %v5221 = vpop.f32.mrb[0].mxu0
        %v5222 = vadd.f32 0.0, %v5221
        %v5223 = vpop.f32.mrb[0].mxu0
        %v5224 = vpop.f32.mrb[0].mxu0
        %v5225 = vadd.f32 0.0, %v5224
        %v5226 = vpop.f32.mrb[0].mxu0
        %5227 = vmatprep.mubr.bf16.mxu0 0
        %5228 = vmatmul.mubr.bf16.gmra.mrb[0].mxu0 %v2098
        %v5229 = vpop.f32.mrb[0].mxu0
        %v5230 = vadd.f32 0.0, %v5229
        %v5231 = vpop.f32.mrb[0].mxu0
        %v5232 = vpop.f32.mrb[0].mxu0
        %v5233 = vadd.f32 0.0, %v5232
        %v5234 = vpop.f32.mrb[0].mxu0
        %5235 = vmatprep.mubr.bf16.mxu0 0
        %5236 = vmatmul.mubr.bf16.gmra.mrb[0].mxu0 %v5008
        %v5237 = vpop.f32.mrb[0].mxu0
        %v5238 = vadd.f32 0.0, %v5237
        %v5239 = vpop.f32.mrb[0].mxu0
        %v5240 = vpop.f32.mrb[0].mxu0
        %v5241 = vadd.f32 0.0, %v5240
        %v5242 = vpop.f32.mrb[0].mxu0
        %5243 = vmatprep.mubr.bf16.mxu0 0
        %5244 = vmatmul.mubr.bf16.gmra.mrb[0].mxu0 %v2104
        %v5245 = vpop.f32.mrb[0].mxu0
        %v5246 = vadd.f32 0.0, %v5245
        %v5247 = vpop.f32.mrb[0].mxu0
        %v5248 = vpop.f32.mrb[0].mxu0
        %v5249 = vadd.f32 0.0, %v5248
        %v5250 = vpop.f32.mrb[0].mxu0
        %5251 = vmatprep.mubr.bf16.mxu0 0
        %5252 = vmatmul.mubr.bf16.gmra.mrb[0].mxu0 %v2107
        %v5253 = vpop.f32.mrb[0].mxu0
        %v5254 = vadd.f32 0.0, %v5253
        %v5255 = vpop.f32.mrb[0].mxu0
        %v5256 = vpop.f32.mrb[0].mxu0
        %v5257 = vadd.f32 0.0, %v5256
        %v5258 = vpop.f32.mrb[0].mxu0
        %5259 = vmatprep.mubr.bf16.mxu0 0
        %5260 = vmatmul.mubr.bf16.gmra.mrb[0].mxu0 %v2110
        %v5261 = vpop.f32.mrb[0].mxu0
        %v5262 = vadd.f32 0.0, %v5261
        %v5263 = vpop.f32.mrb[0].mxu0
        %v5264 = vpop.f32.mrb[0].mxu0
        %v5265 = vadd.f32 0.0, %v5264
        %v5266 = vpop.f32.mrb[0].mxu0
        %5267 = vmatprep.mubr.bf16.mxu0 0
        %5268 = vmatmul.mubr.bf16.gmra.mrb[0].mxu0 %v5011
        %v5269 = vpop.f32.mrb[0].mxu0
        %v5270 = vadd.f32 0.0, %v5269
        %v5271 = vpop.f32.mrb[0].mxu0
        %v5272 = vpop.f32.mrb[0].mxu0
        %v5273 = vadd.f32 0.0, %v5272
        %v5274 = vpop.f32.mrb[0].mxu0
        %5275 = vmatprep.mubr.bf16.mxu0 0
        %5276 = vmatmul.mubr.bf16.gmra.mrb[0].mxu0 %v2116
        %v5277 = vpop.f32.mrb[0].mxu0
        %v5278 = vadd.f32 0.0, %v5277
        %v5279 = vpop.f32.mrb[0].mxu0
        %v5280 = vpop.f32.mrb[0].mxu0
        %v5281 = vadd.f32 0.0, %v5280
        %v5282 = vpop.f32.mrb[0].mxu0
        %5283 = vmatprep.mubr.bf16.mxu0 0
        %5284 = vmatmul.mubr.bf16.gmra.mrb[0].mxu0 %v2119
        %v5285 = vpop.f32.mrb[0].mxu0
        %v5286 = vadd.f32 0.0, %v5285
        %v5287 = vpop.f32.mrb[0].mxu0
        %v5288 = vpop.f32.mrb[0].mxu0
        %v5289 = vadd.f32 0.0, %v5288
        %v5290 = vpop.f32.mrb[0].mxu0
        %5291 = vmatprep.mubr.bf16.mxu0 0
        %5292 = vmatmul.mubr.bf16.gmra.mrb[0].mxu0 %v2122
        %v5293 = vpop.f32.mrb[0].mxu0
        %v5294 = vadd.f32 0.0, %v5293
        %v5295 = vpop.f32.mrb[0].mxu0
        %v5296 = vpop.f32.mrb[0].mxu0
        %v5297 = vadd.f32 0.0, %v5296
        %v5298 = vpop.f32.mrb[0].mxu0
        %5299 = vmatprep.mubr.bf16.mxu0 0
        %5300 = vmatmul.mubr.bf16.gmra.mrb[0].mxu0 %v5014
        %v5301 = vpop.f32.mrb[0].mxu0
        %v5302 = vadd.f32 0.0, %v5301
        %v5303 = vpop.f32.mrb[0].mxu0
        %v5304 = vpop.f32.mrb[0].mxu0
        %v5305 = vadd.f32 0.0, %v5304
        %v5306 = vpop.f32.mrb[0].mxu0
        %5307 = vdwg.mxu0
        %v5308 = vadd.f32 %v4895, %v5054
        %v5309 = vadd.f32 %v4896, %v5057
        %v5310 = vadd.f32 %v4897, %v5062
        %v5311 = vadd.f32 %v4898, %v5065
        %v5312 = vadd.f32 %v4899, %v5070
        %v5313 = vadd.f32 %v4900, %v5073
        %v5314 = vadd.f32 %v4901, %v5078
        %v5315 = vadd.f32 %v4902, %v5081
        %v5316 = vadd.f32 %v4903, %v5086
        %v5317 = vadd.f32 %v4904, %v5089
        %v5318 = vadd.f32 %v4905, %v5094
        %v5319 = vadd.f32 %v4906, %v5097
        %v5320 = vadd.f32 %v4907, %v5102
        %v5321 = vadd.f32 %v4908, %v5105
        %v5322 = vadd.f32 %v4909, %v5110
        %v5323 = vadd.f32 %v4910, %v5113
        %v5324 = vadd.f32 %v4911, %v5118
        %v5325 = vadd.f32 %v4912, %v5121
        %v5326 = vadd.f32 %v4913, %v5126
        %v5327 = vadd.f32 %v4914, %v5129
        %v5328 = vadd.f32 %v4915, %v5134
        %v5329 = vadd.f32 %v4916, %v5137
        %v5330 = vadd.f32 %v4917, %v5142
        %v5331 = vadd.f32 %v4918, %v5145
        %v5332 = vadd.f32 %v4919, %v5150
        %v5333 = vadd.f32 %v4920, %v5153
        %v5334 = vadd.f32 %v4921, %v5158
        %v5335 = vadd.f32 %v4922, %v5161
        %v5336 = vadd.f32 %v4923, %v5166
        %v5337 = vadd.f32 %v4924, %v5169
        %v5338 = vadd.f32 %v4925, %v5174
        %v5339 = vadd.f32 %v4926, %v5177
        %v5340 = vadd.f32 %v4927, %v5182
        %v5341 = vadd.f32 %v4928, %v5185
        %v5342 = vadd.f32 %v4929, %v5190
        %v5343 = vadd.f32 %v4930, %v5193
        %v5344 = vadd.f32 %v4931, %v5198
        %v5345 = vadd.f32 %v4932, %v5201
        %v5346 = vadd.f32 %v4933, %v5206
        %v5347 = vadd.f32 %v4934, %v5209
        %v5348 = vadd.f32 %v4935, %v5214
        %v5349 = vadd.f32 %v4936, %v5217
        %v5350 = vadd.f32 %v4937, %v5222
        %v5351 = vadd.f32 %v4938, %v5225
        %v5352 = vadd.f32 %v4939, %v5230
        %v5353 = vadd.f32 %v4940, %v5233
        %v5354 = vadd.f32 %v4941, %v5238
        %v5355 = vadd.f32 %v4942, %v5241
        %v5356 = vadd.f32 %v4943, %v5246
        %v5357 = vadd.f32 %v4944, %v5249
        %v5358 = vadd.f32 %v4945, %v5254
        %v5359 = vadd.f32 %v4946, %v5257
        %v5360 = vadd.f32 %v4947, %v5262
        %v5361 = vadd.f32 %v4948, %v5265
        %v5362 = vadd.f32 %v4949, %v5270
        %v5363 = vadd.f32 %v4950, %v5273
        %v5364 = vadd.f32 %v4951, %v5278
        %v5365 = vadd.f32 %v4952, %v5281
        %v5366 = vadd.f32 %v4953, %v5286
        %v5367 = vadd.f32 %v4954, %v5289
        %v5368 = vadd.f32 %v4955, %v5294
        %v5369 = vadd.f32 %v4956, %v5297
        %v5370 = vadd.f32 %v4957, %v5302
        %v5371 = vadd.f32 %v4958, %v5305
        %v5373 = vshrl.u32 %v296, 16
        %v5375 = vrot.slane %v5373, 4
        %v5376 = vshll.u32 %v296, 16
        %v5378 = vrot.slane %v5376, 5
        %v5379 = vor.u32 %v5375, %v5378
        %v5380 = vrot.slane %v5379, 4
        %v5382 = vshll.u32 %v297, 16
        %v5384 = vrot.slane %v5382, 5
        %v5385 = vsel %vm467, %v5380, %v5384
        %v5387 = vshrl.u32 %v316, 16
        %v5389 = vrot.slane %v5387, 4
        %v5390 = vshll.u32 %v316, 16
        %v5392 = vrot.slane %v5390, 5
        %v5393 = vor.u32 %v5389, %v5392
        %v5394 = vrot.slane %v5393, 4
        %v5396 = vshll.u32 %v317, 16
        %v5398 = vrot.slane %v5396, 5
        %v5399 = vsel %vm467, %v5394, %v5398
        %v5401 = vshrl.u32 %v336, 16
        %v5403 = vrot.slane %v5401, 4
        %v5404 = vshll.u32 %v336, 16
        %v5406 = vrot.slane %v5404, 5
        %v5407 = vor.u32 %v5403, %v5406
        %v5408 = vrot.slane %v5407, 4
        %v5410 = vshll.u32 %v337, 16
        %v5412 = vrot.slane %v5410, 5
        %v5413 = vsel %vm467, %v5408, %v5412
        %v5415 = vshrl.u32 %v356, 16
        %v5417 = vrot.slane %v5415, 4
        %v5418 = vshll.u32 %v356, 16
        %v5420 = vrot.slane %v5418, 5
        %v5421 = vor.u32 %v5417, %v5420
        %v5422 = vrot.slane %v5421, 4
        %v5424 = vshll.u32 %v357, 16
        %v5426 = vrot.slane %v5424, 5
        %v5427 = vsel %vm467, %v5422, %v5426
        %v5429 = vshrl.u32 %v376, 16
        %v5431 = vrot.slane %v5429, 4
        %v5432 = vshll.u32 %v376, 16
        %v5434 = vrot.slane %v5432, 5
        %v5435 = vor.u32 %v5431, %v5434
        %v5436 = vrot.slane %v5435, 4
        %v5438 = vshll.u32 %v377, 16
        %v5440 = vrot.slane %v5438, 5
        %v5441 = vsel %vm467, %v5436, %v5440
        %v5443 = vshrl.u32 %v396, 16
        %v5445 = vrot.slane %v5443, 4
        %v5446 = vshll.u32 %v396, 16
        %v5448 = vrot.slane %v5446, 5
        %v5449 = vor.u32 %v5445, %v5448
        %v5450 = vrot.slane %v5449, 4
        %v5452 = vshll.u32 %v397, 16
        %v5454 = vrot.slane %v5452, 5
        %v5455 = vsel %vm467, %v5450, %v5454
        %v5457 = vshrl.u32 %v416, 16
        %v5459 = vrot.slane %v5457, 4
        %v5460 = vshll.u32 %v416, 16
        %v5462 = vrot.slane %v5460, 5
        %v5463 = vor.u32 %v5459, %v5462
        %v5464 = vrot.slane %v5463, 4
        %v5466 = vshll.u32 %v417, 16
        %v5468 = vrot.slane %v5466, 5
        %v5469 = vsel %vm467, %v5464, %v5468
        %v5471 = vshrl.u32 %v436, 16
        %v5473 = vrot.slane %v5471, 4
        %v5474 = vshll.u32 %v436, 16
        %v5476 = vrot.slane %v5474, 5
        %v5477 = vor.u32 %v5473, %v5476
        %v5478 = vrot.slane %v5477, 4
        %v5480 = vshll.u32 %v437, 16
        %v5482 = vrot.slane %v5480, 5
        %v5483 = vsel %vm467, %v5478, %v5482
        %v5484 = vunpack.c.l.b16 %v5385
        %v5485 = vunpack.c.l.b16 %v5399
        %v5486 = vunpack.c.l.b16 %v5413
        %v5487 = vunpack.c.l.b16 %v5427
        %v5488 = vunpack.c.l.b16 %v5441
        %v5489 = vunpack.c.l.b16 %v5455
        %v5490 = vunpack.c.l.b16 %v5469
        %v5491 = vunpack.c.l.b16 %v5483
        %v5492 = vpack.c.b16 %v5484, %v3917
        %v5493 = vpack.c.b16 %v5485, %v3918
        %v5494 = vpack.c.b16 %v5486, %v3919
        %v5495 = vpack.c.b16 %v5487, %v3920
        %v5496 = vpack.c.b16 %v5488, %v3921
        %v5497 = vpack.c.b16 %v5489, %v3922
        %v5498 = vpack.c.b16 %v5490, %v3923
        %v5499 = vpack.c.b16 %v5491, %v3924
        %v5503 = vunpack.c.l.b16 %v459
        %v5504 = vunpack.c.l.b16 %v460
        %v5505 = vunpack.c.l.b16 %v461
        %v5506 = vpack.c.b16 %v5504, %v5503
        %v5507 = vpack.c.b16 %v5505, %v5505
        %v5510 = vsel %vm1469, %v5492, 0
        %v5513 = vsel %vm1469, %v5493, 0
        %v5516 = vsel %vm1469, %v5494, 0
        %v5519 = vsel %vm1469, %v5495, 0
        %v5522 = vsel %vm1469, %v5496, 0
        %v5525 = vsel %vm1469, %v5497, 0
        %v5528 = vsel %vm1469, %v5498, 0
        %v5531 = vsel %vm1469, %v5499, 0
        %v5534 = vsel %vm1566, %v5507, 0
        %5536 = vmatprep.subr.bf16.mxu0 0
        %5537 = vmatpush1.bf16.msra.mxu0 %v5506
        %5538 = vmatprep.subr.bf16.mxu0 0
        %5539 = vmatpush1.bf16.msra.mxu0 %v5534
        %5540 = vmatprep.subr.bf16.mxu0 0
        %5541 = vmatpush1.bf16.msra.mxu0 0
        %5542 = vmatprep.subr.bf16.mxu0 0
        %5543 = vmatpush1.bf16.msra.mxu0 0
        %5544 = vmatprep.subr.bf16.mxu0 0
        %5545 = vmatpush1.bf16.msra.mxu0 0
        %5546 = vmatprep.subr.bf16.mxu0 0
        %5547 = vmatpush1.bf16.msra.mxu0 0
        %5548 = vmatprep.subr.bf16.mxu0 0
        %5549 = vmatpush1.bf16.msra.mxu0 0
        %5550 = vmatprep.subr.bf16.mxu0 0
        %5551 = vmatpush1.bf16.msra.mxu0 0
        %5552 = vmatprep.subr.bf16.mxu0 0
        %5553 = vmatpush1.bf16.msra.mxu0 0
        %5554 = vmatprep.subr.bf16.mxu0 0
        %5555 = vmatpush1.bf16.msra.mxu0 0
        %5556 = vmatprep.subr.bf16.mxu0 0
        %5557 = vmatpush1.bf16.msra.mxu0 0
        %5558 = vmatprep.subr.bf16.mxu0 0
        %5559 = vmatpush1.bf16.msra.mxu0 0
        %5560 = vmatprep.subr.bf16.mxu0 0
        %5561 = vmatpush1.bf16.msra.mxu0 0
        %5562 = vmatprep.subr.bf16.mxu0 0
        %5563 = vmatpush1.bf16.msra.mxu0 0
        %5564 = vmatprep.subr.bf16.mxu0 0
        %5565 = vmatpush1.bf16.msra.mxu0 0
        %5566 = vmatprep.subr.bf16.mxu0 0
        %5567 = vmatpush1.bf16.msra.mxu0 0
        %5568 = vmatprep.mubr.bf16.mxu0 0
        %5569 = vmatmul.mubr.bf16.gmra.mrb[0].mxu0 %v1474
        %v5570 = vpop.f32.mrb[0].mxu0
        %v5571 = vadd.f32 0.0, %v5570
        %v5572 = vpop.f32.mrb[0].mxu0
        %v5573 = vpop.f32.mrb[0].mxu0
        %v5574 = vadd.f32 0.0, %v5573
        %v5575 = vpop.f32.mrb[0].mxu0
        %5576 = vmatprep.mubr.bf16.mxu0 0
        %5577 = vmatmul.mubr.bf16.gmra.mrb[0].mxu0 %v1477
        %v5578 = vpop.f32.mrb[0].mxu0
        %v5579 = vadd.f32 0.0, %v5578
        %v5580 = vpop.f32.mrb[0].mxu0
        %v5581 = vpop.f32.mrb[0].mxu0
        %v5582 = vadd.f32 0.0, %v5581
        %v5583 = vpop.f32.mrb[0].mxu0
        %5584 = vmatprep.mubr.bf16.mxu0 0
        %5585 = vmatmul.mubr.bf16.gmra.mrb[0].mxu0 %v1480
        %v5586 = vpop.f32.mrb[0].mxu0
        %v5587 = vadd.f32 0.0, %v5586
        %v5588 = vpop.f32.mrb[0].mxu0
        %v5589 = vpop.f32.mrb[0].mxu0
        %v5590 = vadd.f32 0.0, %v5589
        %v5591 = vpop.f32.mrb[0].mxu0
        %5592 = vmatprep.mubr.bf16.mxu0 0
        %5593 = vmatmul.mubr.bf16.gmra.mrb[0].mxu0 %v5510
        %v5594 = vpop.f32.mrb[0].mxu0
        %v5595 = vadd.f32 0.0, %v5594
        %v5596 = vpop.f32.mrb[0].mxu0
        %v5597 = vpop.f32.mrb[0].mxu0
        %v5598 = vadd.f32 0.0, %v5597
        %v5599 = vpop.f32.mrb[0].mxu0
        %5600 = vmatprep.mubr.bf16.mxu0 0
        %5601 = vmatmul.mubr.bf16.gmra.mrb[0].mxu0 %v1486
        %v5602 = vpop.f32.mrb[0].mxu0
        %v5603 = vadd.f32 0.0, %v5602
        %v5604 = vpop.f32.mrb[0].mxu0
        %v5605 = vpop.f32.mrb[0].mxu0
        %v5606 = vadd.f32 0.0, %v5605
        %v5607 = vpop.f32.mrb[0].mxu0
        %5608 = vmatprep.mubr.bf16.mxu0 0
        %5609 = vmatmul.mubr.bf16.gmra.mrb[0].mxu0 %v1489
        %v5610 = vpop.f32.mrb[0].mxu0
        %v5611 = vadd.f32 0.0, %v5610
        %v5612 = vpop.f32.mrb[0].mxu0
        %v5613 = vpop.f32.mrb[0].mxu0
        %v5614 = vadd.f32 0.0, %v5613
        %v5615 = vpop.f32.mrb[0].mxu0
        %5616 = vmatprep.mubr.bf16.mxu0 0
        %5617 = vmatmul.mubr.bf16.gmra.mrb[0].mxu0 %v1492
        %v5618 = vpop.f32.mrb[0].mxu0
        %v5619 = vadd.f32 0.0, %v5618
        %v5620 = vpop.f32.mrb[0].mxu0
        %v5621 = vpop.f32.mrb[0].mxu0
        %v5622 = vadd.f32 0.0, %v5621
        %v5623 = vpop.f32.mrb[0].mxu0
        %5624 = vmatprep.mubr.bf16.mxu0 0
        %5625 = vmatmul.mubr.bf16.gmra.mrb[0].mxu0 %v5513
        %v5626 = vpop.f32.mrb[0].mxu0
        %v5627 = vadd.f32 0.0, %v5626
        %v5628 = vpop.f32.mrb[0].mxu0
        %v5629 = vpop.f32.mrb[0].mxu0
        %v5630 = vadd.f32 0.0, %v5629
        %v5631 = vpop.f32.mrb[0].mxu0
        %5632 = vmatprep.mubr.bf16.mxu0 0
        %5633 = vmatmul.mubr.bf16.gmra.mrb[0].mxu0 %v1498
        %v5634 = vpop.f32.mrb[0].mxu0
        %v5635 = vadd.f32 0.0, %v5634
        %v5636 = vpop.f32.mrb[0].mxu0
        %v5637 = vpop.f32.mrb[0].mxu0
        %v5638 = vadd.f32 0.0, %v5637
        %v5639 = vpop.f32.mrb[0].mxu0
        %5640 = vmatprep.mubr.bf16.mxu0 0
        %5641 = vmatmul.mubr.bf16.gmra.mrb[0].mxu0 %v1501
        %v5642 = vpop.f32.mrb[0].mxu0
        %v5643 = vadd.f32 0.0, %v5642
        %v5644 = vpop.f32.mrb[0].mxu0
        %v5645 = vpop.f32.mrb[0].mxu0
        %v5646 = vadd.f32 0.0, %v5645
        %v5647 = vpop.f32.mrb[0].mxu0
        %5648 = vmatprep.mubr.bf16.mxu0 0
        %5649 = vmatmul.mubr.bf16.gmra.mrb[0].mxu0 %v1504
        %v5650 = vpop.f32.mrb[0].mxu0
        %v5651 = vadd.f32 0.0, %v5650
        %v5652 = vpop.f32.mrb[0].mxu0
        %v5653 = vpop.f32.mrb[0].mxu0
        %v5654 = vadd.f32 0.0, %v5653
        %v5655 = vpop.f32.mrb[0].mxu0
        %5656 = vmatprep.mubr.bf16.mxu0 0
        %5657 = vmatmul.mubr.bf16.gmra.mrb[0].mxu0 %v5516
        %v5658 = vpop.f32.mrb[0].mxu0
        %v5659 = vadd.f32 0.0, %v5658
        %v5660 = vpop.f32.mrb[0].mxu0
        %v5661 = vpop.f32.mrb[0].mxu0
        %v5662 = vadd.f32 0.0, %v5661
        %v5663 = vpop.f32.mrb[0].mxu0
        %5664 = vmatprep.mubr.bf16.mxu0 0
        %5665 = vmatmul.mubr.bf16.gmra.mrb[0].mxu0 %v1510
        %v5666 = vpop.f32.mrb[0].mxu0
        %v5667 = vadd.f32 0.0, %v5666
        %v5668 = vpop.f32.mrb[0].mxu0
        %v5669 = vpop.f32.mrb[0].mxu0
        %v5670 = vadd.f32 0.0, %v5669
        %v5671 = vpop.f32.mrb[0].mxu0
        %5672 = vmatprep.mubr.bf16.mxu0 0
        %5673 = vmatmul.mubr.bf16.gmra.mrb[0].mxu0 %v1513
        %v5674 = vpop.f32.mrb[0].mxu0
        %v5675 = vadd.f32 0.0, %v5674
        %v5676 = vpop.f32.mrb[0].mxu0
        %v5677 = vpop.f32.mrb[0].mxu0
        %v5678 = vadd.f32 0.0, %v5677
        %v5679 = vpop.f32.mrb[0].mxu0
        %5680 = vmatprep.mubr.bf16.mxu0 0
        %5681 = vmatmul.mubr.bf16.gmra.mrb[0].mxu0 %v1516
        %v5682 = vpop.f32.mrb[0].mxu0
        %v5683 = vadd.f32 0.0, %v5682
        %v5684 = vpop.f32.mrb[0].mxu0
        %v5685 = vpop.f32.mrb[0].mxu0
        %v5686 = vadd.f32 0.0, %v5685
        %v5687 = vpop.f32.mrb[0].mxu0
        %5688 = vmatprep.mubr.bf16.mxu0 0
        %5689 = vmatmul.mubr.bf16.gmra.mrb[0].mxu0 %v5519
        %v5690 = vpop.f32.mrb[0].mxu0
        %v5691 = vadd.f32 0.0, %v5690
        %v5692 = vpop.f32.mrb[0].mxu0
        %v5693 = vpop.f32.mrb[0].mxu0
        %v5694 = vadd.f32 0.0, %v5693
        %v5695 = vpop.f32.mrb[0].mxu0
        %5696 = vmatprep.mubr.bf16.mxu0 0
        %5697 = vmatmul.mubr.bf16.gmra.mrb[0].mxu0 %v1522
        %v5698 = vpop.f32.mrb[0].mxu0
        %v5699 = vadd.f32 0.0, %v5698
        %v5700 = vpop.f32.mrb[0].mxu0
        %v5701 = vpop.f32.mrb[0].mxu0
        %v5702 = vadd.f32 0.0, %v5701
        %v5703 = vpop.f32.mrb[0].mxu0
        %5704 = vmatprep.mubr.bf16.mxu0 0
        %5705 = vmatmul.mubr.bf16.gmra.mrb[0].mxu0 %v1525
        %v5706 = vpop.f32.mrb[0].mxu0
        %v5707 = vadd.f32 0.0, %v5706
        %v5708 = vpop.f32.mrb[0].mxu0
        %v5709 = vpop.f32.mrb[0].mxu0
        %v5710 = vadd.f32 0.0, %v5709
        %v5711 = vpop.f32.mrb[0].mxu0
        %5712 = vmatprep.mubr.bf16.mxu0 0
        %5713 = vmatmul.mubr.bf16.gmra.mrb[0].mxu0 %v1528
        %v5714 = vpop.f32.mrb[0].mxu0
        %v5715 = vadd.f32 0.0, %v5714
        %v5716 = vpop.f32.mrb[0].mxu0
        %v5717 = vpop.f32.mrb[0].mxu0
        %v5718 = vadd.f32 0.0, %v5717
        %v5719 = vpop.f32.mrb[0].mxu0
        %5720 = vmatprep.mubr.bf16.mxu0 0
        %5721 = vmatmul.mubr.bf16.gmra.mrb[0].mxu0 %v5522
        %v5722 = vpop.f32.mrb[0].mxu0
        %v5723 = vadd.f32 0.0, %v5722
        %v5724 = vpop.f32.mrb[0].mxu0
        %v5725 = vpop.f32.mrb[0].mxu0
        %v5726 = vadd.f32 0.0, %v5725
        %v5727 = vpop.f32.mrb[0].mxu0
        %5728 = vmatprep.mubr.bf16.mxu0 0
        %5729 = vmatmul.mubr.bf16.gmra.mrb[0].mxu0 %v1534
        %v5730 = vpop.f32.mrb[0].mxu0
        %v5731 = vadd.f32 0.0, %v5730
        %v5732 = vpop.f32.mrb[0].mxu0
        %v5733 = vpop.f32.mrb[0].mxu0
        %v5734 = vadd.f32 0.0, %v5733
        %v5735 = vpop.f32.mrb[0].mxu0
        %5736 = vmatprep.mubr.bf16.mxu0 0
        %5737 = vmatmul.mubr.bf16.gmra.mrb[0].mxu0 %v1537
        %v5738 = vpop.f32.mrb[0].mxu0
        %v5739 = vadd.f32 0.0, %v5738
        %v5740 = vpop.f32.mrb[0].mxu0
        %v5741 = vpop.f32.mrb[0].mxu0
        %v5742 = vadd.f32 0.0, %v5741
        %v5743 = vpop.f32.mrb[0].mxu0
        %5744 = vmatprep.mubr.bf16.mxu0 0
        %5745 = vmatmul.mubr.bf16.gmra.mrb[0].mxu0 %v1540
        %v5746 = vpop.f32.mrb[0].mxu0
        %v5747 = vadd.f32 0.0, %v5746
        %v5748 = vpop.f32.mrb[0].mxu0
        %v5749 = vpop.f32.mrb[0].mxu0
        %v5750 = vadd.f32 0.0, %v5749
        %v5751 = vpop.f32.mrb[0].mxu0
        %5752 = vmatprep.mubr.bf16.mxu0 0
        %5753 = vmatmul.mubr.bf16.gmra.mrb[0].mxu0 %v5525
        %v5754 = vpop.f32.mrb[0].mxu0
        %v5755 = vadd.f32 0.0, %v5754
        %v5756 = vpop.f32.mrb[0].mxu0
        %v5757 = vpop.f32.mrb[0].mxu0
        %v5758 = vadd.f32 0.0, %v5757
        %v5759 = vpop.f32.mrb[0].mxu0
        %5760 = vmatprep.mubr.bf16.mxu0 0
        %5761 = vmatmul.mubr.bf16.gmra.mrb[0].mxu0 %v1546
        %v5762 = vpop.f32.mrb[0].mxu0
        %v5763 = vadd.f32 0.0, %v5762
        %v5764 = vpop.f32.mrb[0].mxu0
        %v5765 = vpop.f32.mrb[0].mxu0
        %v5766 = vadd.f32 0.0, %v5765
        %v5767 = vpop.f32.mrb[0].mxu0
        %5768 = vmatprep.mubr.bf16.mxu0 0
        %5769 = vmatmul.mubr.bf16.gmra.mrb[0].mxu0 %v1549
        %v5770 = vpop.f32.mrb[0].mxu0
        %v5771 = vadd.f32 0.0, %v5770
        %v5772 = vpop.f32.mrb[0].mxu0
        %v5773 = vpop.f32.mrb[0].mxu0
        %v5774 = vadd.f32 0.0, %v5773
        %v5775 = vpop.f32.mrb[0].mxu0
        %5776 = vmatprep.mubr.bf16.mxu0 0
        %5777 = vmatmul.mubr.bf16.gmra.mrb[0].mxu0 %v1552
        %v5778 = vpop.f32.mrb[0].mxu0
        %v5779 = vadd.f32 0.0, %v5778
        %v5780 = vpop.f32.mrb[0].mxu0
        %v5781 = vpop.f32.mrb[0].mxu0
        %v5782 = vadd.f32 0.0, %v5781
        %v5783 = vpop.f32.mrb[0].mxu0
        %5784 = vmatprep.mubr.bf16.mxu0 0
        %5785 = vmatmul.mubr.bf16.gmra.mrb[0].mxu0 %v5528
        %v5786 = vpop.f32.mrb[0].mxu0
        %v5787 = vadd.f32 0.0, %v5786
        %v5788 = vpop.f32.mrb[0].mxu0
        %v5789 = vpop.f32.mrb[0].mxu0
        %v5790 = vadd.f32 0.0, %v5789
        %v5791 = vpop.f32.mrb[0].mxu0
        %5792 = vmatprep.mubr.bf16.mxu0 0
        %5793 = vmatmul.mubr.bf16.gmra.mrb[0].mxu0 %v1558
        %v5794 = vpop.f32.mrb[0].mxu0
        %v5795 = vadd.f32 0.0, %v5794
        %v5796 = vpop.f32.mrb[0].mxu0
        %v5797 = vpop.f32.mrb[0].mxu0
        %v5798 = vadd.f32 0.0, %v5797
        %v5799 = vpop.f32.mrb[0].mxu0
        %5800 = vmatprep.mubr.bf16.mxu0 0
        %5801 = vmatmul.mubr.bf16.gmra.mrb[0].mxu0 %v1561
        %v5802 = vpop.f32.mrb[0].mxu0
        %v5803 = vadd.f32 0.0, %v5802
        %v5804 = vpop.f32.mrb[0].mxu0
        %v5805 = vpop.f32.mrb[0].mxu0
        %v5806 = vadd.f32 0.0, %v5805
        %v5807 = vpop.f32.mrb[0].mxu0
        %5808 = vmatprep.mubr.bf16.mxu0 0
        %5809 = vmatmul.mubr.bf16.gmra.mrb[0].mxu0 %v1564
        %v5810 = vpop.f32.mrb[0].mxu0
        %v5811 = vadd.f32 0.0, %v5810
        %v5812 = vpop.f32.mrb[0].mxu0
        %v5813 = vpop.f32.mrb[0].mxu0
        %v5814 = vadd.f32 0.0, %v5813
        %v5815 = vpop.f32.mrb[0].mxu0
        %5816 = vmatprep.mubr.bf16.mxu0 0
        %5817 = vmatmul.mubr.bf16.gmra.mrb[0].mxu0 %v5531
        %v5818 = vpop.f32.mrb[0].mxu0
        %v5819 = vadd.f32 0.0, %v5818
        %v5820 = vpop.f32.mrb[0].mxu0
        %v5821 = vpop.f32.mrb[0].mxu0
        %v5822 = vadd.f32 0.0, %v5821
        %v5823 = vpop.f32.mrb[0].mxu0
        %5824 = vdwg.mxu0
        %v5825 = vadd.f32 %v5308, %v5571
        %v5826 = vadd.f32 %v5309, %v5574
        %v5827 = vadd.f32 %v5310, %v5579
        %v5828 = vadd.f32 %v5311, %v5582
        %v5829 = vadd.f32 %v5312, %v5587
        %v5830 = vadd.f32 %v5313, %v5590
        %v5831 = vadd.f32 %v5314, %v5595
        %v5832 = vadd.f32 %v5315, %v5598
        %v5833 = vadd.f32 %v5316, %v5603
        %v5834 = vadd.f32 %v5317, %v5606
        %v5835 = vadd.f32 %v5318, %v5611
        %v5836 = vadd.f32 %v5319, %v5614
        %v5837 = vadd.f32 %v5320, %v5619
        %v5838 = vadd.f32 %v5321, %v5622
        %v5839 = vadd.f32 %v5322, %v5627
        %v5840 = vadd.f32 %v5323, %v5630
        %v5841 = vadd.f32 %v5324, %v5635
        %v5842 = vadd.f32 %v5325, %v5638
        %v5843 = vadd.f32 %v5326, %v5643
        %v5844 = vadd.f32 %v5327, %v5646
        %v5845 = vadd.f32 %v5328, %v5651
        %v5846 = vadd.f32 %v5329, %v5654
        %v5847 = vadd.f32 %v5330, %v5659
        %v5848 = vadd.f32 %v5331, %v5662
        %v5849 = vadd.f32 %v5332, %v5667
        %v5850 = vadd.f32 %v5333, %v5670
        %v5851 = vadd.f32 %v5334, %v5675
        %v5852 = vadd.f32 %v5335, %v5678
        %v5853 = vadd.f32 %v5336, %v5683
        %v5854 = vadd.f32 %v5337, %v5686
        %v5855 = vadd.f32 %v5338, %v5691
        %v5856 = vadd.f32 %v5339, %v5694
        %v5857 = vadd.f32 %v5340, %v5699
        %v5858 = vadd.f32 %v5341, %v5702
        %v5859 = vadd.f32 %v5342, %v5707
        %v5860 = vadd.f32 %v5343, %v5710
        %v5861 = vadd.f32 %v5344, %v5715
        %v5862 = vadd.f32 %v5345, %v5718
        %v5863 = vadd.f32 %v5346, %v5723
        %v5864 = vadd.f32 %v5347, %v5726
        %v5865 = vadd.f32 %v5348, %v5731
        %v5866 = vadd.f32 %v5349, %v5734
        %v5867 = vadd.f32 %v5350, %v5739
        %v5868 = vadd.f32 %v5351, %v5742
        %v5869 = vadd.f32 %v5352, %v5747
        %v5870 = vadd.f32 %v5353, %v5750
        %v5871 = vadd.f32 %v5354, %v5755
        %v5872 = vadd.f32 %v5355, %v5758
        %v5873 = vadd.f32 %v5356, %v5763
        %v5874 = vadd.f32 %v5357, %v5766
        %v5875 = vadd.f32 %v5358, %v5771
        %v5876 = vadd.f32 %v5359, %v5774
        %v5877 = vadd.f32 %v5360, %v5779
        %v5878 = vadd.f32 %v5361, %v5782
        %v5879 = vadd.f32 %v5362, %v5787
        %v5880 = vadd.f32 %v5363, %v5790
        %v5881 = vadd.f32 %v5364, %v5795
        %v5882 = vadd.f32 %v5365, %v5798
        %v5883 = vadd.f32 %v5366, %v5803
        %v5884 = vadd.f32 %v5367, %v5806
        %v5885 = vadd.f32 %v5368, %v5811
        %v5886 = vadd.f32 %v5369, %v5814
        %v5887 = vadd.f32 %v5370, %v5819
        %v5888 = vadd.f32 %v5371, %v5822
        %v5897 = vrot.slane %v296, 5
        %v5898 = vrot.slane %v5897, 4
        %v5899 = vrot.slane %v297, 5
        %v5900 = vsel %vm2482, %v5898, %v5899
        %v5901 = vrot.slane %v316, 5
        %v5902 = vrot.slane %v5901, 4
        %v5903 = vrot.slane %v317, 5
        %v5904 = vsel %vm2482, %v5902, %v5903
        %v5905 = vrot.slane %v336, 5
        %v5906 = vrot.slane %v5905, 4
        %v5907 = vrot.slane %v337, 5
        %v5908 = vsel %vm2482, %v5906, %v5907
        %v5909 = vrot.slane %v356, 5
        %v5910 = vrot.slane %v5909, 4
        %v5911 = vrot.slane %v357, 5
        %v5912 = vsel %vm2482, %v5910, %v5911
        %v5913 = vrot.slane %v376, 5
        %v5914 = vrot.slane %v5913, 4
        %v5915 = vrot.slane %v377, 5
        %v5916 = vsel %vm2482, %v5914, %v5915
        %v5917 = vrot.slane %v396, 5
        %v5918 = vrot.slane %v5917, 4
        %v5919 = vrot.slane %v397, 5
        %v5920 = vsel %vm2482, %v5918, %v5919
        %v5921 = vrot.slane %v416, 5
        %v5922 = vrot.slane %v5921, 4
        %v5923 = vrot.slane %v417, 5
        %v5924 = vsel %vm2482, %v5922, %v5923
        %v5925 = vrot.slane %v436, 5
        %v5926 = vrot.slane %v5925, 4
        %v5927 = vrot.slane %v437, 5
        %v5928 = vsel %vm2482, %v5926, %v5927
        %v5929 = vunpack.c.l.b16 %v5900
        %v5930 = vunpack.c.l.b16 %v5904
        %v5931 = vunpack.c.l.b16 %v5908
        %v5932 = vunpack.c.l.b16 %v5912
        %v5933 = vunpack.c.l.b16 %v5916
        %v5934 = vunpack.c.l.b16 %v5920
        %v5935 = vunpack.c.l.b16 %v5924
        %v5936 = vunpack.c.l.b16 %v5928
        %v5937 = vpack.c.b16 %v5929, %v4458
        %v5938 = vpack.c.b16 %v5930, %v4459
        %v5939 = vpack.c.b16 %v5931, %v4460
        %v5940 = vpack.c.b16 %v5932, %v4461
        %v5941 = vpack.c.b16 %v5933, %v4462
        %v5942 = vpack.c.b16 %v5934, %v4463
        %v5943 = vpack.c.b16 %v5935, %v4464
        %v5944 = vpack.c.b16 %v5936, %v4465
        %v5948 = vunpack.c.l.b16 %v462
        %v5949 = vunpack.c.l.b16 %v463
        %v5950 = vunpack.c.l.b16 %v464
        %v5951 = vpack.c.b16 %v5949, %v5948
        %v5952 = vpack.c.b16 %v5950, %v5950
        %v5955 = vsel %vm1469, %v5937, 0
        %v5958 = vsel %vm1469, %v5938, 0
        %v5961 = vsel %vm1469, %v5939, 0
        %v5964 = vsel %vm1469, %v5940, 0
        %v5967 = vsel %vm1469, %v5941, 0
        %v5970 = vsel %vm1469, %v5942, 0
        %v5973 = vsel %vm1469, %v5943, 0
        %v5976 = vsel %vm1469, %v5944, 0
        %v5979 = vsel %vm1566, %v5952, 0
        %5981 = vmatprep.subr.bf16.mxu0 0
        %5982 = vmatpush1.bf16.msra.mxu0 %v5951
        %5983 = vmatprep.subr.bf16.mxu0 0
        %5984 = vmatpush1.bf16.msra.mxu0 %v5979
        %5985 = vmatprep.subr.bf16.mxu0 0
        %5986 = vmatpush1.bf16.msra.mxu0 0
        %5987 = vmatprep.subr.bf16.mxu0 0
        %5988 = vmatpush1.bf16.msra.mxu0 0
        %5989 = vmatprep.subr.bf16.mxu0 0
        %5990 = vmatpush1.bf16.msra.mxu0 0
        %5991 = vmatprep.subr.bf16.mxu0 0
        %5992 = vmatpush1.bf16.msra.mxu0 0
        %5993 = vmatprep.subr.bf16.mxu0 0
        %5994 = vmatpush1.bf16.msra.mxu0 0
        %5995 = vmatprep.subr.bf16.mxu0 0
        %5996 = vmatpush1.bf16.msra.mxu0 0
        %5997 = vmatprep.subr.bf16.mxu0 0
        %5998 = vmatpush1.bf16.msra.mxu0 0
        %5999 = vmatprep.subr.bf16.mxu0 0
        %6000 = vmatpush1.bf16.msra.mxu0 0
        %6001 = vmatprep.subr.bf16.mxu0 0
        %6002 = vmatpush1.bf16.msra.mxu0 0
        %6003 = vmatprep.subr.bf16.mxu0 0
        %6004 = vmatpush1.bf16.msra.mxu0 0
        %6005 = vmatprep.subr.bf16.mxu0 0
        %6006 = vmatpush1.bf16.msra.mxu0 0
        %6007 = vmatprep.subr.bf16.mxu0 0
        %6008 = vmatpush1.bf16.msra.mxu0 0
        %6009 = vmatprep.subr.bf16.mxu0 0
        %6010 = vmatpush1.bf16.msra.mxu0 0
        %6011 = vmatprep.subr.bf16.mxu0 0
        %6012 = vmatpush1.bf16.msra.mxu0 0
        %6013 = vmatprep.mubr.bf16.mxu0 0
        %6014 = vmatmul.mubr.bf16.gmra.mrb[0].mxu0 %v2848
        %v6015 = vpop.f32.mrb[0].mxu0
        %v6016 = vadd.f32 0.0, %v6015
        %v6017 = vpop.f32.mrb[0].mxu0
        %v6018 = vpop.f32.mrb[0].mxu0
        %v6019 = vadd.f32 0.0, %v6018
        %v6020 = vpop.f32.mrb[0].mxu0
        %6021 = vmatprep.mubr.bf16.mxu0 0
        %6022 = vmatmul.mubr.bf16.gmra.mrb[0].mxu0 %v2851
        %v6023 = vpop.f32.mrb[0].mxu0
        %v6024 = vadd.f32 0.0, %v6023
        %v6025 = vpop.f32.mrb[0].mxu0
        %v6026 = vpop.f32.mrb[0].mxu0
        %v6027 = vadd.f32 0.0, %v6026
        %v6028 = vpop.f32.mrb[0].mxu0
        %6029 = vmatprep.mubr.bf16.mxu0 0
        %6030 = vmatmul.mubr.bf16.gmra.mrb[0].mxu0 %v2854
        %v6031 = vpop.f32.mrb[0].mxu0
        %v6032 = vadd.f32 0.0, %v6031
        %v6033 = vpop.f32.mrb[0].mxu0
        %v6034 = vpop.f32.mrb[0].mxu0
        %v6035 = vadd.f32 0.0, %v6034
        %v6036 = vpop.f32.mrb[0].mxu0
        %6037 = vmatprep.mubr.bf16.mxu0 0
        %6038 = vmatmul.mubr.bf16.gmra.mrb[0].mxu0 %v5955
        %v6039 = vpop.f32.mrb[0].mxu0
        %v6040 = vadd.f32 0.0, %v6039
        %v6041 = vpop.f32.mrb[0].mxu0
        %v6042 = vpop.f32.mrb[0].mxu0
        %v6043 = vadd.f32 0.0, %v6042
        %v6044 = vpop.f32.mrb[0].mxu0
        %6045 = vmatprep.mubr.bf16.mxu0 0
        %6046 = vmatmul.mubr.bf16.gmra.mrb[0].mxu0 %v2860
        %v6047 = vpop.f32.mrb[0].mxu0
        %v6048 = vadd.f32 0.0, %v6047
        %v6049 = vpop.f32.mrb[0].mxu0
        %v6050 = vpop.f32.mrb[0].mxu0
        %v6051 = vadd.f32 0.0, %v6050
        %v6052 = vpop.f32.mrb[0].mxu0
        %6053 = vmatprep.mubr.bf16.mxu0 0
        %6054 = vmatmul.mubr.bf16.gmra.mrb[0].mxu0 %v2863
        %v6055 = vpop.f32.mrb[0].mxu0
        %v6056 = vadd.f32 0.0, %v6055
        %v6057 = vpop.f32.mrb[0].mxu0
        %v6058 = vpop.f32.mrb[0].mxu0
        %v6059 = vadd.f32 0.0, %v6058
        %v6060 = vpop.f32.mrb[0].mxu0
        %6061 = vmatprep.mubr.bf16.mxu0 0
        %6062 = vmatmul.mubr.bf16.gmra.mrb[0].mxu0 %v2866
        %v6063 = vpop.f32.mrb[0].mxu0
        %v6064 = vadd.f32 0.0, %v6063
        %v6065 = vpop.f32.mrb[0].mxu0
        %v6066 = vpop.f32.mrb[0].mxu0
        %v6067 = vadd.f32 0.0, %v6066
        %v6068 = vpop.f32.mrb[0].mxu0
        %6069 = vmatprep.mubr.bf16.mxu0 0
        %6070 = vmatmul.mubr.bf16.gmra.mrb[0].mxu0 %v5958
        %v6071 = vpop.f32.mrb[0].mxu0
        %v6072 = vadd.f32 0.0, %v6071
        %v6073 = vpop.f32.mrb[0].mxu0
        %v6074 = vpop.f32.mrb[0].mxu0
        %v6075 = vadd.f32 0.0, %v6074
        %v6076 = vpop.f32.mrb[0].mxu0
        %6077 = vmatprep.mubr.bf16.mxu0 0
        %6078 = vmatmul.mubr.bf16.gmra.mrb[0].mxu0 %v2872
        %v6079 = vpop.f32.mrb[0].mxu0
        %v6080 = vadd.f32 0.0, %v6079
        %v6081 = vpop.f32.mrb[0].mxu0
        %v6082 = vpop.f32.mrb[0].mxu0
        %v6083 = vadd.f32 0.0, %v6082
        %v6084 = vpop.f32.mrb[0].mxu0
        %6085 = vmatprep.mubr.bf16.mxu0 0
        %6086 = vmatmul.mubr.bf16.gmra.mrb[0].mxu0 %v2875
        %v6087 = vpop.f32.mrb[0].mxu0
        %v6088 = vadd.f32 0.0, %v6087
        %v6089 = vpop.f32.mrb[0].mxu0
        %v6090 = vpop.f32.mrb[0].mxu0
        %v6091 = vadd.f32 0.0, %v6090
        %v6092 = vpop.f32.mrb[0].mxu0
        %6093 = vmatprep.mubr.bf16.mxu0 0
        %6094 = vmatmul.mubr.bf16.gmra.mrb[0].mxu0 %v2878
        %v6095 = vpop.f32.mrb[0].mxu0
        %v6096 = vadd.f32 0.0, %v6095
        %v6097 = vpop.f32.mrb[0].mxu0
        %v6098 = vpop.f32.mrb[0].mxu0
        %v6099 = vadd.f32 0.0, %v6098
        %v6100 = vpop.f32.mrb[0].mxu0
        %6101 = vmatprep.mubr.bf16.mxu0 0
        %6102 = vmatmul.mubr.bf16.gmra.mrb[0].mxu0 %v5961
        %v6103 = vpop.f32.mrb[0].mxu0
        %v6104 = vadd.f32 0.0, %v6103
        %v6105 = vpop.f32.mrb[0].mxu0
        %v6106 = vpop.f32.mrb[0].mxu0
        %v6107 = vadd.f32 0.0, %v6106
        %v6108 = vpop.f32.mrb[0].mxu0
        %6109 = vmatprep.mubr.bf16.mxu0 0
        %6110 = vmatmul.mubr.bf16.gmra.mrb[0].mxu0 %v2884
        %v6111 = vpop.f32.mrb[0].mxu0
        %v6112 = vadd.f32 0.0, %v6111
        %v6113 = vpop.f32.mrb[0].mxu0
        %v6114 = vpop.f32.mrb[0].mxu0
        %v6115 = vadd.f32 0.0, %v6114
        %v6116 = vpop.f32.mrb[0].mxu0
        %6117 = vmatprep.mubr.bf16.mxu0 0
        %6118 = vmatmul.mubr.bf16.gmra.mrb[0].mxu0 %v2887
        %v6119 = vpop.f32.mrb[0].mxu0
        %v6120 = vadd.f32 0.0, %v6119
        %v6121 = vpop.f32.mrb[0].mxu0
        %v6122 = vpop.f32.mrb[0].mxu0
        %v6123 = vadd.f32 0.0, %v6122
        %v6124 = vpop.f32.mrb[0].mxu0
        %6125 = vmatprep.mubr.bf16.mxu0 0
        %6126 = vmatmul.mubr.bf16.gmra.mrb[0].mxu0 %v2890
        %v6127 = vpop.f32.mrb[0].mxu0
        %v6128 = vadd.f32 0.0, %v6127
        %v6129 = vpop.f32.mrb[0].mxu0
        %v6130 = vpop.f32.mrb[0].mxu0
        %v6131 = vadd.f32 0.0, %v6130
        %v6132 = vpop.f32.mrb[0].mxu0
        %6133 = vmatprep.mubr.bf16.mxu0 0
        %6134 = vmatmul.mubr.bf16.gmra.mrb[0].mxu0 %v5964
        %v6135 = vpop.f32.mrb[0].mxu0
        %v6136 = vadd.f32 0.0, %v6135
        %v6137 = vpop.f32.mrb[0].mxu0
        %v6138 = vpop.f32.mrb[0].mxu0
        %v6139 = vadd.f32 0.0, %v6138
        %v6140 = vpop.f32.mrb[0].mxu0
        %6141 = vmatprep.mubr.bf16.mxu0 0
        %6142 = vmatmul.mubr.bf16.gmra.mrb[0].mxu0 %v2896
        %v6143 = vpop.f32.mrb[0].mxu0
        %v6144 = vadd.f32 0.0, %v6143
        %v6145 = vpop.f32.mrb[0].mxu0
        %v6146 = vpop.f32.mrb[0].mxu0
        %v6147 = vadd.f32 0.0, %v6146
        %v6148 = vpop.f32.mrb[0].mxu0
        %6149 = vmatprep.mubr.bf16.mxu0 0
        %6150 = vmatmul.mubr.bf16.gmra.mrb[0].mxu0 %v2899
        %v6151 = vpop.f32.mrb[0].mxu0
        %v6152 = vadd.f32 0.0, %v6151
        %v6153 = vpop.f32.mrb[0].mxu0
        %v6154 = vpop.f32.mrb[0].mxu0
        %v6155 = vadd.f32 0.0, %v6154
        %v6156 = vpop.f32.mrb[0].mxu0
        %6157 = vmatprep.mubr.bf16.mxu0 0
        %6158 = vmatmul.mubr.bf16.gmra.mrb[0].mxu0 %v2902
        %v6159 = vpop.f32.mrb[0].mxu0
        %v6160 = vadd.f32 0.0, %v6159
        %v6161 = vpop.f32.mrb[0].mxu0
        %v6162 = vpop.f32.mrb[0].mxu0
        %v6163 = vadd.f32 0.0, %v6162
        %v6164 = vpop.f32.mrb[0].mxu0
        %6165 = vmatprep.mubr.bf16.mxu0 0
        %6166 = vmatmul.mubr.bf16.gmra.mrb[0].mxu0 %v5967
        %v6167 = vpop.f32.mrb[0].mxu0
        %v6168 = vadd.f32 0.0, %v6167
        %v6169 = vpop.f32.mrb[0].mxu0
        %v6170 = vpop.f32.mrb[0].mxu0
        %v6171 = vadd.f32 0.0, %v6170
        %v6172 = vpop.f32.mrb[0].mxu0
        %6173 = vmatprep.mubr.bf16.mxu0 0
        %6174 = vmatmul.mubr.bf16.gmra.mrb[0].mxu0 %v2908
        %v6175 = vpop.f32.mrb[0].mxu0
        %v6176 = vadd.f32 0.0, %v6175
        %v6177 = vpop.f32.mrb[0].mxu0
        %v6178 = vpop.f32.mrb[0].mxu0
        %v6179 = vadd.f32 0.0, %v6178
        %v6180 = vpop.f32.mrb[0].mxu0
        %6181 = vmatprep.mubr.bf16.mxu0 0
        %6182 = vmatmul.mubr.bf16.gmra.mrb[0].mxu0 %v2911
        %v6183 = vpop.f32.mrb[0].mxu0
        %v6184 = vadd.f32 0.0, %v6183
        %v6185 = vpop.f32.mrb[0].mxu0
        %v6186 = vpop.f32.mrb[0].mxu0
        %v6187 = vadd.f32 0.0, %v6186
        %v6188 = vpop.f32.mrb[0].mxu0
        %6189 = vmatprep.mubr.bf16.mxu0 0
        %6190 = vmatmul.mubr.bf16.gmra.mrb[0].mxu0 %v2914
        %v6191 = vpop.f32.mrb[0].mxu0
        %v6192 = vadd.f32 0.0, %v6191
        %v6193 = vpop.f32.mrb[0].mxu0
        %v6194 = vpop.f32.mrb[0].mxu0
        %v6195 = vadd.f32 0.0, %v6194
        %v6196 = vpop.f32.mrb[0].mxu0
        %6197 = vmatprep.mubr.bf16.mxu0 0
        %6198 = vmatmul.mubr.bf16.gmra.mrb[0].mxu0 %v5970
        %v6199 = vpop.f32.mrb[0].mxu0
        %v6200 = vadd.f32 0.0, %v6199
        %v6201 = vpop.f32.mrb[0].mxu0
        %v6202 = vpop.f32.mrb[0].mxu0
        %v6203 = vadd.f32 0.0, %v6202
        %v6204 = vpop.f32.mrb[0].mxu0
        %6205 = vmatprep.mubr.bf16.mxu0 0
        %6206 = vmatmul.mubr.bf16.gmra.mrb[0].mxu0 %v2920
        %v6207 = vpop.f32.mrb[0].mxu0
        %v6208 = vadd.f32 0.0, %v6207
        %v6209 = vpop.f32.mrb[0].mxu0
        %v6210 = vpop.f32.mrb[0].mxu0
        %v6211 = vadd.f32 0.0, %v6210
        %v6212 = vpop.f32.mrb[0].mxu0
        %6213 = vmatprep.mubr.bf16.mxu0 0
        %6214 = vmatmul.mubr.bf16.gmra.mrb[0].mxu0 %v2923
        %v6215 = vpop.f32.mrb[0].mxu0
        %v6216 = vadd.f32 0.0, %v6215
        %v6217 = vpop.f32.mrb[0].mxu0
        %v6218 = vpop.f32.mrb[0].mxu0
        %v6219 = vadd.f32 0.0, %v6218
        %v6220 = vpop.f32.mrb[0].mxu0
        %6221 = vmatprep.mubr.bf16.mxu0 0
        %6222 = vmatmul.mubr.bf16.gmra.mrb[0].mxu0 %v2926
        %v6223 = vpop.f32.mrb[0].mxu0
        %v6224 = vadd.f32 0.0, %v6223
        %v6225 = vpop.f32.mrb[0].mxu0
        %v6226 = vpop.f32.mrb[0].mxu0
        %v6227 = vadd.f32 0.0, %v6226
        %v6228 = vpop.f32.mrb[0].mxu0
        %6229 = vmatprep.mubr.bf16.mxu0 0
        %6230 = vmatmul.mubr.bf16.gmra.mrb[0].mxu0 %v5973
        %v6231 = vpop.f32.mrb[0].mxu0
        %v6232 = vadd.f32 0.0, %v6231
        %v6233 = vpop.f32.mrb[0].mxu0
        %v6234 = vpop.f32.mrb[0].mxu0
        %v6235 = vadd.f32 0.0, %v6234
        %v6236 = vpop.f32.mrb[0].mxu0
        %6237 = vmatprep.mubr.bf16.mxu0 0
        %6238 = vmatmul.mubr.bf16.gmra.mrb[0].mxu0 %v2932
        %v6239 = vpop.f32.mrb[0].mxu0
        %v6240 = vadd.f32 0.0, %v6239
        %v6241 = vpop.f32.mrb[0].mxu0
        %v6242 = vpop.f32.mrb[0].mxu0
        %v6243 = vadd.f32 0.0, %v6242
        %v6244 = vpop.f32.mrb[0].mxu0
        %6245 = vmatprep.mubr.bf16.mxu0 0
        %6246 = vmatmul.mubr.bf16.gmra.mrb[0].mxu0 %v2935
        %v6247 = vpop.f32.mrb[0].mxu0
        %v6248 = vadd.f32 0.0, %v6247
        %v6249 = vpop.f32.mrb[0].mxu0
        %v6250 = vpop.f32.mrb[0].mxu0
        %v6251 = vadd.f32 0.0, %v6250
        %v6252 = vpop.f32.mrb[0].mxu0
        %6253 = vmatprep.mubr.bf16.mxu0 0
        %6254 = vmatmul.mubr.bf16.gmra.mrb[0].mxu0 %v2938
        %v6255 = vpop.f32.mrb[0].mxu0
        %v6256 = vadd.f32 0.0, %v6255
        %v6257 = vpop.f32.mrb[0].mxu0
        %v6258 = vpop.f32.mrb[0].mxu0
        %v6259 = vadd.f32 0.0, %v6258
        %v6260 = vpop.f32.mrb[0].mxu0
        %6261 = vmatprep.mubr.bf16.mxu0 0
        %6262 = vmatmul.mubr.bf16.gmra.mrb[0].mxu0 %v5976
        %v6263 = vpop.f32.mrb[0].mxu0
        %v6264 = vadd.f32 0.0, %v6263
        %v6265 = vpop.f32.mrb[0].mxu0
        %v6266 = vpop.f32.mrb[0].mxu0
        %v6267 = vadd.f32 0.0, %v6266
        %v6268 = vpop.f32.mrb[0].mxu0
        %6269 = vdwg.mxu0
        %v6270 = vadd.f32 %v5825, %v6016
        %v6271 = vadd.f32 %v5826, %v6019
        %v6272 = vadd.f32 %v5827, %v6024
        %v6273 = vadd.f32 %v5828, %v6027
        %v6274 = vadd.f32 %v5829, %v6032
        %v6275 = vadd.f32 %v5830, %v6035
        %v6276 = vadd.f32 %v5831, %v6040
        %v6277 = vadd.f32 %v5832, %v6043
        %v6278 = vadd.f32 %v5833, %v6048
        %v6279 = vadd.f32 %v5834, %v6051
        %v6280 = vadd.f32 %v5835, %v6056
        %v6281 = vadd.f32 %v5836, %v6059
        %v6282 = vadd.f32 %v5837, %v6064
        %v6283 = vadd.f32 %v5838, %v6067
        %v6284 = vadd.f32 %v5839, %v6072
        %v6285 = vadd.f32 %v5840, %v6075
        %v6286 = vadd.f32 %v5841, %v6080
        %v6287 = vadd.f32 %v5842, %v6083
        %v6288 = vadd.f32 %v5843, %v6088
        %v6289 = vadd.f32 %v5844, %v6091
        %v6290 = vadd.f32 %v5845, %v6096
        %v6291 = vadd.f32 %v5846, %v6099
        %v6292 = vadd.f32 %v5847, %v6104
        %v6293 = vadd.f32 %v5848, %v6107
        %v6294 = vadd.f32 %v5849, %v6112
        %v6295 = vadd.f32 %v5850, %v6115
        %v6296 = vadd.f32 %v5851, %v6120
        %v6297 = vadd.f32 %v5852, %v6123
        %v6298 = vadd.f32 %v5853, %v6128
        %v6299 = vadd.f32 %v5854, %v6131
        %v6300 = vadd.f32 %v5855, %v6136
        %v6301 = vadd.f32 %v5856, %v6139
        %v6302 = vadd.f32 %v5857, %v6144
        %v6303 = vadd.f32 %v5858, %v6147
        %v6304 = vadd.f32 %v5859, %v6152
        %v6305 = vadd.f32 %v5860, %v6155
        %v6306 = vadd.f32 %v5861, %v6160
        %v6307 = vadd.f32 %v5862, %v6163
        %v6308 = vadd.f32 %v5863, %v6168
        %v6309 = vadd.f32 %v5864, %v6171
        %v6310 = vadd.f32 %v5865, %v6176
        %v6311 = vadd.f32 %v5866, %v6179
        %v6312 = vadd.f32 %v5867, %v6184
        %v6313 = vadd.f32 %v5868, %v6187
        %v6314 = vadd.f32 %v5869, %v6192
        %v6315 = vadd.f32 %v5870, %v6195
        %v6316 = vadd.f32 %v5871, %v6200
        %v6317 = vadd.f32 %v5872, %v6203
        %v6318 = vadd.f32 %v5873, %v6208
        %v6319 = vadd.f32 %v5874, %v6211
        %v6320 = vadd.f32 %v5875, %v6216
        %v6321 = vadd.f32 %v5876, %v6219
        %v6322 = vadd.f32 %v5877, %v6224
        %v6323 = vadd.f32 %v5878, %v6227
        %v6324 = vadd.f32 %v5879, %v6232
        %v6325 = vadd.f32 %v5880, %v6235
        %v6326 = vadd.f32 %v5881, %v6240
        %v6327 = vadd.f32 %v5882, %v6243
        %v6328 = vadd.f32 %v5883, %v6248
        %v6329 = vadd.f32 %v5884, %v6251
        %v6330 = vadd.f32 %v5885, %v6256
        %v6331 = vadd.f32 %v5886, %v6259
        %v6332 = vadd.f32 %v5887, %v6264
        %v6333 = vadd.f32 %v5888, %v6267
        %v6334 = vld [vmem:[#allocation7] sm:$0x1]
        %v6336 = vlaneseq
        %v6337 = vshrl.u32 %v6336, 7
        %v6338 = vsub.s32 0, %v6337
        %v6339 = vrot.slane %v6334, %v6338
        %v6341 = vadd.f32 %v6270, %v6339
        %v6342 = vadd.f32 %v6271, %v6339
        %v6343 = vadd.f32 %v6272, %v6339
        %v6344 = vadd.f32 %v6273, %v6339
        %v6345 = vadd.f32 %v6274, %v6339
        %v6346 = vadd.f32 %v6275, %v6339
        %v6347 = vadd.f32 %v6276, %v6339
        %v6348 = vadd.f32 %v6277, %v6339
        %v6349 = vadd.f32 %v6278, %v6339
        %v6350 = vadd.f32 %v6279, %v6339
        %v6351 = vadd.f32 %v6280, %v6339
        %v6352 = vadd.f32 %v6281, %v6339
        %v6353 = vadd.f32 %v6282, %v6339
        %v6354 = vadd.f32 %v6283, %v6339
        %v6355 = vadd.f32 %v6284, %v6339
        %v6356 = vadd.f32 %v6285, %v6339
        %v6357 = vadd.f32 %v6286, %v6339
        %v6358 = vadd.f32 %v6287, %v6339
        %v6359 = vadd.f32 %v6288, %v6339
        %v6360 = vadd.f32 %v6289, %v6339
        %v6361 = vadd.f32 %v6290, %v6339
        %v6362 = vadd.f32 %v6291, %v6339
        %v6363 = vadd.f32 %v6292, %v6339
        %v6364 = vadd.f32 %v6293, %v6339
        %v6365 = vadd.f32 %v6294, %v6339
        %v6366 = vadd.f32 %v6295, %v6339
        %v6367 = vadd.f32 %v6296, %v6339
        %v6368 = vadd.f32 %v6297, %v6339
        %v6369 = vadd.f32 %v6298, %v6339
        %v6370 = vadd.f32 %v6299, %v6339
        %v6371 = vadd.f32 %v6300, %v6339
        %v6372 = vadd.f32 %v6301, %v6339
        %v6373 = vadd.f32 %v6302, %v6339
        %v6374 = vadd.f32 %v6303, %v6339
        %v6375 = vadd.f32 %v6304, %v6339
        %v6376 = vadd.f32 %v6305, %v6339
        %v6377 = vadd.f32 %v6306, %v6339
        %v6378 = vadd.f32 %v6307, %v6339
        %v6379 = vadd.f32 %v6308, %v6339
        %v6380 = vadd.f32 %v6309, %v6339
        %v6381 = vadd.f32 %v6310, %v6339
        %v6382 = vadd.f32 %v6311, %v6339
        %v6383 = vadd.f32 %v6312, %v6339
        %v6384 = vadd.f32 %v6313, %v6339
        %v6385 = vadd.f32 %v6314, %v6339
        %v6386 = vadd.f32 %v6315, %v6339
        %v6387 = vadd.f32 %v6316, %v6339
        %v6388 = vadd.f32 %v6317, %v6339
        %v6389 = vadd.f32 %v6318, %v6339
        %v6390 = vadd.f32 %v6319, %v6339
        %v6391 = vadd.f32 %v6320, %v6339
        %v6392 = vadd.f32 %v6321, %v6339
        %v6393 = vadd.f32 %v6322, %v6339
        %v6394 = vadd.f32 %v6323, %v6339
        %v6395 = vadd.f32 %v6324, %v6339
        %v6396 = vadd.f32 %v6325, %v6339
        %v6397 = vadd.f32 %v6326, %v6339
        %v6398 = vadd.f32 %v6327, %v6339
        %v6399 = vadd.f32 %v6328, %v6339
        %v6400 = vadd.f32 %v6329, %v6339
        %v6401 = vadd.f32 %v6330, %v6339
        %v6402 = vadd.f32 %v6331, %v6339
        %v6403 = vadd.f32 %v6332, %v6339
        %v6404 = vadd.f32 %v6333, %v6339
        %6405 = vst [vmem:[%s267] sm:$0xff] %v6341
        %6406 = vst [vmem:[%s267 + $0x8] sm:$0xff] %v6342
        %6407 = vst [vmem:[%s267 + $0x10] sm:$0xff] %v6343
        %6408 = vst [vmem:[%s267 + $0x18] sm:$0xff] %v6344
        %6409 = vst [vmem:[%s267 + $0x20] sm:$0xff] %v6345
        %6410 = vst [vmem:[%s267 + $0x28] sm:$0xff] %v6346
        %6411 = vst [vmem:[%s267 + $0x30] sm:$0xff] %v6347
        %6412 = vst [vmem:[%s267 + $0x38] sm:$0xff] %v6348
        %6413 = vst [vmem:[%s267 + $0x40] sm:$0xff] %v6349
        %6414 = vst [vmem:[%s267 + $0x48] sm:$0xff] %v6350
        %6415 = vst [vmem:[%s267 + $0x50] sm:$0xff] %v6351
        %6416 = vst [vmem:[%s267 + $0x58] sm:$0xff] %v6352
        %6417 = vst [vmem:[%s267 + $0x60] sm:$0xff] %v6353
        %6418 = vst [vmem:[%s267 + $0x68] sm:$0xff] %v6354
        %6419 = vst [vmem:[%s267 + $0x70] sm:$0xff] %v6355
        %6420 = vst [vmem:[%s267 + $0x78] sm:$0xff] %v6356
        %6421 = vst [vmem:[%s267 + $0x80] sm:$0xff] %v6357
        %6422 = vst [vmem:[%s267 + $0x88] sm:$0xff] %v6358
        %6423 = vst [vmem:[%s267 + $0x90] sm:$0xff] %v6359
        %6424 = vst [vmem:[%s267 + $0x98] sm:$0xff] %v6360
        %6425 = vst [vmem:[%s267 + $0xa0] sm:$0xff] %v6361
        %6426 = vst [vmem:[%s267 + $0xa8] sm:$0xff] %v6362
        %6427 = vst [vmem:[%s267 + $0xb0] sm:$0xff] %v6363
        %6428 = vst [vmem:[%s267 + $0xb8] sm:$0xff] %v6364
        %6429 = vst [vmem:[%s267 + $0xc0] sm:$0xff] %v6365
        %6430 = vst [vmem:[%s267 + $0xc8] sm:$0xff] %v6366
        %6431 = vst [vmem:[%s267 + $0xd0] sm:$0xff] %v6367
        %6432 = vst [vmem:[%s267 + $0xd8] sm:$0xff] %v6368
        %6433 = vst [vmem:[%s267 + $0xe0] sm:$0xff] %v6369
        %6434 = vst [vmem:[%s267 + $0xe8] sm:$0xff] %v6370
        %6435 = vst [vmem:[%s267 + $0xf0] sm:$0xff] %v6371
        %6436 = vst [vmem:[%s267 + $0xf8] sm:$0xff] %v6372
        %6437 = vst [vmem:[%s267 + $0x100] sm:$0xff] %v6373
        %6438 = vst [vmem:[%s267 + $0x108] sm:$0xff] %v6374
        %6439 = vst [vmem:[%s267 + $0x110] sm:$0xff] %v6375
        %6440 = vst [vmem:[%s267 + $0x118] sm:$0xff] %v6376
        %6441 = vst [vmem:[%s267 + $0x120] sm:$0xff] %v6377
        %6442 = vst [vmem:[%s267 + $0x128] sm:$0xff] %v6378
        %6443 = vst [vmem:[%s267 + $0x130] sm:$0xff] %v6379
        %6444 = vst [vmem:[%s267 + $0x138] sm:$0xff] %v6380
        %6445 = vst [vmem:[%s267 + $0x140] sm:$0xff] %v6381
        %6446 = vst [vmem:[%s267 + $0x148] sm:$0xff] %v6382
        %6447 = vst [vmem:[%s267 + $0x150] sm:$0xff] %v6383
        %6448 = vst [vmem:[%s267 + $0x158] sm:$0xff] %v6384
        %6449 = vst [vmem:[%s267 + $0x160] sm:$0xff] %v6385
        %6450 = vst [vmem:[%s267 + $0x168] sm:$0xff] %v6386
        %6451 = vst [vmem:[%s267 + $0x170] sm:$0xff] %v6387
        %6452 = vst [vmem:[%s267 + $0x178] sm:$0xff] %v6388
        %6453 = vst [vmem:[%s267 + $0x180] sm:$0xff] %v6389
        %6454 = vst [vmem:[%s267 + $0x188] sm:$0xff] %v6390
        %6455 = vst [vmem:[%s267 + $0x190] sm:$0xff] %v6391
        %6456 = vst [vmem:[%s267 + $0x198] sm:$0xff] %v6392
        %6457 = vst [vmem:[%s267 + $0x1a0] sm:$0xff] %v6393
        %6458 = vst [vmem:[%s267 + $0x1a8] sm:$0xff] %v6394
        %6459 = vst [vmem:[%s267 + $0x1b0] sm:$0xff] %v6395
        %6460 = vst [vmem:[%s267 + $0x1b8] sm:$0xff] %v6396
        %6461 = vst [vmem:[%s267 + $0x1c0] sm:$0xff] %v6397
        %6462 = vst [vmem:[%s267 + $0x1c8] sm:$0xff] %v6398
        %6463 = vst [vmem:[%s267 + $0x1d0] sm:$0xff] %v6399
        %6464 = vst [vmem:[%s267 + $0x1d8] sm:$0xff] %v6400
        %6465 = vst [vmem:[%s267 + $0x1e0] sm:$0xff] %v6401
        %6466 = vst [vmem:[%s267 + $0x1e8] sm:$0xff] %v6402
        %6467 = vst [vmem:[%s267 + $0x1f0] sm:$0xff] %v6403
        %6468 = vst [vmem:[%s267 + $0x1f8] sm:$0xff] %v6404
        %v6469 = vadd.f32 %v6341, %v6342
        %v6470 = vadd.f32 %v6469, %v6343
        %v6471 = vadd.f32 %v6470, %v6344
        %v6472 = vadd.f32 %v6471, %v6345
        %v6473 = vadd.f32 %v6472, %v6346
        %v6474 = vadd.f32 %v6473, %v6347
        %v6475 = vadd.f32 %v6474, %v6348
        %v6476 = vadd.f32 %v6475, %v6349
        %v6477 = vadd.f32 %v6476, %v6350
        %v6478 = vadd.f32 %v6477, %v6351
        %v6479 = vadd.f32 %v6478, %v6352
        %v6480 = vadd.f32 %v6479, %v6353
        %v6481 = vadd.f32 %v6480, %v6354
        %v6482 = vadd.f32 %v6481, %v6355
        %v6483 = vadd.f32 %v6482, %v6356
        %v6484 = vadd.f32 %v6483, %v6357
        %v6485 = vadd.f32 %v6484, %v6358
        %v6486 = vadd.f32 %v6485, %v6359
        %v6487 = vadd.f32 %v6486, %v6360
        %v6488 = vadd.f32 %v6487, %v6361
        %v6489 = vadd.f32 %v6488, %v6362
        %v6490 = vadd.f32 %v6489, %v6363
        %v6491 = vadd.f32 %v6490, %v6364
        %v6492 = vadd.f32 %v6491, %v6365
        %v6493 = vadd.f32 %v6492, %v6366
        %v6494 = vadd.f32 %v6493, %v6367
        %v6495 = vadd.f32 %v6494, %v6368
        %v6496 = vadd.f32 %v6495, %v6369
        %v6497 = vadd.f32 %v6496, %v6370
        %v6498 = vadd.f32 %v6497, %v6371
        %v6499 = vadd.f32 %v6498, %v6372
        %v6500 = vadd.f32 %v6499, %v6373
        %v6501 = vadd.f32 %v6500, %v6374
        %v6502 = vadd.f32 %v6501, %v6375
        %v6503 = vadd.f32 %v6502, %v6376
        %v6504 = vadd.f32 %v6503, %v6377
        %v6505 = vadd.f32 %v6504, %v6378
        %v6506 = vadd.f32 %v6505, %v6379
        %v6507 = vadd.f32 %v6506, %v6380
        %v6508 = vadd.f32 %v6507, %v6381
        %v6509 = vadd.f32 %v6508, %v6382
        %v6510 = vadd.f32 %v6509, %v6383
        %v6511 = vadd.f32 %v6510, %v6384
        %v6512 = vadd.f32 %v6511, %v6385
        %v6513 = vadd.f32 %v6512, %v6386
        %v6514 = vadd.f32 %v6513, %v6387
        %v6515 = vadd.f32 %v6514, %v6388
        %v6516 = vadd.f32 %v6515, %v6389
        %v6517 = vadd.f32 %v6516, %v6390
        %v6518 = vadd.f32 %v6517, %v6391
        %v6519 = vadd.f32 %v6518, %v6392
        %v6520 = vadd.f32 %v6519, %v6393
        %v6521 = vadd.f32 %v6520, %v6394
        %v6522 = vadd.f32 %v6521, %v6395
        %v6523 = vadd.f32 %v6522, %v6396
        %v6524 = vadd.f32 %v6523, %v6397
        %v6525 = vadd.f32 %v6524, %v6398
        %v6526 = vadd.f32 %v6525, %v6399
        %v6527 = vadd.f32 %v6526, %v6400
        %v6528 = vadd.f32 %v6527, %v6401
        %v6529 = vadd.f32 %v6528, %v6402
        %v6530 = vadd.f32 %v6529, %v6403
        %v6531 = vadd.f32 %v6530, %v6404
        %v6532 = vrot.slane %v6531, 4
        %v6533 = vadd.f32 %v6531, %v6532
        %v6534 = vrot.slane %v6533, 2
        %v6535 = vadd.f32 %v6533, %v6534
        %v6536 = vrot.slane %v6535, 1
        %v6537 = vadd.f32 %v6535, %v6536
        %6538 = vst [vmem:[%s274] sm:$0x1] %v6537
        %v6539 = vmul.f32 %v6341, %v6341
        %v6540 = vmul.f32 %v6342, %v6342
        %v6541 = vmul.f32 %v6343, %v6343
        %v6542 = vmul.f32 %v6344, %v6344
        %v6543 = vmul.f32 %v6345, %v6345
        %v6544 = vmul.f32 %v6346, %v6346
        %v6545 = vmul.f32 %v6347, %v6347
        %v6546 = vmul.f32 %v6348, %v6348
        %v6547 = vmul.f32 %v6349, %v6349
        %v6548 = vmul.f32 %v6350, %v6350
        %v6549 = vmul.f32 %v6351, %v6351
        %v6550 = vmul.f32 %v6352, %v6352
        %v6551 = vmul.f32 %v6353, %v6353
        %v6552 = vmul.f32 %v6354, %v6354
        %v6553 = vmul.f32 %v6355, %v6355
        %v6554 = vmul.f32 %v6356, %v6356
        %v6555 = vmul.f32 %v6357, %v6357
        %v6556 = vmul.f32 %v6358, %v6358
        %v6557 = vmul.f32 %v6359, %v6359
        %v6558 = vmul.f32 %v6360, %v6360
        %v6559 = vmul.f32 %v6361, %v6361
        %v6560 = vmul.f32 %v6362, %v6362
        %v6561 = vmul.f32 %v6363, %v6363
        %v6562 = vmul.f32 %v6364, %v6364
        %v6563 = vmul.f32 %v6365, %v6365
        %v6564 = vmul.f32 %v6366, %v6366
        %v6565 = vmul.f32 %v6367, %v6367
        %v6566 = vmul.f32 %v6368, %v6368
        %v6567 = vmul.f32 %v6369, %v6369
        %v6568 = vmul.f32 %v6370, %v6370
        %v6569 = vmul.f32 %v6371, %v6371
        %v6570 = vmul.f32 %v6372, %v6372
        %v6571 = vmul.f32 %v6373, %v6373
        %v6572 = vmul.f32 %v6374, %v6374
        %v6573 = vmul.f32 %v6375, %v6375
        %v6574 = vmul.f32 %v6376, %v6376
        %v6575 = vmul.f32 %v6377, %v6377
        %v6576 = vmul.f32 %v6378, %v6378
        %v6577 = vmul.f32 %v6379, %v6379
        %v6578 = vmul.f32 %v6380, %v6380
        %v6579 = vmul.f32 %v6381, %v6381
        %v6580 = vmul.f32 %v6382, %v6382
        %v6581 = vmul.f32 %v6383, %v6383
        %v6582 = vmul.f32 %v6384, %v6384
        %v6583 = vmul.f32 %v6385, %v6385
        %v6584 = vmul.f32 %v6386, %v6386
        %v6585 = vmul.f32 %v6387, %v6387
        %v6586 = vmul.f32 %v6388, %v6388
        %v6587 = vmul.f32 %v6389, %v6389
        %v6588 = vmul.f32 %v6390, %v6390
        %v6589 = vmul.f32 %v6391, %v6391
        %v6590 = vmul.f32 %v6392, %v6392
        %v6591 = vmul.f32 %v6393, %v6393
        %v6592 = vmul.f32 %v6394, %v6394
        %v6593 = vmul.f32 %v6395, %v6395
        %v6594 = vmul.f32 %v6396, %v6396
        %v6595 = vmul.f32 %v6397, %v6397
        %v6596 = vmul.f32 %v6398, %v6398
        %v6597 = vmul.f32 %v6399, %v6399
        %v6598 = vmul.f32 %v6400, %v6400
        %v6599 = vmul.f32 %v6401, %v6401
        %v6600 = vmul.f32 %v6402, %v6402
        %v6601 = vmul.f32 %v6403, %v6403
        %v6602 = vmul.f32 %v6404, %v6404
        %v6603 = vadd.f32 %v6539, %v6540
        %v6604 = vadd.f32 %v6603, %v6541
        %v6605 = vadd.f32 %v6604, %v6542
        %v6606 = vadd.f32 %v6605, %v6543
        %v6607 = vadd.f32 %v6606, %v6544
        %v6608 = vadd.f32 %v6607, %v6545
        %v6609 = vadd.f32 %v6608, %v6546
        %v6610 = vadd.f32 %v6609, %v6547
        %v6611 = vadd.f32 %v6610, %v6548
        %v6612 = vadd.f32 %v6611, %v6549
        %v6613 = vadd.f32 %v6612, %v6550
        %v6614 = vadd.f32 %v6613, %v6551
        %v6615 = vadd.f32 %v6614, %v6552
        %v6616 = vadd.f32 %v6615, %v6553
        %v6617 = vadd.f32 %v6616, %v6554
        %v6618 = vadd.f32 %v6617, %v6555
        %v6619 = vadd.f32 %v6618, %v6556
        %v6620 = vadd.f32 %v6619, %v6557
        %v6621 = vadd.f32 %v6620, %v6558
        %v6622 = vadd.f32 %v6621, %v6559
        %v6623 = vadd.f32 %v6622, %v6560
        %v6624 = vadd.f32 %v6623, %v6561
        %v6625 = vadd.f32 %v6624, %v6562
        %v6626 = vadd.f32 %v6625, %v6563
        %v6627 = vadd.f32 %v6626, %v6564
        %v6628 = vadd.f32 %v6627, %v6565
        %v6629 = vadd.f32 %v6628, %v6566
        %v6630 = vadd.f32 %v6629, %v6567
        %v6631 = vadd.f32 %v6630, %v6568
        %v6632 = vadd.f32 %v6631, %v6569
        %v6633 = vadd.f32 %v6632, %v6570
        %v6634 = vadd.f32 %v6633, %v6571
        %v6635 = vadd.f32 %v6634, %v6572
        %v6636 = vadd.f32 %v6635, %v6573
        %v6637 = vadd.f32 %v6636, %v6574
        %v6638 = vadd.f32 %v6637, %v6575
        %v6639 = vadd.f32 %v6638, %v6576
        %v6640 = vadd.f32 %v6639, %v6577
        %v6641 = vadd.f32 %v6640, %v6578
        %v6642 = vadd.f32 %v6641, %v6579
        %v6643 = vadd.f32 %v6642, %v6580
        %v6644 = vadd.f32 %v6643, %v6581
        %v6645 = vadd.f32 %v6644, %v6582
        %v6646 = vadd.f32 %v6645, %v6583
        %v6647 = vadd.f32 %v6646, %v6584
        %v6648 = vadd.f32 %v6647, %v6585
        %v6649 = vadd.f32 %v6648, %v6586
        %v6650 = vadd.f32 %v6649, %v6587
        %v6651 = vadd.f32 %v6650, %v6588
        %v6652 = vadd.f32 %v6651, %v6589
        %v6653 = vadd.f32 %v6652, %v6590
        %v6654 = vadd.f32 %v6653, %v6591
        %v6655 = vadd.f32 %v6654, %v6592
        %v6656 = vadd.f32 %v6655, %v6593
        %v6657 = vadd.f32 %v6656, %v6594
        %v6658 = vadd.f32 %v6657, %v6595
        %v6659 = vadd.f32 %v6658, %v6596
        %v6660 = vadd.f32 %v6659, %v6597
        %v6661 = vadd.f32 %v6660, %v6598
        %v6662 = vadd.f32 %v6661, %v6599
        %v6663 = vadd.f32 %v6662, %v6600
        %v6664 = vadd.f32 %v6663, %v6601
        %v6665 = vadd.f32 %v6664, %v6602
        %v6666 = vrot.slane %v6665, 4
        %v6667 = vadd.f32 %v6665, %v6666
        %v6668 = vrot.slane %v6667, 2
        %v6669 = vadd.f32 %v6667, %v6668
        %v6670 = vrot.slane %v6669, 1
        %v6671 = vadd.f32 %v6669, %v6670
        %6672 = vst [vmem:[%s274 + $0x1] sm:$0x1] %v6671
        %s6673 = sand.u32 %s118, 1
        %s6674 = scalar_lea.sflag [#allocation4], %s6673
        %s6675 = sand.u32 %s118, 1
        %s6676 = smul.addr %s6675, 512
        %s6677 = scalar_lea.vmem [#allocation8], %s6676
        %s6678 = sand.u32 %s146, 1
        %s6679 = scalar_lea.sflag [#allocation10], %s6678
        %s6680 = sand.u32 %s146, 1
        %s6681 = smul.addr %s6680, 2
        %s6682 = scalar_lea.vmem [#allocation9], %s6681
        // Predicated region
        $region45: #{up_forward.4} parent=31 // pred_check
          %p6683 = pneg %p128
        $region46: #{up_forward.4} parent=31 // pred_check_branch
          %6685 = sbr.rel (%p6683) target = $region48
        $region47: #{up_forward.4} parent=31 // pred_region
          %s6686 = smul.u32 8, %s31
          %s6688 = ssub.s32 8192, 8192
          %6689 = vsyncadd %s6674, %s6688
          %s6690 = smul.addr %s6686, 8
          %s6691 = smul.addr %s30, 64
          %s6692 = sadd.s32 %s6690, %s6691
          %s6693 = smul.addr %s6692, 128
          %s6694 = scalar_lea.hbm %s3, %s6693
          %s6695 = sshll.u32 %s6677, 4
          %s6696 = int_to_ptr.vmem [resolvable:$true] %s6695
          %6701 = dma.vmem_to_hbm [thread:$0]  %s6696, 8192, %s6694, %s6674, 128, 128, 8
        $region48: #{up_forward.4} parent=31 // pred_fallthru
          _
        // Predicated region
        $region49: #{up_forward.4} parent=31 // pred_check
          %p6702 = pneg %p156
        $region50: #{up_forward.4} parent=31 // pred_check_branch
          %6704 = sbr.rel (%p6702) target = $region52
        $region51: #{up_forward.4} parent=31 // pred_region
          %s6706 = ssub.s32 32, 32
          %6707 = vsyncadd %s6679, %s6706
          %s6708 = sadd.s32 %s31, %s30
          %s6709 = smul.addr %s6708, 32
          %s6710 = scalar_lea.hbm %s4, %s6709
          %s6712 = sshll.u32 %s6682, 4
          %s6713 = int_to_ptr.vmem [resolvable:$true] %s6712
          %6715 = dma.vmem_to_hbm [thread:$0]  %s6713, 32, %s6710, %s6679
        $region52: #{up_forward.4} parent=31 // pred_fallthru
          _
      $region32: #{up_forward.4} parent=5 // pred_fallthru
        _
      %p6716 = scmp.le.s32.totalorder 2, %s21
      // Predicated region
      $region53: #{up_forward.4} parent=5 // pred_check
        %p6717 = pneg %p6716
      $region54: #{up_forward.4} parent=5 // pred_check_branch
        %6719 = sbr.rel (%p6717) target = $region56
      $region55: #{up_forward.4} parent=5 // pred_region
        %s6720 = ssub.s32 %s21, 2
        // Predicated region
        $region57: #{up_forward.4} parent=55 // pred_check
          %p6721 = pneg %p134
        $region58: #{up_forward.4} parent=55 // pred_check_branch
          %6723 = sbr.rel (%p6721) target = $region60
        $region59: #{up_forward.4} parent=55 // pred_region
          %s6724 = sand.u32 %s119, 1
          %s6725 = scalar_lea.sflag [#allocation4], %s6724
          %s6726 = sand.u32 %s119, 1
          %s6727 = smul.addr %s6726, 512
          %s6728 = scalar_lea.vmem [#allocation8], %s6727
          %6729 = dma.done %s6725, 8192
        $region60: #{up_forward.4} parent=55 // pred_fallthru
          _
        // Predicated region
        $region61: #{up_forward.4} parent=55 // pred_check
          %p6730 = pneg %p162
        $region62: #{up_forward.4} parent=55 // pred_check_branch
          %6732 = sbr.rel (%p6730) target = $region64
        $region63: #{up_forward.4} parent=55 // pred_region
          %s6733 = sand.u32 %s147, 1
          %s6734 = scalar_lea.sflag [#allocation10], %s6733
          %s6735 = sand.u32 %s147, 1
          %s6736 = smul.addr %s6735, 2
          %s6737 = scalar_lea.vmem [#allocation9], %s6736
          %6738 = dma.done %s6734, 32
        $region64: #{up_forward.4} parent=55 // pred_fallthru
          _
      $region56: #{up_forward.4} parent=5 // pred_fallthru
        _
    $region6: #{up_forward.4} parent=1 // loop_footer
      %s25 = sadd.s32 1, %s21
    $region7: #{up_forward.4} parent=1 // loop_footer_branch
      %20 = sbr.rel target = $region3
    $region8: #{up_forward.4} parent=1 // loop_exit
      _
    %6739 = vsyncpa [#allocation3], 1
    %s6740 = scalar_lea.sflag [#allocation3], 1
    %6741 = vsyncpa %s6740, 1
    %6742 = vsyncpa [#allocation6], 1
    %6743 = vsyncpa [#allocation4], 1
    %s6744 = scalar_lea.sflag [#allocation4], 1
    %6745 = vsyncpa %s6744, 1
    %6746 = vsyncpa [#allocation10], 1
    %s6747 = scalar_lea.sflag [#allocation10], 1
    %6748 = vsyncpa %s6747, 1

</llo_original>
